<compile_context>
chip_gen: v7x
topology: tpu7x:2x2x1
jax: 0.10.0
libtpu: 0.0.40
codegen_flags: <defaults>
</compile_context>

<pallas_src>
import math

import jax
import jax.numpy as jnp
from jax.experimental import pallas as pl
from jax.experimental.pallas import tpu as pltpu

# Channel widths fixed by the module definition.
C1, C2, C3, C4 = 1024, 512, 128, 64
KSZ = 5  # conv1 kernel width: kernel_size=(1, 5)


# ----------------------------------------------------------------------------
# Shared math (pure jnp): used inside the Pallas kernel and as the reference.
# ----------------------------------------------------------------------------
def _pool_out_w(w_in, k=2, s=2):
    """Output width of MaxPool2d(kernel=(1,2), stride=2, ceil_mode=True)."""
    out = math.ceil((w_in - k) / s) + 1
    if (out - 1) * s >= w_in:  # PyTorch: last window must start in-bounds
        out -= 1
    return out


def _maxpool_w(h):
    """ceil-mode max-pool (window 2, stride 2) along axis 1 of (B, W, C).

    Returns pooled values (B, W_out, C) f32 and int32 within-window offsets
    (0 = left element, 1 = right element; ties pick the left one, matching
    PyTorch).  The absolute PyTorch (H*W-flattened, H==1) index is 2*j + off.
    """
    b, w_in, c = h.shape
    wp = w_in // 2
    pairs = h[:, :2 * wp, :].reshape(b, wp, 2, c)
    even = pairs[:, :, 0, :]
    odd = pairs[:, :, 1, :]
    vals = jnp.maximum(even, odd)
    off = jnp.where(even >= odd, jnp.int32(0), jnp.int32(1))
    if w_in % 2:  # partial (ceil_mode) window of width 1 at the right edge
        vals = jnp.concatenate([vals, h[:, 2 * wp:, :]], axis=1)
        off = jnp.concatenate([off, jnp.zeros((b, 1, c), jnp.int32)], axis=1)
    return vals, off


def _conv1x1_relu(h, w, bias):
    b, wd, cin = h.shape
    y = jnp.dot(h.reshape(b * wd, cin).astype(w.dtype), w,
                preferred_element_type=jnp.float32)
    return jnp.maximum(y + bias, 0.0).reshape(b, wd, -1)


def _forward_math(x_i2c, w1, b1, w2, b2, w3, b3, w4, b4, wfc, bfc, zy_dim):
    """x_i2c: (B, Wc, K*nf) bf16 im2col input.  Weights bf16, biases f32."""
    b, wc, kf = x_i2c.shape
    # conv1 (kernel (1,5)) + ReLU as a single K=40 matmul.
    y = jnp.dot(x_i2c.reshape(b * wc, kf), w1, preferred_element_type=jnp.float32)
    h = jnp.maximum(y + b1, 0.0).reshape(b, wc, -1)

    h, o1 = _maxpool_w(h)
    h = _conv1x1_relu(h, w2, b2)
    h, o2 = _maxpool_w(h)
    h = _conv1x1_relu(h, w3, b3)
    h, o3 = _maxpool_w(h)
    h = _conv1x1_relu(h, w4, b4)
    h, o4 = _maxpool_w(h)

    bb, w4d, c4d = h.shape
    # (w, c)-ordered flatten; the fc weights were pre-permuted so this matches
    # PyTorch's (c, w)-ordered out4.reshape(...) numerically.
    feat = h.reshape(bb, w4d * c4d).astype(wfc.dtype)
    head = jnp.dot(feat, wfc, preferred_element_type=jnp.float32) + bfc
    zy_loc = head[:, :zy_dim]
    pre = head[:, zy_dim:]
    # Softplus (beta=1), numerically stable, then + 1e-7 as in the module.
    zy_scale = jnp.maximum(pre, 0.0) + jnp.log1p(jnp.exp(-jnp.abs(pre))) + 1e-7
    return zy_loc, zy_scale, o1, o2, o3, o4


# ----------------------------------------------------------------------------
# Pallas kernel (one batch tile per grid step)
# ----------------------------------------------------------------------------
def qzy_kernel(x_ref, w1_ref, b1_ref, w2_ref, b2_ref, w3_ref, b3_ref,
               w4_ref, b4_ref, wfc_ref, bfc_ref,
               zy_loc_ref, zy_scale_ref, o1_ref, o2_ref, o3_ref, o4_ref):
    zy_dim = zy_loc_ref.shape[-1]
    zy_loc, zy_scale, o1, o2, o3, o4 = _forward_math(
        x_ref[...], w1_ref[...], b1_ref[...], w2_ref[...], b2_ref[...],
        w3_ref[...], b3_ref[...], w4_ref[...], b4_ref[...],
        wfc_ref[...], bfc_ref[...], zy_dim)
    zy_loc_ref[...] = zy_loc
    zy_scale_ref[...] = zy_scale
    # int8 within-window offsets: 4x less writeback than absolute int32 idx.
    o1_ref[...] = o1.astype(jnp.int8)
    o2_ref[...] = o2.astype(jnp.int8)
    o3_ref[...] = o3.astype(jnp.int8)
    o4_ref[...] = o4.astype(jnp.int8)


# ----------------------------------------------------------------------------
# Parameters (deterministic, synthetic, PyTorch layouts) + layout conversion
# ----------------------------------------------------------------------------
def init_torch_like_params(key, n_feature, zy_dim):
    keys = jax.random.split(key, 10)

    def xavier(k, shape, fan_in, fan_out):
        bound = math.sqrt(6.0 / (fan_in + fan_out))
        return jax.random.uniform(k, shape, jnp.float32, -bound, bound)

    def conv_bias(k, cout, fan_in):
        bound = 1.0 / math.sqrt(fan_in)
        return jax.random.uniform(k, (cout,), jnp.float32, -bound, bound)

    return {
        # PyTorch layouts: conv weight (Cout, Cin, 1, K), fc weight (out, in).
        "conv1_w": xavier(keys[0], (C1, n_feature, 1, KSZ), n_feature * KSZ, C1 * KSZ),
        "conv1_b": conv_bias(keys[1], C1, n_feature * KSZ),
        "conv2_w": xavier(keys[2], (C2, C1, 1, 1), C1, C2),
        "conv2_b": conv_bias(keys[3], C2, C1),
        "conv3_w": xavier(keys[4], (C3, C2, 1, 1), C2, C3),
        "conv3_b": conv_bias(keys[5], C3, C2),
        "conv4_w": xavier(keys[6], (C4, C3, 1, 1), C3, C4),
        "conv4_b": conv_bias(keys[7], C4, C3),
        "fc11_w": xavier(keys[8], (zy_dim, C4 * 2), C4 * 2, zy_dim),
        "fc11_b": jnp.zeros((zy_dim,), jnp.float32),
        "fc12_w": xavier(keys[9], (zy_dim, C4 * 2), C4 * 2, zy_dim),
        "fc12_b": jnp.zeros((zy_dim,), jnp.float32),
    }


def _perm_fc_for_kernel(w, c_dim, w_dim):
    # torch fc weight (out, c_dim*w_dim) indexed [o, c*w_dim + w]
    #   -> kernel layout (w_dim*c_dim, out) indexed [w*c_dim + c, o]
    out_dim = w.shape[0]
    wr = w.reshape(out_dim, c_dim, w_dim)          # [o, c, w]
    return jnp.transpose(wr, (2, 1, 0)).reshape(w_dim * c_dim, out_dim)


def _prepare_inputs(x, tp):
    """Glue: replicate the PyTorch view + convert everything to kernel layout."""
    t, f = x.shape[2], x.shape[3]
    # Faithful to the module: x.float().view(-1, x.shape[3], 1, x.shape[2])
    # is a row-major RESHAPE (not a permute).
    x_img = x.astype(jnp.float32).reshape(-1, f, 1, t)        # NCHW (B, nf, 1, T)
    x_cl = jnp.transpose(x_img[:, :, 0, :], (0, 2, 1))         # (B, T, nf)

    wc = t - KSZ + 1
    w1 = _pool_out_w(wc)
    w2 = _pool_out_w(w1)
    w3 = _pool_out_w(w2)
    w4 = _pool_out_w(w3)
    assert C4 * w4 == 128, "fc11/fc12 expect 128 input features (C4 * W4)"

    # im2col for the (1,5) conv: (B, Wc, K*nf), K-major feature order matching
    # conv1_w reshaped (K, nf, C1) -> (K*nf, C1).
    x_i2c = jnp.concatenate([x_cl[:, kk:kk + wc, :] for kk in range(KSZ)],
                            axis=-1).astype(jnp.bfloat16)
    w1k = jnp.transpose(tp["conv1_w"][:, :, 0, :], (2, 1, 0)).reshape(KSZ * f, C1)
    # Fused FC head weight / bias: (128, 2*zy), (1, 2*zy).
    wfc = jnp.concatenate([_perm_fc_for_kernel(tp["fc11_w"], C4, w4),
                           _perm_fc_for_kernel(tp["fc12_w"], C4, w4)], axis=1)
    bfc = jnp.concatenate([tp["fc11_b"], tp["fc12_b"]])[None, :]

    bf16 = jnp.bfloat16
    kargs = (
        w1k.astype(bf16), tp["conv1_b"][None, :],
        jnp.transpose(tp["conv2_w"][:, :, 0, 0], (1, 0)).astype(bf16), tp["conv2_b"][None, :],
        jnp.transpose(tp["conv3_w"][:, :, 0, 0], (1, 0)).astype(bf16), tp["conv3_b"][None, :],
        jnp.transpose(tp["conv4_w"][:, :, 0, 0], (1, 0)).astype(bf16), tp["conv4_b"][None, :],
        wfc.astype(bf16), bfc,
    )
    dims = (x_cl.shape[0], wc, w1, w2, w3, w4, tp["fc11_w"].shape[0])
    return x_i2c, kargs, dims


# ----------------------------------------------------------------------------
# Wrapper: batch-tiled pallas_call + conversion back to PyTorch conventions
# ----------------------------------------------------------------------------
def qzy_forward(x, torch_params, batch_tile=32):
    x_i2c, kargs, dims = _prepare_inputs(x, torch_params)
    b, wc, w1d, w2d, w3d, w4d, zy = dims
    kf = x_i2c.shape[-1]

    # Batch tile: a single block if B is small, otherwise a multiple of 8 so
    # the (bt, zy) output blocks satisfy the sublane tiling constraint.
    bt = min(batch_tile, b)
    if b > bt:
        bt = max(8, bt - bt % 8)
    b_pad = pl.cdiv(b, bt) * bt
    if b_pad != b:
        x_i2c = jnp.pad(x_i2c, ((0, b_pad - b), (0, 0), (0, 0)))
    grid = (b_pad // bt,)

    def wspec(shape):  # weights: same block every grid step -> VMEM-resident
        return pl.BlockSpec(shape, lambda i: (0,) * len(shape))

    in_specs = [pl.BlockSpec((bt, wc, kf), lambda i: (i, 0, 0))] + \
               [wspec(a.shape) for a in kargs]
    out_shape = (
        jax.ShapeDtypeStruct((b_pad, zy), jnp.float32),           # zy_loc
        jax.ShapeDtypeStruct((b_pad, zy), jnp.float32),           # zy_scale
        jax.ShapeDtypeStruct((b_pad, w1d, C1), jnp.int8),         # pool1 offsets
        jax.ShapeDtypeStruct((b_pad, w2d, C2), jnp.int8),         # pool2 offsets
        jax.ShapeDtypeStruct((b_pad, w3d, C3), jnp.int8),         # pool3 offsets
        jax.ShapeDtypeStruct((b_pad, w4d, C4), jnp.int8),         # pool4 offsets
    )
    out_specs = (
        pl.BlockSpec((bt, zy), lambda i: (i, 0)),
        pl.BlockSpec((bt, zy), lambda i: (i, 0)),
        pl.BlockSpec((bt, w1d, C1), lambda i: (i, 0, 0)),
        pl.BlockSpec((bt, w2d, C2), lambda i: (i, 0, 0)),
        pl.BlockSpec((bt, w3d, C3), lambda i: (i, 0, 0)),
        pl.BlockSpec((bt, w4d, C4), lambda i: (i, 0, 0)),
    )

    outs = pl.pallas_call(
        qzy_kernel,
        grid=grid,
        in_specs=in_specs,
        out_specs=out_specs,
        out_shape=out_shape,
        compiler_params=pltpu.CompilerParams(
            dimension_semantics=("parallel",),      # v7x: shard tiles over 2 TCs
            vmem_limit_bytes=32 * 1024 * 1024),     # safe on v5e / v6e / v7x
    )(x_i2c, *kargs)

    zy_loc, zy_scale, o1, o2, o3, o4 = outs
    zy_loc, zy_scale = zy_loc[:b], zy_scale[:b]

    # TODO(synk): PyTorch returns int64 pool indices; int32 is used on TPU.
    def to_torch_idx(off, w_out):
        idx = off[:b].astype(jnp.int32) + \
            2 * jnp.arange(w_out, dtype=jnp.int32)[None, :, None]
        return jnp.transpose(idx, (0, 2, 1))[:, :, None, :]      # (B, C, 1, W)

    idxs = [to_torch_idx(o1, w1d), to_torch_idx(o2, w2d),
            to_torch_idx(o3, w3d), to_torch_idx(o4, w4d)]
    sizes = [(b, C1, 1, w1d), (b, C2, 1, w2d), (b, C3, 1, w3d), (b, C4, 1, w4d)]
    return zy_loc, zy_scale, idxs, sizes


# ----------------------------------------------------------------------------
if __name__ == "__main__":
    B, T, NF, ZY = 2, 26, 8, 16     # T=26 -> W4=2 so that C4*W4 == 128 (fc in)
    key = jax.random.PRNGKey(0)
    kx, kparams = jax.random.split(key)
    # Input follows the PyTorch caller convention: (B, 1, T, n_feature).
    x = jax.random.normal(kx, (B, 1, T, NF), dtype=jnp.float32)
    tp = init_torch_like_params(kparams, NF, ZY)

    zy_loc, zy_scale, idxs, sizes = qzy_forward(x, tp)
    jax.block_until_ready((zy_loc, zy_scale, idxs))

    # Pure-JAX reference (same math, same bf16 operands) for a sanity check.
    x_i2c, kargs, dims = _prepare_inputs(x, tp)
    ref = _forward_math(x_i2c, *kargs, ZY)
    assert zy_loc.shape == (B, ZY) and zy_scale.shape == (B, ZY)
    assert jnp.allclose(zy_loc, ref[0], rtol=1e-2, atol=1e-2)
    assert jnp.allclose(zy_scale, ref[1], rtol=1e-2, atol=1e-2)
    assert [tuple(i.shape) for i in idxs] == [tuple(s) for s in sizes]
    assert all(i.dtype == jnp.int32 for i in idxs)

    print("KERNEL_OK")
</pallas_src>

<mosaic_0001>
module attributes {stable_mosaic.version = 11 : i64} {
  func.func @qzy_kernel(%arg0: i32, %arg1: memref<2x22x40xbf16, #tpu.memory_space<vmem>>, %arg2: memref<40x1024xbf16, #tpu.memory_space<vmem>>, %arg3: memref<1x1024xf32, #tpu.memory_space<vmem>>, %arg4: memref<1024x512xbf16, #tpu.memory_space<vmem>>, %arg5: memref<1x512xf32, #tpu.memory_space<vmem>>, %arg6: memref<512x128xbf16, #tpu.memory_space<vmem>>, %arg7: memref<1x128xf32, #tpu.memory_space<vmem>>, %arg8: memref<128x64xbf16, #tpu.memory_space<vmem>>, %arg9: memref<1x64xf32, #tpu.memory_space<vmem>>, %arg10: memref<128x32xbf16, #tpu.memory_space<vmem>>, %arg11: memref<1x32xf32, #tpu.memory_space<vmem>>, %arg12: memref<2x16xf32, #tpu.memory_space<vmem>>, %arg13: memref<2x16xf32, #tpu.memory_space<vmem>>, %arg14: memref<2x11x1024xi8, #tpu.memory_space<vmem>>, %arg15: memref<2x6x512xi8, #tpu.memory_space<vmem>>, %arg16: memref<2x3x128xi8, #tpu.memory_space<vmem>>, %arg17: memref<2x2x64xi8, #tpu.memory_space<vmem>>) attributes {dimension_semantics = [#tpu.dimension_semantics<parallel>], iteration_bounds = array<i64: 1>, scalar_prefetch = 0 : i64, scratch_operands = 0 : i64, tpu.core_type = #tpu.core_type<tc>, window_params = [{transform_indices = @transform_0, window_bounds = array<i64: 2, 22, 40>}, {pipeline_mode = #tpu.pipeline_mode<synchronous>, transform_indices = @transform_1, window_bounds = array<i64: 40, 1024>}, {pipeline_mode = #tpu.pipeline_mode<synchronous>, transform_indices = @transform_2, window_bounds = array<i64: 1, 1024>}, {pipeline_mode = #tpu.pipeline_mode<synchronous>, transform_indices = @transform_3, window_bounds = array<i64: 1024, 512>}, {pipeline_mode = #tpu.pipeline_mode<synchronous>, transform_indices = @transform_4, window_bounds = array<i64: 1, 512>}, {pipeline_mode = #tpu.pipeline_mode<synchronous>, transform_indices = @transform_5, window_bounds = array<i64: 512, 128>}, {pipeline_mode = #tpu.pipeline_mode<synchronous>, transform_indices = @transform_6, window_bounds = array<i64: 1, 128>}, {pipeline_mode = #tpu.pipeline_mode<synchronous>, transform_indices = @transform_7, window_bounds = array<i64: 128, 64>}, {pipeline_mode = #tpu.pipeline_mode<synchronous>, transform_indices = @transform_8, window_bounds = array<i64: 1, 64>}, {pipeline_mode = #tpu.pipeline_mode<synchronous>, transform_indices = @transform_9, window_bounds = array<i64: 128, 32>}, {pipeline_mode = #tpu.pipeline_mode<synchronous>, transform_indices = @transform_10, window_bounds = array<i64: 1, 32>}, {transform_indices = @transform_11, window_bounds = array<i64: 2, 16>}, {transform_indices = @transform_12, window_bounds = array<i64: 2, 16>}, {transform_indices = @transform_13, window_bounds = array<i64: 2, 11, 1024>}, {transform_indices = @transform_14, window_bounds = array<i64: 2, 6, 512>}, {transform_indices = @transform_15, window_bounds = array<i64: 2, 3, 128>}, {transform_indices = @transform_16, window_bounds = array<i64: 2, 2, 64>}]} {
    %c0 = arith.constant 0 : index
    %c0_0 = arith.constant 0 : index
    %c0_1 = arith.constant 0 : index
    %0 = vector.load %arg1[%c0, %c0_0, %c0_1] : memref<2x22x40xbf16, #tpu.memory_space<vmem>>, vector<2x22x40xbf16>
    %c0_2 = arith.constant 0 : index
    %c0_3 = arith.constant 0 : index
    %1 = vector.load %arg2[%c0_2, %c0_3] : memref<40x1024xbf16, #tpu.memory_space<vmem>>, vector<40x1024xbf16>
    %c0_4 = arith.constant 0 : index
    %c0_5 = arith.constant 0 : index
    %2 = vector.load %arg3[%c0_4, %c0_5] : memref<1x1024xf32, #tpu.memory_space<vmem>>, vector<1x1024xf32>
    %c0_6 = arith.constant 0 : index
    %c0_7 = arith.constant 0 : index
    %3 = vector.load %arg4[%c0_6, %c0_7] : memref<1024x512xbf16, #tpu.memory_space<vmem>>, vector<1024x512xbf16>
    %c0_8 = arith.constant 0 : index
    %c0_9 = arith.constant 0 : index
    %4 = vector.load %arg5[%c0_8, %c0_9] : memref<1x512xf32, #tpu.memory_space<vmem>>, vector<1x512xf32>
    %c0_10 = arith.constant 0 : index
    %c0_11 = arith.constant 0 : index
    %5 = vector.load %arg6[%c0_10, %c0_11] : memref<512x128xbf16, #tpu.memory_space<vmem>>, vector<512x128xbf16>
    %c0_12 = arith.constant 0 : index
    %c0_13 = arith.constant 0 : index
    %6 = vector.load %arg7[%c0_12, %c0_13] : memref<1x128xf32, #tpu.memory_space<vmem>>, vector<1x128xf32>
    %c0_14 = arith.constant 0 : index
    %c0_15 = arith.constant 0 : index
    %7 = vector.load %arg8[%c0_14, %c0_15] : memref<128x64xbf16, #tpu.memory_space<vmem>>, vector<128x64xbf16>
    %c0_16 = arith.constant 0 : index
    %c0_17 = arith.constant 0 : index
    %8 = vector.load %arg9[%c0_16, %c0_17] : memref<1x64xf32, #tpu.memory_space<vmem>>, vector<1x64xf32>
    %c0_18 = arith.constant 0 : index
    %c0_19 = arith.constant 0 : index
    %9 = vector.load %arg10[%c0_18, %c0_19] : memref<128x32xbf16, #tpu.memory_space<vmem>>, vector<128x32xbf16>
    %c0_20 = arith.constant 0 : index
    %c0_21 = arith.constant 0 : index
    %10 = vector.load %arg11[%c0_20, %c0_21] : memref<1x32xf32, #tpu.memory_space<vmem>>, vector<1x32xf32>
    %11 = vector.shape_cast %0 : vector<2x22x40xbf16> to vector<44x40xbf16>
    %cst = arith.constant dense<0.000000e+00> : vector<44x1024xf32>
    %12 = tpu.matmul %11, %1, %cst {dimension_numbers = #tpu.dot_dimension_numbers<[1], [0], [0], [1], [0, 0, 1, 1], [], []>} : vector<44x40xbf16>, vector<40x1024xbf16>, vector<44x1024xf32> -> vector<44x1024xf32>
    %13 = vector.broadcast %2 : vector<1x1024xf32> to vector<44x1024xf32>
    %14 = arith.addf %12, %13 : vector<44x1024xf32>
    %cst_22 = arith.constant 0.000000e+00 : f32
    %15 = vector.broadcast %cst_22 : f32 to vector<44x1024xf32>
    %16 = arith.maximumf %14, %15 : vector<44x1024xf32>
    %17 = vector.shape_cast %16 : vector<44x1024xf32> to vector<2x22x1024xf32>
    %18 = vector.shape_cast %17 : vector<2x22x1024xf32> to vector<2x11x2x1024xf32>
    %19 = vector.extract_strided_slice %18 {offsets = [0, 0, 0, 0], sizes = [2, 11, 1, 1024], strides = [1, 1, 1, 1]} : vector<2x11x2x1024xf32> to vector<2x11x1x1024xf32>
    %20 = vector.shape_cast %19 : vector<2x11x1x1024xf32> to vector<2x11x1024xf32>
    %21 = vector.extract_strided_slice %18 {offsets = [0, 0, 1, 0], sizes = [2, 11, 1, 1024], strides = [1, 1, 1, 1]} : vector<2x11x2x1024xf32> to vector<2x11x1x1024xf32>
    %22 = vector.shape_cast %21 : vector<2x11x1x1024xf32> to vector<2x11x1024xf32>
    %23 = arith.maximumf %20, %22 : vector<2x11x1024xf32>
    %24 = arith.cmpf oge, %20, %22 : vector<2x11x1024xf32>
    %c0_i32 = arith.constant 0 : i32
    %c1_i32 = arith.constant 1 : i32
    %25 = vector.broadcast %c0_i32 : i32 to vector<2x11x1024xi32>
    %26 = vector.broadcast %c1_i32 : i32 to vector<2x11x1024xi32>
    %27 = arith.select %24, %25, %26 : vector<2x11x1024xi1>, vector<2x11x1024xi32>
    %28 = vector.shape_cast %23 : vector<2x11x1024xf32> to vector<22x1024xf32>
    %29 = arith.truncf %28 : vector<22x1024xf32> to vector<22x1024xbf16>
    %cst_23 = arith.constant dense<0.000000e+00> : vector<22x512xf32>
    %30 = tpu.matmul %29, %3, %cst_23 {dimension_numbers = #tpu.dot_dimension_numbers<[1], [0], [0], [1], [0, 0, 1, 1], [], []>} : vector<22x1024xbf16>, vector<1024x512xbf16>, vector<22x512xf32> -> vector<22x512xf32>
    %31 = vector.broadcast %4 : vector<1x512xf32> to vector<22x512xf32>
    %32 = arith.addf %30, %31 : vector<22x512xf32>
    %cst_24 = arith.constant 0.000000e+00 : f32
    %33 = vector.broadcast %cst_24 : f32 to vector<22x512xf32>
    %34 = arith.maximumf %32, %33 : vector<22x512xf32>
    %35 = vector.shape_cast %34 : vector<22x512xf32> to vector<2x11x512xf32>
    %36 = vector.extract_strided_slice %35 {offsets = [0, 0, 0], sizes = [2, 10, 512], strides = [1, 1, 1]} : vector<2x11x512xf32> to vector<2x10x512xf32>
    %37 = vector.shape_cast %36 : vector<2x10x512xf32> to vector<2x5x2x512xf32>
    %38 = vector.extract_strided_slice %37 {offsets = [0, 0, 0, 0], sizes = [2, 5, 1, 512], strides = [1, 1, 1, 1]} : vector<2x5x2x512xf32> to vector<2x5x1x512xf32>
    %39 = vector.shape_cast %38 : vector<2x5x1x512xf32> to vector<2x5x512xf32>
    %40 = vector.extract_strided_slice %37 {offsets = [0, 0, 1, 0], sizes = [2, 5, 1, 512], strides = [1, 1, 1, 1]} : vector<2x5x2x512xf32> to vector<2x5x1x512xf32>
    %41 = vector.shape_cast %40 : vector<2x5x1x512xf32> to vector<2x5x512xf32>
    %42 = arith.maximumf %39, %41 : vector<2x5x512xf32>
    %43 = arith.cmpf oge, %39, %41 : vector<2x5x512xf32>
    %c0_i32_25 = arith.constant 0 : i32
    %c1_i32_26 = arith.constant 1 : i32
    %44 = vector.broadcast %c0_i32_25 : i32 to vector<2x5x512xi32>
    %45 = vector.broadcast %c1_i32_26 : i32 to vector<2x5x512xi32>
    %46 = arith.select %43, %44, %45 : vector<2x5x512xi1>, vector<2x5x512xi32>
    %47 = vector.extract_strided_slice %35 {offsets = [0, 10, 0], sizes = [2, 1, 512], strides = [1, 1, 1]} : vector<2x11x512xf32> to vector<2x1x512xf32>
    %48 = tpu.concatenate %42, %47 in 1 : vector<2x5x512xf32>, vector<2x1x512xf32> -> vector<2x6x512xf32>
    %c0_i32_27 = arith.constant 0 : i32
    %49 = vector.broadcast %c0_i32_27 : i32 to vector<2x1x512xi32>
    %50 = tpu.concatenate %46, %49 in 1 : vector<2x5x512xi32>, vector<2x1x512xi32> -> vector<2x6x512xi32>
    %51 = vector.shape_cast %48 : vector<2x6x512xf32> to vector<12x512xf32>
    %52 = arith.truncf %51 : vector<12x512xf32> to vector<12x512xbf16>
    %cst_28 = arith.constant dense<0.000000e+00> : vector<12x128xf32>
    %53 = tpu.matmul %52, %5, %cst_28 {dimension_numbers = #tpu.dot_dimension_numbers<[1], [0], [0], [1], [0, 0, 1, 1], [], []>} : vector<12x512xbf16>, vector<512x128xbf16>, vector<12x128xf32> -> vector<12x128xf32>
    %54 = vector.broadcast %6 : vector<1x128xf32> to vector<12x128xf32>
    %55 = arith.addf %53, %54 : vector<12x128xf32>
    %cst_29 = arith.constant 0.000000e+00 : f32
    %56 = vector.broadcast %cst_29 : f32 to vector<12x128xf32>
    %57 = arith.maximumf %55, %56 : vector<12x128xf32>
    %58 = vector.shape_cast %57 : vector<12x128xf32> to vector<2x6x128xf32>
    %59 = vector.shape_cast %58 : vector<2x6x128xf32> to vector<2x3x2x128xf32>
    %60 = vector.extract_strided_slice %59 {offsets = [0, 0, 0, 0], sizes = [2, 3, 1, 128], strides = [1, 1, 1, 1]} : vector<2x3x2x128xf32> to vector<2x3x1x128xf32>
    %61 = vector.shape_cast %60 : vector<2x3x1x128xf32> to vector<2x3x128xf32>
    %62 = vector.extract_strided_slice %59 {offsets = [0, 0, 1, 0], sizes = [2, 3, 1, 128], strides = [1, 1, 1, 1]} : vector<2x3x2x128xf32> to vector<2x3x1x128xf32>
    %63 = vector.shape_cast %62 : vector<2x3x1x128xf32> to vector<2x3x128xf32>
    %64 = arith.maximumf %61, %63 : vector<2x3x128xf32>
    %65 = arith.cmpf oge, %61, %63 : vector<2x3x128xf32>
    %c0_i32_30 = arith.constant 0 : i32
    %c1_i32_31 = arith.constant 1 : i32
    %66 = vector.broadcast %c0_i32_30 : i32 to vector<2x3x128xi32>
    %67 = vector.broadcast %c1_i32_31 : i32 to vector<2x3x128xi32>
    %68 = arith.select %65, %66, %67 : vector<2x3x128xi1>, vector<2x3x128xi32>
    %69 = vector.shape_cast %64 : vector<2x3x128xf32> to vector<6x128xf32>
    %70 = arith.truncf %69 : vector<6x128xf32> to vector<6x128xbf16>
    %cst_32 = arith.constant dense<0.000000e+00> : vector<6x64xf32>
    %71 = tpu.matmul %70, %7, %cst_32 {dimension_numbers = #tpu.dot_dimension_numbers<[1], [0], [0], [1], [0, 0, 1, 1], [], []>} : vector<6x128xbf16>, vector<128x64xbf16>, vector<6x64xf32> -> vector<6x64xf32>
    %72 = vector.broadcast %8 : vector<1x64xf32> to vector<6x64xf32>
    %73 = arith.addf %71, %72 : vector<6x64xf32>
    %cst_33 = arith.constant 0.000000e+00 : f32
    %74 = vector.broadcast %cst_33 : f32 to vector<6x64xf32>
    %75 = arith.maximumf %73, %74 : vector<6x64xf32>
    %76 = vector.shape_cast %75 : vector<6x64xf32> to vector<2x3x64xf32>
    %77 = vector.extract_strided_slice %76 {offsets = [0, 0, 0], sizes = [2, 2, 64], strides = [1, 1, 1]} : vector<2x3x64xf32> to vector<2x2x64xf32>
    %78 = vector.shape_cast %77 : vector<2x2x64xf32> to vector<2x1x2x64xf32>
    %79 = vector.extract_strided_slice %78 {offsets = [0, 0, 0, 0], sizes = [2, 1, 1, 64], strides = [1, 1, 1, 1]} : vector<2x1x2x64xf32> to vector<2x1x1x64xf32>
    %80 = vector.shape_cast %79 : vector<2x1x1x64xf32> to vector<2x1x64xf32>
    %81 = vector.extract_strided_slice %78 {offsets = [0, 0, 1, 0], sizes = [2, 1, 1, 64], strides = [1, 1, 1, 1]} : vector<2x1x2x64xf32> to vector<2x1x1x64xf32>
    %82 = vector.shape_cast %81 : vector<2x1x1x64xf32> to vector<2x1x64xf32>
    %83 = arith.maximumf %80, %82 : vector<2x1x64xf32>
    %84 = arith.cmpf oge, %80, %82 : vector<2x1x64xf32>
    %c0_i32_34 = arith.constant 0 : i32
    %c1_i32_35 = arith.constant 1 : i32
    %85 = vector.broadcast %c0_i32_34 : i32 to vector<2x1x64xi32>
    %86 = vector.broadcast %c1_i32_35 : i32 to vector<2x1x64xi32>
    %87 = arith.select %84, %85, %86 : vector<2x1x64xi1>, vector<2x1x64xi32>
    %88 = vector.extract_strided_slice %76 {offsets = [0, 2, 0], sizes = [2, 1, 64], strides = [1, 1, 1]} : vector<2x3x64xf32> to vector<2x1x64xf32>
    %89 = tpu.concatenate %83, %88 in 1 : vector<2x1x64xf32>, vector<2x1x64xf32> -> vector<2x2x64xf32>
    %c0_i32_36 = arith.constant 0 : i32
    %90 = vector.broadcast %c0_i32_36 : i32 to vector<2x1x64xi32>
    %91 = tpu.concatenate %87, %90 in 1 : vector<2x1x64xi32>, vector<2x1x64xi32> -> vector<2x2x64xi32>
    %92 = vector.shape_cast %89 : vector<2x2x64xf32> to vector<2x128xf32>
    %93 = arith.truncf %92 : vector<2x128xf32> to vector<2x128xbf16>
    %cst_37 = arith.constant dense<0.000000e+00> : vector<2x32xf32>
    %94 = tpu.matmul %93, %9, %cst_37 {dimension_numbers = #tpu.dot_dimension_numbers<[1], [0], [0], [1], [0, 0, 1, 1], [], []>} : vector<2x128xbf16>, vector<128x32xbf16>, vector<2x32xf32> -> vector<2x32xf32>
    %95 = vector.broadcast %10 : vector<1x32xf32> to vector<2x32xf32>
    %96 = arith.addf %94, %95 : vector<2x32xf32>
    %97 = vector.extract_strided_slice %96 {offsets = [0, 0], sizes = [2, 16], strides = [1, 1]} : vector<2x32xf32> to vector<2x16xf32>
    %98 = vector.extract_strided_slice %96 {offsets = [0, 16], sizes = [2, 16], strides = [1, 1]} : vector<2x32xf32> to vector<2x16xf32>
    %cst_38 = arith.constant 0.000000e+00 : f32
    %99 = vector.broadcast %cst_38 : f32 to vector<2x16xf32>
    %100 = arith.maximumf %98, %99 : vector<2x16xf32>
    %101 = math.absf %98 : vector<2x16xf32>
    %cst_39 = arith.constant 0.000000e+00 : f32
    %102 = vector.broadcast %cst_39 : f32 to vector<2x16xf32>
    %103 = arith.subf %102, %101 : vector<2x16xf32>
    %104 = math.exp %103 : vector<2x16xf32>
    %105 = math.log1p %104 : vector<2x16xf32>
    %106 = arith.addf %100, %105 : vector<2x16xf32>
    %cst_40 = arith.constant 1.000000e-07 : f32
    %107 = vector.broadcast %cst_40 : f32 to vector<2x16xf32>
    %108 = arith.addf %106, %107 : vector<2x16xf32>
    %c0_41 = arith.constant 0 : index
    %c0_42 = arith.constant 0 : index
    %109 = vector.load %arg12[%c0_41, %c0_42] : memref<2x16xf32, #tpu.memory_space<vmem>>, vector<2x16xf32>
    tpu.vector_store %arg12[%c0_41, %c0_42], %97 {strides = array<i32>} : memref<2x16xf32, #tpu.memory_space<vmem>>, vector<2x16xf32>,
    %c0_43 = arith.constant 0 : index
    %c0_44 = arith.constant 0 : index
    %110 = vector.load %arg13[%c0_43, %c0_44] : memref<2x16xf32, #tpu.memory_space<vmem>>, vector<2x16xf32>
    tpu.vector_store %arg13[%c0_43, %c0_44], %108 {strides = array<i32>} : memref<2x16xf32, #tpu.memory_space<vmem>>, vector<2x16xf32>,
    %111 = arith.trunci %27 : vector<2x11x1024xi32> to vector<2x11x1024xi8>
    %c0_45 = arith.constant 0 : index
    %c0_46 = arith.constant 0 : index
    %c0_47 = arith.constant 0 : index
    %112 = vector.load %arg14[%c0_45, %c0_46, %c0_47] : memref<2x11x1024xi8, #tpu.memory_space<vmem>>, vector<2x11x1024xi8>
    tpu.vector_store %arg14[%c0_45, %c0_46, %c0_47], %111 {strides = array<i32>} : memref<2x11x1024xi8, #tpu.memory_space<vmem>>, vector<2x11x1024xi8>,
    %113 = arith.trunci %50 : vector<2x6x512xi32> to vector<2x6x512xi8>
    %c0_48 = arith.constant 0 : index
    %c0_49 = arith.constant 0 : index
    %c0_50 = arith.constant 0 : index
    %114 = vector.load %arg15[%c0_48, %c0_49, %c0_50] : memref<2x6x512xi8, #tpu.memory_space<vmem>>, vector<2x6x512xi8>
    tpu.vector_store %arg15[%c0_48, %c0_49, %c0_50], %113 {strides = array<i32>} : memref<2x6x512xi8, #tpu.memory_space<vmem>>, vector<2x6x512xi8>,
    %115 = arith.trunci %68 : vector<2x3x128xi32> to vector<2x3x128xi8>
    %c0_51 = arith.constant 0 : index
    %c0_52 = arith.constant 0 : index
    %c0_53 = arith.constant 0 : index
    %116 = vector.load %arg16[%c0_51, %c0_52, %c0_53] : memref<2x3x128xi8, #tpu.memory_space<vmem>>, vector<2x3x128xi8>
    tpu.vector_store %arg16[%c0_51, %c0_52, %c0_53], %115 {strides = array<i32>} : memref<2x3x128xi8, #tpu.memory_space<vmem>>, vector<2x3x128xi8>,
    %117 = arith.trunci %91 : vector<2x2x64xi32> to vector<2x2x64xi8>
    %c0_54 = arith.constant 0 : index
    %c0_55 = arith.constant 0 : index
    %c0_56 = arith.constant 0 : index
    %118 = vector.load %arg17[%c0_54, %c0_55, %c0_56] : memref<2x2x64xi8, #tpu.memory_space<vmem>>, vector<2x2x64xi8>
    tpu.vector_store %arg17[%c0_54, %c0_55, %c0_56], %117 {strides = array<i32>} : memref<2x2x64xi8, #tpu.memory_space<vmem>>, vector<2x2x64xi8>,
    return
  }
  func.func @transform_0(%arg0: i32) -> (i32, i32, i32) {
    %c0_i32 = arith.constant 0 : i32
    %c0_i32_0 = arith.constant 0 : i32
    %c0_i32_1 = arith.constant 0 : i32
    return %arg0, %c0_i32, %c0_i32_0 : i32, i32, i32
  }
  func.func @transform_1(%arg0: i32) -> (i32, i32) {
    %c0_i32 = arith.constant 0 : i32
    %c0_i32_0 = arith.constant 0 : i32
    %c0_i32_1 = arith.constant 0 : i32
    return %c0_i32, %c0_i32_0 : i32, i32
  }
  func.func @transform_2(%arg0: i32) -> (i32, i32) {
    %c0_i32 = arith.constant 0 : i32
    %c0_i32_0 = arith.constant 0 : i32
    %c0_i32_1 = arith.constant 0 : i32
    return %c0_i32, %c0_i32_0 : i32, i32
  }
  func.func @transform_3(%arg0: i32) -> (i32, i32) {
    %c0_i32 = arith.constant 0 : i32
    %c0_i32_0 = arith.constant 0 : i32
    %c0_i32_1 = arith.constant 0 : i32
    return %c0_i32, %c0_i32_0 : i32, i32
  }
  func.func @transform_4(%arg0: i32) -> (i32, i32) {
    %c0_i32 = arith.constant 0 : i32
    %c0_i32_0 = arith.constant 0 : i32
    %c0_i32_1 = arith.constant 0 : i32
    return %c0_i32, %c0_i32_0 : i32, i32
  }
  func.func @transform_5(%arg0: i32) -> (i32, i32) {
    %c0_i32 = arith.constant 0 : i32
    %c0_i32_0 = arith.constant 0 : i32
    %c0_i32_1 = arith.constant 0 : i32
    return %c0_i32, %c0_i32_0 : i32, i32
  }
  func.func @transform_6(%arg0: i32) -> (i32, i32) {
    %c0_i32 = arith.constant 0 : i32
    %c0_i32_0 = arith.constant 0 : i32
    %c0_i32_1 = arith.constant 0 : i32
    return %c0_i32, %c0_i32_0 : i32, i32
  }
  func.func @transform_7(%arg0: i32) -> (i32, i32) {
    %c0_i32 = arith.constant 0 : i32
    %c0_i32_0 = arith.constant 0 : i32
    %c0_i32_1 = arith.constant 0 : i32
    return %c0_i32, %c0_i32_0 : i32, i32
  }
  func.func @transform_8(%arg0: i32) -> (i32, i32) {
    %c0_i32 = arith.constant 0 : i32
    %c0_i32_0 = arith.constant 0 : i32
    %c0_i32_1 = arith.constant 0 : i32
    return %c0_i32, %c0_i32_0 : i32, i32
  }
  func.func @transform_9(%arg0: i32) -> (i32, i32) {
    %c0_i32 = arith.constant 0 : i32
    %c0_i32_0 = arith.constant 0 : i32
    %c0_i32_1 = arith.constant 0 : i32
    return %c0_i32, %c0_i32_0 : i32, i32
  }
  func.func @transform_10(%arg0: i32) -> (i32, i32) {
    %c0_i32 = arith.constant 0 : i32
    %c0_i32_0 = arith.constant 0 : i32
    %c0_i32_1 = arith.constant 0 : i32
    return %c0_i32, %c0_i32_0 : i32, i32
  }
  func.func @transform_11(%arg0: i32) -> (i32, i32) {
    %c0_i32 = arith.constant 0 : i32
    %c0_i32_0 = arith.constant 0 : i32
    return %arg0, %c0_i32 : i32, i32
  }
  func.func @transform_12(%arg0: i32) -> (i32, i32) {
    %c0_i32 = arith.constant 0 : i32
    %c0_i32_0 = arith.constant 0 : i32
    return %arg0, %c0_i32 : i32, i32
  }
  func.func @transform_13(%arg0: i32) -> (i32, i32, i32) {
    %c0_i32 = arith.constant 0 : i32
    %c0_i32_0 = arith.constant 0 : i32
    %c0_i32_1 = arith.constant 0 : i32
    return %arg0, %c0_i32, %c0_i32_0 : i32, i32, i32
  }
  func.func @transform_14(%arg0: i32) -> (i32, i32, i32) {
    %c0_i32 = arith.constant 0 : i32
    %c0_i32_0 = arith.constant 0 : i32
    %c0_i32_1 = arith.constant 0 : i32
    return %arg0, %c0_i32, %c0_i32_0 : i32, i32, i32
  }
  func.func @transform_15(%arg0: i32) -> (i32, i32, i32) {
    %c0_i32 = arith.constant 0 : i32
    %c0_i32_0 = arith.constant 0 : i32
    %c0_i32_1 = arith.constant 0 : i32
    return %arg0, %c0_i32, %c0_i32_0 : i32, i32, i32
  }
  func.func @transform_16(%arg0: i32) -> (i32, i32, i32) {
    %c0_i32 = arith.constant 0 : i32
    %c0_i32_0 = arith.constant 0 : i32
    %c0_i32_1 = arith.constant 0 : i32
    return %arg0, %c0_i32, %c0_i32_0 : i32, i32, i32
  }
}

</mosaic_0001>

<llo_original>
// kernel: tpu_custom_call.1
$region0: #{tpu_custom_call.1}
  #allocation0 [shape = 'u32[]', space=smem, size = 0x4, offset = 0x4, fixed_abs, tag = 'smem constant byte address 0x4 - core index']
  #allocation1 [shape = 'u32[144,128]{1,0:T(1,128)}', space=vmem, size = 0x12000, scoped, tag = 'internal scratch']
  %s0 = inlined_call_operand.vmem [shape: bf16[2,22,40], index: 0, kind: input, shape index: {}]
  %s1 = inlined_call_operand.vmem [shape: bf16[40,1024], index: 1, kind: input, shape index: {}]
  %s2 = inlined_call_operand.vmem [shape: f32[1,1024], index: 2, kind: input, shape index: {}]
  %s3 = inlined_call_operand.hbm [shape: bf16[1024,512], index: 3, kind: input, shape index: {}]
  %s4 = inlined_call_operand.vmem [shape: f32[1,512], index: 4, kind: input, shape index: {}]
  %s5 = inlined_call_operand.hbm [shape: bf16[512,128], index: 5, kind: input, shape index: {}]
  %s6 = inlined_call_operand.vmem [shape: f32[1,128], index: 6, kind: input, shape index: {}]
  %s7 = inlined_call_operand.vmem [shape: bf16[128,64], index: 7, kind: input, shape index: {}]
  %s8 = inlined_call_operand.vmem [shape: f32[1,64], index: 8, kind: input, shape index: {}]
  %s9 = inlined_call_operand.vmem [shape: bf16[128,32], index: 9, kind: input, shape index: {}]
  %s10 = inlined_call_operand.vmem [shape: f32[1,32], index: 10, kind: input, shape index: {}]
  %s11 = inlined_call_operand.hbm [shape: f32[2,16], index: 11, kind: output, shape index: {0}]
  %s12 = inlined_call_operand.hbm [shape: f32[2,16], index: 12, kind: output, shape index: {1}]
  %s13 = inlined_call_operand.hbm [shape: s8[2,11,1024], index: 13, kind: output, shape index: {2}]
  %s14 = inlined_call_operand.hbm [shape: s8[2,6,512], index: 14, kind: output, shape index: {3}]
  %s15 = inlined_call_operand.hbm [shape: s8[2,3,128], index: 15, kind: output, shape index: {4}]
  %s16 = inlined_call_operand.hbm [shape: s8[2,2,64], index: 16, kind: output, shape index: {5}]
  %17 = xla_tuple %s11, %s12, %s13, %s14, %s15, %s16
  %s18 = sld [smem:[#allocation0]]
  $region102: #{tpu_custom_call.1} parent=0
    _
  %s20 = ssub.s32 1, %s18
  %s21 = scalar_select 0, %s20, %s18
  $region1: #{tpu_custom_call.1} parent=0
    #allocation2 [shape = 'u8[1048576]{0}', space=vmem, size = 0x100000, scoped, tag = 'input window, operand 3, single buffered']
    #allocation3 [shape = 's32[1]{0}', space=sflag, size = 0x4, scoped, tag = 'scoped memory for tpu_custom_call.1']
    #allocation4 [shape = 's32[1]{0}', space=sflag, size = 0x4, scoped, tag = 'scoped memory for tpu_custom_call.1']
    #allocation5 [shape = 'u8[131072]{0}', space=vmem, size = 0x20000, scoped, tag = 'input window, operand 5, single buffered']
    #allocation6 [shape = 's32[1]{0}', space=sflag, size = 0x4, scoped, tag = 'scoped memory for tpu_custom_call.1']
    #allocation7 [shape = 'u8[1024]{0}', space=vmem, size = 0x400, scoped, tag = 'output window, operand 0, single buffered']
    #allocation8 [shape = 'u8[1024]{0}', space=vmem, size = 0x400, scoped, tag = 'output window, operand 1, single buffered']
    #allocation9 [shape = 's32[1]{0}', space=sflag, size = 0x4, scoped, tag = 'scoped memory for tpu_custom_call.1']
    #allocation10 [shape = 'u8[32768]{0}', space=vmem, size = 0x8000, scoped, tag = 'output window, operand 2, single buffered']
    #allocation11 [shape = 'u8[8192]{0}', space=vmem, size = 0x2000, scoped, tag = 'output window, operand 3, single buffered']
    #allocation12 [shape = 's32[1]{0}', space=sflag, size = 0x4, scoped, tag = 'scoped memory for tpu_custom_call.1']
    #allocation13 [shape = 'u8[1024]{0}', space=vmem, size = 0x400, scoped, tag = 'output window, operand 4, single buffered']
    #allocation14 [shape = 'u8[1024]{0}', space=vmem, size = 0x400, scoped, tag = 'output window, operand 5, single buffered']
    #allocation15 [shape = 's32[1]{0}', space=sflag, size = 0x4, scoped, tag = 'scoped memory for tpu_custom_call.1']
    %22 = vsyncpa [#allocation3], 0
    %23 = vsyncpa [#allocation6], 0
    %24 = vsyncpa [#allocation4], 0
    %25 = vsyncpa [#allocation9], 0
    %26 = vsyncpa [#allocation12], 0
    %27 = vsyncpa [#allocation15], 0
    // Predicated region
    $region2: #{tpu_custom_call.1} parent=1 // pred_check
      _
    $region3: #{tpu_custom_call.1} parent=1 // pred_check_branch
      %29 = sbr.rel (0) target = $region5
    $region4: #{tpu_custom_call.1} parent=1 // pred_region
      _
    $region5: #{tpu_custom_call.1} parent=1 // pred_fallthru
      _
    // Predicated region
    $region6: #{tpu_custom_call.1} parent=1 // pred_check
      _
    $region7: #{tpu_custom_call.1} parent=1 // pred_check_branch
      %31 = sbr.rel (0) target = $region9
    $region8: #{tpu_custom_call.1} parent=1 // pred_region
      _
    $region9: #{tpu_custom_call.1} parent=1 // pred_fallthru
      _
    // Predicated region
    $region10: #{tpu_custom_call.1} parent=1 // pred_check
      _
    $region11: #{tpu_custom_call.1} parent=1 // pred_check_branch
      %33 = sbr.rel (0) target = $region13
    $region12: #{tpu_custom_call.1} parent=1 // pred_region
      _
    $region13: #{tpu_custom_call.1} parent=1 // pred_fallthru
      _
    // Predicated region
    $region14: #{tpu_custom_call.1} parent=1 // pred_check
      _
    $region15: #{tpu_custom_call.1} parent=1 // pred_check_branch
      %35 = sbr.rel (0) target = $region17
    $region16: #{tpu_custom_call.1} parent=1 // pred_region
      %s37 = ssub.s32 32768, 32768
      %38 = vsyncadd [#allocation3], %s37
      %s39 = sshll.u32 [#allocation2], 4
      %s40 = int_to_ptr.vmem [resolvable:$true] %s39
      %45 = dma.hbm_to_vmem [thread:$0]  %s3, 32768, %s40, [#allocation3], 256, 256, 16
    $region17: #{tpu_custom_call.1} parent=1 // pred_fallthru
      _
    // Predicated region
    $region18: #{tpu_custom_call.1} parent=1 // pred_check
      _
    $region19: #{tpu_custom_call.1} parent=1 // pred_check_branch
      %47 = sbr.rel (0) target = $region21
    $region20: #{tpu_custom_call.1} parent=1 // pred_region
      _
    $region21: #{tpu_custom_call.1} parent=1 // pred_fallthru
      _
    // Predicated region
    $region22: #{tpu_custom_call.1} parent=1 // pred_check
      _
    $region23: #{tpu_custom_call.1} parent=1 // pred_check_branch
      %49 = sbr.rel (0) target = $region25
    $region24: #{tpu_custom_call.1} parent=1 // pred_region
      %s51 = ssub.s32 4096, 4096
      %52 = vsyncadd [#allocation6], %s51
      %s53 = sshll.u32 [#allocation5], 4
      %s54 = int_to_ptr.vmem [resolvable:$true] %s53
      %59 = dma.hbm_to_vmem [thread:$0]  %s5, 4096, %s54, [#allocation6], 64, 64, 4
    $region25: #{tpu_custom_call.1} parent=1 // pred_fallthru
      _
    // Predicated region
    $region26: #{tpu_custom_call.1} parent=1 // pred_check
      _
    $region27: #{tpu_custom_call.1} parent=1 // pred_check_branch
      %61 = sbr.rel (0) target = $region29
    $region28: #{tpu_custom_call.1} parent=1 // pred_region
      _
    $region29: #{tpu_custom_call.1} parent=1 // pred_fallthru
      _
    // Predicated region
    $region30: #{tpu_custom_call.1} parent=1 // pred_check
      _
    $region31: #{tpu_custom_call.1} parent=1 // pred_check_branch
      %63 = sbr.rel (0) target = $region33
    $region32: #{tpu_custom_call.1} parent=1 // pred_region
      _
    $region33: #{tpu_custom_call.1} parent=1 // pred_fallthru
      _
    // Predicated region
    $region34: #{tpu_custom_call.1} parent=1 // pred_check
      _
    $region35: #{tpu_custom_call.1} parent=1 // pred_check_branch
      %65 = sbr.rel (0) target = $region37
    $region36: #{tpu_custom_call.1} parent=1 // pred_region
      _
    $region37: #{tpu_custom_call.1} parent=1 // pred_fallthru
      _
    // Predicated region
    $region38: #{tpu_custom_call.1} parent=1 // pred_check
      _
    $region39: #{tpu_custom_call.1} parent=1 // pred_check_branch
      %67 = sbr.rel (0) target = $region41
    $region40: #{tpu_custom_call.1} parent=1 // pred_region
      _
    $region41: #{tpu_custom_call.1} parent=1 // pred_fallthru
      _
    // Predicated region
    $region42: #{tpu_custom_call.1} parent=1 // pred_check
      _
    $region43: #{tpu_custom_call.1} parent=1 // pred_check_branch
      %69 = sbr.rel (0) target = $region45
    $region44: #{tpu_custom_call.1} parent=1 // pred_region
      _
    $region45: #{tpu_custom_call.1} parent=1 // pred_fallthru
      _
    // Predicated region
    $region46: #{tpu_custom_call.1} parent=1 // pred_check
      _
    $region47: #{tpu_custom_call.1} parent=1 // pred_check_branch
      %71 = sbr.rel (0) target = $region49
    $region48: #{tpu_custom_call.1} parent=1 // pred_region
      %72 = dma.done [#allocation3], 32768
    $region49: #{tpu_custom_call.1} parent=1 // pred_fallthru
      _
    // Predicated region
    $region50: #{tpu_custom_call.1} parent=1 // pred_check
      _
    $region51: #{tpu_custom_call.1} parent=1 // pred_check_branch
      %74 = sbr.rel (0) target = $region53
    $region52: #{tpu_custom_call.1} parent=1 // pred_region
      %75 = dma.done [#allocation6], 4096
    $region53: #{tpu_custom_call.1} parent=1 // pred_fallthru
      _
    %v77 = vld [vmem:[%s0] sm:$0xf]
    %v78 = vld [vmem:[%s0 + $0x4] sm:$0xf]
    %v79 = vld [vmem:[%s0 + $0x8] sm:$0x7]
    %v80 = vld [vmem:[%s0 + $0xc] sm:$0xf]
    %v81 = vld [vmem:[%s0 + $0x10] sm:$0xf]
    %v82 = vld [vmem:[%s0 + $0x14] sm:$0x7]
    %v83 = vld [vmem:[%s1] sm:$0xff]
    %v84 = vld [vmem:[%s1 + $0x8] sm:$0xff]
    %v85 = vld [vmem:[%s1 + $0x10] sm:$0xff]
    %v86 = vld [vmem:[%s1 + $0x18] sm:$0xff]
    %v87 = vld [vmem:[%s1 + $0x20] sm:$0xff]
    %v88 = vld [vmem:[%s1 + $0x28] sm:$0xff]
    %v89 = vld [vmem:[%s1 + $0x30] sm:$0xff]
    %v90 = vld [vmem:[%s1 + $0x38] sm:$0xff]
    %v91 = vld [vmem:[%s1 + $0x40] sm:$0xff]
    %v92 = vld [vmem:[%s1 + $0x48] sm:$0xff]
    %v93 = vld [vmem:[%s1 + $0x50] sm:$0xff]
    %v94 = vld [vmem:[%s1 + $0x58] sm:$0xff]
    %v95 = vld [vmem:[%s1 + $0x60] sm:$0xff]
    %v96 = vld [vmem:[%s1 + $0x68] sm:$0xff]
    %v97 = vld [vmem:[%s1 + $0x70] sm:$0xff]
    %v98 = vld [vmem:[%s1 + $0x78] sm:$0xff]
    %v99 = vld [vmem:[%s1 + $0x80] sm:$0xff]
    %v100 = vld [vmem:[%s1 + $0x88] sm:$0xff]
    %v101 = vld [vmem:[%s1 + $0x90] sm:$0xff]
    %v102 = vld [vmem:[%s1 + $0x98] sm:$0xff]
    %v103 = vld [vmem:[%s2] sm:$0xff]
    %v104 = vld [vmem:[#allocation2] sm:$0xff]
    %v105 = vld [vmem:[#allocation2 + $0x8] sm:$0xff]
    %v106 = vld [vmem:[#allocation2 + $0x10] sm:$0xff]
    %v107 = vld [vmem:[#allocation2 + $0x18] sm:$0xff]
    %v108 = vld [vmem:[#allocation2 + $0x20] sm:$0xff]
    %v109 = vld [vmem:[#allocation2 + $0x28] sm:$0xff]
    %v110 = vld [vmem:[#allocation2 + $0x30] sm:$0xff]
    %v111 = vld [vmem:[#allocation2 + $0x38] sm:$0xff]
    %v112 = vld [vmem:[#allocation2 + $0x40] sm:$0xff]
    %v113 = vld [vmem:[#allocation2 + $0x48] sm:$0xff]
    %v114 = vld [vmem:[#allocation2 + $0x50] sm:$0xff]
    %v115 = vld [vmem:[#allocation2 + $0x58] sm:$0xff]
    %v116 = vld [vmem:[#allocation2 + $0x60] sm:$0xff]
    %v117 = vld [vmem:[#allocation2 + $0x68] sm:$0xff]
    %v118 = vld [vmem:[#allocation2 + $0x70] sm:$0xff]
    %v119 = vld [vmem:[#allocation2 + $0x78] sm:$0xff]
    %v120 = vld [vmem:[#allocation2 + $0x80] sm:$0xff]
    %v121 = vld [vmem:[#allocation2 + $0x88] sm:$0xff]
    %v122 = vld [vmem:[#allocation2 + $0x90] sm:$0xff]
    %v123 = vld [vmem:[#allocation2 + $0x98] sm:$0xff]
    %v124 = vld [vmem:[#allocation2 + $0xa0] sm:$0xff]
    %v125 = vld [vmem:[#allocation2 + $0xa8] sm:$0xff]
    %v126 = vld [vmem:[#allocation2 + $0xb0] sm:$0xff]
    %v127 = vld [vmem:[#allocation2 + $0xb8] sm:$0xff]
    %v128 = vld [vmem:[#allocation2 + $0xc0] sm:$0xff]
    %v129 = vld [vmem:[#allocation2 + $0xc8] sm:$0xff]
    %v130 = vld [vmem:[#allocation2 + $0xd0] sm:$0xff]
    %v131 = vld [vmem:[#allocation2 + $0xd8] sm:$0xff]
    %v132 = vld [vmem:[#allocation2 + $0xe0] sm:$0xff]
    %v133 = vld [vmem:[#allocation2 + $0xe8] sm:$0xff]
    %v134 = vld [vmem:[#allocation2 + $0xf0] sm:$0xff]
    %v135 = vld [vmem:[#allocation2 + $0xf8] sm:$0xff]
    %v136 = vld [vmem:[#allocation2 + $0x100] sm:$0xff]
    %v137 = vld [vmem:[#allocation2 + $0x108] sm:$0xff]
    %v138 = vld [vmem:[#allocation2 + $0x110] sm:$0xff]
    %v139 = vld [vmem:[#allocation2 + $0x118] sm:$0xff]
    %v140 = vld [vmem:[#allocation2 + $0x120] sm:$0xff]
    %v141 = vld [vmem:[#allocation2 + $0x128] sm:$0xff]
    %v142 = vld [vmem:[#allocation2 + $0x130] sm:$0xff]
    %v143 = vld [vmem:[#allocation2 + $0x138] sm:$0xff]
    %v144 = vld [vmem:[#allocation2 + $0x140] sm:$0xff]
    %v145 = vld [vmem:[#allocation2 + $0x148] sm:$0xff]
    %v146 = vld [vmem:[#allocation2 + $0x150] sm:$0xff]
    %v147 = vld [vmem:[#allocation2 + $0x158] sm:$0xff]
    %v148 = vld [vmem:[#allocation2 + $0x160] sm:$0xff]
    %v149 = vld [vmem:[#allocation2 + $0x168] sm:$0xff]
    %v150 = vld [vmem:[#allocation2 + $0x170] sm:$0xff]
    %v151 = vld [vmem:[#allocation2 + $0x178] sm:$0xff]
    %v152 = vld [vmem:[#allocation2 + $0x180] sm:$0xff]
    %v153 = vld [vmem:[#allocation2 + $0x188] sm:$0xff]
    %v154 = vld [vmem:[#allocation2 + $0x190] sm:$0xff]
    %v155 = vld [vmem:[#allocation2 + $0x198] sm:$0xff]
    %v156 = vld [vmem:[#allocation2 + $0x1a0] sm:$0xff]
    %v157 = vld [vmem:[#allocation2 + $0x1a8] sm:$0xff]
    %v158 = vld [vmem:[#allocation2 + $0x1b0] sm:$0xff]
    %v159 = vld [vmem:[#allocation2 + $0x1b8] sm:$0xff]
    %v160 = vld [vmem:[#allocation2 + $0x1c0] sm:$0xff]
    %v161 = vld [vmem:[#allocation2 + $0x1c8] sm:$0xff]
    %v162 = vld [vmem:[#allocation2 + $0x1d0] sm:$0xff]
    %v163 = vld [vmem:[#allocation2 + $0x1d8] sm:$0xff]
    %v164 = vld [vmem:[#allocation2 + $0x1e0] sm:$0xff]
    %v165 = vld [vmem:[#allocation2 + $0x1e8] sm:$0xff]
    %v166 = vld [vmem:[#allocation2 + $0x1f0] sm:$0xff]
    %v167 = vld [vmem:[#allocation2 + $0x1f8] sm:$0xff]
    %v168 = vld [vmem:[#allocation2 + $0x200] sm:$0xff]
    %v169 = vld [vmem:[#allocation2 + $0x208] sm:$0xff]
    %v170 = vld [vmem:[#allocation2 + $0x210] sm:$0xff]
    %v171 = vld [vmem:[#allocation2 + $0x218] sm:$0xff]
    %v172 = vld [vmem:[#allocation2 + $0x220] sm:$0xff]
    %v173 = vld [vmem:[#allocation2 + $0x228] sm:$0xff]
    %v174 = vld [vmem:[#allocation2 + $0x230] sm:$0xff]
    %v175 = vld [vmem:[#allocation2 + $0x238] sm:$0xff]
    %v176 = vld [vmem:[#allocation2 + $0x240] sm:$0xff]
    %v177 = vld [vmem:[#allocation2 + $0x248] sm:$0xff]
    %v178 = vld [vmem:[#allocation2 + $0x250] sm:$0xff]
    %v179 = vld [vmem:[#allocation2 + $0x258] sm:$0xff]
    %v180 = vld [vmem:[#allocation2 + $0x260] sm:$0xff]
    %v181 = vld [vmem:[#allocation2 + $0x268] sm:$0xff]
    %v182 = vld [vmem:[#allocation2 + $0x270] sm:$0xff]
    %v183 = vld [vmem:[#allocation2 + $0x278] sm:$0xff]
    %v184 = vld [vmem:[#allocation2 + $0x280] sm:$0xff]
    %v185 = vld [vmem:[#allocation2 + $0x288] sm:$0xff]
    %v186 = vld [vmem:[#allocation2 + $0x290] sm:$0xff]
    %v187 = vld [vmem:[#allocation2 + $0x298] sm:$0xff]
    %v188 = vld [vmem:[#allocation2 + $0x2a0] sm:$0xff]
    %v189 = vld [vmem:[#allocation2 + $0x2a8] sm:$0xff]
    %v190 = vld [vmem:[#allocation2 + $0x2b0] sm:$0xff]
    %v191 = vld [vmem:[#allocation2 + $0x2b8] sm:$0xff]
    %v192 = vld [vmem:[#allocation2 + $0x2c0] sm:$0xff]
    %v193 = vld [vmem:[#allocation2 + $0x2c8] sm:$0xff]
    %v194 = vld [vmem:[#allocation2 + $0x2d0] sm:$0xff]
    %v195 = vld [vmem:[#allocation2 + $0x2d8] sm:$0xff]
    %v196 = vld [vmem:[#allocation2 + $0x2e0] sm:$0xff]
    %v197 = vld [vmem:[#allocation2 + $0x2e8] sm:$0xff]
    %v198 = vld [vmem:[#allocation2 + $0x2f0] sm:$0xff]
    %v199 = vld [vmem:[#allocation2 + $0x2f8] sm:$0xff]
    %v200 = vld [vmem:[#allocation2 + $0x300] sm:$0xff]
    %v201 = vld [vmem:[#allocation2 + $0x308] sm:$0xff]
    %v202 = vld [vmem:[#allocation2 + $0x310] sm:$0xff]
    %v203 = vld [vmem:[#allocation2 + $0x318] sm:$0xff]
    %v204 = vld [vmem:[#allocation2 + $0x320] sm:$0xff]
    %v205 = vld [vmem:[#allocation2 + $0x328] sm:$0xff]
    %v206 = vld [vmem:[#allocation2 + $0x330] sm:$0xff]
    %v207 = vld [vmem:[#allocation2 + $0x338] sm:$0xff]
    %v208 = vld [vmem:[#allocation2 + $0x340] sm:$0xff]
    %v209 = vld [vmem:[#allocation2 + $0x348] sm:$0xff]
    %v210 = vld [vmem:[#allocation2 + $0x350] sm:$0xff]
    %v211 = vld [vmem:[#allocation2 + $0x358] sm:$0xff]
    %v212 = vld [vmem:[#allocation2 + $0x360] sm:$0xff]
    %v213 = vld [vmem:[#allocation2 + $0x368] sm:$0xff]
    %v214 = vld [vmem:[#allocation2 + $0x370] sm:$0xff]
    %v215 = vld [vmem:[#allocation2 + $0x378] sm:$0xff]
    %v216 = vld [vmem:[#allocation2 + $0x380] sm:$0xff]
    %v217 = vld [vmem:[#allocation2 + $0x388] sm:$0xff]
    %v218 = vld [vmem:[#allocation2 + $0x390] sm:$0xff]
    %v219 = vld [vmem:[#allocation2 + $0x398] sm:$0xff]
    %v220 = vld [vmem:[#allocation2 + $0x3a0] sm:$0xff]
    %v221 = vld [vmem:[#allocation2 + $0x3a8] sm:$0xff]
    %v222 = vld [vmem:[#allocation2 + $0x3b0] sm:$0xff]
    %v223 = vld [vmem:[#allocation2 + $0x3b8] sm:$0xff]
    %v224 = vld [vmem:[#allocation2 + $0x3c0] sm:$0xff]
    %v225 = vld [vmem:[#allocation2 + $0x3c8] sm:$0xff]
    %v226 = vld [vmem:[#allocation2 + $0x3d0] sm:$0xff]
    %v227 = vld [vmem:[#allocation2 + $0x3d8] sm:$0xff]
    %v228 = vld [vmem:[#allocation2 + $0x3e0] sm:$0xff]
    %v229 = vld [vmem:[#allocation2 + $0x3e8] sm:$0xff]
    %v230 = vld [vmem:[#allocation2 + $0x3f0] sm:$0xff]
    %v231 = vld [vmem:[#allocation2 + $0x3f8] sm:$0xff]
    %v232 = vld [vmem:[#allocation2 + $0x400] sm:$0xff]
    %v233 = vld [vmem:[#allocation2 + $0x408] sm:$0xff]
    %v234 = vld [vmem:[#allocation2 + $0x410] sm:$0xff]
    %v235 = vld [vmem:[#allocation2 + $0x418] sm:$0xff]
    %v236 = vld [vmem:[#allocation2 + $0x420] sm:$0xff]
    %v237 = vld [vmem:[#allocation2 + $0x428] sm:$0xff]
    %v238 = vld [vmem:[#allocation2 + $0x430] sm:$0xff]
    %v239 = vld [vmem:[#allocation2 + $0x438] sm:$0xff]
    %v240 = vld [vmem:[#allocation2 + $0x440] sm:$0xff]
    %v241 = vld [vmem:[#allocation2 + $0x448] sm:$0xff]
    %v242 = vld [vmem:[#allocation2 + $0x450] sm:$0xff]
    %v243 = vld [vmem:[#allocation2 + $0x458] sm:$0xff]
    %v244 = vld [vmem:[#allocation2 + $0x460] sm:$0xff]
    %v245 = vld [vmem:[#allocation2 + $0x468] sm:$0xff]
    %v246 = vld [vmem:[#allocation2 + $0x470] sm:$0xff]
    %v247 = vld [vmem:[#allocation2 + $0x478] sm:$0xff]
    %v248 = vld [vmem:[#allocation2 + $0x480] sm:$0xff]
    %v249 = vld [vmem:[#allocation2 + $0x488] sm:$0xff]
    %v250 = vld [vmem:[#allocation2 + $0x490] sm:$0xff]
    %v251 = vld [vmem:[#allocation2 + $0x498] sm:$0xff]
    %v252 = vld [vmem:[#allocation2 + $0x4a0] sm:$0xff]
    %v253 = vld [vmem:[#allocation2 + $0x4a8] sm:$0xff]
    %v254 = vld [vmem:[#allocation2 + $0x4b0] sm:$0xff]
    %v255 = vld [vmem:[#allocation2 + $0x4b8] sm:$0xff]
    %v256 = vld [vmem:[#allocation2 + $0x4c0] sm:$0xff]
    %v257 = vld [vmem:[#allocation2 + $0x4c8] sm:$0xff]
    %v258 = vld [vmem:[#allocation2 + $0x4d0] sm:$0xff]
    %v259 = vld [vmem:[#allocation2 + $0x4d8] sm:$0xff]
    %v260 = vld [vmem:[#allocation2 + $0x4e0] sm:$0xff]
    %v261 = vld [vmem:[#allocation2 + $0x4e8] sm:$0xff]
    %v262 = vld [vmem:[#allocation2 + $0x4f0] sm:$0xff]
    %v263 = vld [vmem:[#allocation2 + $0x4f8] sm:$0xff]
    %v264 = vld [vmem:[#allocation2 + $0x500] sm:$0xff]
    %v265 = vld [vmem:[#allocation2 + $0x508] sm:$0xff]
    %v266 = vld [vmem:[#allocation2 + $0x510] sm:$0xff]
    %v267 = vld [vmem:[#allocation2 + $0x518] sm:$0xff]
    %v268 = vld [vmem:[#allocation2 + $0x520] sm:$0xff]
    %v269 = vld [vmem:[#allocation2 + $0x528] sm:$0xff]
    %v270 = vld [vmem:[#allocation2 + $0x530] sm:$0xff]
    %v271 = vld [vmem:[#allocation2 + $0x538] sm:$0xff]
    %v272 = vld [vmem:[#allocation2 + $0x540] sm:$0xff]
    %v273 = vld [vmem:[#allocation2 + $0x548] sm:$0xff]
    %v274 = vld [vmem:[#allocation2 + $0x550] sm:$0xff]
    %v275 = vld [vmem:[#allocation2 + $0x558] sm:$0xff]
    %v276 = vld [vmem:[#allocation2 + $0x560] sm:$0xff]
    %v277 = vld [vmem:[#allocation2 + $0x568] sm:$0xff]
    %v278 = vld [vmem:[#allocation2 + $0x570] sm:$0xff]
    %v279 = vld [vmem:[#allocation2 + $0x578] sm:$0xff]
    %v280 = vld [vmem:[#allocation2 + $0x580] sm:$0xff]
    %v281 = vld [vmem:[#allocation2 + $0x588] sm:$0xff]
    %v282 = vld [vmem:[#allocation2 + $0x590] sm:$0xff]
    %v283 = vld [vmem:[#allocation2 + $0x598] sm:$0xff]
    %v284 = vld [vmem:[#allocation2 + $0x5a0] sm:$0xff]
    %v285 = vld [vmem:[#allocation2 + $0x5a8] sm:$0xff]
    %v286 = vld [vmem:[#allocation2 + $0x5b0] sm:$0xff]
    %v287 = vld [vmem:[#allocation2 + $0x5b8] sm:$0xff]
    %v288 = vld [vmem:[#allocation2 + $0x5c0] sm:$0xff]
    %v289 = vld [vmem:[#allocation2 + $0x5c8] sm:$0xff]
    %v290 = vld [vmem:[#allocation2 + $0x5d0] sm:$0xff]
    %v291 = vld [vmem:[#allocation2 + $0x5d8] sm:$0xff]
    %v292 = vld [vmem:[#allocation2 + $0x5e0] sm:$0xff]
    %v293 = vld [vmem:[#allocation2 + $0x5e8] sm:$0xff]
    %v294 = vld [vmem:[#allocation2 + $0x5f0] sm:$0xff]
    %v295 = vld [vmem:[#allocation2 + $0x5f8] sm:$0xff]
    %v296 = vld [vmem:[#allocation2 + $0x600] sm:$0xff]
    %v297 = vld [vmem:[#allocation2 + $0x608] sm:$0xff]
    %v298 = vld [vmem:[#allocation2 + $0x610] sm:$0xff]
    %v299 = vld [vmem:[#allocation2 + $0x618] sm:$0xff]
    %v300 = vld [vmem:[#allocation2 + $0x620] sm:$0xff]
    %v301 = vld [vmem:[#allocation2 + $0x628] sm:$0xff]
    %v302 = vld [vmem:[#allocation2 + $0x630] sm:$0xff]
    %v303 = vld [vmem:[#allocation2 + $0x638] sm:$0xff]
    %v304 = vld [vmem:[#allocation2 + $0x640] sm:$0xff]
    %v305 = vld [vmem:[#allocation2 + $0x648] sm:$0xff]
    %v306 = vld [vmem:[#allocation2 + $0x650] sm:$0xff]
    %v307 = vld [vmem:[#allocation2 + $0x658] sm:$0xff]
    %v308 = vld [vmem:[#allocation2 + $0x660] sm:$0xff]
    %v309 = vld [vmem:[#allocation2 + $0x668] sm:$0xff]
    %v310 = vld [vmem:[#allocation2 + $0x670] sm:$0xff]
    %v311 = vld [vmem:[#allocation2 + $0x678] sm:$0xff]
    %v312 = vld [vmem:[#allocation2 + $0x680] sm:$0xff]
    %v313 = vld [vmem:[#allocation2 + $0x688] sm:$0xff]
    %v314 = vld [vmem:[#allocation2 + $0x690] sm:$0xff]
    %v315 = vld [vmem:[#allocation2 + $0x698] sm:$0xff]
    %v316 = vld [vmem:[#allocation2 + $0x6a0] sm:$0xff]
    %v317 = vld [vmem:[#allocation2 + $0x6a8] sm:$0xff]
    %v318 = vld [vmem:[#allocation2 + $0x6b0] sm:$0xff]
    %v319 = vld [vmem:[#allocation2 + $0x6b8] sm:$0xff]
    %v320 = vld [vmem:[#allocation2 + $0x6c0] sm:$0xff]
    %v321 = vld [vmem:[#allocation2 + $0x6c8] sm:$0xff]
    %v322 = vld [vmem:[#allocation2 + $0x6d0] sm:$0xff]
    %v323 = vld [vmem:[#allocation2 + $0x6d8] sm:$0xff]
    %v324 = vld [vmem:[#allocation2 + $0x6e0] sm:$0xff]
    %v325 = vld [vmem:[#allocation2 + $0x6e8] sm:$0xff]
    %v326 = vld [vmem:[#allocation2 + $0x6f0] sm:$0xff]
    %v327 = vld [vmem:[#allocation2 + $0x6f8] sm:$0xff]
    %v328 = vld [vmem:[#allocation2 + $0x700] sm:$0xff]
    %v329 = vld [vmem:[#allocation2 + $0x708] sm:$0xff]
    %v330 = vld [vmem:[#allocation2 + $0x710] sm:$0xff]
    %v331 = vld [vmem:[#allocation2 + $0x718] sm:$0xff]
    %v332 = vld [vmem:[#allocation2 + $0x720] sm:$0xff]
    %v333 = vld [vmem:[#allocation2 + $0x728] sm:$0xff]
    %v334 = vld [vmem:[#allocation2 + $0x730] sm:$0xff]
    %v335 = vld [vmem:[#allocation2 + $0x738] sm:$0xff]
    %v336 = vld [vmem:[#allocation2 + $0x740] sm:$0xff]
    %v337 = vld [vmem:[#allocation2 + $0x748] sm:$0xff]
    %v338 = vld [vmem:[#allocation2 + $0x750] sm:$0xff]
    %v339 = vld [vmem:[#allocation2 + $0x758] sm:$0xff]
    %v340 = vld [vmem:[#allocation2 + $0x760] sm:$0xff]
    %v341 = vld [vmem:[#allocation2 + $0x768] sm:$0xff]
    %v342 = vld [vmem:[#allocation2 + $0x770] sm:$0xff]
    %v343 = vld [vmem:[#allocation2 + $0x778] sm:$0xff]
    %v344 = vld [vmem:[#allocation2 + $0x780] sm:$0xff]
    %v345 = vld [vmem:[#allocation2 + $0x788] sm:$0xff]
    %v346 = vld [vmem:[#allocation2 + $0x790] sm:$0xff]
    %v347 = vld [vmem:[#allocation2 + $0x798] sm:$0xff]
    %v348 = vld [vmem:[#allocation2 + $0x7a0] sm:$0xff]
    %v349 = vld [vmem:[#allocation2 + $0x7a8] sm:$0xff]
    %v350 = vld [vmem:[#allocation2 + $0x7b0] sm:$0xff]
    %v351 = vld [vmem:[#allocation2 + $0x7b8] sm:$0xff]
    %v352 = vld [vmem:[#allocation2 + $0x7c0] sm:$0xff]
    %v353 = vld [vmem:[#allocation2 + $0x7c8] sm:$0xff]
    %v354 = vld [vmem:[#allocation2 + $0x7d0] sm:$0xff]
    %v355 = vld [vmem:[#allocation2 + $0x7d8] sm:$0xff]
    %v356 = vld [vmem:[#allocation2 + $0x7e0] sm:$0xff]
    %v357 = vld [vmem:[#allocation2 + $0x7e8] sm:$0xff]
    %v358 = vld [vmem:[#allocation2 + $0x7f0] sm:$0xff]
    %v359 = vld [vmem:[#allocation2 + $0x7f8] sm:$0xff]
    %v360 = vld [vmem:[%s4] sm:$0xf]
    %v361 = vld [vmem:[#allocation5] sm:$0xf]
    %v362 = vld [vmem:[#allocation5 + $0x4] sm:$0xf]
    %v363 = vld [vmem:[#allocation5 + $0x8] sm:$0xf]
    %v364 = vld [vmem:[#allocation5 + $0xc] sm:$0xf]
    %v365 = vld [vmem:[#allocation5 + $0x10] sm:$0xf]
    %v366 = vld [vmem:[#allocation5 + $0x14] sm:$0xf]
    %v367 = vld [vmem:[#allocation5 + $0x18] sm:$0xf]
    %v368 = vld [vmem:[#allocation5 + $0x1c] sm:$0xf]
    %v369 = vld [vmem:[#allocation5 + $0x20] sm:$0xf]
    %v370 = vld [vmem:[#allocation5 + $0x24] sm:$0xf]
    %v371 = vld [vmem:[#allocation5 + $0x28] sm:$0xf]
    %v372 = vld [vmem:[#allocation5 + $0x2c] sm:$0xf]
    %v373 = vld [vmem:[#allocation5 + $0x30] sm:$0xf]
    %v374 = vld [vmem:[#allocation5 + $0x34] sm:$0xf]
    %v375 = vld [vmem:[#allocation5 + $0x38] sm:$0xf]
    %v376 = vld [vmem:[#allocation5 + $0x3c] sm:$0xf]
    %v377 = vld [vmem:[#allocation5 + $0x40] sm:$0xf]
    %v378 = vld [vmem:[#allocation5 + $0x44] sm:$0xf]
    %v379 = vld [vmem:[#allocation5 + $0x48] sm:$0xf]
    %v380 = vld [vmem:[#allocation5 + $0x4c] sm:$0xf]
    %v381 = vld [vmem:[#allocation5 + $0x50] sm:$0xf]
    %v382 = vld [vmem:[#allocation5 + $0x54] sm:$0xf]
    %v383 = vld [vmem:[#allocation5 + $0x58] sm:$0xf]
    %v384 = vld [vmem:[#allocation5 + $0x5c] sm:$0xf]
    %v385 = vld [vmem:[#allocation5 + $0x60] sm:$0xf]
    %v386 = vld [vmem:[#allocation5 + $0x64] sm:$0xf]
    %v387 = vld [vmem:[#allocation5 + $0x68] sm:$0xf]
    %v388 = vld [vmem:[#allocation5 + $0x6c] sm:$0xf]
    %v389 = vld [vmem:[#allocation5 + $0x70] sm:$0xf]
    %v390 = vld [vmem:[#allocation5 + $0x74] sm:$0xf]
    %v391 = vld [vmem:[#allocation5 + $0x78] sm:$0xf]
    %v392 = vld [vmem:[#allocation5 + $0x7c] sm:$0xf]
    %v393 = vld [vmem:[#allocation5 + $0x80] sm:$0xf]
    %v394 = vld [vmem:[#allocation5 + $0x84] sm:$0xf]
    %v395 = vld [vmem:[#allocation5 + $0x88] sm:$0xf]
    %v396 = vld [vmem:[#allocation5 + $0x8c] sm:$0xf]
    %v397 = vld [vmem:[#allocation5 + $0x90] sm:$0xf]
    %v398 = vld [vmem:[#allocation5 + $0x94] sm:$0xf]
    %v399 = vld [vmem:[#allocation5 + $0x98] sm:$0xf]
    %v400 = vld [vmem:[#allocation5 + $0x9c] sm:$0xf]
    %v401 = vld [vmem:[#allocation5 + $0xa0] sm:$0xf]
    %v402 = vld [vmem:[#allocation5 + $0xa4] sm:$0xf]
    %v403 = vld [vmem:[#allocation5 + $0xa8] sm:$0xf]
    %v404 = vld [vmem:[#allocation5 + $0xac] sm:$0xf]
    %v405 = vld [vmem:[#allocation5 + $0xb0] sm:$0xf]
    %v406 = vld [vmem:[#allocation5 + $0xb4] sm:$0xf]
    %v407 = vld [vmem:[#allocation5 + $0xb8] sm:$0xf]
    %v408 = vld [vmem:[#allocation5 + $0xbc] sm:$0xf]
    %v409 = vld [vmem:[#allocation5 + $0xc0] sm:$0xf]
    %v410 = vld [vmem:[#allocation5 + $0xc4] sm:$0xf]
    %v411 = vld [vmem:[#allocation5 + $0xc8] sm:$0xf]
    %v412 = vld [vmem:[#allocation5 + $0xcc] sm:$0xf]
    %v413 = vld [vmem:[#allocation5 + $0xd0] sm:$0xf]
    %v414 = vld [vmem:[#allocation5 + $0xd4] sm:$0xf]
    %v415 = vld [vmem:[#allocation5 + $0xd8] sm:$0xf]
    %v416 = vld [vmem:[#allocation5 + $0xdc] sm:$0xf]
    %v417 = vld [vmem:[#allocation5 + $0xe0] sm:$0xf]
    %v418 = vld [vmem:[#allocation5 + $0xe4] sm:$0xf]
    %v419 = vld [vmem:[#allocation5 + $0xe8] sm:$0xf]
    %v420 = vld [vmem:[#allocation5 + $0xec] sm:$0xf]
    %v421 = vld [vmem:[#allocation5 + $0xf0] sm:$0xf]
    %v422 = vld [vmem:[#allocation5 + $0xf4] sm:$0xf]
    %v423 = vld [vmem:[#allocation5 + $0xf8] sm:$0xf]
    %v424 = vld [vmem:[#allocation5 + $0xfc] sm:$0xf]
    %v425 = vld [vmem:[%s6] sm:$0x1]
    %v426 = vld [vmem:[%s7] sm:$0xf]
    %v427 = vld [vmem:[%s7 + $0x4] sm:$0xf]
    %v428 = vld [vmem:[%s7 + $0x8] sm:$0xf]
    %v429 = vld [vmem:[%s7 + $0xc] sm:$0xf]
    %v430 = vld [vmem:[%s7 + $0x10] sm:$0xf]
    %v431 = vld [vmem:[%s7 + $0x14] sm:$0xf]
    %v432 = vld [vmem:[%s7 + $0x18] sm:$0xf]
    %v433 = vld [vmem:[%s7 + $0x1c] sm:$0xf]
    %v434 = vld [vmem:[%s7 + $0x20] sm:$0xf]
    %v435 = vld [vmem:[%s7 + $0x24] sm:$0xf]
    %v436 = vld [vmem:[%s7 + $0x28] sm:$0xf]
    %v437 = vld [vmem:[%s7 + $0x2c] sm:$0xf]
    %v438 = vld [vmem:[%s7 + $0x30] sm:$0xf]
    %v439 = vld [vmem:[%s7 + $0x34] sm:$0xf]
    %v440 = vld [vmem:[%s7 + $0x38] sm:$0xf]
    %v441 = vld [vmem:[%s7 + $0x3c] sm:$0xf]
    %v442 = vld [vmem:[%s8] sm:$0x1]
    %v443 = vld [vmem:[%s9] sm:$0xf]
    %v444 = vld [vmem:[%s9 + $0x4] sm:$0xf]
    %v445 = vld [vmem:[%s9 + $0x8] sm:$0xf]
    %v446 = vld [vmem:[%s9 + $0xc] sm:$0xf]
    %v447 = vld [vmem:[%s9 + $0x10] sm:$0xf]
    %v448 = vld [vmem:[%s9 + $0x14] sm:$0xf]
    %v449 = vld [vmem:[%s9 + $0x18] sm:$0xf]
    %v450 = vld [vmem:[%s9 + $0x1c] sm:$0xf]
    %v451 = vld [vmem:[%s9 + $0x20] sm:$0xf]
    %v452 = vld [vmem:[%s9 + $0x24] sm:$0xf]
    %v453 = vld [vmem:[%s9 + $0x28] sm:$0xf]
    %v454 = vld [vmem:[%s9 + $0x2c] sm:$0xf]
    %v455 = vld [vmem:[%s9 + $0x30] sm:$0xf]
    %v456 = vld [vmem:[%s9 + $0x34] sm:$0xf]
    %v457 = vld [vmem:[%s9 + $0x38] sm:$0xf]
    %v458 = vld [vmem:[%s9 + $0x3c] sm:$0xf]
    %v459 = vld [vmem:[%s10] sm:$0x1]
    %v467 = vunpack.c.l.s4 1966171168
    %v468 = vunpack.c.0.s8 %v467
    %v469 = vlaneseq
    %v470 = vshrl.u32 %v469, 7
    %v471 = vsub.s32 %v468, %v470
    %v472 = vrot.slane %v77, %v471
    %v473 = vcombine.high %v472, %v472
    %v475 = vunpack.c.l.s4 1966171168
    %v476 = vunpack.c.0.s8 %v475
    %v477 = vlaneseq
    %v478 = vshrl.u32 %v477, 7
    %v479 = vsub.s32 %v476, %v478
    %v480 = vrot.slane %v472, %v479
    %v482 = vunpack.c.l.s4 1966171168
    %v483 = vunpack.c.0.s8 %v482
    %v484 = vlaneseq
    %v485 = vshrl.u32 %v484, 7
    %v486 = vsub.s32 %v483, %v485
    %v487 = vrot.slane %v473, %v486
    %v488 = vcombine.high %v480, %v480
    %v489 = vcombine.high %v487, %v487
    %v491 = vunpack.c.l.s4 1966171168
    %v492 = vunpack.c.0.s8 %v491
    %v493 = vlaneseq
    %v494 = vshrl.u32 %v493, 7
    %v495 = vsub.s32 %v492, %v494
    %v496 = vrot.slane %v78, %v495
    %v497 = vcombine.high %v496, %v496
    %v499 = vunpack.c.l.s4 1966171168
    %v500 = vunpack.c.0.s8 %v499
    %v501 = vlaneseq
    %v502 = vshrl.u32 %v501, 7
    %v503 = vsub.s32 %v500, %v502
    %v504 = vrot.slane %v496, %v503
    %v506 = vunpack.c.l.s4 1966171168
    %v507 = vunpack.c.0.s8 %v506
    %v508 = vlaneseq
    %v509 = vshrl.u32 %v508, 7
    %v510 = vsub.s32 %v507, %v509
    %v511 = vrot.slane %v497, %v510
    %v512 = vcombine.high %v504, %v504
    %v513 = vcombine.high %v511, %v511
    %v515 = vunpack.c.l.s4 1966171168
    %v516 = vunpack.c.0.s8 %v515
    %v517 = vlaneseq
    %v518 = vshrl.u32 %v517, 7
    %v519 = vsub.s32 %v516, %v518
    %v520 = vrot.slane %v79, %v519
    %v521 = vcombine.high %v520, %v520
    %v523 = vunpack.c.l.s4 1966171168
    %v524 = vunpack.c.0.s8 %v523
    %v525 = vlaneseq
    %v526 = vshrl.u32 %v525, 7
    %v527 = vsub.s32 %v524, %v526
    %v528 = vrot.slane %v520, %v527
    %v530 = vunpack.c.l.s4 1966171168
    %v531 = vunpack.c.0.s8 %v530
    %v532 = vlaneseq
    %v533 = vshrl.u32 %v532, 7
    %v534 = vsub.s32 %v531, %v533
    %v535 = vrot.slane %v521, %v534
    %v536 = vcombine.high %v528, %v528
    %v538 = vunpack.c.l.s4 1966171168
    %v539 = vunpack.c.0.s8 %v538
    %v540 = vlaneseq
    %v541 = vshrl.u32 %v540, 7
    %v542 = vsub.s32 %v539, %v541
    %v543 = vrot.slane %v80, %v542
    %v544 = vcombine.high %v543, %v543
    %v546 = vunpack.c.l.s4 1966171168
    %v547 = vunpack.c.0.s8 %v546
    %v548 = vlaneseq
    %v549 = vshrl.u32 %v548, 7
    %v550 = vsub.s32 %v547, %v549
    %v551 = vrot.slane %v543, %v550
    %v553 = vunpack.c.l.s4 1966171168
    %v554 = vunpack.c.0.s8 %v553
    %v555 = vlaneseq
    %v556 = vshrl.u32 %v555, 7
    %v557 = vsub.s32 %v554, %v556
    %v558 = vrot.slane %v544, %v557
    %v559 = vcombine.high %v551, %v551
    %v560 = vcombine.high %v558, %v558
    %v562 = vunpack.c.l.s4 1966171168
    %v563 = vunpack.c.0.s8 %v562
    %v564 = vlaneseq
    %v565 = vshrl.u32 %v564, 7
    %v566 = vsub.s32 %v563, %v565
    %v567 = vrot.slane %v81, %v566
    %v568 = vcombine.high %v567, %v567
    %v570 = vunpack.c.l.s4 1966171168
    %v571 = vunpack.c.0.s8 %v570
    %v572 = vlaneseq
    %v573 = vshrl.u32 %v572, 7
    %v574 = vsub.s32 %v571, %v573
    %v575 = vrot.slane %v567, %v574
    %v577 = vunpack.c.l.s4 1966171168
    %v578 = vunpack.c.0.s8 %v577
    %v579 = vlaneseq
    %v580 = vshrl.u32 %v579, 7
    %v581 = vsub.s32 %v578, %v580
    %v582 = vrot.slane %v568, %v581
    %v583 = vcombine.high %v575, %v575
    %v584 = vcombine.high %v582, %v582
    %v586 = vunpack.c.l.s4 1966171168
    %v587 = vunpack.c.0.s8 %v586
    %v588 = vlaneseq
    %v589 = vshrl.u32 %v588, 7
    %v590 = vsub.s32 %v587, %v589
    %v591 = vrot.slane %v82, %v590
    %v592 = vcombine.high %v591, %v591
    %v594 = vunpack.c.l.s4 1966171168
    %v595 = vunpack.c.0.s8 %v594
    %v596 = vlaneseq
    %v597 = vshrl.u32 %v596, 7
    %v598 = vsub.s32 %v595, %v597
    %v599 = vrot.slane %v591, %v598
    %v601 = vunpack.c.l.s4 1966171168
    %v602 = vunpack.c.0.s8 %v601
    %v603 = vlaneseq
    %v604 = vshrl.u32 %v603, 7
    %v605 = vsub.s32 %v602, %v604
    %v606 = vrot.slane %v592, %v605
    %v607 = vcombine.high %v599, %v599
    %v609 = vlaneseq
    %v610 = vshrl.u32 %v609, 7
    %v611 = vsub.s32 0, %v610
    %v612 = vrot.slane %v103, %v611
    %v613 = vlaneseq
    %v614 = vshrl.u32 %v613, 7
    %v615 = vsub.s32 1, %v614
    %v616 = vrot.slane %v103, %v615
    %v617 = vlaneseq
    %v618 = vshrl.u32 %v617, 7
    %v619 = vsub.s32 2, %v618
    %v620 = vrot.slane %v103, %v619
    %v621 = vlaneseq
    %v622 = vshrl.u32 %v621, 7
    %v623 = vsub.s32 3, %v622
    %v624 = vrot.slane %v103, %v623
    %v625 = vlaneseq
    %v626 = vshrl.u32 %v625, 7
    %v627 = vsub.s32 4, %v626
    %v628 = vrot.slane %v103, %v627
    %v629 = vlaneseq
    %v630 = vshrl.u32 %v629, 7
    %v631 = vsub.s32 5, %v630
    %v632 = vrot.slane %v103, %v631
    %v633 = vlaneseq
    %v634 = vshrl.u32 %v633, 7
    %v635 = vsub.s32 6, %v634
    %v636 = vrot.slane %v103, %v635
    %v637 = vlaneseq
    %v638 = vshrl.u32 %v637, 7
    %v639 = vsub.s32 7, %v638
    %v640 = vrot.slane %v103, %v639
    %v649 = vcombine.low %v480, %v487
    %v650 = vcombine.low %v488, %v489
    %v651 = vcombine.low %v504, %v511
    %v652 = vcombine.low %v512, %v513
    %v654 = vunpack.c.l.s4 1966171168
    %v655 = vunpack.c.0.s8 %v654
    %v656 = vlaneseq
    %v657 = vshrl.u32 %v656, 7
    %v658 = vsub.s32 %v655, %v657
    %v659 = vrot.slane %v649, %v658
    %v661 = vunpack.c.l.s4 1966171168
    %v662 = vunpack.c.0.s8 %v661
    %v663 = vlaneseq
    %v664 = vshrl.u32 %v663, 7
    %v665 = vsub.s32 %v662, %v664
    %v666 = vrot.slane %v650, %v665
    %v668 = vunpack.c.l.s4 1966171168
    %v669 = vunpack.c.0.s8 %v668
    %v670 = vlaneseq
    %v671 = vshrl.u32 %v670, 7
    %v672 = vsub.s32 %v669, %v671
    %v673 = vrot.slane %v651, %v672
    %v675 = vunpack.c.l.s4 1966171168
    %v676 = vunpack.c.0.s8 %v675
    %v677 = vlaneseq
    %v678 = vshrl.u32 %v677, 7
    %v679 = vsub.s32 %v676, %v678
    %v680 = vrot.slane %v652, %v679
    %v681 = vcombine.low %v659, %v666
    %v682 = vcombine.low %v673, %v680
    %v684 = vunpack.c.l.s4 1966171168
    %v685 = vunpack.c.0.s8 %v684
    %v686 = vlaneseq
    %v687 = vshrl.u32 %v686, 7
    %v688 = vsub.s32 %v685, %v687
    %v689 = vrot.slane %v681, %v688
    %v691 = vunpack.c.l.s4 1966171168
    %v692 = vunpack.c.0.s8 %v691
    %v693 = vlaneseq
    %v694 = vshrl.u32 %v693, 7
    %v695 = vsub.s32 %v692, %v694
    %v696 = vrot.slane %v682, %v695
    %v697 = vcombine.low %v689, %v696
    %v698 = vcombine.low %v528, %v535
    %v699 = vcombine.low %v536, %v551
    %v700 = vcombine.low %v558, %v559
    %v701 = vcombine.low %v560, %v575
    %v703 = vunpack.c.l.s4 1966171168
    %v704 = vunpack.c.0.s8 %v703
    %v705 = vlaneseq
    %v706 = vshrl.u32 %v705, 7
    %v707 = vsub.s32 %v704, %v706
    %v708 = vrot.slane %v698, %v707
    %v710 = vunpack.c.l.s4 1966171168
    %v711 = vunpack.c.0.s8 %v710
    %v712 = vlaneseq
    %v713 = vshrl.u32 %v712, 7
    %v714 = vsub.s32 %v711, %v713
    %v715 = vrot.slane %v699, %v714
    %v717 = vunpack.c.l.s4 1966171168
    %v718 = vunpack.c.0.s8 %v717
    %v719 = vlaneseq
    %v720 = vshrl.u32 %v719, 7
    %v721 = vsub.s32 %v718, %v720
    %v722 = vrot.slane %v700, %v721
    %v724 = vunpack.c.l.s4 1966171168
    %v725 = vunpack.c.0.s8 %v724
    %v726 = vlaneseq
    %v727 = vshrl.u32 %v726, 7
    %v728 = vsub.s32 %v725, %v727
    %v729 = vrot.slane %v701, %v728
    %v730 = vcombine.low %v708, %v715
    %v731 = vcombine.low %v722, %v729
    %v733 = vunpack.c.l.s4 1966171168
    %v734 = vunpack.c.0.s8 %v733
    %v735 = vlaneseq
    %v736 = vshrl.u32 %v735, 7
    %v737 = vsub.s32 %v734, %v736
    %v738 = vrot.slane %v730, %v737
    %v740 = vunpack.c.l.s4 1966171168
    %v741 = vunpack.c.0.s8 %v740
    %v742 = vlaneseq
    %v743 = vshrl.u32 %v742, 7
    %v744 = vsub.s32 %v741, %v743
    %v745 = vrot.slane %v731, %v744
    %v746 = vcombine.low %v738, %v745
    %v747 = vcombine.low %v582, %v583
    %v748 = vcombine.low %v584, %v599
    %v749 = vcombine.low %v606, %v607
    %v751 = vunpack.c.l.s4 1966171168
    %v752 = vunpack.c.0.s8 %v751
    %v753 = vlaneseq
    %v754 = vshrl.u32 %v753, 7
    %v755 = vsub.s32 %v752, %v754
    %v756 = vrot.slane %v747, %v755
    %v758 = vunpack.c.l.s4 1966171168
    %v759 = vunpack.c.0.s8 %v758
    %v760 = vlaneseq
    %v761 = vshrl.u32 %v760, 7
    %v762 = vsub.s32 %v759, %v761
    %v763 = vrot.slane %v748, %v762
    %v765 = vunpack.c.l.s4 1966171168
    %v766 = vunpack.c.0.s8 %v765
    %v767 = vlaneseq
    %v768 = vshrl.u32 %v767, 7
    %v769 = vsub.s32 %v766, %v768
    %v770 = vrot.slane %v749, %v769
    %v771 = vcombine.low %v756, %v763
    %v773 = vunpack.c.l.s4 1966171168
    %v774 = vunpack.c.0.s8 %v773
    %v775 = vlaneseq
    %v776 = vshrl.u32 %v775, 7
    %v777 = vsub.s32 %v774, %v776
    %v778 = vrot.slane %v771, %v777
    %v780 = vunpack.c.l.s4 1966171168
    %v781 = vunpack.c.0.s8 %v780
    %v782 = vlaneseq
    %v783 = vshrl.u32 %v782, 7
    %v784 = vsub.s32 %v781, %v783
    %v785 = vrot.slane %v770, %v784
    %v786 = vcombine.low %v778, %v785
    %v807 = vunpack.c.l.b16 %v83
    %v808 = vunpack.c.h.b16 %v83
    %v809 = vunpack.c.l.b16 %v84
    %v810 = vunpack.c.h.b16 %v84
    %v811 = vunpack.c.l.b16 %v85
    %v812 = vunpack.c.h.b16 %v85
    %v813 = vunpack.c.l.b16 %v86
    %v814 = vunpack.c.h.b16 %v86
    %v815 = vunpack.c.l.b16 %v87
    %v816 = vunpack.c.h.b16 %v87
    %v817 = vunpack.c.l.b16 %v88
    %v818 = vunpack.c.h.b16 %v88
    %v819 = vunpack.c.l.b16 %v89
    %v820 = vunpack.c.h.b16 %v89
    %v821 = vunpack.c.l.b16 %v90
    %v822 = vunpack.c.h.b16 %v90
    %v823 = vunpack.c.l.b16 %v91
    %v824 = vunpack.c.h.b16 %v91
    %v825 = vunpack.c.l.b16 %v92
    %v826 = vunpack.c.h.b16 %v92
    %v827 = vunpack.c.l.b16 %v93
    %v828 = vunpack.c.h.b16 %v93
    %v829 = vunpack.c.l.b16 %v94
    %v830 = vunpack.c.h.b16 %v94
    %v831 = vunpack.c.l.b16 %v95
    %v832 = vunpack.c.h.b16 %v95
    %v833 = vunpack.c.l.b16 %v96
    %v834 = vunpack.c.h.b16 %v96
    %v835 = vunpack.c.l.b16 %v97
    %v836 = vunpack.c.h.b16 %v97
    %v837 = vunpack.c.l.b16 %v98
    %v838 = vunpack.c.h.b16 %v98
    %v839 = vunpack.c.l.b16 %v99
    %v840 = vunpack.c.h.b16 %v99
    %v841 = vunpack.c.l.b16 %v100
    %v842 = vunpack.c.h.b16 %v100
    %v843 = vunpack.c.l.b16 %v101
    %v844 = vunpack.c.h.b16 %v101
    %v845 = vunpack.c.l.b16 %v102
    %v846 = vunpack.c.h.b16 %v102
    %v847 = vpack.c.b16 %v815, %v807
    %v848 = vpack.c.b16 %v816, %v808
    %v849 = vpack.c.b16 %v817, %v809
    %v850 = vpack.c.b16 %v818, %v810
    %v851 = vpack.c.b16 %v819, %v811
    %v852 = vpack.c.b16 %v820, %v812
    %v853 = vpack.c.b16 %v821, %v813
    %v854 = vpack.c.b16 %v822, %v814
    %v855 = vpack.c.b16 %v831, %v823
    %v856 = vpack.c.b16 %v832, %v824
    %v857 = vpack.c.b16 %v833, %v825
    %v858 = vpack.c.b16 %v834, %v826
    %v859 = vpack.c.b16 %v835, %v827
    %v860 = vpack.c.b16 %v836, %v828
    %v861 = vpack.c.b16 %v837, %v829
    %v862 = vpack.c.b16 %v838, %v830
    %v863 = vpack.c.b16 %v839, %v839
    %v864 = vpack.c.b16 %v840, %v840
    %v865 = vpack.c.b16 %v841, %v841
    %v866 = vpack.c.b16 %v842, %v842
    %v867 = vpack.c.b16 %v843, %v843
    %v868 = vpack.c.b16 %v844, %v844
    %v869 = vpack.c.b16 %v845, %v845
    %v870 = vpack.c.b16 %v846, %v846
    %vm887 = vcmask 326656
    %v889 = vsel %vm887, %v697, 0
    %v892 = vsel %vm887, %v746, 0
    %v895 = vsel %vm887, %v786, 0
    %vm897 = vcmask 1043456
    %v899 = vsel %vm897, %v863, 0
    %v902 = vsel %vm897, %v864, 0
    %v905 = vsel %vm897, %v865, 0
    %v908 = vsel %vm897, %v866, 0
    %v911 = vsel %vm897, %v867, 0
    %v914 = vsel %vm897, %v868, 0
    %v917 = vsel %vm897, %v869, 0
    %v920 = vsel %vm897, %v870, 0
    %922 = vmatprep.subr.bf16.mxu0 %v848
    %923 = vmatpush1.bf16.msra.mxu0 %v847
    %924 = vmatprep.subr.bf16.mxu0 %v856
    %925 = vmatpush1.bf16.msra.mxu0 %v855
    %926 = vmatprep.subr.bf16.mxu0 %v902
    %927 = vmatpush1.bf16.msra.mxu0 %v899
    %928 = vmatprep.subr.bf16.mxu0 0
    %929 = vmatpush1.bf16.msra.mxu0 0
    %930 = vmatprep.subr.bf16.mxu0 0
    %931 = vmatpush1.bf16.msra.mxu0 0
    %932 = vmatprep.subr.bf16.mxu0 0
    %933 = vmatpush1.bf16.msra.mxu0 0
    %934 = vmatprep.subr.bf16.mxu0 0
    %935 = vmatpush1.bf16.msra.mxu0 0
    %936 = vmatprep.subr.bf16.mxu0 0
    %937 = vmatpush1.bf16.msra.mxu0 0
    %938 = vmatprep.subr.bf16.mxu0 0
    %939 = vmatpush1.bf16.msra.mxu0 0
    %940 = vmatprep.subr.bf16.mxu0 0
    %941 = vmatpush1.bf16.msra.mxu0 0
    %942 = vmatprep.subr.bf16.mxu0 0
    %943 = vmatpush1.bf16.msra.mxu0 0
    %944 = vmatprep.subr.bf16.mxu0 0
    %945 = vmatpush1.bf16.msra.mxu0 0
    %946 = vmatprep.subr.bf16.mxu0 0
    %947 = vmatpush1.bf16.msra.mxu0 0
    %948 = vmatprep.subr.bf16.mxu0 0
    %949 = vmatpush1.bf16.msra.mxu0 0
    %950 = vmatprep.subr.bf16.mxu0 0
    %951 = vmatpush1.bf16.msra.mxu0 0
    %952 = vmatprep.subr.bf16.mxu0 0
    %953 = vmatpush1.bf16.msra.mxu0 0
    %954 = vmatprep.mubr.bf16.mxu0 0
    %955 = vmatmul.mubr.bf16.gmra.mrb[0].mxu0 %v889
    %v956 = vpop.f32.mrb[0].mxu0
    %v957 = vadd.f32 %v612, %v956
    %v958 = vpop.f32.mrb[0].mxu0
    %v959 = vadd.f32 %v616, %v958
    %v960 = vpop.f32.mrb[0].mxu0
    %v961 = vadd.f32 %v612, %v960
    %v962 = vpop.f32.mrb[0].mxu0
    %v963 = vadd.f32 %v616, %v962
    %964 = vmatprep.mubr.bf16.mxu0 0
    %965 = vmatmul.mubr.bf16.gmra.mrb[0].mxu0 %v892
    %v966 = vpop.f32.mrb[0].mxu0
    %v967 = vadd.f32 %v612, %v966
    %v968 = vpop.f32.mrb[0].mxu0
    %v969 = vadd.f32 %v616, %v968
    %v970 = vpop.f32.mrb[0].mxu0
    %v971 = vadd.f32 %v612, %v970
    %v972 = vpop.f32.mrb[0].mxu0
    %v973 = vadd.f32 %v616, %v972
    %974 = vmatprep.mubr.bf16.mxu0 0
    %975 = vmatmul.mubr.bf16.gmra.mrb[0].mxu0 %v895
    %v976 = vpop.f32.mrb[0].mxu0
    %v977 = vadd.f32 %v612, %v976
    %v978 = vpop.f32.mrb[0].mxu0
    %v979 = vadd.f32 %v616, %v978
    %v980 = vpop.f32.mrb[0].mxu0
    %v981 = vadd.f32 %v612, %v980
    %v982 = vpop.f32.mrb[0].mxu0
    %v983 = vadd.f32 %v616, %v982
    %984 = vdwg.mxu0
    %985 = vmatprep.subr.bf16.mxu0 %v850
    %986 = vmatpush1.bf16.msra.mxu0 %v849
    %987 = vmatprep.subr.bf16.mxu0 %v858
    %988 = vmatpush1.bf16.msra.mxu0 %v857
    %989 = vmatprep.subr.bf16.mxu0 %v908
    %990 = vmatpush1.bf16.msra.mxu0 %v905
    %991 = vmatprep.subr.bf16.mxu0 0
    %992 = vmatpush1.bf16.msra.mxu0 0
    %993 = vmatprep.subr.bf16.mxu0 0
    %994 = vmatpush1.bf16.msra.mxu0 0
    %995 = vmatprep.subr.bf16.mxu0 0
    %996 = vmatpush1.bf16.msra.mxu0 0
    %997 = vmatprep.subr.bf16.mxu0 0
    %998 = vmatpush1.bf16.msra.mxu0 0
    %999 = vmatprep.subr.bf16.mxu0 0
    %1000 = vmatpush1.bf16.msra.mxu0 0
    %1001 = vmatprep.subr.bf16.mxu0 0
    %1002 = vmatpush1.bf16.msra.mxu0 0
    %1003 = vmatprep.subr.bf16.mxu0 0
    %1004 = vmatpush1.bf16.msra.mxu0 0
    %1005 = vmatprep.subr.bf16.mxu0 0
    %1006 = vmatpush1.bf16.msra.mxu0 0
    %1007 = vmatprep.subr.bf16.mxu0 0
    %1008 = vmatpush1.bf16.msra.mxu0 0
    %1009 = vmatprep.subr.bf16.mxu0 0
    %1010 = vmatpush1.bf16.msra.mxu0 0
    %1011 = vmatprep.subr.bf16.mxu0 0
    %1012 = vmatpush1.bf16.msra.mxu0 0
    %1013 = vmatprep.subr.bf16.mxu0 0
    %1014 = vmatpush1.bf16.msra.mxu0 0
    %1015 = vmatprep.subr.bf16.mxu0 0
    %1016 = vmatpush1.bf16.msra.mxu0 0
    %1017 = vmatprep.mubr.bf16.mxu0 0
    %1018 = vmatmul.mubr.bf16.gmra.mrb[0].mxu0 %v889
    %v1019 = vpop.f32.mrb[0].mxu0
    %v1020 = vadd.f32 %v620, %v1019
    %v1021 = vpop.f32.mrb[0].mxu0
    %v1022 = vadd.f32 %v624, %v1021
    %v1023 = vpop.f32.mrb[0].mxu0
    %v1024 = vadd.f32 %v620, %v1023
    %v1025 = vpop.f32.mrb[0].mxu0
    %v1026 = vadd.f32 %v624, %v1025
    %1027 = vmatprep.mubr.bf16.mxu0 0
    %1028 = vmatmul.mubr.bf16.gmra.mrb[0].mxu0 %v892
    %v1029 = vpop.f32.mrb[0].mxu0
    %v1030 = vadd.f32 %v620, %v1029
    %v1031 = vpop.f32.mrb[0].mxu0
    %v1032 = vadd.f32 %v624, %v1031
    %v1033 = vpop.f32.mrb[0].mxu0
    %v1034 = vadd.f32 %v620, %v1033
    %v1035 = vpop.f32.mrb[0].mxu0
    %v1036 = vadd.f32 %v624, %v1035
    %1037 = vmatprep.mubr.bf16.mxu0 0
    %1038 = vmatmul.mubr.bf16.gmra.mrb[0].mxu0 %v895
    %v1039 = vpop.f32.mrb[0].mxu0
    %v1040 = vadd.f32 %v620, %v1039
    %v1041 = vpop.f32.mrb[0].mxu0
    %v1042 = vadd.f32 %v624, %v1041
    %v1043 = vpop.f32.mrb[0].mxu0
    %v1044 = vadd.f32 %v620, %v1043
    %v1045 = vpop.f32.mrb[0].mxu0
    %v1046 = vadd.f32 %v624, %v1045
    %1047 = vdwg.mxu0
    %1048 = vmatprep.subr.bf16.mxu0 %v852
    %1049 = vmatpush1.bf16.msra.mxu0 %v851
    %1050 = vmatprep.subr.bf16.mxu0 %v860
    %1051 = vmatpush1.bf16.msra.mxu0 %v859
    %1052 = vmatprep.subr.bf16.mxu0 %v914
    %1053 = vmatpush1.bf16.msra.mxu0 %v911
    %1054 = vmatprep.subr.bf16.mxu0 0
    %1055 = vmatpush1.bf16.msra.mxu0 0
    %1056 = vmatprep.subr.bf16.mxu0 0
    %1057 = vmatpush1.bf16.msra.mxu0 0
    %1058 = vmatprep.subr.bf16.mxu0 0
    %1059 = vmatpush1.bf16.msra.mxu0 0
    %1060 = vmatprep.subr.bf16.mxu0 0
    %1061 = vmatpush1.bf16.msra.mxu0 0
    %1062 = vmatprep.subr.bf16.mxu0 0
    %1063 = vmatpush1.bf16.msra.mxu0 0
    %1064 = vmatprep.subr.bf16.mxu0 0
    %1065 = vmatpush1.bf16.msra.mxu0 0
    %1066 = vmatprep.subr.bf16.mxu0 0
    %1067 = vmatpush1.bf16.msra.mxu0 0
    %1068 = vmatprep.subr.bf16.mxu0 0
    %1069 = vmatpush1.bf16.msra.mxu0 0
    %1070 = vmatprep.subr.bf16.mxu0 0
    %1071 = vmatpush1.bf16.msra.mxu0 0
    %1072 = vmatprep.subr.bf16.mxu0 0
    %1073 = vmatpush1.bf16.msra.mxu0 0
    %1074 = vmatprep.subr.bf16.mxu0 0
    %1075 = vmatpush1.bf16.msra.mxu0 0
    %1076 = vmatprep.subr.bf16.mxu0 0
    %1077 = vmatpush1.bf16.msra.mxu0 0
    %1078 = vmatprep.subr.bf16.mxu0 0
    %1079 = vmatpush1.bf16.msra.mxu0 0
    %1080 = vmatprep.mubr.bf16.mxu0 0
    %1081 = vmatmul.mubr.bf16.gmra.mrb[0].mxu0 %v889
    %v1082 = vpop.f32.mrb[0].mxu0
    %v1083 = vadd.f32 %v628, %v1082
    %v1084 = vpop.f32.mrb[0].mxu0
    %v1085 = vadd.f32 %v632, %v1084
    %v1086 = vpop.f32.mrb[0].mxu0
    %v1087 = vadd.f32 %v628, %v1086
    %v1088 = vpop.f32.mrb[0].mxu0
    %v1089 = vadd.f32 %v632, %v1088
    %1090 = vmatprep.mubr.bf16.mxu0 0
    %1091 = vmatmul.mubr.bf16.gmra.mrb[0].mxu0 %v892
    %v1092 = vpop.f32.mrb[0].mxu0
    %v1093 = vadd.f32 %v628, %v1092
    %v1094 = vpop.f32.mrb[0].mxu0
    %v1095 = vadd.f32 %v632, %v1094
    %v1096 = vpop.f32.mrb[0].mxu0
    %v1097 = vadd.f32 %v628, %v1096
    %v1098 = vpop.f32.mrb[0].mxu0
    %v1099 = vadd.f32 %v632, %v1098
    %1100 = vmatprep.mubr.bf16.mxu0 0
    %1101 = vmatmul.mubr.bf16.gmra.mrb[0].mxu0 %v895
    %v1102 = vpop.f32.mrb[0].mxu0
    %v1103 = vadd.f32 %v628, %v1102
    %v1104 = vpop.f32.mrb[0].mxu0
    %v1105 = vadd.f32 %v632, %v1104
    %v1106 = vpop.f32.mrb[0].mxu0
    %v1107 = vadd.f32 %v628, %v1106
    %v1108 = vpop.f32.mrb[0].mxu0
    %v1109 = vadd.f32 %v632, %v1108
    %1110 = vdwg.mxu0
    %1111 = vmatprep.subr.bf16.mxu0 %v854
    %1112 = vmatpush1.bf16.msra.mxu0 %v853
    %1113 = vmatprep.subr.bf16.mxu0 %v862
    %1114 = vmatpush1.bf16.msra.mxu0 %v861
    %1115 = vmatprep.subr.bf16.mxu0 %v920
    %1116 = vmatpush1.bf16.msra.mxu0 %v917
    %1117 = vmatprep.subr.bf16.mxu0 0
    %1118 = vmatpush1.bf16.msra.mxu0 0
    %1119 = vmatprep.subr.bf16.mxu0 0
    %1120 = vmatpush1.bf16.msra.mxu0 0
    %1121 = vmatprep.subr.bf16.mxu0 0
    %1122 = vmatpush1.bf16.msra.mxu0 0
    %1123 = vmatprep.subr.bf16.mxu0 0
    %1124 = vmatpush1.bf16.msra.mxu0 0
    %1125 = vmatprep.subr.bf16.mxu0 0
    %1126 = vmatpush1.bf16.msra.mxu0 0
    %1127 = vmatprep.subr.bf16.mxu0 0
    %1128 = vmatpush1.bf16.msra.mxu0 0
    %1129 = vmatprep.subr.bf16.mxu0 0
    %1130 = vmatpush1.bf16.msra.mxu0 0
    %1131 = vmatprep.subr.bf16.mxu0 0
    %1132 = vmatpush1.bf16.msra.mxu0 0
    %1133 = vmatprep.subr.bf16.mxu0 0
    %1134 = vmatpush1.bf16.msra.mxu0 0
    %1135 = vmatprep.subr.bf16.mxu0 0
    %1136 = vmatpush1.bf16.msra.mxu0 0
    %1137 = vmatprep.subr.bf16.mxu0 0
    %1138 = vmatpush1.bf16.msra.mxu0 0
    %1139 = vmatprep.subr.bf16.mxu0 0
    %1140 = vmatpush1.bf16.msra.mxu0 0
    %1141 = vmatprep.subr.bf16.mxu0 0
    %1142 = vmatpush1.bf16.msra.mxu0 0
    %1143 = vmatprep.mubr.bf16.mxu0 0
    %1144 = vmatmul.mubr.bf16.gmra.mrb[0].mxu0 %v889
    %v1145 = vpop.f32.mrb[0].mxu0
    %v1146 = vadd.f32 %v636, %v1145
    %v1147 = vpop.f32.mrb[0].mxu0
    %v1148 = vadd.f32 %v640, %v1147
    %v1149 = vpop.f32.mrb[0].mxu0
    %v1150 = vadd.f32 %v636, %v1149
    %v1151 = vpop.f32.mrb[0].mxu0
    %v1152 = vadd.f32 %v640, %v1151
    %1153 = vmatprep.mubr.bf16.mxu0 0
    %1154 = vmatmul.mubr.bf16.gmra.mrb[0].mxu0 %v892
    %v1155 = vpop.f32.mrb[0].mxu0
    %v1156 = vadd.f32 %v636, %v1155
    %v1157 = vpop.f32.mrb[0].mxu0
    %v1158 = vadd.f32 %v640, %v1157
    %v1159 = vpop.f32.mrb[0].mxu0
    %v1160 = vadd.f32 %v636, %v1159
    %v1161 = vpop.f32.mrb[0].mxu0
    %v1162 = vadd.f32 %v640, %v1161
    %1163 = vmatprep.mubr.bf16.mxu0 0
    %1164 = vmatmul.mubr.bf16.gmra.mrb[0].mxu0 %v895
    %v1165 = vpop.f32.mrb[0].mxu0
    %v1166 = vadd.f32 %v636, %v1165
    %v1167 = vpop.f32.mrb[0].mxu0
    %v1168 = vadd.f32 %v640, %v1167
    %v1169 = vpop.f32.mrb[0].mxu0
    %v1170 = vadd.f32 %v636, %v1169
    %v1171 = vpop.f32.mrb[0].mxu0
    %v1172 = vadd.f32 %v640, %v1171
    %1173 = vdwg.mxu0
    %v1174 = vmax.f32 %v957, 0.0
    %v1175 = vmax.f32 %v959, 0.0
    %v1176 = vmax.f32 %v1020, 0.0
    %v1177 = vmax.f32 %v1022, 0.0
    %v1178 = vmax.f32 %v1083, 0.0
    %v1179 = vmax.f32 %v1085, 0.0
    %v1180 = vmax.f32 %v1146, 0.0
    %v1181 = vmax.f32 %v1148, 0.0
    %v1182 = vmax.f32 %v961, 0.0
    %v1183 = vmax.f32 %v963, 0.0
    %v1184 = vmax.f32 %v1024, 0.0
    %v1185 = vmax.f32 %v1026, 0.0
    %v1186 = vmax.f32 %v1087, 0.0
    %v1187 = vmax.f32 %v1089, 0.0
    %v1188 = vmax.f32 %v1150, 0.0
    %v1189 = vmax.f32 %v1152, 0.0
    %v1190 = vmax.f32 %v967, 0.0
    %v1191 = vmax.f32 %v969, 0.0
    %v1192 = vmax.f32 %v1030, 0.0
    %v1193 = vmax.f32 %v1032, 0.0
    %v1194 = vmax.f32 %v1093, 0.0
    %v1195 = vmax.f32 %v1095, 0.0
    %v1196 = vmax.f32 %v1156, 0.0
    %v1197 = vmax.f32 %v1158, 0.0
    %v1198 = vmax.f32 %v971, 0.0
    %v1199 = vmax.f32 %v973, 0.0
    %v1200 = vmax.f32 %v1034, 0.0
    %v1201 = vmax.f32 %v1036, 0.0
    %v1202 = vmax.f32 %v1097, 0.0
    %v1203 = vmax.f32 %v1099, 0.0
    %v1204 = vmax.f32 %v1160, 0.0
    %v1205 = vmax.f32 %v1162, 0.0
    %v1206 = vmax.f32 %v977, 0.0
    %v1207 = vmax.f32 %v979, 0.0
    %v1208 = vmax.f32 %v1040, 0.0
    %v1209 = vmax.f32 %v1042, 0.0
    %v1210 = vmax.f32 %v1103, 0.0
    %v1211 = vmax.f32 %v1105, 0.0
    %v1212 = vmax.f32 %v1166, 0.0
    %v1213 = vmax.f32 %v1168, 0.0
    %v1214 = vmax.f32 %v981, 0.0
    %v1215 = vmax.f32 %v983, 0.0
    %v1216 = vmax.f32 %v1044, 0.0
    %v1217 = vmax.f32 %v1046, 0.0
    %v1218 = vmax.f32 %v1107, 0.0
    %v1219 = vmax.f32 %v1109, 0.0
    %v1220 = vmax.f32 %v1170, 0.0
    %v1221 = vmax.f32 %v1172, 0.0
    %v1270 = vcombine.low %v1174, %v1175
    %v1271 = vcombine.high %v1174, %v1175
    %v1272 = vcombine.low %v1176, %v1177
    %v1273 = vcombine.high %v1176, %v1177
    %v1275 = vunpack.c.l.s4 1983009808
    %v1276 = vunpack.c.0.s8 %v1275
    %v1277 = vlaneseq
    %v1278 = vshrl.u32 %v1277, 7
    %v1279 = vsub.s32 %v1276, %v1278
    %v1280 = vrot.slane %v1270, %v1279
    %v1282 = vunpack.c.l.s4 1983009808
    %v1283 = vunpack.c.0.s8 %v1282
    %v1284 = vlaneseq
    %v1285 = vshrl.u32 %v1284, 7
    %v1286 = vsub.s32 %v1283, %v1285
    %v1287 = vrot.slane %v1271, %v1286
    %v1289 = vunpack.c.l.s4 1983009808
    %v1290 = vunpack.c.0.s8 %v1289
    %v1291 = vlaneseq
    %v1292 = vshrl.u32 %v1291, 7
    %v1293 = vsub.s32 %v1290, %v1292
    %v1294 = vrot.slane %v1272, %v1293
    %v1296 = vunpack.c.l.s4 1983009808
    %v1297 = vunpack.c.0.s8 %v1296
    %v1298 = vlaneseq
    %v1299 = vshrl.u32 %v1298, 7
    %v1300 = vsub.s32 %v1297, %v1299
    %v1301 = vrot.slane %v1273, %v1300
    %v1302 = vcombine.low %v1280, %v1294
    %v1303 = vcombine.high %v1280, %v1294
    %v1304 = vcombine.low %v1287, %v1301
    %v1305 = vcombine.high %v1287, %v1301
    %v1306 = vcombine.low %v1178, %v1179
    %v1307 = vcombine.high %v1178, %v1179
    %v1308 = vcombine.low %v1180, %v1181
    %v1309 = vcombine.high %v1180, %v1181
    %v1311 = vunpack.c.l.s4 1983009808
    %v1312 = vunpack.c.0.s8 %v1311
    %v1313 = vlaneseq
    %v1314 = vshrl.u32 %v1313, 7
    %v1315 = vsub.s32 %v1312, %v1314
    %v1316 = vrot.slane %v1306, %v1315
    %v1318 = vunpack.c.l.s4 1983009808
    %v1319 = vunpack.c.0.s8 %v1318
    %v1320 = vlaneseq
    %v1321 = vshrl.u32 %v1320, 7
    %v1322 = vsub.s32 %v1319, %v1321
    %v1323 = vrot.slane %v1307, %v1322
    %v1325 = vunpack.c.l.s4 1983009808
    %v1326 = vunpack.c.0.s8 %v1325
    %v1327 = vlaneseq
    %v1328 = vshrl.u32 %v1327, 7
    %v1329 = vsub.s32 %v1326, %v1328
    %v1330 = vrot.slane %v1308, %v1329
    %v1332 = vunpack.c.l.s4 1983009808
    %v1333 = vunpack.c.0.s8 %v1332
    %v1334 = vlaneseq
    %v1335 = vshrl.u32 %v1334, 7
    %v1336 = vsub.s32 %v1333, %v1335
    %v1337 = vrot.slane %v1309, %v1336
    %v1338 = vcombine.low %v1316, %v1330
    %v1339 = vcombine.high %v1316, %v1330
    %v1340 = vcombine.low %v1323, %v1337
    %v1341 = vcombine.high %v1323, %v1337
    %v1342 = vcombine.low %v1182, %v1183
    %v1343 = vcombine.high %v1182, %v1183
    %v1344 = vcombine.low %v1184, %v1185
    %v1345 = vcombine.high %v1184, %v1185
    %v1347 = vunpack.c.l.s4 1983009808
    %v1348 = vunpack.c.0.s8 %v1347
    %v1349 = vlaneseq
    %v1350 = vshrl.u32 %v1349, 7
    %v1351 = vsub.s32 %v1348, %v1350
    %v1352 = vrot.slane %v1342, %v1351
    %v1354 = vunpack.c.l.s4 1983009808
    %v1355 = vunpack.c.0.s8 %v1354
    %v1356 = vlaneseq
    %v1357 = vshrl.u32 %v1356, 7
    %v1358 = vsub.s32 %v1355, %v1357
    %v1359 = vrot.slane %v1343, %v1358
    %v1361 = vunpack.c.l.s4 1983009808
    %v1362 = vunpack.c.0.s8 %v1361
    %v1363 = vlaneseq
    %v1364 = vshrl.u32 %v1363, 7
    %v1365 = vsub.s32 %v1362, %v1364
    %v1366 = vrot.slane %v1344, %v1365
    %v1368 = vunpack.c.l.s4 1983009808
    %v1369 = vunpack.c.0.s8 %v1368
    %v1370 = vlaneseq
    %v1371 = vshrl.u32 %v1370, 7
    %v1372 = vsub.s32 %v1369, %v1371
    %v1373 = vrot.slane %v1345, %v1372
    %v1374 = vcombine.low %v1352, %v1366
    %v1375 = vcombine.high %v1352, %v1366
    %v1376 = vcombine.low %v1359, %v1373
    %v1377 = vcombine.high %v1359, %v1373
    %v1378 = vcombine.low %v1186, %v1187
    %v1379 = vcombine.high %v1186, %v1187
    %v1380 = vcombine.low %v1188, %v1189
    %v1381 = vcombine.high %v1188, %v1189
    %v1383 = vunpack.c.l.s4 1983009808
    %v1384 = vunpack.c.0.s8 %v1383
    %v1385 = vlaneseq
    %v1386 = vshrl.u32 %v1385, 7
    %v1387 = vsub.s32 %v1384, %v1386
    %v1388 = vrot.slane %v1378, %v1387
    %v1390 = vunpack.c.l.s4 1983009808
    %v1391 = vunpack.c.0.s8 %v1390
    %v1392 = vlaneseq
    %v1393 = vshrl.u32 %v1392, 7
    %v1394 = vsub.s32 %v1391, %v1393
    %v1395 = vrot.slane %v1379, %v1394
    %v1397 = vunpack.c.l.s4 1983009808
    %v1398 = vunpack.c.0.s8 %v1397
    %v1399 = vlaneseq
    %v1400 = vshrl.u32 %v1399, 7
    %v1401 = vsub.s32 %v1398, %v1400
    %v1402 = vrot.slane %v1380, %v1401
    %v1404 = vunpack.c.l.s4 1983009808
    %v1405 = vunpack.c.0.s8 %v1404
    %v1406 = vlaneseq
    %v1407 = vshrl.u32 %v1406, 7
    %v1408 = vsub.s32 %v1405, %v1407
    %v1409 = vrot.slane %v1381, %v1408
    %v1410 = vcombine.low %v1388, %v1402
    %v1411 = vcombine.high %v1388, %v1402
    %v1412 = vcombine.low %v1395, %v1409
    %v1413 = vcombine.high %v1395, %v1409
    %v1414 = vcombine.low %v1190, %v1191
    %v1415 = vcombine.high %v1190, %v1191
    %v1416 = vcombine.low %v1192, %v1193
    %v1417 = vcombine.high %v1192, %v1193
    %v1419 = vunpack.c.l.s4 1983009808
    %v1420 = vunpack.c.0.s8 %v1419
    %v1421 = vlaneseq
    %v1422 = vshrl.u32 %v1421, 7
    %v1423 = vsub.s32 %v1420, %v1422
    %v1424 = vrot.slane %v1414, %v1423
    %v1426 = vunpack.c.l.s4 1983009808
    %v1427 = vunpack.c.0.s8 %v1426
    %v1428 = vlaneseq
    %v1429 = vshrl.u32 %v1428, 7
    %v1430 = vsub.s32 %v1427, %v1429
    %v1431 = vrot.slane %v1415, %v1430
    %v1433 = vunpack.c.l.s4 1983009808
    %v1434 = vunpack.c.0.s8 %v1433
    %v1435 = vlaneseq
    %v1436 = vshrl.u32 %v1435, 7
    %v1437 = vsub.s32 %v1434, %v1436
    %v1438 = vrot.slane %v1416, %v1437
    %v1440 = vunpack.c.l.s4 1983009808
    %v1441 = vunpack.c.0.s8 %v1440
    %v1442 = vlaneseq
    %v1443 = vshrl.u32 %v1442, 7
    %v1444 = vsub.s32 %v1441, %v1443
    %v1445 = vrot.slane %v1417, %v1444
    %v1446 = vcombine.low %v1424, %v1438
    %v1447 = vcombine.high %v1424, %v1438
    %v1448 = vcombine.low %v1431, %v1445
    %v1449 = vcombine.high %v1431, %v1445
    %v1450 = vcombine.low %v1194, %v1195
    %v1451 = vcombine.high %v1194, %v1195
    %v1452 = vcombine.low %v1196, %v1197
    %v1453 = vcombine.high %v1196, %v1197
    %v1455 = vunpack.c.l.s4 1983009808
    %v1456 = vunpack.c.0.s8 %v1455
    %v1457 = vlaneseq
    %v1458 = vshrl.u32 %v1457, 7
    %v1459 = vsub.s32 %v1456, %v1458
    %v1460 = vrot.slane %v1450, %v1459
    %v1462 = vunpack.c.l.s4 1983009808
    %v1463 = vunpack.c.0.s8 %v1462
    %v1464 = vlaneseq
    %v1465 = vshrl.u32 %v1464, 7
    %v1466 = vsub.s32 %v1463, %v1465
    %v1467 = vrot.slane %v1451, %v1466
    %v1469 = vunpack.c.l.s4 1983009808
    %v1470 = vunpack.c.0.s8 %v1469
    %v1471 = vlaneseq
    %v1472 = vshrl.u32 %v1471, 7
    %v1473 = vsub.s32 %v1470, %v1472
    %v1474 = vrot.slane %v1452, %v1473
    %v1476 = vunpack.c.l.s4 1983009808
    %v1477 = vunpack.c.0.s8 %v1476
    %v1478 = vlaneseq
    %v1479 = vshrl.u32 %v1478, 7
    %v1480 = vsub.s32 %v1477, %v1479
    %v1481 = vrot.slane %v1453, %v1480
    %v1482 = vcombine.low %v1460, %v1474
    %v1483 = vcombine.high %v1460, %v1474
    %v1484 = vcombine.low %v1467, %v1481
    %v1485 = vcombine.high %v1467, %v1481
    %v1486 = vcombine.low %v1198, %v1199
    %v1487 = vcombine.high %v1198, %v1199
    %v1488 = vcombine.low %v1200, %v1201
    %v1489 = vcombine.high %v1200, %v1201
    %v1491 = vunpack.c.l.s4 1983009808
    %v1492 = vunpack.c.0.s8 %v1491
    %v1493 = vlaneseq
    %v1494 = vshrl.u32 %v1493, 7
    %v1495 = vsub.s32 %v1492, %v1494
    %v1496 = vrot.slane %v1486, %v1495
    %v1498 = vunpack.c.l.s4 1983009808
    %v1499 = vunpack.c.0.s8 %v1498
    %v1500 = vlaneseq
    %v1501 = vshrl.u32 %v1500, 7
    %v1502 = vsub.s32 %v1499, %v1501
    %v1503 = vrot.slane %v1487, %v1502
    %v1505 = vunpack.c.l.s4 1983009808
    %v1506 = vunpack.c.0.s8 %v1505
    %v1507 = vlaneseq
    %v1508 = vshrl.u32 %v1507, 7
    %v1509 = vsub.s32 %v1506, %v1508
    %v1510 = vrot.slane %v1488, %v1509
    %v1512 = vunpack.c.l.s4 1983009808
    %v1513 = vunpack.c.0.s8 %v1512
    %v1514 = vlaneseq
    %v1515 = vshrl.u32 %v1514, 7
    %v1516 = vsub.s32 %v1513, %v1515
    %v1517 = vrot.slane %v1489, %v1516
    %v1518 = vcombine.low %v1496, %v1510
    %v1519 = vcombine.high %v1496, %v1510
    %v1520 = vcombine.low %v1503, %v1517
    %v1521 = vcombine.high %v1503, %v1517
    %v1522 = vcombine.low %v1202, %v1203
    %v1523 = vcombine.high %v1202, %v1203
    %v1524 = vcombine.low %v1204, %v1205
    %v1525 = vcombine.high %v1204, %v1205
    %v1527 = vunpack.c.l.s4 1983009808
    %v1528 = vunpack.c.0.s8 %v1527
    %v1529 = vlaneseq
    %v1530 = vshrl.u32 %v1529, 7
    %v1531 = vsub.s32 %v1528, %v1530
    %v1532 = vrot.slane %v1522, %v1531
    %v1534 = vunpack.c.l.s4 1983009808
    %v1535 = vunpack.c.0.s8 %v1534
    %v1536 = vlaneseq
    %v1537 = vshrl.u32 %v1536, 7
    %v1538 = vsub.s32 %v1535, %v1537
    %v1539 = vrot.slane %v1523, %v1538
    %v1541 = vunpack.c.l.s4 1983009808
    %v1542 = vunpack.c.0.s8 %v1541
    %v1543 = vlaneseq
    %v1544 = vshrl.u32 %v1543, 7
    %v1545 = vsub.s32 %v1542, %v1544
    %v1546 = vrot.slane %v1524, %v1545
    %v1548 = vunpack.c.l.s4 1983009808
    %v1549 = vunpack.c.0.s8 %v1548
    %v1550 = vlaneseq
    %v1551 = vshrl.u32 %v1550, 7
    %v1552 = vsub.s32 %v1549, %v1551
    %v1553 = vrot.slane %v1525, %v1552
    %v1554 = vcombine.low %v1532, %v1546
    %v1555 = vcombine.high %v1532, %v1546
    %v1556 = vcombine.low %v1539, %v1553
    %v1557 = vcombine.high %v1539, %v1553
    %v1558 = vcombine.low %v1206, %v1207
    %v1559 = vcombine.high %v1206, %v1207
    %v1560 = vcombine.low %v1208, %v1209
    %v1561 = vcombine.high %v1208, %v1209
    %v1563 = vunpack.c.l.s4 1983009808
    %v1564 = vunpack.c.0.s8 %v1563
    %v1565 = vlaneseq
    %v1566 = vshrl.u32 %v1565, 7
    %v1567 = vsub.s32 %v1564, %v1566
    %v1568 = vrot.slane %v1558, %v1567
    %v1570 = vunpack.c.l.s4 1983009808
    %v1571 = vunpack.c.0.s8 %v1570
    %v1572 = vlaneseq
    %v1573 = vshrl.u32 %v1572, 7
    %v1574 = vsub.s32 %v1571, %v1573
    %v1575 = vrot.slane %v1559, %v1574
    %v1577 = vunpack.c.l.s4 1983009808
    %v1578 = vunpack.c.0.s8 %v1577
    %v1579 = vlaneseq
    %v1580 = vshrl.u32 %v1579, 7
    %v1581 = vsub.s32 %v1578, %v1580
    %v1582 = vrot.slane %v1560, %v1581
    %v1584 = vunpack.c.l.s4 1983009808
    %v1585 = vunpack.c.0.s8 %v1584
    %v1586 = vlaneseq
    %v1587 = vshrl.u32 %v1586, 7
    %v1588 = vsub.s32 %v1585, %v1587
    %v1589 = vrot.slane %v1561, %v1588
    %v1590 = vcombine.low %v1568, %v1582
    %v1591 = vcombine.high %v1568, %v1582
    %v1592 = vcombine.low %v1575, %v1589
    %v1593 = vcombine.high %v1575, %v1589
    %v1594 = vcombine.low %v1210, %v1211
    %v1595 = vcombine.high %v1210, %v1211
    %v1596 = vcombine.low %v1212, %v1213
    %v1597 = vcombine.high %v1212, %v1213
    %v1599 = vunpack.c.l.s4 1983009808
    %v1600 = vunpack.c.0.s8 %v1599
    %v1601 = vlaneseq
    %v1602 = vshrl.u32 %v1601, 7
    %v1603 = vsub.s32 %v1600, %v1602
    %v1604 = vrot.slane %v1594, %v1603
    %v1606 = vunpack.c.l.s4 1983009808
    %v1607 = vunpack.c.0.s8 %v1606
    %v1608 = vlaneseq
    %v1609 = vshrl.u32 %v1608, 7
    %v1610 = vsub.s32 %v1607, %v1609
    %v1611 = vrot.slane %v1595, %v1610
    %v1613 = vunpack.c.l.s4 1983009808
    %v1614 = vunpack.c.0.s8 %v1613
    %v1615 = vlaneseq
    %v1616 = vshrl.u32 %v1615, 7
    %v1617 = vsub.s32 %v1614, %v1616
    %v1618 = vrot.slane %v1596, %v1617
    %v1620 = vunpack.c.l.s4 1983009808
    %v1621 = vunpack.c.0.s8 %v1620
    %v1622 = vlaneseq
    %v1623 = vshrl.u32 %v1622, 7
    %v1624 = vsub.s32 %v1621, %v1623
    %v1625 = vrot.slane %v1597, %v1624
    %v1626 = vcombine.low %v1604, %v1618
    %v1627 = vcombine.high %v1604, %v1618
    %v1628 = vcombine.low %v1611, %v1625
    %v1629 = vcombine.high %v1611, %v1625
    %v1630 = vcombine.low %v1214, %v1215
    %v1631 = vcombine.low %v1216, %v1217
    %v1633 = vunpack.c.l.s4 1983009808
    %v1634 = vunpack.c.0.s8 %v1633
    %v1635 = vlaneseq
    %v1636 = vshrl.u32 %v1635, 7
    %v1637 = vsub.s32 %v1634, %v1636
    %v1638 = vrot.slane %v1630, %v1637
    %v1640 = vunpack.c.l.s4 1983009808
    %v1641 = vunpack.c.0.s8 %v1640
    %v1642 = vlaneseq
    %v1643 = vshrl.u32 %v1642, 7
    %v1644 = vsub.s32 %v1641, %v1643
    %v1645 = vrot.slane %v1631, %v1644
    %v1646 = vcombine.low %v1638, %v1645
    %v1647 = vcombine.high %v1638, %v1645
    %v1648 = vcombine.low %v1218, %v1219
    %v1649 = vcombine.low %v1220, %v1221
    %v1651 = vunpack.c.l.s4 1983009808
    %v1652 = vunpack.c.0.s8 %v1651
    %v1653 = vlaneseq
    %v1654 = vshrl.u32 %v1653, 7
    %v1655 = vsub.s32 %v1652, %v1654
    %v1656 = vrot.slane %v1648, %v1655
    %v1658 = vunpack.c.l.s4 1983009808
    %v1659 = vunpack.c.0.s8 %v1658
    %v1660 = vlaneseq
    %v1661 = vshrl.u32 %v1660, 7
    %v1662 = vsub.s32 %v1659, %v1661
    %v1663 = vrot.slane %v1649, %v1662
    %v1664 = vcombine.low %v1656, %v1663
    %v1665 = vcombine.high %v1656, %v1663
    %v1710 = vrot.slane %v1302, 7
    %v1711 = vrot.slane %v1710, 2
    %v1712 = vrot.slane %v1338, 7
    %v1713 = vrot.slane %v1712, 2
    %v1714 = vrot.slane %v1303, 7
    %v1715 = vrot.slane %v1714, 2
    %v1716 = vrot.slane %v1339, 7
    %v1717 = vrot.slane %v1716, 2
    %v1718 = vrot.slane %v1304, 7
    %v1719 = vrot.slane %v1718, 2
    %v1720 = vrot.slane %v1340, 7
    %v1721 = vrot.slane %v1720, 2
    %v1722 = vrot.slane %v1305, 7
    %v1723 = vrot.slane %v1722, 2
    %v1724 = vrot.slane %v1341, 7
    %v1725 = vrot.slane %v1724, 2
    %v1726 = vrot.slane %v1374, 7
    %v1727 = vrot.slane %v1726, 2
    %v1728 = vrot.slane %v1410, 7
    %v1729 = vrot.slane %v1728, 2
    %v1730 = vrot.slane %v1375, 7
    %v1731 = vrot.slane %v1730, 2
    %v1732 = vrot.slane %v1411, 7
    %v1733 = vrot.slane %v1732, 2
    %v1734 = vrot.slane %v1376, 7
    %v1735 = vrot.slane %v1734, 2
    %v1736 = vrot.slane %v1412, 7
    %v1737 = vrot.slane %v1736, 2
    %v1738 = vrot.slane %v1377, 7
    %v1739 = vrot.slane %v1738, 2
    %v1740 = vrot.slane %v1413, 7
    %v1741 = vrot.slane %v1740, 2
    %v1742 = vrot.slane %v1446, 7
    %v1743 = vrot.slane %v1742, 2
    %v1744 = vrot.slane %v1482, 7
    %v1745 = vrot.slane %v1744, 2
    %v1746 = vrot.slane %v1447, 7
    %v1747 = vrot.slane %v1746, 2
    %v1748 = vrot.slane %v1483, 7
    %v1749 = vrot.slane %v1748, 2
    %v1750 = vrot.slane %v1448, 7
    %v1751 = vrot.slane %v1750, 2
    %v1752 = vrot.slane %v1484, 7
    %v1753 = vrot.slane %v1752, 2
    %v1754 = vrot.slane %v1449, 7
    %v1755 = vrot.slane %v1754, 2
    %v1756 = vrot.slane %v1485, 7
    %v1757 = vrot.slane %v1756, 2
    %v1758 = vrot.slane %v1518, 7
    %v1759 = vrot.slane %v1758, 2
    %v1760 = vrot.slane %v1554, 7
    %v1761 = vrot.slane %v1760, 2
    %v1762 = vrot.slane %v1519, 7
    %v1763 = vrot.slane %v1762, 2
    %v1764 = vrot.slane %v1555, 7
    %v1765 = vrot.slane %v1764, 2
    %v1766 = vrot.slane %v1520, 7
    %v1767 = vrot.slane %v1766, 2
    %v1768 = vrot.slane %v1556, 7
    %v1769 = vrot.slane %v1768, 2
    %v1770 = vrot.slane %v1521, 7
    %v1771 = vrot.slane %v1770, 2
    %v1772 = vrot.slane %v1557, 7
    %v1773 = vrot.slane %v1772, 2
    %v1774 = vrot.slane %v1590, 7
    %v1775 = vrot.slane %v1774, 2
    %v1776 = vrot.slane %v1626, 7
    %v1777 = vrot.slane %v1776, 2
    %v1778 = vrot.slane %v1591, 7
    %v1779 = vrot.slane %v1778, 2
    %v1780 = vrot.slane %v1627, 7
    %v1781 = vrot.slane %v1780, 2
    %v1782 = vrot.slane %v1592, 7
    %v1783 = vrot.slane %v1782, 2
    %v1784 = vrot.slane %v1628, 7
    %v1785 = vrot.slane %v1784, 2
    %v1786 = vrot.slane %v1593, 7
    %v1787 = vrot.slane %v1786, 2
    %v1788 = vrot.slane %v1629, 7
    %v1789 = vrot.slane %v1788, 2
    %v1790 = vrot.slane %v1646, 7
    %v1791 = vrot.slane %v1790, 2
    %v1792 = vrot.slane %v1664, 7
    %v1793 = vrot.slane %v1792, 2
    %v1794 = vrot.slane %v1647, 7
    %v1795 = vrot.slane %v1794, 2
    %v1796 = vrot.slane %v1665, 7
    %v1797 = vrot.slane %v1796, 2
    %v1842 = vmax.f32 %v1302, %v1711
    %v1843 = vmax.f32 %v1338, %v1713
    %v1844 = vmax.f32 %v1303, %v1715
    %v1845 = vmax.f32 %v1339, %v1717
    %v1846 = vmax.f32 %v1304, %v1719
    %v1847 = vmax.f32 %v1340, %v1721
    %v1848 = vmax.f32 %v1305, %v1723
    %v1849 = vmax.f32 %v1341, %v1725
    %v1850 = vmax.f32 %v1374, %v1727
    %v1851 = vmax.f32 %v1410, %v1729
    %v1852 = vmax.f32 %v1375, %v1731
    %v1853 = vmax.f32 %v1411, %v1733
    %v1854 = vmax.f32 %v1376, %v1735
    %v1855 = vmax.f32 %v1412, %v1737
    %v1856 = vmax.f32 %v1377, %v1739
    %v1857 = vmax.f32 %v1413, %v1741
    %v1858 = vmax.f32 %v1446, %v1743
    %v1859 = vmax.f32 %v1482, %v1745
    %v1860 = vmax.f32 %v1447, %v1747
    %v1861 = vmax.f32 %v1483, %v1749
    %v1862 = vmax.f32 %v1448, %v1751
    %v1863 = vmax.f32 %v1484, %v1753
    %v1864 = vmax.f32 %v1449, %v1755
    %v1865 = vmax.f32 %v1485, %v1757
    %v1866 = vmax.f32 %v1518, %v1759
    %v1867 = vmax.f32 %v1554, %v1761
    %v1868 = vmax.f32 %v1519, %v1763
    %v1869 = vmax.f32 %v1555, %v1765
    %v1870 = vmax.f32 %v1520, %v1767
    %v1871 = vmax.f32 %v1556, %v1769
    %v1872 = vmax.f32 %v1521, %v1771
    %v1873 = vmax.f32 %v1557, %v1773
    %v1874 = vmax.f32 %v1590, %v1775
    %v1875 = vmax.f32 %v1626, %v1777
    %v1876 = vmax.f32 %v1591, %v1779
    %v1877 = vmax.f32 %v1627, %v1781
    %v1878 = vmax.f32 %v1592, %v1783
    %v1879 = vmax.f32 %v1628, %v1785
    %v1880 = vmax.f32 %v1593, %v1787
    %v1881 = vmax.f32 %v1629, %v1789
    %v1882 = vmax.f32 %v1646, %v1791
    %v1883 = vmax.f32 %v1664, %v1793
    %v1884 = vmax.f32 %v1647, %v1795
    %v1885 = vmax.f32 %v1665, %v1797
    %vm1886 = vcmp.ge.f32.partialorder %v1302, %v1711
    %vm1887 = vcmp.ge.f32.partialorder %v1338, %v1713
    %vm1888 = vcmp.ge.f32.partialorder %v1303, %v1715
    %vm1889 = vcmp.ge.f32.partialorder %v1339, %v1717
    %vm1890 = vcmp.ge.f32.partialorder %v1304, %v1719
    %vm1891 = vcmp.ge.f32.partialorder %v1340, %v1721
    %vm1892 = vcmp.ge.f32.partialorder %v1305, %v1723
    %vm1893 = vcmp.ge.f32.partialorder %v1341, %v1725
    %vm1894 = vcmp.ge.f32.partialorder %v1374, %v1727
    %vm1895 = vcmp.ge.f32.partialorder %v1410, %v1729
    %vm1896 = vcmp.ge.f32.partialorder %v1375, %v1731
    %vm1897 = vcmp.ge.f32.partialorder %v1411, %v1733
    %vm1898 = vcmp.ge.f32.partialorder %v1376, %v1735
    %vm1899 = vcmp.ge.f32.partialorder %v1412, %v1737
    %vm1900 = vcmp.ge.f32.partialorder %v1377, %v1739
    %vm1901 = vcmp.ge.f32.partialorder %v1413, %v1741
    %vm1902 = vcmp.ge.f32.partialorder %v1446, %v1743
    %vm1903 = vcmp.ge.f32.partialorder %v1482, %v1745
    %vm1904 = vcmp.ge.f32.partialorder %v1447, %v1747
    %vm1905 = vcmp.ge.f32.partialorder %v1483, %v1749
    %vm1906 = vcmp.ge.f32.partialorder %v1448, %v1751
    %vm1907 = vcmp.ge.f32.partialorder %v1484, %v1753
    %vm1908 = vcmp.ge.f32.partialorder %v1449, %v1755
    %vm1909 = vcmp.ge.f32.partialorder %v1485, %v1757
    %vm1910 = vcmp.ge.f32.partialorder %v1518, %v1759
    %vm1911 = vcmp.ge.f32.partialorder %v1554, %v1761
    %vm1912 = vcmp.ge.f32.partialorder %v1519, %v1763
    %vm1913 = vcmp.ge.f32.partialorder %v1555, %v1765
    %vm1914 = vcmp.ge.f32.partialorder %v1520, %v1767
    %vm1915 = vcmp.ge.f32.partialorder %v1556, %v1769
    %vm1916 = vcmp.ge.f32.partialorder %v1521, %v1771
    %vm1917 = vcmp.ge.f32.partialorder %v1557, %v1773
    %vm1918 = vcmp.ge.f32.partialorder %v1590, %v1775
    %vm1919 = vcmp.ge.f32.partialorder %v1626, %v1777
    %vm1920 = vcmp.ge.f32.partialorder %v1591, %v1779
    %vm1921 = vcmp.ge.f32.partialorder %v1627, %v1781
    %vm1922 = vcmp.ge.f32.partialorder %v1592, %v1783
    %vm1923 = vcmp.ge.f32.partialorder %v1628, %v1785
    %vm1924 = vcmp.ge.f32.partialorder %v1593, %v1787
    %vm1925 = vcmp.ge.f32.partialorder %v1629, %v1789
    %vm1926 = vcmp.ge.f32.partialorder %v1646, %v1791
    %vm1927 = vcmp.ge.f32.partialorder %v1664, %v1793
    %vm1928 = vcmp.ge.f32.partialorder %v1647, %v1795
    %vm1929 = vcmp.ge.f32.partialorder %v1665, %v1797
    %v1930 = vsel %vm1886, 0, 1
    %v1931 = vsel %vm1887, 0, 1
    %v1932 = vsel %vm1888, 0, 1
    %v1933 = vsel %vm1889, 0, 1
    %v1934 = vsel %vm1890, 0, 1
    %v1935 = vsel %vm1891, 0, 1
    %v1936 = vsel %vm1892, 0, 1
    %v1937 = vsel %vm1893, 0, 1
    %v1938 = vsel %vm1894, 0, 1
    %v1939 = vsel %vm1895, 0, 1
    %v1940 = vsel %vm1896, 0, 1
    %v1941 = vsel %vm1897, 0, 1
    %v1942 = vsel %vm1898, 0, 1
    %v1943 = vsel %vm1899, 0, 1
    %v1944 = vsel %vm1900, 0, 1
    %v1945 = vsel %vm1901, 0, 1
    %v1946 = vsel %vm1902, 0, 1
    %v1947 = vsel %vm1903, 0, 1
    %v1948 = vsel %vm1904, 0, 1
    %v1949 = vsel %vm1905, 0, 1
    %v1950 = vsel %vm1906, 0, 1
    %v1951 = vsel %vm1907, 0, 1
    %v1952 = vsel %vm1908, 0, 1
    %v1953 = vsel %vm1909, 0, 1
    %v1954 = vsel %vm1910, 0, 1
    %v1955 = vsel %vm1911, 0, 1
    %v1956 = vsel %vm1912, 0, 1
    %v1957 = vsel %vm1913, 0, 1
    %v1958 = vsel %vm1914, 0, 1
    %v1959 = vsel %vm1915, 0, 1
    %v1960 = vsel %vm1916, 0, 1
    %v1961 = vsel %vm1917, 0, 1
    %v1962 = vsel %vm1918, 0, 1
    %v1963 = vsel %vm1919, 0, 1
    %v1964 = vsel %vm1920, 0, 1
    %v1965 = vsel %vm1921, 0, 1
    %v1966 = vsel %vm1922, 0, 1
    %v1967 = vsel %vm1923, 0, 1
    %v1968 = vsel %vm1924, 0, 1
    %v1969 = vsel %vm1925, 0, 1
    %v1970 = vsel %vm1926, 0, 1
    %v1971 = vsel %vm1927, 0, 1
    %v1972 = vsel %vm1928, 0, 1
    %v1973 = vsel %vm1929, 0, 1
    %v2018 = vlaneseq
    %v2019 = vshrl.u32 %v2018, 7
    %v2020 = vsub.s32 0, %v2019
    %v2021 = vrot.slane %v1842, %v2020
    %v2022 = vlaneseq
    %v2023 = vshrl.u32 %v2022, 7
    %v2024 = vsub.s32 2, %v2023
    %v2025 = vrot.slane %v1842, %v2024
    %v2026 = vlaneseq
    %v2027 = vshrl.u32 %v2026, 7
    %v2028 = vsub.s32 4, %v2027
    %v2029 = vrot.slane %v1842, %v2028
    %v2030 = vlaneseq
    %v2031 = vshrl.u32 %v2030, 7
    %v2032 = vsub.s32 6, %v2031
    %v2033 = vrot.slane %v1842, %v2032
    %v2034 = vlaneseq
    %v2035 = vshrl.u32 %v2034, 7
    %v2036 = vsub.s32 0, %v2035
    %v2037 = vrot.slane %v1843, %v2036
    %v2038 = vlaneseq
    %v2039 = vshrl.u32 %v2038, 7
    %v2040 = vsub.s32 2, %v2039
    %v2041 = vrot.slane %v1843, %v2040
    %v2042 = vlaneseq
    %v2043 = vshrl.u32 %v2042, 7
    %v2044 = vsub.s32 4, %v2043
    %v2045 = vrot.slane %v1843, %v2044
    %v2046 = vlaneseq
    %v2047 = vshrl.u32 %v2046, 7
    %v2048 = vsub.s32 6, %v2047
    %v2049 = vrot.slane %v1843, %v2048
    %v2050 = vlaneseq
    %v2051 = vshrl.u32 %v2050, 7
    %v2052 = vsub.s32 0, %v2051
    %v2053 = vrot.slane %v1844, %v2052
    %v2054 = vlaneseq
    %v2055 = vshrl.u32 %v2054, 7
    %v2056 = vsub.s32 2, %v2055
    %v2057 = vrot.slane %v1844, %v2056
    %v2058 = vlaneseq
    %v2059 = vshrl.u32 %v2058, 7
    %v2060 = vsub.s32 4, %v2059
    %v2061 = vrot.slane %v1844, %v2060
    %v2062 = vlaneseq
    %v2063 = vshrl.u32 %v2062, 7
    %v2064 = vsub.s32 6, %v2063
    %v2065 = vrot.slane %v1844, %v2064
    %v2066 = vlaneseq
    %v2067 = vshrl.u32 %v2066, 7
    %v2068 = vsub.s32 0, %v2067
    %v2069 = vrot.slane %v1845, %v2068
    %v2070 = vlaneseq
    %v2071 = vshrl.u32 %v2070, 7
    %v2072 = vsub.s32 2, %v2071
    %v2073 = vrot.slane %v1845, %v2072
    %v2074 = vlaneseq
    %v2075 = vshrl.u32 %v2074, 7
    %v2076 = vsub.s32 4, %v2075
    %v2077 = vrot.slane %v1845, %v2076
    %v2078 = vlaneseq
    %v2079 = vshrl.u32 %v2078, 7
    %v2080 = vsub.s32 6, %v2079
    %v2081 = vrot.slane %v1845, %v2080
    %v2082 = vlaneseq
    %v2083 = vshrl.u32 %v2082, 7
    %v2084 = vsub.s32 0, %v2083
    %v2085 = vrot.slane %v1846, %v2084
    %v2086 = vlaneseq
    %v2087 = vshrl.u32 %v2086, 7
    %v2088 = vsub.s32 2, %v2087
    %v2089 = vrot.slane %v1846, %v2088
    %v2090 = vlaneseq
    %v2091 = vshrl.u32 %v2090, 7
    %v2092 = vsub.s32 4, %v2091
    %v2093 = vrot.slane %v1846, %v2092
    %v2094 = vlaneseq
    %v2095 = vshrl.u32 %v2094, 7
    %v2096 = vsub.s32 6, %v2095
    %v2097 = vrot.slane %v1846, %v2096
    %v2098 = vlaneseq
    %v2099 = vshrl.u32 %v2098, 7
    %v2100 = vsub.s32 0, %v2099
    %v2101 = vrot.slane %v1847, %v2100
    %v2102 = vlaneseq
    %v2103 = vshrl.u32 %v2102, 7
    %v2104 = vsub.s32 2, %v2103
    %v2105 = vrot.slane %v1847, %v2104
    %v2106 = vlaneseq
    %v2107 = vshrl.u32 %v2106, 7
    %v2108 = vsub.s32 4, %v2107
    %v2109 = vrot.slane %v1847, %v2108
    %v2110 = vlaneseq
    %v2111 = vshrl.u32 %v2110, 7
    %v2112 = vsub.s32 6, %v2111
    %v2113 = vrot.slane %v1847, %v2112
    %v2114 = vlaneseq
    %v2115 = vshrl.u32 %v2114, 7
    %v2116 = vsub.s32 0, %v2115
    %v2117 = vrot.slane %v1848, %v2116
    %v2118 = vlaneseq
    %v2119 = vshrl.u32 %v2118, 7
    %v2120 = vsub.s32 2, %v2119
    %v2121 = vrot.slane %v1848, %v2120
    %v2122 = vlaneseq
    %v2123 = vshrl.u32 %v2122, 7
    %v2124 = vsub.s32 4, %v2123
    %v2125 = vrot.slane %v1848, %v2124
    %v2126 = vlaneseq
    %v2127 = vshrl.u32 %v2126, 7
    %v2128 = vsub.s32 6, %v2127
    %v2129 = vrot.slane %v1848, %v2128
    %v2130 = vlaneseq
    %v2131 = vshrl.u32 %v2130, 7
    %v2132 = vsub.s32 0, %v2131
    %v2133 = vrot.slane %v1849, %v2132
    %v2134 = vlaneseq
    %v2135 = vshrl.u32 %v2134, 7
    %v2136 = vsub.s32 2, %v2135
    %v2137 = vrot.slane %v1849, %v2136
    %v2138 = vlaneseq
    %v2139 = vshrl.u32 %v2138, 7
    %v2140 = vsub.s32 4, %v2139
    %v2141 = vrot.slane %v1849, %v2140
    %v2142 = vlaneseq
    %v2143 = vshrl.u32 %v2142, 7
    %v2144 = vsub.s32 6, %v2143
    %v2145 = vrot.slane %v1849, %v2144
    %v2146 = vlaneseq
    %v2147 = vshrl.u32 %v2146, 7
    %v2148 = vsub.s32 0, %v2147
    %v2149 = vrot.slane %v1850, %v2148
    %v2150 = vlaneseq
    %v2151 = vshrl.u32 %v2150, 7
    %v2152 = vsub.s32 2, %v2151
    %v2153 = vrot.slane %v1850, %v2152
    %v2154 = vlaneseq
    %v2155 = vshrl.u32 %v2154, 7
    %v2156 = vsub.s32 4, %v2155
    %v2157 = vrot.slane %v1850, %v2156
    %v2158 = vlaneseq
    %v2159 = vshrl.u32 %v2158, 7
    %v2160 = vsub.s32 6, %v2159
    %v2161 = vrot.slane %v1850, %v2160
    %v2162 = vlaneseq
    %v2163 = vshrl.u32 %v2162, 7
    %v2164 = vsub.s32 0, %v2163
    %v2165 = vrot.slane %v1851, %v2164
    %v2166 = vlaneseq
    %v2167 = vshrl.u32 %v2166, 7
    %v2168 = vsub.s32 2, %v2167
    %v2169 = vrot.slane %v1851, %v2168
    %v2170 = vlaneseq
    %v2171 = vshrl.u32 %v2170, 7
    %v2172 = vsub.s32 4, %v2171
    %v2173 = vrot.slane %v1851, %v2172
    %v2174 = vlaneseq
    %v2175 = vshrl.u32 %v2174, 7
    %v2176 = vsub.s32 6, %v2175
    %v2177 = vrot.slane %v1851, %v2176
    %v2178 = vlaneseq
    %v2179 = vshrl.u32 %v2178, 7
    %v2180 = vsub.s32 0, %v2179
    %v2181 = vrot.slane %v1852, %v2180
    %v2182 = vlaneseq
    %v2183 = vshrl.u32 %v2182, 7
    %v2184 = vsub.s32 2, %v2183
    %v2185 = vrot.slane %v1852, %v2184
    %v2186 = vlaneseq
    %v2187 = vshrl.u32 %v2186, 7
    %v2188 = vsub.s32 4, %v2187
    %v2189 = vrot.slane %v1852, %v2188
    %v2190 = vlaneseq
    %v2191 = vshrl.u32 %v2190, 7
    %v2192 = vsub.s32 6, %v2191
    %v2193 = vrot.slane %v1852, %v2192
    %v2194 = vlaneseq
    %v2195 = vshrl.u32 %v2194, 7
    %v2196 = vsub.s32 0, %v2195
    %v2197 = vrot.slane %v1853, %v2196
    %v2198 = vlaneseq
    %v2199 = vshrl.u32 %v2198, 7
    %v2200 = vsub.s32 2, %v2199
    %v2201 = vrot.slane %v1853, %v2200
    %v2202 = vlaneseq
    %v2203 = vshrl.u32 %v2202, 7
    %v2204 = vsub.s32 4, %v2203
    %v2205 = vrot.slane %v1853, %v2204
    %v2206 = vlaneseq
    %v2207 = vshrl.u32 %v2206, 7
    %v2208 = vsub.s32 6, %v2207
    %v2209 = vrot.slane %v1853, %v2208
    %v2210 = vlaneseq
    %v2211 = vshrl.u32 %v2210, 7
    %v2212 = vsub.s32 0, %v2211
    %v2213 = vrot.slane %v1854, %v2212
    %v2214 = vlaneseq
    %v2215 = vshrl.u32 %v2214, 7
    %v2216 = vsub.s32 2, %v2215
    %v2217 = vrot.slane %v1854, %v2216
    %v2218 = vlaneseq
    %v2219 = vshrl.u32 %v2218, 7
    %v2220 = vsub.s32 4, %v2219
    %v2221 = vrot.slane %v1854, %v2220
    %v2222 = vlaneseq
    %v2223 = vshrl.u32 %v2222, 7
    %v2224 = vsub.s32 6, %v2223
    %v2225 = vrot.slane %v1854, %v2224
    %v2226 = vlaneseq
    %v2227 = vshrl.u32 %v2226, 7
    %v2228 = vsub.s32 0, %v2227
    %v2229 = vrot.slane %v1855, %v2228
    %v2230 = vlaneseq
    %v2231 = vshrl.u32 %v2230, 7
    %v2232 = vsub.s32 2, %v2231
    %v2233 = vrot.slane %v1855, %v2232
    %v2234 = vlaneseq
    %v2235 = vshrl.u32 %v2234, 7
    %v2236 = vsub.s32 4, %v2235
    %v2237 = vrot.slane %v1855, %v2236
    %v2238 = vlaneseq
    %v2239 = vshrl.u32 %v2238, 7
    %v2240 = vsub.s32 6, %v2239
    %v2241 = vrot.slane %v1855, %v2240
    %v2242 = vlaneseq
    %v2243 = vshrl.u32 %v2242, 7
    %v2244 = vsub.s32 0, %v2243
    %v2245 = vrot.slane %v1856, %v2244
    %v2246 = vlaneseq
    %v2247 = vshrl.u32 %v2246, 7
    %v2248 = vsub.s32 2, %v2247
    %v2249 = vrot.slane %v1856, %v2248
    %v2250 = vlaneseq
    %v2251 = vshrl.u32 %v2250, 7
    %v2252 = vsub.s32 4, %v2251
    %v2253 = vrot.slane %v1856, %v2252
    %v2254 = vlaneseq
    %v2255 = vshrl.u32 %v2254, 7
    %v2256 = vsub.s32 6, %v2255
    %v2257 = vrot.slane %v1856, %v2256
    %v2258 = vlaneseq
    %v2259 = vshrl.u32 %v2258, 7
    %v2260 = vsub.s32 0, %v2259
    %v2261 = vrot.slane %v1857, %v2260
    %v2262 = vlaneseq
    %v2263 = vshrl.u32 %v2262, 7
    %v2264 = vsub.s32 2, %v2263
    %v2265 = vrot.slane %v1857, %v2264
    %v2266 = vlaneseq
    %v2267 = vshrl.u32 %v2266, 7
    %v2268 = vsub.s32 4, %v2267
    %v2269 = vrot.slane %v1857, %v2268
    %v2270 = vlaneseq
    %v2271 = vshrl.u32 %v2270, 7
    %v2272 = vsub.s32 6, %v2271
    %v2273 = vrot.slane %v1857, %v2272
    %v2274 = vlaneseq
    %v2275 = vshrl.u32 %v2274, 7
    %v2276 = vsub.s32 0, %v2275
    %v2277 = vrot.slane %v1858, %v2276
    %v2278 = vlaneseq
    %v2279 = vshrl.u32 %v2278, 7
    %v2280 = vsub.s32 2, %v2279
    %v2281 = vrot.slane %v1858, %v2280
    %v2282 = vlaneseq
    %v2283 = vshrl.u32 %v2282, 7
    %v2284 = vsub.s32 4, %v2283
    %v2285 = vrot.slane %v1858, %v2284
    %v2286 = vlaneseq
    %v2287 = vshrl.u32 %v2286, 7
    %v2288 = vsub.s32 6, %v2287
    %v2289 = vrot.slane %v1858, %v2288
    %v2290 = vlaneseq
    %v2291 = vshrl.u32 %v2290, 7
    %v2292 = vsub.s32 0, %v2291
    %v2293 = vrot.slane %v1859, %v2292
    %v2294 = vlaneseq
    %v2295 = vshrl.u32 %v2294, 7
    %v2296 = vsub.s32 2, %v2295
    %v2297 = vrot.slane %v1859, %v2296
    %v2298 = vlaneseq
    %v2299 = vshrl.u32 %v2298, 7
    %v2300 = vsub.s32 4, %v2299
    %v2301 = vrot.slane %v1859, %v2300
    %v2302 = vlaneseq
    %v2303 = vshrl.u32 %v2302, 7
    %v2304 = vsub.s32 6, %v2303
    %v2305 = vrot.slane %v1859, %v2304
    %v2306 = vlaneseq
    %v2307 = vshrl.u32 %v2306, 7
    %v2308 = vsub.s32 0, %v2307
    %v2309 = vrot.slane %v1860, %v2308
    %v2310 = vlaneseq
    %v2311 = vshrl.u32 %v2310, 7
    %v2312 = vsub.s32 2, %v2311
    %v2313 = vrot.slane %v1860, %v2312
    %v2314 = vlaneseq
    %v2315 = vshrl.u32 %v2314, 7
    %v2316 = vsub.s32 4, %v2315
    %v2317 = vrot.slane %v1860, %v2316
    %v2318 = vlaneseq
    %v2319 = vshrl.u32 %v2318, 7
    %v2320 = vsub.s32 6, %v2319
    %v2321 = vrot.slane %v1860, %v2320
    %v2322 = vlaneseq
    %v2323 = vshrl.u32 %v2322, 7
    %v2324 = vsub.s32 0, %v2323
    %v2325 = vrot.slane %v1861, %v2324
    %v2326 = vlaneseq
    %v2327 = vshrl.u32 %v2326, 7
    %v2328 = vsub.s32 2, %v2327
    %v2329 = vrot.slane %v1861, %v2328
    %v2330 = vlaneseq
    %v2331 = vshrl.u32 %v2330, 7
    %v2332 = vsub.s32 4, %v2331
    %v2333 = vrot.slane %v1861, %v2332
    %v2334 = vlaneseq
    %v2335 = vshrl.u32 %v2334, 7
    %v2336 = vsub.s32 6, %v2335
    %v2337 = vrot.slane %v1861, %v2336
    %v2338 = vlaneseq
    %v2339 = vshrl.u32 %v2338, 7
    %v2340 = vsub.s32 0, %v2339
    %v2341 = vrot.slane %v1862, %v2340
    %v2342 = vlaneseq
    %v2343 = vshrl.u32 %v2342, 7
    %v2344 = vsub.s32 2, %v2343
    %v2345 = vrot.slane %v1862, %v2344
    %v2346 = vlaneseq
    %v2347 = vshrl.u32 %v2346, 7
    %v2348 = vsub.s32 4, %v2347
    %v2349 = vrot.slane %v1862, %v2348
    %v2350 = vlaneseq
    %v2351 = vshrl.u32 %v2350, 7
    %v2352 = vsub.s32 6, %v2351
    %v2353 = vrot.slane %v1862, %v2352
    %v2354 = vlaneseq
    %v2355 = vshrl.u32 %v2354, 7
    %v2356 = vsub.s32 0, %v2355
    %v2357 = vrot.slane %v1863, %v2356
    %v2358 = vlaneseq
    %v2359 = vshrl.u32 %v2358, 7
    %v2360 = vsub.s32 2, %v2359
    %v2361 = vrot.slane %v1863, %v2360
    %v2362 = vlaneseq
    %v2363 = vshrl.u32 %v2362, 7
    %v2364 = vsub.s32 4, %v2363
    %v2365 = vrot.slane %v1863, %v2364
    %v2366 = vlaneseq
    %v2367 = vshrl.u32 %v2366, 7
    %v2368 = vsub.s32 6, %v2367
    %v2369 = vrot.slane %v1863, %v2368
    %v2370 = vlaneseq
    %v2371 = vshrl.u32 %v2370, 7
    %v2372 = vsub.s32 0, %v2371
    %v2373 = vrot.slane %v1864, %v2372
    %v2374 = vlaneseq
    %v2375 = vshrl.u32 %v2374, 7
    %v2376 = vsub.s32 2, %v2375
    %v2377 = vrot.slane %v1864, %v2376
    %v2378 = vlaneseq
    %v2379 = vshrl.u32 %v2378, 7
    %v2380 = vsub.s32 4, %v2379
    %v2381 = vrot.slane %v1864, %v2380
    %v2382 = vlaneseq
    %v2383 = vshrl.u32 %v2382, 7
    %v2384 = vsub.s32 6, %v2383
    %v2385 = vrot.slane %v1864, %v2384
    %v2386 = vlaneseq
    %v2387 = vshrl.u32 %v2386, 7
    %v2388 = vsub.s32 0, %v2387
    %v2389 = vrot.slane %v1865, %v2388
    %v2390 = vlaneseq
    %v2391 = vshrl.u32 %v2390, 7
    %v2392 = vsub.s32 2, %v2391
    %v2393 = vrot.slane %v1865, %v2392
    %v2394 = vlaneseq
    %v2395 = vshrl.u32 %v2394, 7
    %v2396 = vsub.s32 4, %v2395
    %v2397 = vrot.slane %v1865, %v2396
    %v2398 = vlaneseq
    %v2399 = vshrl.u32 %v2398, 7
    %v2400 = vsub.s32 6, %v2399
    %v2401 = vrot.slane %v1865, %v2400
    %v2402 = vlaneseq
    %v2403 = vshrl.u32 %v2402, 7
    %v2404 = vsub.s32 0, %v2403
    %v2405 = vrot.slane %v1866, %v2404
    %v2406 = vlaneseq
    %v2407 = vshrl.u32 %v2406, 7
    %v2408 = vsub.s32 2, %v2407
    %v2409 = vrot.slane %v1866, %v2408
    %v2410 = vlaneseq
    %v2411 = vshrl.u32 %v2410, 7
    %v2412 = vsub.s32 4, %v2411
    %v2413 = vrot.slane %v1866, %v2412
    %v2414 = vlaneseq
    %v2415 = vshrl.u32 %v2414, 7
    %v2416 = vsub.s32 6, %v2415
    %v2417 = vrot.slane %v1866, %v2416
    %v2418 = vlaneseq
    %v2419 = vshrl.u32 %v2418, 7
    %v2420 = vsub.s32 0, %v2419
    %v2421 = vrot.slane %v1867, %v2420
    %v2422 = vlaneseq
    %v2423 = vshrl.u32 %v2422, 7
    %v2424 = vsub.s32 2, %v2423
    %v2425 = vrot.slane %v1867, %v2424
    %v2426 = vlaneseq
    %v2427 = vshrl.u32 %v2426, 7
    %v2428 = vsub.s32 4, %v2427
    %v2429 = vrot.slane %v1867, %v2428
    %v2430 = vlaneseq
    %v2431 = vshrl.u32 %v2430, 7
    %v2432 = vsub.s32 6, %v2431
    %v2433 = vrot.slane %v1867, %v2432
    %v2434 = vlaneseq
    %v2435 = vshrl.u32 %v2434, 7
    %v2436 = vsub.s32 0, %v2435
    %v2437 = vrot.slane %v1868, %v2436
    %v2438 = vlaneseq
    %v2439 = vshrl.u32 %v2438, 7
    %v2440 = vsub.s32 2, %v2439
    %v2441 = vrot.slane %v1868, %v2440
    %v2442 = vlaneseq
    %v2443 = vshrl.u32 %v2442, 7
    %v2444 = vsub.s32 4, %v2443
    %v2445 = vrot.slane %v1868, %v2444
    %v2446 = vlaneseq
    %v2447 = vshrl.u32 %v2446, 7
    %v2448 = vsub.s32 6, %v2447
    %v2449 = vrot.slane %v1868, %v2448
    %v2450 = vlaneseq
    %v2451 = vshrl.u32 %v2450, 7
    %v2452 = vsub.s32 0, %v2451
    %v2453 = vrot.slane %v1869, %v2452
    %v2454 = vlaneseq
    %v2455 = vshrl.u32 %v2454, 7
    %v2456 = vsub.s32 2, %v2455
    %v2457 = vrot.slane %v1869, %v2456
    %v2458 = vlaneseq
    %v2459 = vshrl.u32 %v2458, 7
    %v2460 = vsub.s32 4, %v2459
    %v2461 = vrot.slane %v1869, %v2460
    %v2462 = vlaneseq
    %v2463 = vshrl.u32 %v2462, 7
    %v2464 = vsub.s32 6, %v2463
    %v2465 = vrot.slane %v1869, %v2464
    %v2466 = vlaneseq
    %v2467 = vshrl.u32 %v2466, 7
    %v2468 = vsub.s32 0, %v2467
    %v2469 = vrot.slane %v1870, %v2468
    %v2470 = vlaneseq
    %v2471 = vshrl.u32 %v2470, 7
    %v2472 = vsub.s32 2, %v2471
    %v2473 = vrot.slane %v1870, %v2472
    %v2474 = vlaneseq
    %v2475 = vshrl.u32 %v2474, 7
    %v2476 = vsub.s32 4, %v2475
    %v2477 = vrot.slane %v1870, %v2476
    %v2478 = vlaneseq
    %v2479 = vshrl.u32 %v2478, 7
    %v2480 = vsub.s32 6, %v2479
    %v2481 = vrot.slane %v1870, %v2480
    %v2482 = vlaneseq
    %v2483 = vshrl.u32 %v2482, 7
    %v2484 = vsub.s32 0, %v2483
    %v2485 = vrot.slane %v1871, %v2484
    %v2486 = vlaneseq
    %v2487 = vshrl.u32 %v2486, 7
    %v2488 = vsub.s32 2, %v2487
    %v2489 = vrot.slane %v1871, %v2488
    %v2490 = vlaneseq
    %v2491 = vshrl.u32 %v2490, 7
    %v2492 = vsub.s32 4, %v2491
    %v2493 = vrot.slane %v1871, %v2492
    %v2494 = vlaneseq
    %v2495 = vshrl.u32 %v2494, 7
    %v2496 = vsub.s32 6, %v2495
    %v2497 = vrot.slane %v1871, %v2496
    %v2498 = vlaneseq
    %v2499 = vshrl.u32 %v2498, 7
    %v2500 = vsub.s32 0, %v2499
    %v2501 = vrot.slane %v1872, %v2500
    %v2502 = vlaneseq
    %v2503 = vshrl.u32 %v2502, 7
    %v2504 = vsub.s32 2, %v2503
    %v2505 = vrot.slane %v1872, %v2504
    %v2506 = vlaneseq
    %v2507 = vshrl.u32 %v2506, 7
    %v2508 = vsub.s32 4, %v2507
    %v2509 = vrot.slane %v1872, %v2508
    %v2510 = vlaneseq
    %v2511 = vshrl.u32 %v2510, 7
    %v2512 = vsub.s32 6, %v2511
    %v2513 = vrot.slane %v1872, %v2512
    %v2514 = vlaneseq
    %v2515 = vshrl.u32 %v2514, 7
    %v2516 = vsub.s32 0, %v2515
    %v2517 = vrot.slane %v1873, %v2516
    %v2518 = vlaneseq
    %v2519 = vshrl.u32 %v2518, 7
    %v2520 = vsub.s32 2, %v2519
    %v2521 = vrot.slane %v1873, %v2520
    %v2522 = vlaneseq
    %v2523 = vshrl.u32 %v2522, 7
    %v2524 = vsub.s32 4, %v2523
    %v2525 = vrot.slane %v1873, %v2524
    %v2526 = vlaneseq
    %v2527 = vshrl.u32 %v2526, 7
    %v2528 = vsub.s32 6, %v2527
    %v2529 = vrot.slane %v1873, %v2528
    %v2530 = vlaneseq
    %v2531 = vshrl.u32 %v2530, 7
    %v2532 = vsub.s32 0, %v2531
    %v2533 = vrot.slane %v1874, %v2532
    %v2534 = vlaneseq
    %v2535 = vshrl.u32 %v2534, 7
    %v2536 = vsub.s32 2, %v2535
    %v2537 = vrot.slane %v1874, %v2536
    %v2538 = vlaneseq
    %v2539 = vshrl.u32 %v2538, 7
    %v2540 = vsub.s32 4, %v2539
    %v2541 = vrot.slane %v1874, %v2540
    %v2542 = vlaneseq
    %v2543 = vshrl.u32 %v2542, 7
    %v2544 = vsub.s32 6, %v2543
    %v2545 = vrot.slane %v1874, %v2544
    %v2546 = vlaneseq
    %v2547 = vshrl.u32 %v2546, 7
    %v2548 = vsub.s32 0, %v2547
    %v2549 = vrot.slane %v1875, %v2548
    %v2550 = vlaneseq
    %v2551 = vshrl.u32 %v2550, 7
    %v2552 = vsub.s32 2, %v2551
    %v2553 = vrot.slane %v1875, %v2552
    %v2554 = vlaneseq
    %v2555 = vshrl.u32 %v2554, 7
    %v2556 = vsub.s32 4, %v2555
    %v2557 = vrot.slane %v1875, %v2556
    %v2558 = vlaneseq
    %v2559 = vshrl.u32 %v2558, 7
    %v2560 = vsub.s32 6, %v2559
    %v2561 = vrot.slane %v1875, %v2560
    %v2562 = vlaneseq
    %v2563 = vshrl.u32 %v2562, 7
    %v2564 = vsub.s32 0, %v2563
    %v2565 = vrot.slane %v1876, %v2564
    %v2566 = vlaneseq
    %v2567 = vshrl.u32 %v2566, 7
    %v2568 = vsub.s32 2, %v2567
    %v2569 = vrot.slane %v1876, %v2568
    %v2570 = vlaneseq
    %v2571 = vshrl.u32 %v2570, 7
    %v2572 = vsub.s32 4, %v2571
    %v2573 = vrot.slane %v1876, %v2572
    %v2574 = vlaneseq
    %v2575 = vshrl.u32 %v2574, 7
    %v2576 = vsub.s32 6, %v2575
    %v2577 = vrot.slane %v1876, %v2576
    %v2578 = vlaneseq
    %v2579 = vshrl.u32 %v2578, 7
    %v2580 = vsub.s32 0, %v2579
    %v2581 = vrot.slane %v1877, %v2580
    %v2582 = vlaneseq
    %v2583 = vshrl.u32 %v2582, 7
    %v2584 = vsub.s32 2, %v2583
    %v2585 = vrot.slane %v1877, %v2584
    %v2586 = vlaneseq
    %v2587 = vshrl.u32 %v2586, 7
    %v2588 = vsub.s32 4, %v2587
    %v2589 = vrot.slane %v1877, %v2588
    %v2590 = vlaneseq
    %v2591 = vshrl.u32 %v2590, 7
    %v2592 = vsub.s32 6, %v2591
    %v2593 = vrot.slane %v1877, %v2592
    %v2594 = vlaneseq
    %v2595 = vshrl.u32 %v2594, 7
    %v2596 = vsub.s32 0, %v2595
    %v2597 = vrot.slane %v1878, %v2596
    %v2598 = vlaneseq
    %v2599 = vshrl.u32 %v2598, 7
    %v2600 = vsub.s32 2, %v2599
    %v2601 = vrot.slane %v1878, %v2600
    %v2602 = vlaneseq
    %v2603 = vshrl.u32 %v2602, 7
    %v2604 = vsub.s32 4, %v2603
    %v2605 = vrot.slane %v1878, %v2604
    %v2606 = vlaneseq
    %v2607 = vshrl.u32 %v2606, 7
    %v2608 = vsub.s32 6, %v2607
    %v2609 = vrot.slane %v1878, %v2608
    %v2610 = vlaneseq
    %v2611 = vshrl.u32 %v2610, 7
    %v2612 = vsub.s32 0, %v2611
    %v2613 = vrot.slane %v1879, %v2612
    %v2614 = vlaneseq
    %v2615 = vshrl.u32 %v2614, 7
    %v2616 = vsub.s32 2, %v2615
    %v2617 = vrot.slane %v1879, %v2616
    %v2618 = vlaneseq
    %v2619 = vshrl.u32 %v2618, 7
    %v2620 = vsub.s32 4, %v2619
    %v2621 = vrot.slane %v1879, %v2620
    %v2622 = vlaneseq
    %v2623 = vshrl.u32 %v2622, 7
    %v2624 = vsub.s32 6, %v2623
    %v2625 = vrot.slane %v1879, %v2624
    %v2626 = vlaneseq
    %v2627 = vshrl.u32 %v2626, 7
    %v2628 = vsub.s32 0, %v2627
    %v2629 = vrot.slane %v1880, %v2628
    %v2630 = vlaneseq
    %v2631 = vshrl.u32 %v2630, 7
    %v2632 = vsub.s32 2, %v2631
    %v2633 = vrot.slane %v1880, %v2632
    %v2634 = vlaneseq
    %v2635 = vshrl.u32 %v2634, 7
    %v2636 = vsub.s32 4, %v2635
    %v2637 = vrot.slane %v1880, %v2636
    %v2638 = vlaneseq
    %v2639 = vshrl.u32 %v2638, 7
    %v2640 = vsub.s32 6, %v2639
    %v2641 = vrot.slane %v1880, %v2640
    %v2642 = vlaneseq
    %v2643 = vshrl.u32 %v2642, 7
    %v2644 = vsub.s32 0, %v2643
    %v2645 = vrot.slane %v1881, %v2644
    %v2646 = vlaneseq
    %v2647 = vshrl.u32 %v2646, 7
    %v2648 = vsub.s32 2, %v2647
    %v2649 = vrot.slane %v1881, %v2648
    %v2650 = vlaneseq
    %v2651 = vshrl.u32 %v2650, 7
    %v2652 = vsub.s32 4, %v2651
    %v2653 = vrot.slane %v1881, %v2652
    %v2654 = vlaneseq
    %v2655 = vshrl.u32 %v2654, 7
    %v2656 = vsub.s32 6, %v2655
    %v2657 = vrot.slane %v1881, %v2656
    %v2658 = vlaneseq
    %v2659 = vshrl.u32 %v2658, 7
    %v2660 = vsub.s32 0, %v2659
    %v2661 = vrot.slane %v1882, %v2660
    %v2662 = vlaneseq
    %v2663 = vshrl.u32 %v2662, 7
    %v2664 = vsub.s32 2, %v2663
    %v2665 = vrot.slane %v1882, %v2664
    %v2666 = vlaneseq
    %v2667 = vshrl.u32 %v2666, 7
    %v2668 = vsub.s32 4, %v2667
    %v2669 = vrot.slane %v1882, %v2668
    %v2670 = vlaneseq
    %v2671 = vshrl.u32 %v2670, 7
    %v2672 = vsub.s32 6, %v2671
    %v2673 = vrot.slane %v1882, %v2672
    %v2674 = vlaneseq
    %v2675 = vshrl.u32 %v2674, 7
    %v2676 = vsub.s32 0, %v2675
    %v2677 = vrot.slane %v1883, %v2676
    %v2678 = vlaneseq
    %v2679 = vshrl.u32 %v2678, 7
    %v2680 = vsub.s32 2, %v2679
    %v2681 = vrot.slane %v1883, %v2680
    %v2682 = vlaneseq
    %v2683 = vshrl.u32 %v2682, 7
    %v2684 = vsub.s32 4, %v2683
    %v2685 = vrot.slane %v1883, %v2684
    %v2686 = vlaneseq
    %v2687 = vshrl.u32 %v2686, 7
    %v2688 = vsub.s32 6, %v2687
    %v2689 = vrot.slane %v1883, %v2688
    %v2690 = vlaneseq
    %v2691 = vshrl.u32 %v2690, 7
    %v2692 = vsub.s32 0, %v2691
    %v2693 = vrot.slane %v1884, %v2692
    %v2694 = vlaneseq
    %v2695 = vshrl.u32 %v2694, 7
    %v2696 = vsub.s32 2, %v2695
    %v2697 = vrot.slane %v1884, %v2696
    %v2698 = vlaneseq
    %v2699 = vshrl.u32 %v2698, 7
    %v2700 = vsub.s32 4, %v2699
    %v2701 = vrot.slane %v1884, %v2700
    %v2702 = vlaneseq
    %v2703 = vshrl.u32 %v2702, 7
    %v2704 = vsub.s32 6, %v2703
    %v2705 = vrot.slane %v1884, %v2704
    %v2706 = vlaneseq
    %v2707 = vshrl.u32 %v2706, 7
    %v2708 = vsub.s32 0, %v2707
    %v2709 = vrot.slane %v1885, %v2708
    %v2710 = vlaneseq
    %v2711 = vshrl.u32 %v2710, 7
    %v2712 = vsub.s32 2, %v2711
    %v2713 = vrot.slane %v1885, %v2712
    %v2714 = vlaneseq
    %v2715 = vshrl.u32 %v2714, 7
    %v2716 = vsub.s32 4, %v2715
    %v2717 = vrot.slane %v1885, %v2716
    %v2718 = vlaneseq
    %v2719 = vshrl.u32 %v2718, 7
    %v2720 = vsub.s32 6, %v2719
    %v2721 = vrot.slane %v1885, %v2720
    %v2898 = vpack.c.bf16 %v2021, %v2021
    %v2899 = vpack.c.bf16 %v2025, %v2025
    %v2900 = vpack.c.bf16 %v2029, %v2029
    %v2901 = vpack.c.bf16 %v2033, %v2033
    %v2902 = vpack.c.bf16 %v2037, %v2037
    %v2903 = vpack.c.bf16 %v2041, %v2041
    %v2904 = vpack.c.bf16 %v2045, %v2045
    %v2905 = vpack.c.bf16 %v2049, %v2049
    %v2906 = vpack.c.bf16 %v2053, %v2053
    %v2907 = vpack.c.bf16 %v2057, %v2057
    %v2908 = vpack.c.bf16 %v2061, %v2061
    %v2909 = vpack.c.bf16 %v2065, %v2065
    %v2910 = vpack.c.bf16 %v2069, %v2069
    %v2911 = vpack.c.bf16 %v2073, %v2073
    %v2912 = vpack.c.bf16 %v2077, %v2077
    %v2913 = vpack.c.bf16 %v2081, %v2081
    %v2914 = vpack.c.bf16 %v2085, %v2085
    %v2915 = vpack.c.bf16 %v2089, %v2089
    %v2916 = vpack.c.bf16 %v2093, %v2093
    %v2917 = vpack.c.bf16 %v2097, %v2097
    %v2918 = vpack.c.bf16 %v2101, %v2101
    %v2919 = vpack.c.bf16 %v2105, %v2105
    %v2920 = vpack.c.bf16 %v2109, %v2109
    %v2921 = vpack.c.bf16 %v2113, %v2113
    %v2922 = vpack.c.bf16 %v2117, %v2117
    %v2923 = vpack.c.bf16 %v2121, %v2121
    %v2924 = vpack.c.bf16 %v2125, %v2125
    %v2925 = vpack.c.bf16 %v2129, %v2129
    %v2926 = vpack.c.bf16 %v2133, %v2133
    %v2927 = vpack.c.bf16 %v2137, %v2137
    %v2928 = vpack.c.bf16 %v2141, %v2141
    %v2929 = vpack.c.bf16 %v2145, %v2145
    %v2930 = vpack.c.bf16 %v2149, %v2149
    %v2931 = vpack.c.bf16 %v2153, %v2153
    %v2932 = vpack.c.bf16 %v2157, %v2157
    %v2933 = vpack.c.bf16 %v2161, %v2161
    %v2934 = vpack.c.bf16 %v2165, %v2165
    %v2935 = vpack.c.bf16 %v2169, %v2169
    %v2936 = vpack.c.bf16 %v2173, %v2173
    %v2937 = vpack.c.bf16 %v2177, %v2177
    %v2938 = vpack.c.bf16 %v2181, %v2181
    %v2939 = vpack.c.bf16 %v2185, %v2185
    %v2940 = vpack.c.bf16 %v2189, %v2189
    %v2941 = vpack.c.bf16 %v2193, %v2193
    %v2942 = vpack.c.bf16 %v2197, %v2197
    %v2943 = vpack.c.bf16 %v2201, %v2201
    %v2944 = vpack.c.bf16 %v2205, %v2205
    %v2945 = vpack.c.bf16 %v2209, %v2209
    %v2946 = vpack.c.bf16 %v2213, %v2213
    %v2947 = vpack.c.bf16 %v2217, %v2217
    %v2948 = vpack.c.bf16 %v2221, %v2221
    %v2949 = vpack.c.bf16 %v2225, %v2225
    %v2950 = vpack.c.bf16 %v2229, %v2229
    %v2951 = vpack.c.bf16 %v2233, %v2233
    %v2952 = vpack.c.bf16 %v2237, %v2237
    %v2953 = vpack.c.bf16 %v2241, %v2241
    %v2954 = vpack.c.bf16 %v2245, %v2245
    %v2955 = vpack.c.bf16 %v2249, %v2249
    %v2956 = vpack.c.bf16 %v2253, %v2253
    %v2957 = vpack.c.bf16 %v2257, %v2257
    %v2958 = vpack.c.bf16 %v2261, %v2261
    %v2959 = vpack.c.bf16 %v2265, %v2265
    %v2960 = vpack.c.bf16 %v2269, %v2269
    %v2961 = vpack.c.bf16 %v2273, %v2273
    %v2962 = vpack.c.bf16 %v2277, %v2277
    %v2963 = vpack.c.bf16 %v2281, %v2281
    %v2964 = vpack.c.bf16 %v2285, %v2285
    %v2965 = vpack.c.bf16 %v2289, %v2289
    %v2966 = vpack.c.bf16 %v2293, %v2293
    %v2967 = vpack.c.bf16 %v2297, %v2297
    %v2968 = vpack.c.bf16 %v2301, %v2301
    %v2969 = vpack.c.bf16 %v2305, %v2305
    %v2970 = vpack.c.bf16 %v2309, %v2309
    %v2971 = vpack.c.bf16 %v2313, %v2313
    %v2972 = vpack.c.bf16 %v2317, %v2317
    %v2973 = vpack.c.bf16 %v2321, %v2321
    %v2974 = vpack.c.bf16 %v2325, %v2325
    %v2975 = vpack.c.bf16 %v2329, %v2329
    %v2976 = vpack.c.bf16 %v2333, %v2333
    %v2977 = vpack.c.bf16 %v2337, %v2337
    %v2978 = vpack.c.bf16 %v2341, %v2341
    %v2979 = vpack.c.bf16 %v2345, %v2345
    %v2980 = vpack.c.bf16 %v2349, %v2349
    %v2981 = vpack.c.bf16 %v2353, %v2353
    %v2982 = vpack.c.bf16 %v2357, %v2357
    %v2983 = vpack.c.bf16 %v2361, %v2361
    %v2984 = vpack.c.bf16 %v2365, %v2365
    %v2985 = vpack.c.bf16 %v2369, %v2369
    %v2986 = vpack.c.bf16 %v2373, %v2373
    %v2987 = vpack.c.bf16 %v2377, %v2377
    %v2988 = vpack.c.bf16 %v2381, %v2381
    %v2989 = vpack.c.bf16 %v2385, %v2385
    %v2990 = vpack.c.bf16 %v2389, %v2389
    %v2991 = vpack.c.bf16 %v2393, %v2393
    %v2992 = vpack.c.bf16 %v2397, %v2397
    %v2993 = vpack.c.bf16 %v2401, %v2401
    %v2994 = vpack.c.bf16 %v2405, %v2405
    %v2995 = vpack.c.bf16 %v2409, %v2409
    %v2996 = vpack.c.bf16 %v2413, %v2413
    %v2997 = vpack.c.bf16 %v2417, %v2417
    %v2998 = vpack.c.bf16 %v2421, %v2421
    %v2999 = vpack.c.bf16 %v2425, %v2425
    %v3000 = vpack.c.bf16 %v2429, %v2429
    %v3001 = vpack.c.bf16 %v2433, %v2433
    %v3002 = vpack.c.bf16 %v2437, %v2437
    %v3003 = vpack.c.bf16 %v2441, %v2441
    %v3004 = vpack.c.bf16 %v2445, %v2445
    %v3005 = vpack.c.bf16 %v2449, %v2449
    %v3006 = vpack.c.bf16 %v2453, %v2453
    %v3007 = vpack.c.bf16 %v2457, %v2457
    %v3008 = vpack.c.bf16 %v2461, %v2461
    %v3009 = vpack.c.bf16 %v2465, %v2465
    %v3010 = vpack.c.bf16 %v2469, %v2469
    %v3011 = vpack.c.bf16 %v2473, %v2473
    %v3012 = vpack.c.bf16 %v2477, %v2477
    %v3013 = vpack.c.bf16 %v2481, %v2481
    %v3014 = vpack.c.bf16 %v2485, %v2485
    %v3015 = vpack.c.bf16 %v2489, %v2489
    %v3016 = vpack.c.bf16 %v2493, %v2493
    %v3017 = vpack.c.bf16 %v2497, %v2497
    %v3018 = vpack.c.bf16 %v2501, %v2501
    %v3019 = vpack.c.bf16 %v2505, %v2505
    %v3020 = vpack.c.bf16 %v2509, %v2509
    %v3021 = vpack.c.bf16 %v2513, %v2513
    %v3022 = vpack.c.bf16 %v2517, %v2517
    %v3023 = vpack.c.bf16 %v2521, %v2521
    %v3024 = vpack.c.bf16 %v2525, %v2525
    %v3025 = vpack.c.bf16 %v2529, %v2529
    %v3026 = vpack.c.bf16 %v2533, %v2533
    %v3027 = vpack.c.bf16 %v2537, %v2537
    %v3028 = vpack.c.bf16 %v2541, %v2541
    %v3029 = vpack.c.bf16 %v2545, %v2545
    %v3030 = vpack.c.bf16 %v2549, %v2549
    %v3031 = vpack.c.bf16 %v2553, %v2553
    %v3032 = vpack.c.bf16 %v2557, %v2557
    %v3033 = vpack.c.bf16 %v2561, %v2561
    %v3034 = vpack.c.bf16 %v2565, %v2565
    %v3035 = vpack.c.bf16 %v2569, %v2569
    %v3036 = vpack.c.bf16 %v2573, %v2573
    %v3037 = vpack.c.bf16 %v2577, %v2577
    %v3038 = vpack.c.bf16 %v2581, %v2581
    %v3039 = vpack.c.bf16 %v2585, %v2585
    %v3040 = vpack.c.bf16 %v2589, %v2589
    %v3041 = vpack.c.bf16 %v2593, %v2593
    %v3042 = vpack.c.bf16 %v2597, %v2597
    %v3043 = vpack.c.bf16 %v2601, %v2601
    %v3044 = vpack.c.bf16 %v2605, %v2605
    %v3045 = vpack.c.bf16 %v2609, %v2609
    %v3046 = vpack.c.bf16 %v2613, %v2613
    %v3047 = vpack.c.bf16 %v2617, %v2617
    %v3048 = vpack.c.bf16 %v2621, %v2621
    %v3049 = vpack.c.bf16 %v2625, %v2625
    %v3050 = vpack.c.bf16 %v2629, %v2629
    %v3051 = vpack.c.bf16 %v2633, %v2633
    %v3052 = vpack.c.bf16 %v2637, %v2637
    %v3053 = vpack.c.bf16 %v2641, %v2641
    %v3054 = vpack.c.bf16 %v2645, %v2645
    %v3055 = vpack.c.bf16 %v2649, %v2649
    %v3056 = vpack.c.bf16 %v2653, %v2653
    %v3057 = vpack.c.bf16 %v2657, %v2657
    %v3058 = vpack.c.bf16 %v2661, %v2661
    %v3059 = vpack.c.bf16 %v2665, %v2665
    %v3060 = vpack.c.bf16 %v2669, %v2669
    %v3061 = vpack.c.bf16 %v2673, %v2673
    %v3062 = vpack.c.bf16 %v2677, %v2677
    %v3063 = vpack.c.bf16 %v2681, %v2681
    %v3064 = vpack.c.bf16 %v2685, %v2685
    %v3065 = vpack.c.bf16 %v2689, %v2689
    %v3066 = vpack.c.bf16 %v2693, %v2693
    %v3067 = vpack.c.bf16 %v2697, %v2697
    %v3068 = vpack.c.bf16 %v2701, %v2701
    %v3069 = vpack.c.bf16 %v2705, %v2705
    %v3070 = vpack.c.bf16 %v2709, %v2709
    %v3071 = vpack.c.bf16 %v2713, %v2713
    %v3072 = vpack.c.bf16 %v2717, %v2717
    %v3073 = vpack.c.bf16 %v2721, %v2721
    %v3075 = vlaneseq
    %v3076 = vshrl.u32 %v3075, 7
    %v3077 = vsub.s32 0, %v3076
    %v3078 = vrot.slane %v360, %v3077
    %v3079 = vlaneseq
    %v3080 = vshrl.u32 %v3079, 7
    %v3081 = vsub.s32 1, %v3080
    %v3082 = vrot.slane %v360, %v3081
    %v3083 = vlaneseq
    %v3084 = vshrl.u32 %v3083, 7
    %v3085 = vsub.s32 2, %v3084
    %v3086 = vrot.slane %v360, %v3085
    %v3087 = vlaneseq
    %v3088 = vshrl.u32 %v3087, 7
    %v3089 = vsub.s32 3, %v3088
    %v3090 = vrot.slane %v360, %v3089
    %v3271 = vunpack.c.l.b16 %v2898
    %v3272 = vunpack.c.l.b16 %v2899
    %v3273 = vunpack.c.l.b16 %v2900
    %v3274 = vunpack.c.l.b16 %v2901
    %v3275 = vunpack.c.l.b16 %v2902
    %v3276 = vunpack.c.l.b16 %v2903
    %v3277 = vunpack.c.l.b16 %v2904
    %v3278 = vunpack.c.l.b16 %v2905
    %v3279 = vunpack.c.l.b16 %v2906
    %v3280 = vunpack.c.l.b16 %v2907
    %v3281 = vunpack.c.l.b16 %v2908
    %v3282 = vunpack.c.l.b16 %v2909
    %v3283 = vunpack.c.l.b16 %v2910
    %v3284 = vunpack.c.l.b16 %v2911
    %v3285 = vunpack.c.l.b16 %v2912
    %v3286 = vunpack.c.l.b16 %v2913
    %v3287 = vunpack.c.l.b16 %v2914
    %v3288 = vunpack.c.l.b16 %v2915
    %v3289 = vunpack.c.l.b16 %v2916
    %v3290 = vunpack.c.l.b16 %v2917
    %v3291 = vunpack.c.l.b16 %v2918
    %v3292 = vunpack.c.l.b16 %v2919
    %v3293 = vunpack.c.l.b16 %v2920
    %v3294 = vunpack.c.l.b16 %v2921
    %v3295 = vunpack.c.l.b16 %v2922
    %v3296 = vunpack.c.l.b16 %v2923
    %v3297 = vunpack.c.l.b16 %v2924
    %v3298 = vunpack.c.l.b16 %v2925
    %v3299 = vunpack.c.l.b16 %v2926
    %v3300 = vunpack.c.l.b16 %v2927
    %v3301 = vunpack.c.l.b16 %v2928
    %v3302 = vunpack.c.l.b16 %v2929
    %v3303 = vunpack.c.l.b16 %v2930
    %v3304 = vunpack.c.l.b16 %v2931
    %v3305 = vunpack.c.l.b16 %v2932
    %v3306 = vunpack.c.l.b16 %v2933
    %v3307 = vunpack.c.l.b16 %v2934
    %v3308 = vunpack.c.l.b16 %v2935
    %v3309 = vunpack.c.l.b16 %v2936
    %v3310 = vunpack.c.l.b16 %v2937
    %v3311 = vunpack.c.l.b16 %v2938
    %v3312 = vunpack.c.l.b16 %v2939
    %v3313 = vunpack.c.l.b16 %v2940
    %v3314 = vunpack.c.l.b16 %v2941
    %v3315 = vunpack.c.l.b16 %v2942
    %v3316 = vunpack.c.l.b16 %v2943
    %v3317 = vunpack.c.l.b16 %v2944
    %v3318 = vunpack.c.l.b16 %v2945
    %v3319 = vunpack.c.l.b16 %v2946
    %v3320 = vunpack.c.l.b16 %v2947
    %v3321 = vunpack.c.l.b16 %v2948
    %v3322 = vunpack.c.l.b16 %v2949
    %v3323 = vunpack.c.l.b16 %v2950
    %v3324 = vunpack.c.l.b16 %v2951
    %v3325 = vunpack.c.l.b16 %v2952
    %v3326 = vunpack.c.l.b16 %v2953
    %v3327 = vunpack.c.l.b16 %v2954
    %v3328 = vunpack.c.l.b16 %v2955
    %v3329 = vunpack.c.l.b16 %v2956
    %v3330 = vunpack.c.l.b16 %v2957
    %v3331 = vunpack.c.l.b16 %v2958
    %v3332 = vunpack.c.l.b16 %v2959
    %v3333 = vunpack.c.l.b16 %v2960
    %v3334 = vunpack.c.l.b16 %v2961
    %v3335 = vunpack.c.l.b16 %v2962
    %v3336 = vunpack.c.l.b16 %v2963
    %v3337 = vunpack.c.l.b16 %v2964
    %v3338 = vunpack.c.l.b16 %v2965
    %v3339 = vunpack.c.l.b16 %v2966
    %v3340 = vunpack.c.l.b16 %v2967
    %v3341 = vunpack.c.l.b16 %v2968
    %v3342 = vunpack.c.l.b16 %v2969
    %v3343 = vunpack.c.l.b16 %v2970
    %v3344 = vunpack.c.l.b16 %v2971
    %v3345 = vunpack.c.l.b16 %v2972
    %v3346 = vunpack.c.l.b16 %v2973
    %v3347 = vunpack.c.l.b16 %v2974
    %v3348 = vunpack.c.l.b16 %v2975
    %v3349 = vunpack.c.l.b16 %v2976
    %v3350 = vunpack.c.l.b16 %v2977
    %v3351 = vunpack.c.l.b16 %v2978
    %v3352 = vunpack.c.l.b16 %v2979
    %v3353 = vunpack.c.l.b16 %v2980
    %v3354 = vunpack.c.l.b16 %v2981
    %v3355 = vunpack.c.l.b16 %v2982
    %v3356 = vunpack.c.l.b16 %v2983
    %v3357 = vunpack.c.l.b16 %v2984
    %v3358 = vunpack.c.l.b16 %v2985
    %v3359 = vunpack.c.l.b16 %v2986
    %v3360 = vunpack.c.l.b16 %v2987
    %v3361 = vunpack.c.l.b16 %v2988
    %v3362 = vunpack.c.l.b16 %v2989
    %v3363 = vunpack.c.l.b16 %v2990
    %v3364 = vunpack.c.l.b16 %v2991
    %v3365 = vunpack.c.l.b16 %v2992
    %v3366 = vunpack.c.l.b16 %v2993
    %v3367 = vunpack.c.l.b16 %v2994
    %v3368 = vunpack.c.l.b16 %v2995
    %v3369 = vunpack.c.l.b16 %v2996
    %v3370 = vunpack.c.l.b16 %v2997
    %v3371 = vunpack.c.l.b16 %v2998
    %v3372 = vunpack.c.l.b16 %v2999
    %v3373 = vunpack.c.l.b16 %v3000
    %v3374 = vunpack.c.l.b16 %v3001
    %v3375 = vunpack.c.l.b16 %v3002
    %v3376 = vunpack.c.l.b16 %v3003
    %v3377 = vunpack.c.l.b16 %v3004
    %v3378 = vunpack.c.l.b16 %v3005
    %v3379 = vunpack.c.l.b16 %v3006
    %v3380 = vunpack.c.l.b16 %v3007
    %v3381 = vunpack.c.l.b16 %v3008
    %v3382 = vunpack.c.l.b16 %v3009
    %v3383 = vunpack.c.l.b16 %v3010
    %v3384 = vunpack.c.l.b16 %v3011
    %v3385 = vunpack.c.l.b16 %v3012
    %v3386 = vunpack.c.l.b16 %v3013
    %v3387 = vunpack.c.l.b16 %v3014
    %v3388 = vunpack.c.l.b16 %v3015
    %v3389 = vunpack.c.l.b16 %v3016
    %v3390 = vunpack.c.l.b16 %v3017
    %v3391 = vunpack.c.l.b16 %v3018
    %v3392 = vunpack.c.l.b16 %v3019
    %v3393 = vunpack.c.l.b16 %v3020
    %v3394 = vunpack.c.l.b16 %v3021
    %v3395 = vunpack.c.l.b16 %v3022
    %v3396 = vunpack.c.l.b16 %v3023
    %v3397 = vunpack.c.l.b16 %v3024
    %v3398 = vunpack.c.l.b16 %v3025
    %v3399 = vunpack.c.l.b16 %v3026
    %v3400 = vunpack.c.l.b16 %v3027
    %v3401 = vunpack.c.l.b16 %v3028
    %v3402 = vunpack.c.l.b16 %v3029
    %v3403 = vunpack.c.l.b16 %v3030
    %v3404 = vunpack.c.l.b16 %v3031
    %v3405 = vunpack.c.l.b16 %v3032
    %v3406 = vunpack.c.l.b16 %v3033
    %v3407 = vunpack.c.l.b16 %v3034
    %v3408 = vunpack.c.l.b16 %v3035
    %v3409 = vunpack.c.l.b16 %v3036
    %v3410 = vunpack.c.l.b16 %v3037
    %v3411 = vunpack.c.l.b16 %v3038
    %v3412 = vunpack.c.l.b16 %v3039
    %v3413 = vunpack.c.l.b16 %v3040
    %v3414 = vunpack.c.l.b16 %v3041
    %v3415 = vunpack.c.l.b16 %v3042
    %v3416 = vunpack.c.l.b16 %v3043
    %v3417 = vunpack.c.l.b16 %v3044
    %v3418 = vunpack.c.l.b16 %v3045
    %v3419 = vunpack.c.l.b16 %v3046
    %v3420 = vunpack.c.l.b16 %v3047
    %v3421 = vunpack.c.l.b16 %v3048
    %v3422 = vunpack.c.l.b16 %v3049
    %v3423 = vunpack.c.l.b16 %v3050
    %v3424 = vunpack.c.l.b16 %v3051
    %v3425 = vunpack.c.l.b16 %v3052
    %v3426 = vunpack.c.l.b16 %v3053
    %v3427 = vunpack.c.l.b16 %v3054
    %v3428 = vunpack.c.l.b16 %v3055
    %v3429 = vunpack.c.l.b16 %v3056
    %v3430 = vunpack.c.l.b16 %v3057
    %v3431 = vunpack.c.l.b16 %v3058
    %v3432 = vunpack.c.l.b16 %v3059
    %v3433 = vunpack.c.l.b16 %v3060
    %v3434 = vunpack.c.l.b16 %v3061
    %v3435 = vunpack.c.l.b16 %v3062
    %v3436 = vunpack.c.l.b16 %v3063
    %v3437 = vunpack.c.l.b16 %v3064
    %v3438 = vunpack.c.l.b16 %v3065
    %v3439 = vunpack.c.l.b16 %v3066
    %v3440 = vunpack.c.l.b16 %v3067
    %v3441 = vunpack.c.l.b16 %v3068
    %v3442 = vunpack.c.l.b16 %v3069
    %v3443 = vunpack.c.l.b16 %v3070
    %v3444 = vunpack.c.l.b16 %v3071
    %v3445 = vunpack.c.l.b16 %v3072
    %v3446 = vunpack.c.l.b16 %v3073
    %v3447 = vrot.slane %v3279, 7
    %vm3448 = vcmask 1041409
    %v3449 = vsel %vm3448, %v3447, %v3271
    %v3450 = vrot.slane %v3287, 6
    %vm3451 = vcmask 1042434
    %v3452 = vsel %vm3451, %v3450, %v3449
    %v3453 = vrot.slane %v3295, 5
    %vm3454 = vcmask 1043459
    %v3455 = vsel %vm3454, %v3453, %v3452
    %v3456 = vrot.slane %v3303, 4
    %vm3457 = vcmask 1044484
    %v3458 = vsel %vm3457, %v3456, %v3455
    %v3459 = vrot.slane %v3311, 3
    %vm3460 = vcmask 1045509
    %v3461 = vsel %vm3460, %v3459, %v3458
    %v3462 = vrot.slane %v3319, 2
    %vm3463 = vcmask 1046534
    %v3464 = vsel %vm3463, %v3462, %v3461
    %v3465 = vrot.slane %v3327, 1
    %vm3466 = vcmask 1047559
    %v3467 = vsel %vm3466, %v3465, %v3464
    %v3468 = vrot.slane %v3280, 7
    %v3469 = vsel %vm3448, %v3468, %v3272
    %v3470 = vrot.slane %v3288, 6
    %v3471 = vsel %vm3451, %v3470, %v3469
    %v3472 = vrot.slane %v3296, 5
    %v3473 = vsel %vm3454, %v3472, %v3471
    %v3474 = vrot.slane %v3304, 4
    %v3475 = vsel %vm3457, %v3474, %v3473
    %v3476 = vrot.slane %v3312, 3
    %v3477 = vsel %vm3460, %v3476, %v3475
    %v3478 = vrot.slane %v3320, 2
    %v3479 = vsel %vm3463, %v3478, %v3477
    %v3480 = vrot.slane %v3328, 1
    %v3481 = vsel %vm3466, %v3480, %v3479
    %v3482 = vrot.slane %v3281, 7
    %v3483 = vsel %vm3448, %v3482, %v3273
    %v3484 = vrot.slane %v3289, 6
    %v3485 = vsel %vm3451, %v3484, %v3483
    %v3486 = vrot.slane %v3297, 5
    %v3487 = vsel %vm3454, %v3486, %v3485
    %v3488 = vrot.slane %v3305, 4
    %v3489 = vsel %vm3457, %v3488, %v3487
    %v3490 = vrot.slane %v3313, 3
    %v3491 = vsel %vm3460, %v3490, %v3489
    %v3492 = vrot.slane %v3321, 2
    %v3493 = vsel %vm3463, %v3492, %v3491
    %v3494 = vrot.slane %v3329, 1
    %v3495 = vsel %vm3466, %v3494, %v3493
    %v3496 = vrot.slane %v3282, 7
    %v3497 = vsel %vm3448, %v3496, %v3274
    %v3498 = vrot.slane %v3290, 6
    %v3499 = vsel %vm3451, %v3498, %v3497
    %v3500 = vrot.slane %v3298, 5
    %v3501 = vsel %vm3454, %v3500, %v3499
    %v3502 = vrot.slane %v3306, 4
    %v3503 = vsel %vm3457, %v3502, %v3501
    %v3504 = vrot.slane %v3314, 3
    %v3505 = vsel %vm3460, %v3504, %v3503
    %v3506 = vrot.slane %v3322, 2
    %v3507 = vsel %vm3463, %v3506, %v3505
    %v3508 = vrot.slane %v3330, 1
    %v3509 = vsel %vm3466, %v3508, %v3507
    %v3510 = vrot.slane %v3283, 7
    %v3511 = vsel %vm3448, %v3510, %v3275
    %v3512 = vrot.slane %v3291, 6
    %v3513 = vsel %vm3451, %v3512, %v3511
    %v3514 = vrot.slane %v3299, 5
    %v3515 = vsel %vm3454, %v3514, %v3513
    %v3516 = vrot.slane %v3307, 4
    %v3517 = vsel %vm3457, %v3516, %v3515
    %v3518 = vrot.slane %v3315, 3
    %v3519 = vsel %vm3460, %v3518, %v3517
    %v3520 = vrot.slane %v3323, 2
    %v3521 = vsel %vm3463, %v3520, %v3519
    %v3522 = vrot.slane %v3331, 1
    %v3523 = vsel %vm3466, %v3522, %v3521
    %v3524 = vrot.slane %v3284, 7
    %v3525 = vsel %vm3448, %v3524, %v3276
    %v3526 = vrot.slane %v3292, 6
    %v3527 = vsel %vm3451, %v3526, %v3525
    %v3528 = vrot.slane %v3300, 5
    %v3529 = vsel %vm3454, %v3528, %v3527
    %v3530 = vrot.slane %v3308, 4
    %v3531 = vsel %vm3457, %v3530, %v3529
    %v3532 = vrot.slane %v3316, 3
    %v3533 = vsel %vm3460, %v3532, %v3531
    %v3534 = vrot.slane %v3324, 2
    %v3535 = vsel %vm3463, %v3534, %v3533
    %v3536 = vrot.slane %v3332, 1
    %v3537 = vsel %vm3466, %v3536, %v3535
    %v3538 = vrot.slane %v3285, 7
    %v3539 = vsel %vm3448, %v3538, %v3277
    %v3540 = vrot.slane %v3293, 6
    %v3541 = vsel %vm3451, %v3540, %v3539
    %v3542 = vrot.slane %v3301, 5
    %v3543 = vsel %vm3454, %v3542, %v3541
    %v3544 = vrot.slane %v3309, 4
    %v3545 = vsel %vm3457, %v3544, %v3543
    %v3546 = vrot.slane %v3317, 3
    %v3547 = vsel %vm3460, %v3546, %v3545
    %v3548 = vrot.slane %v3325, 2
    %v3549 = vsel %vm3463, %v3548, %v3547
    %v3550 = vrot.slane %v3333, 1
    %v3551 = vsel %vm3466, %v3550, %v3549
    %v3552 = vrot.slane %v3286, 7
    %v3553 = vsel %vm3448, %v3552, %v3278
    %v3554 = vrot.slane %v3294, 6
    %v3555 = vsel %vm3451, %v3554, %v3553
    %v3556 = vrot.slane %v3302, 5
    %v3557 = vsel %vm3454, %v3556, %v3555
    %v3558 = vrot.slane %v3310, 4
    %v3559 = vsel %vm3457, %v3558, %v3557
    %v3560 = vrot.slane %v3318, 3
    %v3561 = vsel %vm3460, %v3560, %v3559
    %v3562 = vrot.slane %v3326, 2
    %v3563 = vsel %vm3463, %v3562, %v3561
    %v3564 = vrot.slane %v3334, 1
    %v3565 = vsel %vm3466, %v3564, %v3563
    %v3566 = vrot.slane %v3343, 7
    %v3567 = vsel %vm3448, %v3566, %v3335
    %v3568 = vrot.slane %v3351, 6
    %v3569 = vsel %vm3451, %v3568, %v3567
    %v3570 = vrot.slane %v3359, 5
    %v3571 = vsel %vm3454, %v3570, %v3569
    %v3572 = vrot.slane %v3367, 4
    %v3573 = vsel %vm3457, %v3572, %v3571
    %v3574 = vrot.slane %v3375, 3
    %v3575 = vsel %vm3460, %v3574, %v3573
    %v3576 = vrot.slane %v3383, 2
    %v3577 = vsel %vm3463, %v3576, %v3575
    %v3578 = vrot.slane %v3391, 1
    %v3579 = vsel %vm3466, %v3578, %v3577
    %v3580 = vrot.slane %v3344, 7
    %v3581 = vsel %vm3448, %v3580, %v3336
    %v3582 = vrot.slane %v3352, 6
    %v3583 = vsel %vm3451, %v3582, %v3581
    %v3584 = vrot.slane %v3360, 5
    %v3585 = vsel %vm3454, %v3584, %v3583
    %v3586 = vrot.slane %v3368, 4
    %v3587 = vsel %vm3457, %v3586, %v3585
    %v3588 = vrot.slane %v3376, 3
    %v3589 = vsel %vm3460, %v3588, %v3587
    %v3590 = vrot.slane %v3384, 2
    %v3591 = vsel %vm3463, %v3590, %v3589
    %v3592 = vrot.slane %v3392, 1
    %v3593 = vsel %vm3466, %v3592, %v3591
    %v3594 = vrot.slane %v3345, 7
    %v3595 = vsel %vm3448, %v3594, %v3337
    %v3596 = vrot.slane %v3353, 6
    %v3597 = vsel %vm3451, %v3596, %v3595
    %v3598 = vrot.slane %v3361, 5
    %v3599 = vsel %vm3454, %v3598, %v3597
    %v3600 = vrot.slane %v3369, 4
    %v3601 = vsel %vm3457, %v3600, %v3599
    %v3602 = vrot.slane %v3377, 3
    %v3603 = vsel %vm3460, %v3602, %v3601
    %v3604 = vrot.slane %v3385, 2
    %v3605 = vsel %vm3463, %v3604, %v3603
    %v3606 = vrot.slane %v3393, 1
    %v3607 = vsel %vm3466, %v3606, %v3605
    %v3608 = vrot.slane %v3346, 7
    %v3609 = vsel %vm3448, %v3608, %v3338
    %v3610 = vrot.slane %v3354, 6
    %v3611 = vsel %vm3451, %v3610, %v3609
    %v3612 = vrot.slane %v3362, 5
    %v3613 = vsel %vm3454, %v3612, %v3611
    %v3614 = vrot.slane %v3370, 4
    %v3615 = vsel %vm3457, %v3614, %v3613
    %v3616 = vrot.slane %v3378, 3
    %v3617 = vsel %vm3460, %v3616, %v3615
    %v3618 = vrot.slane %v3386, 2
    %v3619 = vsel %vm3463, %v3618, %v3617
    %v3620 = vrot.slane %v3394, 1
    %v3621 = vsel %vm3466, %v3620, %v3619
    %v3622 = vrot.slane %v3347, 7
    %v3623 = vsel %vm3448, %v3622, %v3339
    %v3624 = vrot.slane %v3355, 6
    %v3625 = vsel %vm3451, %v3624, %v3623
    %v3626 = vrot.slane %v3363, 5
    %v3627 = vsel %vm3454, %v3626, %v3625
    %v3628 = vrot.slane %v3371, 4
    %v3629 = vsel %vm3457, %v3628, %v3627
    %v3630 = vrot.slane %v3379, 3
    %v3631 = vsel %vm3460, %v3630, %v3629
    %v3632 = vrot.slane %v3387, 2
    %v3633 = vsel %vm3463, %v3632, %v3631
    %v3634 = vrot.slane %v3395, 1
    %v3635 = vsel %vm3466, %v3634, %v3633
    %v3636 = vrot.slane %v3348, 7
    %v3637 = vsel %vm3448, %v3636, %v3340
    %v3638 = vrot.slane %v3356, 6
    %v3639 = vsel %vm3451, %v3638, %v3637
    %v3640 = vrot.slane %v3364, 5
    %v3641 = vsel %vm3454, %v3640, %v3639
    %v3642 = vrot.slane %v3372, 4
    %v3643 = vsel %vm3457, %v3642, %v3641
    %v3644 = vrot.slane %v3380, 3
    %v3645 = vsel %vm3460, %v3644, %v3643
    %v3646 = vrot.slane %v3388, 2
    %v3647 = vsel %vm3463, %v3646, %v3645
    %v3648 = vrot.slane %v3396, 1
    %v3649 = vsel %vm3466, %v3648, %v3647
    %v3650 = vrot.slane %v3349, 7
    %v3651 = vsel %vm3448, %v3650, %v3341
    %v3652 = vrot.slane %v3357, 6
    %v3653 = vsel %vm3451, %v3652, %v3651
    %v3654 = vrot.slane %v3365, 5
    %v3655 = vsel %vm3454, %v3654, %v3653
    %v3656 = vrot.slane %v3373, 4
    %v3657 = vsel %vm3457, %v3656, %v3655
    %v3658 = vrot.slane %v3381, 3
    %v3659 = vsel %vm3460, %v3658, %v3657
    %v3660 = vrot.slane %v3389, 2
    %v3661 = vsel %vm3463, %v3660, %v3659
    %v3662 = vrot.slane %v3397, 1
    %v3663 = vsel %vm3466, %v3662, %v3661
    %v3664 = vrot.slane %v3350, 7
    %v3665 = vsel %vm3448, %v3664, %v3342
    %v3666 = vrot.slane %v3358, 6
    %v3667 = vsel %vm3451, %v3666, %v3665
    %v3668 = vrot.slane %v3366, 5
    %v3669 = vsel %vm3454, %v3668, %v3667
    %v3670 = vrot.slane %v3374, 4
    %v3671 = vsel %vm3457, %v3670, %v3669
    %v3672 = vrot.slane %v3382, 3
    %v3673 = vsel %vm3460, %v3672, %v3671
    %v3674 = vrot.slane %v3390, 2
    %v3675 = vsel %vm3463, %v3674, %v3673
    %v3676 = vrot.slane %v3398, 1
    %v3677 = vsel %vm3466, %v3676, %v3675
    %v3678 = vrot.slane %v3407, 7
    %v3679 = vsel %vm3448, %v3678, %v3399
    %v3680 = vrot.slane %v3415, 6
    %v3681 = vsel %vm3451, %v3680, %v3679
    %v3682 = vrot.slane %v3423, 5
    %v3683 = vsel %vm3454, %v3682, %v3681
    %v3684 = vrot.slane %v3431, 4
    %v3685 = vsel %vm3457, %v3684, %v3683
    %v3686 = vrot.slane %v3439, 3
    %v3687 = vsel %vm3460, %v3686, %v3685
    %v3688 = vrot.slane %v3408, 7
    %v3689 = vsel %vm3448, %v3688, %v3400
    %v3690 = vrot.slane %v3416, 6
    %v3691 = vsel %vm3451, %v3690, %v3689
    %v3692 = vrot.slane %v3424, 5
    %v3693 = vsel %vm3454, %v3692, %v3691
    %v3694 = vrot.slane %v3432, 4
    %v3695 = vsel %vm3457, %v3694, %v3693
    %v3696 = vrot.slane %v3440, 3
    %v3697 = vsel %vm3460, %v3696, %v3695
    %v3698 = vrot.slane %v3409, 7
    %v3699 = vsel %vm3448, %v3698, %v3401
    %v3700 = vrot.slane %v3417, 6
    %v3701 = vsel %vm3451, %v3700, %v3699
    %v3702 = vrot.slane %v3425, 5
    %v3703 = vsel %vm3454, %v3702, %v3701
    %v3704 = vrot.slane %v3433, 4
    %v3705 = vsel %vm3457, %v3704, %v3703
    %v3706 = vrot.slane %v3441, 3
    %v3707 = vsel %vm3460, %v3706, %v3705
    %v3708 = vrot.slane %v3410, 7
    %v3709 = vsel %vm3448, %v3708, %v3402
    %v3710 = vrot.slane %v3418, 6
    %v3711 = vsel %vm3451, %v3710, %v3709
    %v3712 = vrot.slane %v3426, 5
    %v3713 = vsel %vm3454, %v3712, %v3711
    %v3714 = vrot.slane %v3434, 4
    %v3715 = vsel %vm3457, %v3714, %v3713
    %v3716 = vrot.slane %v3442, 3
    %v3717 = vsel %vm3460, %v3716, %v3715
    %v3718 = vrot.slane %v3411, 7
    %v3719 = vsel %vm3448, %v3718, %v3403
    %v3720 = vrot.slane %v3419, 6
    %v3721 = vsel %vm3451, %v3720, %v3719
    %v3722 = vrot.slane %v3427, 5
    %v3723 = vsel %vm3454, %v3722, %v3721
    %v3724 = vrot.slane %v3435, 4
    %v3725 = vsel %vm3457, %v3724, %v3723
    %v3726 = vrot.slane %v3443, 3
    %v3727 = vsel %vm3460, %v3726, %v3725
    %v3728 = vrot.slane %v3412, 7
    %v3729 = vsel %vm3448, %v3728, %v3404
    %v3730 = vrot.slane %v3420, 6
    %v3731 = vsel %vm3451, %v3730, %v3729
    %v3732 = vrot.slane %v3428, 5
    %v3733 = vsel %vm3454, %v3732, %v3731
    %v3734 = vrot.slane %v3436, 4
    %v3735 = vsel %vm3457, %v3734, %v3733
    %v3736 = vrot.slane %v3444, 3
    %v3737 = vsel %vm3460, %v3736, %v3735
    %v3738 = vrot.slane %v3413, 7
    %v3739 = vsel %vm3448, %v3738, %v3405
    %v3740 = vrot.slane %v3421, 6
    %v3741 = vsel %vm3451, %v3740, %v3739
    %v3742 = vrot.slane %v3429, 5
    %v3743 = vsel %vm3454, %v3742, %v3741
    %v3744 = vrot.slane %v3437, 4
    %v3745 = vsel %vm3457, %v3744, %v3743
    %v3746 = vrot.slane %v3445, 3
    %v3747 = vsel %vm3460, %v3746, %v3745
    %v3748 = vrot.slane %v3414, 7
    %v3749 = vsel %vm3448, %v3748, %v3406
    %v3750 = vrot.slane %v3422, 6
    %v3751 = vsel %vm3451, %v3750, %v3749
    %v3752 = vrot.slane %v3430, 5
    %v3753 = vsel %vm3454, %v3752, %v3751
    %v3754 = vrot.slane %v3438, 4
    %v3755 = vsel %vm3457, %v3754, %v3753
    %v3756 = vrot.slane %v3446, 3
    %v3757 = vsel %vm3460, %v3756, %v3755
    %v3758 = vpack.c.b16 %v3579, %v3467
    %v3759 = vpack.c.b16 %v3593, %v3481
    %v3760 = vpack.c.b16 %v3607, %v3495
    %v3761 = vpack.c.b16 %v3621, %v3509
    %v3762 = vpack.c.b16 %v3635, %v3523
    %v3763 = vpack.c.b16 %v3649, %v3537
    %v3764 = vpack.c.b16 %v3663, %v3551
    %v3765 = vpack.c.b16 %v3677, %v3565
    %v3766 = vpack.c.b16 %v3687, %v3687
    %v3767 = vpack.c.b16 %v3697, %v3697
    %v3768 = vpack.c.b16 %v3707, %v3707
    %v3769 = vpack.c.b16 %v3717, %v3717
    %v3770 = vpack.c.b16 %v3727, %v3727
    %v3771 = vpack.c.b16 %v3737, %v3737
    %v3772 = vpack.c.b16 %v3747, %v3747
    %v3773 = vpack.c.b16 %v3757, %v3757
    %v4046 = vunpack.c.l.b16 %v104
    %v4047 = vunpack.c.h.b16 %v104
    %v4048 = vunpack.c.l.b16 %v105
    %v4049 = vunpack.c.h.b16 %v105
    %v4050 = vunpack.c.l.b16 %v106
    %v4051 = vunpack.c.h.b16 %v106
    %v4052 = vunpack.c.l.b16 %v107
    %v4053 = vunpack.c.h.b16 %v107
    %v4054 = vunpack.c.l.b16 %v108
    %v4055 = vunpack.c.h.b16 %v108
    %v4056 = vunpack.c.l.b16 %v109
    %v4057 = vunpack.c.h.b16 %v109
    %v4058 = vunpack.c.l.b16 %v110
    %v4059 = vunpack.c.h.b16 %v110
    %v4060 = vunpack.c.l.b16 %v111
    %v4061 = vunpack.c.h.b16 %v111
    %v4062 = vunpack.c.l.b16 %v112
    %v4063 = vunpack.c.h.b16 %v112
    %v4064 = vunpack.c.l.b16 %v113
    %v4065 = vunpack.c.h.b16 %v113
    %v4066 = vunpack.c.l.b16 %v114
    %v4067 = vunpack.c.h.b16 %v114
    %v4068 = vunpack.c.l.b16 %v115
    %v4069 = vunpack.c.h.b16 %v115
    %v4070 = vunpack.c.l.b16 %v116
    %v4071 = vunpack.c.h.b16 %v116
    %v4072 = vunpack.c.l.b16 %v117
    %v4073 = vunpack.c.h.b16 %v117
    %v4074 = vunpack.c.l.b16 %v118
    %v4075 = vunpack.c.h.b16 %v118
    %v4076 = vunpack.c.l.b16 %v119
    %v4077 = vunpack.c.h.b16 %v119
    %v4078 = vunpack.c.l.b16 %v120
    %v4079 = vunpack.c.h.b16 %v120
    %v4080 = vunpack.c.l.b16 %v121
    %v4081 = vunpack.c.h.b16 %v121
    %v4082 = vunpack.c.l.b16 %v122
    %v4083 = vunpack.c.h.b16 %v122
    %v4084 = vunpack.c.l.b16 %v123
    %v4085 = vunpack.c.h.b16 %v123
    %v4086 = vunpack.c.l.b16 %v124
    %v4087 = vunpack.c.h.b16 %v124
    %v4088 = vunpack.c.l.b16 %v125
    %v4089 = vunpack.c.h.b16 %v125
    %v4090 = vunpack.c.l.b16 %v126
    %v4091 = vunpack.c.h.b16 %v126
    %v4092 = vunpack.c.l.b16 %v127
    %v4093 = vunpack.c.h.b16 %v127
    %v4094 = vunpack.c.l.b16 %v128
    %v4095 = vunpack.c.h.b16 %v128
    %v4096 = vunpack.c.l.b16 %v129
    %v4097 = vunpack.c.h.b16 %v129
    %v4098 = vunpack.c.l.b16 %v130
    %v4099 = vunpack.c.h.b16 %v130
    %v4100 = vunpack.c.l.b16 %v131
    %v4101 = vunpack.c.h.b16 %v131
    %v4102 = vunpack.c.l.b16 %v132
    %v4103 = vunpack.c.h.b16 %v132
    %v4104 = vunpack.c.l.b16 %v133
    %v4105 = vunpack.c.h.b16 %v133
    %v4106 = vunpack.c.l.b16 %v134
    %v4107 = vunpack.c.h.b16 %v134
    %v4108 = vunpack.c.l.b16 %v135
    %v4109 = vunpack.c.h.b16 %v135
    %v4110 = vunpack.c.l.b16 %v136
    %v4111 = vunpack.c.h.b16 %v136
    %v4112 = vunpack.c.l.b16 %v137
    %v4113 = vunpack.c.h.b16 %v137
    %v4114 = vunpack.c.l.b16 %v138
    %v4115 = vunpack.c.h.b16 %v138
    %v4116 = vunpack.c.l.b16 %v139
    %v4117 = vunpack.c.h.b16 %v139
    %v4118 = vunpack.c.l.b16 %v140
    %v4119 = vunpack.c.h.b16 %v140
    %v4120 = vunpack.c.l.b16 %v141
    %v4121 = vunpack.c.h.b16 %v141
    %v4122 = vunpack.c.l.b16 %v142
    %v4123 = vunpack.c.h.b16 %v142
    %v4124 = vunpack.c.l.b16 %v143
    %v4125 = vunpack.c.h.b16 %v143
    %v4126 = vunpack.c.l.b16 %v144
    %v4127 = vunpack.c.h.b16 %v144
    %v4128 = vunpack.c.l.b16 %v145
    %v4129 = vunpack.c.h.b16 %v145
    %v4130 = vunpack.c.l.b16 %v146
    %v4131 = vunpack.c.h.b16 %v146
    %v4132 = vunpack.c.l.b16 %v147
    %v4133 = vunpack.c.h.b16 %v147
    %v4134 = vunpack.c.l.b16 %v148
    %v4135 = vunpack.c.h.b16 %v148
    %v4136 = vunpack.c.l.b16 %v149
    %v4137 = vunpack.c.h.b16 %v149
    %v4138 = vunpack.c.l.b16 %v150
    %v4139 = vunpack.c.h.b16 %v150
    %v4140 = vunpack.c.l.b16 %v151
    %v4141 = vunpack.c.h.b16 %v151
    %v4142 = vunpack.c.l.b16 %v152
    %v4143 = vunpack.c.h.b16 %v152
    %v4144 = vunpack.c.l.b16 %v153
    %v4145 = vunpack.c.h.b16 %v153
    %v4146 = vunpack.c.l.b16 %v154
    %v4147 = vunpack.c.h.b16 %v154
    %v4148 = vunpack.c.l.b16 %v155
    %v4149 = vunpack.c.h.b16 %v155
    %v4150 = vunpack.c.l.b16 %v156
    %v4151 = vunpack.c.h.b16 %v156
    %v4152 = vunpack.c.l.b16 %v157
    %v4153 = vunpack.c.h.b16 %v157
    %v4154 = vunpack.c.l.b16 %v158
    %v4155 = vunpack.c.h.b16 %v158
    %v4156 = vunpack.c.l.b16 %v159
    %v4157 = vunpack.c.h.b16 %v159
    %v4158 = vunpack.c.l.b16 %v160
    %v4159 = vunpack.c.h.b16 %v160
    %v4160 = vunpack.c.l.b16 %v161
    %v4161 = vunpack.c.h.b16 %v161
    %v4162 = vunpack.c.l.b16 %v162
    %v4163 = vunpack.c.h.b16 %v162
    %v4164 = vunpack.c.l.b16 %v163
    %v4165 = vunpack.c.h.b16 %v163
    %v4166 = vunpack.c.l.b16 %v164
    %v4167 = vunpack.c.h.b16 %v164
    %v4168 = vunpack.c.l.b16 %v165
    %v4169 = vunpack.c.h.b16 %v165
    %v4170 = vunpack.c.l.b16 %v166
    %v4171 = vunpack.c.h.b16 %v166
    %v4172 = vunpack.c.l.b16 %v167
    %v4173 = vunpack.c.h.b16 %v167
    %v4174 = vunpack.c.l.b16 %v168
    %v4175 = vunpack.c.h.b16 %v168
    %v4176 = vunpack.c.l.b16 %v169
    %v4177 = vunpack.c.h.b16 %v169
    %v4178 = vunpack.c.l.b16 %v170
    %v4179 = vunpack.c.h.b16 %v170
    %v4180 = vunpack.c.l.b16 %v171
    %v4181 = vunpack.c.h.b16 %v171
    %v4182 = vunpack.c.l.b16 %v172
    %v4183 = vunpack.c.h.b16 %v172
    %v4184 = vunpack.c.l.b16 %v173
    %v4185 = vunpack.c.h.b16 %v173
    %v4186 = vunpack.c.l.b16 %v174
    %v4187 = vunpack.c.h.b16 %v174
    %v4188 = vunpack.c.l.b16 %v175
    %v4189 = vunpack.c.h.b16 %v175
    %v4190 = vunpack.c.l.b16 %v176
    %v4191 = vunpack.c.h.b16 %v176
    %v4192 = vunpack.c.l.b16 %v177
    %v4193 = vunpack.c.h.b16 %v177
    %v4194 = vunpack.c.l.b16 %v178
    %v4195 = vunpack.c.h.b16 %v178
    %v4196 = vunpack.c.l.b16 %v179
    %v4197 = vunpack.c.h.b16 %v179
    %v4198 = vunpack.c.l.b16 %v180
    %v4199 = vunpack.c.h.b16 %v180
    %v4200 = vunpack.c.l.b16 %v181
    %v4201 = vunpack.c.h.b16 %v181
    %v4202 = vunpack.c.l.b16 %v182
    %v4203 = vunpack.c.h.b16 %v182
    %v4204 = vunpack.c.l.b16 %v183
    %v4205 = vunpack.c.h.b16 %v183
    %v4206 = vunpack.c.l.b16 %v184
    %v4207 = vunpack.c.h.b16 %v184
    %v4208 = vunpack.c.l.b16 %v185
    %v4209 = vunpack.c.h.b16 %v185
    %v4210 = vunpack.c.l.b16 %v186
    %v4211 = vunpack.c.h.b16 %v186
    %v4212 = vunpack.c.l.b16 %v187
    %v4213 = vunpack.c.h.b16 %v187
    %v4214 = vunpack.c.l.b16 %v188
    %v4215 = vunpack.c.h.b16 %v188
    %v4216 = vunpack.c.l.b16 %v189
    %v4217 = vunpack.c.h.b16 %v189
    %v4218 = vunpack.c.l.b16 %v190
    %v4219 = vunpack.c.h.b16 %v190
    %v4220 = vunpack.c.l.b16 %v191
    %v4221 = vunpack.c.h.b16 %v191
    %v4222 = vunpack.c.l.b16 %v192
    %v4223 = vunpack.c.h.b16 %v192
    %v4224 = vunpack.c.l.b16 %v193
    %v4225 = vunpack.c.h.b16 %v193
    %v4226 = vunpack.c.l.b16 %v194
    %v4227 = vunpack.c.h.b16 %v194
    %v4228 = vunpack.c.l.b16 %v195
    %v4229 = vunpack.c.h.b16 %v195
    %v4230 = vunpack.c.l.b16 %v196
    %v4231 = vunpack.c.h.b16 %v196
    %v4232 = vunpack.c.l.b16 %v197
    %v4233 = vunpack.c.h.b16 %v197
    %v4234 = vunpack.c.l.b16 %v198
    %v4235 = vunpack.c.h.b16 %v198
    %v4236 = vunpack.c.l.b16 %v199
    %v4237 = vunpack.c.h.b16 %v199
    %v4238 = vunpack.c.l.b16 %v200
    %v4239 = vunpack.c.h.b16 %v200
    %v4240 = vunpack.c.l.b16 %v201
    %v4241 = vunpack.c.h.b16 %v201
    %v4242 = vunpack.c.l.b16 %v202
    %v4243 = vunpack.c.h.b16 %v202
    %v4244 = vunpack.c.l.b16 %v203
    %v4245 = vunpack.c.h.b16 %v203
    %v4246 = vunpack.c.l.b16 %v204
    %v4247 = vunpack.c.h.b16 %v204
    %v4248 = vunpack.c.l.b16 %v205
    %v4249 = vunpack.c.h.b16 %v205
    %v4250 = vunpack.c.l.b16 %v206
    %v4251 = vunpack.c.h.b16 %v206
    %v4252 = vunpack.c.l.b16 %v207
    %v4253 = vunpack.c.h.b16 %v207
    %v4254 = vunpack.c.l.b16 %v208
    %v4255 = vunpack.c.h.b16 %v208
    %v4256 = vunpack.c.l.b16 %v209
    %v4257 = vunpack.c.h.b16 %v209
    %v4258 = vunpack.c.l.b16 %v210
    %v4259 = vunpack.c.h.b16 %v210
    %v4260 = vunpack.c.l.b16 %v211
    %v4261 = vunpack.c.h.b16 %v211
    %v4262 = vunpack.c.l.b16 %v212
    %v4263 = vunpack.c.h.b16 %v212
    %v4264 = vunpack.c.l.b16 %v213
    %v4265 = vunpack.c.h.b16 %v213
    %v4266 = vunpack.c.l.b16 %v214
    %v4267 = vunpack.c.h.b16 %v214
    %v4268 = vunpack.c.l.b16 %v215
    %v4269 = vunpack.c.h.b16 %v215
    %v4270 = vunpack.c.l.b16 %v216
    %v4271 = vunpack.c.h.b16 %v216
    %v4272 = vunpack.c.l.b16 %v217
    %v4273 = vunpack.c.h.b16 %v217
    %v4274 = vunpack.c.l.b16 %v218
    %v4275 = vunpack.c.h.b16 %v218
    %v4276 = vunpack.c.l.b16 %v219
    %v4277 = vunpack.c.h.b16 %v219
    %v4278 = vunpack.c.l.b16 %v220
    %v4279 = vunpack.c.h.b16 %v220
    %v4280 = vunpack.c.l.b16 %v221
    %v4281 = vunpack.c.h.b16 %v221
    %v4282 = vunpack.c.l.b16 %v222
    %v4283 = vunpack.c.h.b16 %v222
    %v4284 = vunpack.c.l.b16 %v223
    %v4285 = vunpack.c.h.b16 %v223
    %v4286 = vunpack.c.l.b16 %v224
    %v4287 = vunpack.c.h.b16 %v224
    %v4288 = vunpack.c.l.b16 %v225
    %v4289 = vunpack.c.h.b16 %v225
    %v4290 = vunpack.c.l.b16 %v226
    %v4291 = vunpack.c.h.b16 %v226
    %v4292 = vunpack.c.l.b16 %v227
    %v4293 = vunpack.c.h.b16 %v227
    %v4294 = vunpack.c.l.b16 %v228
    %v4295 = vunpack.c.h.b16 %v228
    %v4296 = vunpack.c.l.b16 %v229
    %v4297 = vunpack.c.h.b16 %v229
    %v4298 = vunpack.c.l.b16 %v230
    %v4299 = vunpack.c.h.b16 %v230
    %v4300 = vunpack.c.l.b16 %v231
    %v4301 = vunpack.c.h.b16 %v231
    %v4302 = vunpack.c.l.b16 %v232
    %v4303 = vunpack.c.h.b16 %v232
    %v4304 = vunpack.c.l.b16 %v233
    %v4305 = vunpack.c.h.b16 %v233
    %v4306 = vunpack.c.l.b16 %v234
    %v4307 = vunpack.c.h.b16 %v234
    %v4308 = vunpack.c.l.b16 %v235
    %v4309 = vunpack.c.h.b16 %v235
    %v4310 = vunpack.c.l.b16 %v236
    %v4311 = vunpack.c.h.b16 %v236
    %v4312 = vunpack.c.l.b16 %v237
    %v4313 = vunpack.c.h.b16 %v237
    %v4314 = vunpack.c.l.b16 %v238
    %v4315 = vunpack.c.h.b16 %v238
    %v4316 = vunpack.c.l.b16 %v239
    %v4317 = vunpack.c.h.b16 %v239
    %v4318 = vunpack.c.l.b16 %v240
    %v4319 = vunpack.c.h.b16 %v240
    %v4320 = vunpack.c.l.b16 %v241
    %v4321 = vunpack.c.h.b16 %v241
    %v4322 = vunpack.c.l.b16 %v242
    %v4323 = vunpack.c.h.b16 %v242
    %v4324 = vunpack.c.l.b16 %v243
    %v4325 = vunpack.c.h.b16 %v243
    %v4326 = vunpack.c.l.b16 %v244
    %v4327 = vunpack.c.h.b16 %v244
    %v4328 = vunpack.c.l.b16 %v245
    %v4329 = vunpack.c.h.b16 %v245
    %v4330 = vunpack.c.l.b16 %v246
    %v4331 = vunpack.c.h.b16 %v246
    %v4332 = vunpack.c.l.b16 %v247
    %v4333 = vunpack.c.h.b16 %v247
    %v4334 = vunpack.c.l.b16 %v248
    %v4335 = vunpack.c.h.b16 %v248
    %v4336 = vunpack.c.l.b16 %v249
    %v4337 = vunpack.c.h.b16 %v249
    %v4338 = vunpack.c.l.b16 %v250
    %v4339 = vunpack.c.h.b16 %v250
    %v4340 = vunpack.c.l.b16 %v251
    %v4341 = vunpack.c.h.b16 %v251
    %v4342 = vunpack.c.l.b16 %v252
    %v4343 = vunpack.c.h.b16 %v252
    %v4344 = vunpack.c.l.b16 %v253
    %v4345 = vunpack.c.h.b16 %v253
    %v4346 = vunpack.c.l.b16 %v254
    %v4347 = vunpack.c.h.b16 %v254
    %v4348 = vunpack.c.l.b16 %v255
    %v4349 = vunpack.c.h.b16 %v255
    %v4350 = vunpack.c.l.b16 %v256
    %v4351 = vunpack.c.h.b16 %v256
    %v4352 = vunpack.c.l.b16 %v257
    %v4353 = vunpack.c.h.b16 %v257
    %v4354 = vunpack.c.l.b16 %v258
    %v4355 = vunpack.c.h.b16 %v258
    %v4356 = vunpack.c.l.b16 %v259
    %v4357 = vunpack.c.h.b16 %v259
    %v4358 = vunpack.c.l.b16 %v260
    %v4359 = vunpack.c.h.b16 %v260
    %v4360 = vunpack.c.l.b16 %v261
    %v4361 = vunpack.c.h.b16 %v261
    %v4362 = vunpack.c.l.b16 %v262
    %v4363 = vunpack.c.h.b16 %v262
    %v4364 = vunpack.c.l.b16 %v263
    %v4365 = vunpack.c.h.b16 %v263
    %v4366 = vunpack.c.l.b16 %v264
    %v4367 = vunpack.c.h.b16 %v264
    %v4368 = vunpack.c.l.b16 %v265
    %v4369 = vunpack.c.h.b16 %v265
    %v4370 = vunpack.c.l.b16 %v266
    %v4371 = vunpack.c.h.b16 %v266
    %v4372 = vunpack.c.l.b16 %v267
    %v4373 = vunpack.c.h.b16 %v267
    %v4374 = vunpack.c.l.b16 %v268
    %v4375 = vunpack.c.h.b16 %v268
    %v4376 = vunpack.c.l.b16 %v269
    %v4377 = vunpack.c.h.b16 %v269
    %v4378 = vunpack.c.l.b16 %v270
    %v4379 = vunpack.c.h.b16 %v270
    %v4380 = vunpack.c.l.b16 %v271
    %v4381 = vunpack.c.h.b16 %v271
    %v4382 = vunpack.c.l.b16 %v272
    %v4383 = vunpack.c.h.b16 %v272
    %v4384 = vunpack.c.l.b16 %v273
    %v4385 = vunpack.c.h.b16 %v273
    %v4386 = vunpack.c.l.b16 %v274
    %v4387 = vunpack.c.h.b16 %v274
    %v4388 = vunpack.c.l.b16 %v275
    %v4389 = vunpack.c.h.b16 %v275
    %v4390 = vunpack.c.l.b16 %v276
    %v4391 = vunpack.c.h.b16 %v276
    %v4392 = vunpack.c.l.b16 %v277
    %v4393 = vunpack.c.h.b16 %v277
    %v4394 = vunpack.c.l.b16 %v278
    %v4395 = vunpack.c.h.b16 %v278
    %v4396 = vunpack.c.l.b16 %v279
    %v4397 = vunpack.c.h.b16 %v279
    %v4398 = vunpack.c.l.b16 %v280
    %v4399 = vunpack.c.h.b16 %v280
    %v4400 = vunpack.c.l.b16 %v281
    %v4401 = vunpack.c.h.b16 %v281
    %v4402 = vunpack.c.l.b16 %v282
    %v4403 = vunpack.c.h.b16 %v282
    %v4404 = vunpack.c.l.b16 %v283
    %v4405 = vunpack.c.h.b16 %v283
    %v4406 = vunpack.c.l.b16 %v284
    %v4407 = vunpack.c.h.b16 %v284
    %v4408 = vunpack.c.l.b16 %v285
    %v4409 = vunpack.c.h.b16 %v285
    %v4410 = vunpack.c.l.b16 %v286
    %v4411 = vunpack.c.h.b16 %v286
    %v4412 = vunpack.c.l.b16 %v287
    %v4413 = vunpack.c.h.b16 %v287
    %v4414 = vunpack.c.l.b16 %v288
    %v4415 = vunpack.c.h.b16 %v288
    %v4416 = vunpack.c.l.b16 %v289
    %v4417 = vunpack.c.h.b16 %v289
    %v4418 = vunpack.c.l.b16 %v290
    %v4419 = vunpack.c.h.b16 %v290
    %v4420 = vunpack.c.l.b16 %v291
    %v4421 = vunpack.c.h.b16 %v291
    %v4422 = vunpack.c.l.b16 %v292
    %v4423 = vunpack.c.h.b16 %v292
    %v4424 = vunpack.c.l.b16 %v293
    %v4425 = vunpack.c.h.b16 %v293
    %v4426 = vunpack.c.l.b16 %v294
    %v4427 = vunpack.c.h.b16 %v294
    %v4428 = vunpack.c.l.b16 %v295
    %v4429 = vunpack.c.h.b16 %v295
    %v4430 = vunpack.c.l.b16 %v296
    %v4431 = vunpack.c.h.b16 %v296
    %v4432 = vunpack.c.l.b16 %v297
    %v4433 = vunpack.c.h.b16 %v297
    %v4434 = vunpack.c.l.b16 %v298
    %v4435 = vunpack.c.h.b16 %v298
    %v4436 = vunpack.c.l.b16 %v299
    %v4437 = vunpack.c.h.b16 %v299
    %v4438 = vunpack.c.l.b16 %v300
    %v4439 = vunpack.c.h.b16 %v300
    %v4440 = vunpack.c.l.b16 %v301
    %v4441 = vunpack.c.h.b16 %v301
    %v4442 = vunpack.c.l.b16 %v302
    %v4443 = vunpack.c.h.b16 %v302
    %v4444 = vunpack.c.l.b16 %v303
    %v4445 = vunpack.c.h.b16 %v303
    %v4446 = vunpack.c.l.b16 %v304
    %v4447 = vunpack.c.h.b16 %v304
    %v4448 = vunpack.c.l.b16 %v305
    %v4449 = vunpack.c.h.b16 %v305
    %v4450 = vunpack.c.l.b16 %v306
    %v4451 = vunpack.c.h.b16 %v306
    %v4452 = vunpack.c.l.b16 %v307
    %v4453 = vunpack.c.h.b16 %v307
    %v4454 = vunpack.c.l.b16 %v308
    %v4455 = vunpack.c.h.b16 %v308
    %v4456 = vunpack.c.l.b16 %v309
    %v4457 = vunpack.c.h.b16 %v309
    %v4458 = vunpack.c.l.b16 %v310
    %v4459 = vunpack.c.h.b16 %v310
    %v4460 = vunpack.c.l.b16 %v311
    %v4461 = vunpack.c.h.b16 %v311
    %v4462 = vunpack.c.l.b16 %v312
    %v4463 = vunpack.c.h.b16 %v312
    %v4464 = vunpack.c.l.b16 %v313
    %v4465 = vunpack.c.h.b16 %v313
    %v4466 = vunpack.c.l.b16 %v314
    %v4467 = vunpack.c.h.b16 %v314
    %v4468 = vunpack.c.l.b16 %v315
    %v4469 = vunpack.c.h.b16 %v315
    %v4470 = vunpack.c.l.b16 %v316
    %v4471 = vunpack.c.h.b16 %v316
    %v4472 = vunpack.c.l.b16 %v317
    %v4473 = vunpack.c.h.b16 %v317
    %v4474 = vunpack.c.l.b16 %v318
    %v4475 = vunpack.c.h.b16 %v318
    %v4476 = vunpack.c.l.b16 %v319
    %v4477 = vunpack.c.h.b16 %v319
    %v4478 = vunpack.c.l.b16 %v320
    %v4479 = vunpack.c.h.b16 %v320
    %v4480 = vunpack.c.l.b16 %v321
    %v4481 = vunpack.c.h.b16 %v321
    %v4482 = vunpack.c.l.b16 %v322
    %v4483 = vunpack.c.h.b16 %v322
    %v4484 = vunpack.c.l.b16 %v323
    %v4485 = vunpack.c.h.b16 %v323
    %v4486 = vunpack.c.l.b16 %v324
    %v4487 = vunpack.c.h.b16 %v324
    %v4488 = vunpack.c.l.b16 %v325
    %v4489 = vunpack.c.h.b16 %v325
    %v4490 = vunpack.c.l.b16 %v326
    %v4491 = vunpack.c.h.b16 %v326
    %v4492 = vunpack.c.l.b16 %v327
    %v4493 = vunpack.c.h.b16 %v327
    %v4494 = vunpack.c.l.b16 %v328
    %v4495 = vunpack.c.h.b16 %v328
    %v4496 = vunpack.c.l.b16 %v329
    %v4497 = vunpack.c.h.b16 %v329
    %v4498 = vunpack.c.l.b16 %v330
    %v4499 = vunpack.c.h.b16 %v330
    %v4500 = vunpack.c.l.b16 %v331
    %v4501 = vunpack.c.h.b16 %v331
    %v4502 = vunpack.c.l.b16 %v332
    %v4503 = vunpack.c.h.b16 %v332
    %v4504 = vunpack.c.l.b16 %v333
    %v4505 = vunpack.c.h.b16 %v333
    %v4506 = vunpack.c.l.b16 %v334
    %v4507 = vunpack.c.h.b16 %v334
    %v4508 = vunpack.c.l.b16 %v335
    %v4509 = vunpack.c.h.b16 %v335
    %v4510 = vunpack.c.l.b16 %v336
    %v4511 = vunpack.c.h.b16 %v336
    %v4512 = vunpack.c.l.b16 %v337
    %v4513 = vunpack.c.h.b16 %v337
    %v4514 = vunpack.c.l.b16 %v338
    %v4515 = vunpack.c.h.b16 %v338
    %v4516 = vunpack.c.l.b16 %v339
    %v4517 = vunpack.c.h.b16 %v339
    %v4518 = vunpack.c.l.b16 %v340
    %v4519 = vunpack.c.h.b16 %v340
    %v4520 = vunpack.c.l.b16 %v341
    %v4521 = vunpack.c.h.b16 %v341
    %v4522 = vunpack.c.l.b16 %v342
    %v4523 = vunpack.c.h.b16 %v342
    %v4524 = vunpack.c.l.b16 %v343
    %v4525 = vunpack.c.h.b16 %v343
    %v4526 = vunpack.c.l.b16 %v344
    %v4527 = vunpack.c.h.b16 %v344
    %v4528 = vunpack.c.l.b16 %v345
    %v4529 = vunpack.c.h.b16 %v345
    %v4530 = vunpack.c.l.b16 %v346
    %v4531 = vunpack.c.h.b16 %v346
    %v4532 = vunpack.c.l.b16 %v347
    %v4533 = vunpack.c.h.b16 %v347
    %v4534 = vunpack.c.l.b16 %v348
    %v4535 = vunpack.c.h.b16 %v348
    %v4536 = vunpack.c.l.b16 %v349
    %v4537 = vunpack.c.h.b16 %v349
    %v4538 = vunpack.c.l.b16 %v350
    %v4539 = vunpack.c.h.b16 %v350
    %v4540 = vunpack.c.l.b16 %v351
    %v4541 = vunpack.c.h.b16 %v351
    %v4542 = vunpack.c.l.b16 %v352
    %v4543 = vunpack.c.h.b16 %v352
    %v4544 = vunpack.c.l.b16 %v353
    %v4545 = vunpack.c.h.b16 %v353
    %v4546 = vunpack.c.l.b16 %v354
    %v4547 = vunpack.c.h.b16 %v354
    %v4548 = vunpack.c.l.b16 %v355
    %v4549 = vunpack.c.h.b16 %v355
    %v4550 = vunpack.c.l.b16 %v356
    %v4551 = vunpack.c.h.b16 %v356
    %v4552 = vunpack.c.l.b16 %v357
    %v4553 = vunpack.c.h.b16 %v357
    %v4554 = vunpack.c.l.b16 %v358
    %v4555 = vunpack.c.h.b16 %v358
    %v4556 = vunpack.c.l.b16 %v359
    %v4557 = vunpack.c.h.b16 %v359
    %v4558 = vpack.c.b16 %v4050, %v4046
    %v4559 = vpack.c.b16 %v4051, %v4047
    %v4560 = vpack.c.b16 %v4052, %v4048
    %v4561 = vpack.c.b16 %v4053, %v4049
    %v4562 = vpack.c.b16 %v4058, %v4054
    %v4563 = vpack.c.b16 %v4059, %v4055
    %v4564 = vpack.c.b16 %v4060, %v4056
    %v4565 = vpack.c.b16 %v4061, %v4057
    %v4566 = vpack.c.b16 %v4066, %v4062
    %v4567 = vpack.c.b16 %v4067, %v4063
    %v4568 = vpack.c.b16 %v4068, %v4064
    %v4569 = vpack.c.b16 %v4069, %v4065
    %v4570 = vpack.c.b16 %v4074, %v4070
    %v4571 = vpack.c.b16 %v4075, %v4071
    %v4572 = vpack.c.b16 %v4076, %v4072
    %v4573 = vpack.c.b16 %v4077, %v4073
    %v4574 = vpack.c.b16 %v4082, %v4078
    %v4575 = vpack.c.b16 %v4083, %v4079
    %v4576 = vpack.c.b16 %v4084, %v4080
    %v4577 = vpack.c.b16 %v4085, %v4081
    %v4578 = vpack.c.b16 %v4090, %v4086
    %v4579 = vpack.c.b16 %v4091, %v4087
    %v4580 = vpack.c.b16 %v4092, %v4088
    %v4581 = vpack.c.b16 %v4093, %v4089
    %v4582 = vpack.c.b16 %v4098, %v4094
    %v4583 = vpack.c.b16 %v4099, %v4095
    %v4584 = vpack.c.b16 %v4100, %v4096
    %v4585 = vpack.c.b16 %v4101, %v4097
    %v4586 = vpack.c.b16 %v4106, %v4102
    %v4587 = vpack.c.b16 %v4107, %v4103
    %v4588 = vpack.c.b16 %v4108, %v4104
    %v4589 = vpack.c.b16 %v4109, %v4105
    %v4590 = vpack.c.b16 %v4114, %v4110
    %v4591 = vpack.c.b16 %v4115, %v4111
    %v4592 = vpack.c.b16 %v4116, %v4112
    %v4593 = vpack.c.b16 %v4117, %v4113
    %v4594 = vpack.c.b16 %v4122, %v4118
    %v4595 = vpack.c.b16 %v4123, %v4119
    %v4596 = vpack.c.b16 %v4124, %v4120
    %v4597 = vpack.c.b16 %v4125, %v4121
    %v4598 = vpack.c.b16 %v4130, %v4126
    %v4599 = vpack.c.b16 %v4131, %v4127
    %v4600 = vpack.c.b16 %v4132, %v4128
    %v4601 = vpack.c.b16 %v4133, %v4129
    %v4602 = vpack.c.b16 %v4138, %v4134
    %v4603 = vpack.c.b16 %v4139, %v4135
    %v4604 = vpack.c.b16 %v4140, %v4136
    %v4605 = vpack.c.b16 %v4141, %v4137
    %v4606 = vpack.c.b16 %v4146, %v4142
    %v4607 = vpack.c.b16 %v4147, %v4143
    %v4608 = vpack.c.b16 %v4148, %v4144
    %v4609 = vpack.c.b16 %v4149, %v4145
    %v4610 = vpack.c.b16 %v4154, %v4150
    %v4611 = vpack.c.b16 %v4155, %v4151
    %v4612 = vpack.c.b16 %v4156, %v4152
    %v4613 = vpack.c.b16 %v4157, %v4153
    %v4614 = vpack.c.b16 %v4162, %v4158
    %v4615 = vpack.c.b16 %v4163, %v4159
    %v4616 = vpack.c.b16 %v4164, %v4160
    %v4617 = vpack.c.b16 %v4165, %v4161
    %v4618 = vpack.c.b16 %v4170, %v4166
    %v4619 = vpack.c.b16 %v4171, %v4167
    %v4620 = vpack.c.b16 %v4172, %v4168
    %v4621 = vpack.c.b16 %v4173, %v4169
    %v4622 = vpack.c.b16 %v4178, %v4174
    %v4623 = vpack.c.b16 %v4179, %v4175
    %v4624 = vpack.c.b16 %v4180, %v4176
    %v4625 = vpack.c.b16 %v4181, %v4177
    %v4626 = vpack.c.b16 %v4186, %v4182
    %v4627 = vpack.c.b16 %v4187, %v4183
    %v4628 = vpack.c.b16 %v4188, %v4184
    %v4629 = vpack.c.b16 %v4189, %v4185
    %v4630 = vpack.c.b16 %v4194, %v4190
    %v4631 = vpack.c.b16 %v4195, %v4191
    %v4632 = vpack.c.b16 %v4196, %v4192
    %v4633 = vpack.c.b16 %v4197, %v4193
    %v4634 = vpack.c.b16 %v4202, %v4198
    %v4635 = vpack.c.b16 %v4203, %v4199
    %v4636 = vpack.c.b16 %v4204, %v4200
    %v4637 = vpack.c.b16 %v4205, %v4201
    %v4638 = vpack.c.b16 %v4210, %v4206
    %v4639 = vpack.c.b16 %v4211, %v4207
    %v4640 = vpack.c.b16 %v4212, %v4208
    %v4641 = vpack.c.b16 %v4213, %v4209
    %v4642 = vpack.c.b16 %v4218, %v4214
    %v4643 = vpack.c.b16 %v4219, %v4215
    %v4644 = vpack.c.b16 %v4220, %v4216
    %v4645 = vpack.c.b16 %v4221, %v4217
    %v4646 = vpack.c.b16 %v4226, %v4222
    %v4647 = vpack.c.b16 %v4227, %v4223
    %v4648 = vpack.c.b16 %v4228, %v4224
    %v4649 = vpack.c.b16 %v4229, %v4225
    %v4650 = vpack.c.b16 %v4234, %v4230
    %v4651 = vpack.c.b16 %v4235, %v4231
    %v4652 = vpack.c.b16 %v4236, %v4232
    %v4653 = vpack.c.b16 %v4237, %v4233
    %v4654 = vpack.c.b16 %v4242, %v4238
    %v4655 = vpack.c.b16 %v4243, %v4239
    %v4656 = vpack.c.b16 %v4244, %v4240
    %v4657 = vpack.c.b16 %v4245, %v4241
    %v4658 = vpack.c.b16 %v4250, %v4246
    %v4659 = vpack.c.b16 %v4251, %v4247
    %v4660 = vpack.c.b16 %v4252, %v4248
    %v4661 = vpack.c.b16 %v4253, %v4249
    %v4662 = vpack.c.b16 %v4258, %v4254
    %v4663 = vpack.c.b16 %v4259, %v4255
    %v4664 = vpack.c.b16 %v4260, %v4256
    %v4665 = vpack.c.b16 %v4261, %v4257
    %v4666 = vpack.c.b16 %v4266, %v4262
    %v4667 = vpack.c.b16 %v4267, %v4263
    %v4668 = vpack.c.b16 %v4268, %v4264
    %v4669 = vpack.c.b16 %v4269, %v4265
    %v4670 = vpack.c.b16 %v4274, %v4270
    %v4671 = vpack.c.b16 %v4275, %v4271
    %v4672 = vpack.c.b16 %v4276, %v4272
    %v4673 = vpack.c.b16 %v4277, %v4273
    %v4674 = vpack.c.b16 %v4282, %v4278
    %v4675 = vpack.c.b16 %v4283, %v4279
    %v4676 = vpack.c.b16 %v4284, %v4280
    %v4677 = vpack.c.b16 %v4285, %v4281
    %v4678 = vpack.c.b16 %v4290, %v4286
    %v4679 = vpack.c.b16 %v4291, %v4287
    %v4680 = vpack.c.b16 %v4292, %v4288
    %v4681 = vpack.c.b16 %v4293, %v4289
    %v4682 = vpack.c.b16 %v4298, %v4294
    %v4683 = vpack.c.b16 %v4299, %v4295
    %v4684 = vpack.c.b16 %v4300, %v4296
    %v4685 = vpack.c.b16 %v4301, %v4297
    %v4686 = vpack.c.b16 %v4306, %v4302
    %v4687 = vpack.c.b16 %v4307, %v4303
    %v4688 = vpack.c.b16 %v4308, %v4304
    %v4689 = vpack.c.b16 %v4309, %v4305
    %v4690 = vpack.c.b16 %v4314, %v4310
    %v4691 = vpack.c.b16 %v4315, %v4311
    %v4692 = vpack.c.b16 %v4316, %v4312
    %v4693 = vpack.c.b16 %v4317, %v4313
    %v4694 = vpack.c.b16 %v4322, %v4318
    %v4695 = vpack.c.b16 %v4323, %v4319
    %v4696 = vpack.c.b16 %v4324, %v4320
    %v4697 = vpack.c.b16 %v4325, %v4321
    %v4698 = vpack.c.b16 %v4330, %v4326
    %v4699 = vpack.c.b16 %v4331, %v4327
    %v4700 = vpack.c.b16 %v4332, %v4328
    %v4701 = vpack.c.b16 %v4333, %v4329
    %v4702 = vpack.c.b16 %v4338, %v4334
    %v4703 = vpack.c.b16 %v4339, %v4335
    %v4704 = vpack.c.b16 %v4340, %v4336
    %v4705 = vpack.c.b16 %v4341, %v4337
    %v4706 = vpack.c.b16 %v4346, %v4342
    %v4707 = vpack.c.b16 %v4347, %v4343
    %v4708 = vpack.c.b16 %v4348, %v4344
    %v4709 = vpack.c.b16 %v4349, %v4345
    %v4710 = vpack.c.b16 %v4354, %v4350
    %v4711 = vpack.c.b16 %v4355, %v4351
    %v4712 = vpack.c.b16 %v4356, %v4352
    %v4713 = vpack.c.b16 %v4357, %v4353
    %v4714 = vpack.c.b16 %v4362, %v4358
    %v4715 = vpack.c.b16 %v4363, %v4359
    %v4716 = vpack.c.b16 %v4364, %v4360
    %v4717 = vpack.c.b16 %v4365, %v4361
    %v4718 = vpack.c.b16 %v4370, %v4366
    %v4719 = vpack.c.b16 %v4371, %v4367
    %v4720 = vpack.c.b16 %v4372, %v4368
    %v4721 = vpack.c.b16 %v4373, %v4369
    %v4722 = vpack.c.b16 %v4378, %v4374
    %v4723 = vpack.c.b16 %v4379, %v4375
    %v4724 = vpack.c.b16 %v4380, %v4376
    %v4725 = vpack.c.b16 %v4381, %v4377
    %v4726 = vpack.c.b16 %v4386, %v4382
    %v4727 = vpack.c.b16 %v4387, %v4383
    %v4728 = vpack.c.b16 %v4388, %v4384
    %v4729 = vpack.c.b16 %v4389, %v4385
    %v4730 = vpack.c.b16 %v4394, %v4390
    %v4731 = vpack.c.b16 %v4395, %v4391
    %v4732 = vpack.c.b16 %v4396, %v4392
    %v4733 = vpack.c.b16 %v4397, %v4393
    %v4734 = vpack.c.b16 %v4402, %v4398
    %v4735 = vpack.c.b16 %v4403, %v4399
    %v4736 = vpack.c.b16 %v4404, %v4400
    %v4737 = vpack.c.b16 %v4405, %v4401
    %v4738 = vpack.c.b16 %v4410, %v4406
    %v4739 = vpack.c.b16 %v4411, %v4407
    %v4740 = vpack.c.b16 %v4412, %v4408
    %v4741 = vpack.c.b16 %v4413, %v4409
    %v4742 = vpack.c.b16 %v4418, %v4414
    %v4743 = vpack.c.b16 %v4419, %v4415
    %v4744 = vpack.c.b16 %v4420, %v4416
    %v4745 = vpack.c.b16 %v4421, %v4417
    %v4746 = vpack.c.b16 %v4426, %v4422
    %v4747 = vpack.c.b16 %v4427, %v4423
    %v4748 = vpack.c.b16 %v4428, %v4424
    %v4749 = vpack.c.b16 %v4429, %v4425
    %v4750 = vpack.c.b16 %v4434, %v4430
    %v4751 = vpack.c.b16 %v4435, %v4431
    %v4752 = vpack.c.b16 %v4436, %v4432
    %v4753 = vpack.c.b16 %v4437, %v4433
    %v4754 = vpack.c.b16 %v4442, %v4438
    %v4755 = vpack.c.b16 %v4443, %v4439
    %v4756 = vpack.c.b16 %v4444, %v4440
    %v4757 = vpack.c.b16 %v4445, %v4441
    %v4758 = vpack.c.b16 %v4450, %v4446
    %v4759 = vpack.c.b16 %v4451, %v4447
    %v4760 = vpack.c.b16 %v4452, %v4448
    %v4761 = vpack.c.b16 %v4453, %v4449
    %v4762 = vpack.c.b16 %v4458, %v4454
    %v4763 = vpack.c.b16 %v4459, %v4455
    %v4764 = vpack.c.b16 %v4460, %v4456
    %v4765 = vpack.c.b16 %v4461, %v4457
    %v4766 = vpack.c.b16 %v4466, %v4462
    %v4767 = vpack.c.b16 %v4467, %v4463
    %v4768 = vpack.c.b16 %v4468, %v4464
    %v4769 = vpack.c.b16 %v4469, %v4465
    %v4770 = vpack.c.b16 %v4474, %v4470
    %v4771 = vpack.c.b16 %v4475, %v4471
    %v4772 = vpack.c.b16 %v4476, %v4472
    %v4773 = vpack.c.b16 %v4477, %v4473
    %v4774 = vpack.c.b16 %v4482, %v4478
    %v4775 = vpack.c.b16 %v4483, %v4479
    %v4776 = vpack.c.b16 %v4484, %v4480
    %v4777 = vpack.c.b16 %v4485, %v4481
    %v4778 = vpack.c.b16 %v4490, %v4486
    %v4779 = vpack.c.b16 %v4491, %v4487
    %v4780 = vpack.c.b16 %v4492, %v4488
    %v4781 = vpack.c.b16 %v4493, %v4489
    %v4782 = vpack.c.b16 %v4498, %v4494
    %v4783 = vpack.c.b16 %v4499, %v4495
    %v4784 = vpack.c.b16 %v4500, %v4496
    %v4785 = vpack.c.b16 %v4501, %v4497
    %v4786 = vpack.c.b16 %v4506, %v4502
    %v4787 = vpack.c.b16 %v4507, %v4503
    %v4788 = vpack.c.b16 %v4508, %v4504
    %v4789 = vpack.c.b16 %v4509, %v4505
    %v4790 = vpack.c.b16 %v4514, %v4510
    %v4791 = vpack.c.b16 %v4515, %v4511
    %v4792 = vpack.c.b16 %v4516, %v4512
    %v4793 = vpack.c.b16 %v4517, %v4513
    %v4794 = vpack.c.b16 %v4522, %v4518
    %v4795 = vpack.c.b16 %v4523, %v4519
    %v4796 = vpack.c.b16 %v4524, %v4520
    %v4797 = vpack.c.b16 %v4525, %v4521
    %v4798 = vpack.c.b16 %v4530, %v4526
    %v4799 = vpack.c.b16 %v4531, %v4527
    %v4800 = vpack.c.b16 %v4532, %v4528
    %v4801 = vpack.c.b16 %v4533, %v4529
    %v4802 = vpack.c.b16 %v4538, %v4534
    %v4803 = vpack.c.b16 %v4539, %v4535
    %v4804 = vpack.c.b16 %v4540, %v4536
    %v4805 = vpack.c.b16 %v4541, %v4537
    %v4806 = vpack.c.b16 %v4546, %v4542
    %v4807 = vpack.c.b16 %v4547, %v4543
    %v4808 = vpack.c.b16 %v4548, %v4544
    %v4809 = vpack.c.b16 %v4549, %v4545
    %v4810 = vpack.c.b16 %v4554, %v4550
    %v4811 = vpack.c.b16 %v4555, %v4551
    %v4812 = vpack.c.b16 %v4556, %v4552
    %v4813 = vpack.c.b16 %v4557, %v4553
    %5070 = vmatprep.subr.bf16.mxu0 %v4559
    %5071 = vmatpush1.bf16.msra.mxu0 %v4558
    %5072 = vmatprep.subr.bf16.mxu0 %v4563
    %5073 = vmatpush1.bf16.msra.mxu0 %v4562
    %5074 = vmatprep.subr.bf16.mxu0 %v4567
    %5075 = vmatpush1.bf16.msra.mxu0 %v4566
    %5076 = vmatprep.subr.bf16.mxu0 %v4571
    %5077 = vmatpush1.bf16.msra.mxu0 %v4570
    %5078 = vmatprep.subr.bf16.mxu0 %v4575
    %5079 = vmatpush1.bf16.msra.mxu0 %v4574
    %5080 = vmatprep.subr.bf16.mxu0 %v4579
    %5081 = vmatpush1.bf16.msra.mxu0 %v4578
    %5082 = vmatprep.subr.bf16.mxu0 %v4583
    %5083 = vmatpush1.bf16.msra.mxu0 %v4582
    %5084 = vmatprep.subr.bf16.mxu0 %v4587
    %5085 = vmatpush1.bf16.msra.mxu0 %v4586
    %5086 = vmatprep.subr.bf16.mxu0 %v4591
    %5087 = vmatpush1.bf16.msra.mxu0 %v4590
    %5088 = vmatprep.subr.bf16.mxu0 %v4595
    %5089 = vmatpush1.bf16.msra.mxu0 %v4594
    %5090 = vmatprep.subr.bf16.mxu0 %v4599
    %5091 = vmatpush1.bf16.msra.mxu0 %v4598
    %5092 = vmatprep.subr.bf16.mxu0 %v4603
    %5093 = vmatpush1.bf16.msra.mxu0 %v4602
    %5094 = vmatprep.subr.bf16.mxu0 %v4607
    %5095 = vmatpush1.bf16.msra.mxu0 %v4606
    %5096 = vmatprep.subr.bf16.mxu0 %v4611
    %5097 = vmatpush1.bf16.msra.mxu0 %v4610
    %5098 = vmatprep.subr.bf16.mxu0 %v4615
    %5099 = vmatpush1.bf16.msra.mxu0 %v4614
    %5100 = vmatprep.subr.bf16.mxu0 %v4619
    %5101 = vmatpush1.bf16.msra.mxu0 %v4618
    %5102 = vmatprep.mubr.bf16.mxu0 %v3759
    %5103 = vmatmul.mubr.bf16.gmra.mrb[0].mxu0 %v3758
    %v5104 = vpop.f32.mrb[0].mxu0
    %v5105 = vadd.f32 %v3078, %v5104
    %v5106 = vpop.f32.mrb[0].mxu0
    %v5107 = vadd.f32 %v3082, %v5106
    %v5108 = vpop.f32.mrb[0].mxu0
    %v5109 = vadd.f32 %v3078, %v5108
    %v5110 = vpop.f32.mrb[0].mxu0
    %v5111 = vadd.f32 %v3082, %v5110
    %5112 = vmatprep.mubr.bf16.mxu0 %v3767
    %5113 = vmatmul.mubr.bf16.gmra.mrb[0].mxu0 %v3766
    %v5114 = vpop.f32.mrb[0].mxu0
    %v5115 = vadd.f32 %v3078, %v5114
    %v5116 = vpop.f32.mrb[0].mxu0
    %v5117 = vadd.f32 %v3082, %v5116
    %v5118 = vpop.f32.mrb[0].mxu0
    %v5119 = vpop.f32.mrb[0].mxu0
    %5120 = vdwg.mxu0
    %5121 = vmatprep.subr.bf16.mxu0 %v4623
    %5122 = vmatpush1.bf16.msra.mxu0 %v4622
    %5123 = vmatprep.subr.bf16.mxu0 %v4627
    %5124 = vmatpush1.bf16.msra.mxu0 %v4626
    %5125 = vmatprep.subr.bf16.mxu0 %v4631
    %5126 = vmatpush1.bf16.msra.mxu0 %v4630
    %5127 = vmatprep.subr.bf16.mxu0 %v4635
    %5128 = vmatpush1.bf16.msra.mxu0 %v4634
    %5129 = vmatprep.subr.bf16.mxu0 %v4639
    %5130 = vmatpush1.bf16.msra.mxu0 %v4638
    %5131 = vmatprep.subr.bf16.mxu0 %v4643
    %5132 = vmatpush1.bf16.msra.mxu0 %v4642
    %5133 = vmatprep.subr.bf16.mxu0 %v4647
    %5134 = vmatpush1.bf16.msra.mxu0 %v4646
    %5135 = vmatprep.subr.bf16.mxu0 %v4651
    %5136 = vmatpush1.bf16.msra.mxu0 %v4650
    %5137 = vmatprep.subr.bf16.mxu0 %v4655
    %5138 = vmatpush1.bf16.msra.mxu0 %v4654
    %5139 = vmatprep.subr.bf16.mxu0 %v4659
    %5140 = vmatpush1.bf16.msra.mxu0 %v4658
    %5141 = vmatprep.subr.bf16.mxu0 %v4663
    %5142 = vmatpush1.bf16.msra.mxu0 %v4662
    %5143 = vmatprep.subr.bf16.mxu0 %v4667
    %5144 = vmatpush1.bf16.msra.mxu0 %v4666
    %5145 = vmatprep.subr.bf16.mxu0 %v4671
    %5146 = vmatpush1.bf16.msra.mxu0 %v4670
    %5147 = vmatprep.subr.bf16.mxu0 %v4675
    %5148 = vmatpush1.bf16.msra.mxu0 %v4674
    %5149 = vmatprep.subr.bf16.mxu0 %v4679
    %5150 = vmatpush1.bf16.msra.mxu0 %v4678
    %5151 = vmatprep.subr.bf16.mxu0 %v4683
    %5152 = vmatpush1.bf16.msra.mxu0 %v4682
    %5153 = vmatprep.mubr.bf16.mxu0 %v3761
    %5154 = vmatmul.mubr.bf16.gmra.mrb[0].mxu0 %v3760
    %v5155 = vpop.f32.mrb[0].mxu0
    %v5156 = vadd.f32 %v5105, %v5155
    %v5157 = vpop.f32.mrb[0].mxu0
    %v5158 = vadd.f32 %v5107, %v5157
    %v5159 = vpop.f32.mrb[0].mxu0
    %v5160 = vadd.f32 %v5109, %v5159
    %v5161 = vpop.f32.mrb[0].mxu0
    %v5162 = vadd.f32 %v5111, %v5161
    %5163 = vmatprep.mubr.bf16.mxu0 %v3769
    %5164 = vmatmul.mubr.bf16.gmra.mrb[0].mxu0 %v3768
    %v5165 = vpop.f32.mrb[0].mxu0
    %v5166 = vadd.f32 %v5115, %v5165
    %v5167 = vpop.f32.mrb[0].mxu0
    %v5168 = vadd.f32 %v5117, %v5167
    %v5169 = vpop.f32.mrb[0].mxu0
    %v5170 = vpop.f32.mrb[0].mxu0
    %5171 = vdwg.mxu0
    %5172 = vmatprep.subr.bf16.mxu0 %v4687
    %5173 = vmatpush1.bf16.msra.mxu0 %v4686
    %5174 = vmatprep.subr.bf16.mxu0 %v4691
    %5175 = vmatpush1.bf16.msra.mxu0 %v4690
    %5176 = vmatprep.subr.bf16.mxu0 %v4695
    %5177 = vmatpush1.bf16.msra.mxu0 %v4694
    %5178 = vmatprep.subr.bf16.mxu0 %v4699
    %5179 = vmatpush1.bf16.msra.mxu0 %v4698
    %5180 = vmatprep.subr.bf16.mxu0 %v4703
    %5181 = vmatpush1.bf16.msra.mxu0 %v4702
    %5182 = vmatprep.subr.bf16.mxu0 %v4707
    %5183 = vmatpush1.bf16.msra.mxu0 %v4706
    %5184 = vmatprep.subr.bf16.mxu0 %v4711
    %5185 = vmatpush1.bf16.msra.mxu0 %v4710
    %5186 = vmatprep.subr.bf16.mxu0 %v4715
    %5187 = vmatpush1.bf16.msra.mxu0 %v4714
    %5188 = vmatprep.subr.bf16.mxu0 %v4719
    %5189 = vmatpush1.bf16.msra.mxu0 %v4718
    %5190 = vmatprep.subr.bf16.mxu0 %v4723
    %5191 = vmatpush1.bf16.msra.mxu0 %v4722
    %5192 = vmatprep.subr.bf16.mxu0 %v4727
    %5193 = vmatpush1.bf16.msra.mxu0 %v4726
    %5194 = vmatprep.subr.bf16.mxu0 %v4731
    %5195 = vmatpush1.bf16.msra.mxu0 %v4730
    %5196 = vmatprep.subr.bf16.mxu0 %v4735
    %5197 = vmatpush1.bf16.msra.mxu0 %v4734
    %5198 = vmatprep.subr.bf16.mxu0 %v4739
    %5199 = vmatpush1.bf16.msra.mxu0 %v4738
    %5200 = vmatprep.subr.bf16.mxu0 %v4743
    %5201 = vmatpush1.bf16.msra.mxu0 %v4742
    %5202 = vmatprep.subr.bf16.mxu0 %v4747
    %5203 = vmatpush1.bf16.msra.mxu0 %v4746
    %5204 = vmatprep.mubr.bf16.mxu0 %v3763
    %5205 = vmatmul.mubr.bf16.gmra.mrb[0].mxu0 %v3762
    %v5206 = vpop.f32.mrb[0].mxu0
    %v5207 = vadd.f32 %v5156, %v5206
    %v5208 = vpop.f32.mrb[0].mxu0
    %v5209 = vadd.f32 %v5158, %v5208
    %v5210 = vpop.f32.mrb[0].mxu0
    %v5211 = vadd.f32 %v5160, %v5210
    %v5212 = vpop.f32.mrb[0].mxu0
    %v5213 = vadd.f32 %v5162, %v5212
    %5214 = vmatprep.mubr.bf16.mxu0 %v3771
    %5215 = vmatmul.mubr.bf16.gmra.mrb[0].mxu0 %v3770
    %v5216 = vpop.f32.mrb[0].mxu0
    %v5217 = vadd.f32 %v5166, %v5216
    %v5218 = vpop.f32.mrb[0].mxu0
    %v5219 = vadd.f32 %v5168, %v5218
    %v5220 = vpop.f32.mrb[0].mxu0
    %v5221 = vpop.f32.mrb[0].mxu0
    %5222 = vdwg.mxu0
    %5223 = vmatprep.subr.bf16.mxu0 %v4751
    %5224 = vmatpush1.bf16.msra.mxu0 %v4750
    %5225 = vmatprep.subr.bf16.mxu0 %v4755
    %5226 = vmatpush1.bf16.msra.mxu0 %v4754
    %5227 = vmatprep.subr.bf16.mxu0 %v4759
    %5228 = vmatpush1.bf16.msra.mxu0 %v4758
    %5229 = vmatprep.subr.bf16.mxu0 %v4763
    %5230 = vmatpush1.bf16.msra.mxu0 %v4762
    %5231 = vmatprep.subr.bf16.mxu0 %v4767
    %5232 = vmatpush1.bf16.msra.mxu0 %v4766
    %5233 = vmatprep.subr.bf16.mxu0 %v4771
    %5234 = vmatpush1.bf16.msra.mxu0 %v4770
    %5235 = vmatprep.subr.bf16.mxu0 %v4775
    %5236 = vmatpush1.bf16.msra.mxu0 %v4774
    %5237 = vmatprep.subr.bf16.mxu0 %v4779
    %5238 = vmatpush1.bf16.msra.mxu0 %v4778
    %5239 = vmatprep.subr.bf16.mxu0 %v4783
    %5240 = vmatpush1.bf16.msra.mxu0 %v4782
    %5241 = vmatprep.subr.bf16.mxu0 %v4787
    %5242 = vmatpush1.bf16.msra.mxu0 %v4786
    %5243 = vmatprep.subr.bf16.mxu0 %v4791
    %5244 = vmatpush1.bf16.msra.mxu0 %v4790
    %5245 = vmatprep.subr.bf16.mxu0 %v4795
    %5246 = vmatpush1.bf16.msra.mxu0 %v4794
    %5247 = vmatprep.subr.bf16.mxu0 %v4799
    %5248 = vmatpush1.bf16.msra.mxu0 %v4798
    %5249 = vmatprep.subr.bf16.mxu0 %v4803
    %5250 = vmatpush1.bf16.msra.mxu0 %v4802
    %5251 = vmatprep.subr.bf16.mxu0 %v4807
    %5252 = vmatpush1.bf16.msra.mxu0 %v4806
    %5253 = vmatprep.subr.bf16.mxu0 %v4811
    %5254 = vmatpush1.bf16.msra.mxu0 %v4810
    %5255 = vmatprep.mubr.bf16.mxu0 %v3765
    %5256 = vmatmul.mubr.bf16.gmra.mrb[0].mxu0 %v3764
    %v5257 = vpop.f32.mrb[0].mxu0
    %v5258 = vadd.f32 %v5207, %v5257
    %v5259 = vpop.f32.mrb[0].mxu0
    %v5260 = vadd.f32 %v5209, %v5259
    %v5261 = vpop.f32.mrb[0].mxu0
    %v5262 = vadd.f32 %v5211, %v5261
    %v5263 = vpop.f32.mrb[0].mxu0
    %v5264 = vadd.f32 %v5213, %v5263
    %5265 = vmatprep.mubr.bf16.mxu0 %v3773
    %5266 = vmatmul.mubr.bf16.gmra.mrb[0].mxu0 %v3772
    %v5267 = vpop.f32.mrb[0].mxu0
    %v5268 = vadd.f32 %v5217, %v5267
    %v5269 = vpop.f32.mrb[0].mxu0
    %v5270 = vadd.f32 %v5219, %v5269
    %v5271 = vpop.f32.mrb[0].mxu0
    %v5272 = vpop.f32.mrb[0].mxu0
    %5273 = vdwg.mxu0
    %5274 = vmatprep.subr.bf16.mxu0 %v4561
    %5275 = vmatpush1.bf16.msra.mxu0 %v4560
    %5276 = vmatprep.subr.bf16.mxu0 %v4565
    %5277 = vmatpush1.bf16.msra.mxu0 %v4564
    %5278 = vmatprep.subr.bf16.mxu0 %v4569
    %5279 = vmatpush1.bf16.msra.mxu0 %v4568
    %5280 = vmatprep.subr.bf16.mxu0 %v4573
    %5281 = vmatpush1.bf16.msra.mxu0 %v4572
    %5282 = vmatprep.subr.bf16.mxu0 %v4577
    %5283 = vmatpush1.bf16.msra.mxu0 %v4576
    %5284 = vmatprep.subr.bf16.mxu0 %v4581
    %5285 = vmatpush1.bf16.msra.mxu0 %v4580
    %5286 = vmatprep.subr.bf16.mxu0 %v4585
    %5287 = vmatpush1.bf16.msra.mxu0 %v4584
    %5288 = vmatprep.subr.bf16.mxu0 %v4589
    %5289 = vmatpush1.bf16.msra.mxu0 %v4588
    %5290 = vmatprep.subr.bf16.mxu0 %v4593
    %5291 = vmatpush1.bf16.msra.mxu0 %v4592
    %5292 = vmatprep.subr.bf16.mxu0 %v4597
    %5293 = vmatpush1.bf16.msra.mxu0 %v4596
    %5294 = vmatprep.subr.bf16.mxu0 %v4601
    %5295 = vmatpush1.bf16.msra.mxu0 %v4600
    %5296 = vmatprep.subr.bf16.mxu0 %v4605
    %5297 = vmatpush1.bf16.msra.mxu0 %v4604
    %5298 = vmatprep.subr.bf16.mxu0 %v4609
    %5299 = vmatpush1.bf16.msra.mxu0 %v4608
    %5300 = vmatprep.subr.bf16.mxu0 %v4613
    %5301 = vmatpush1.bf16.msra.mxu0 %v4612
    %5302 = vmatprep.subr.bf16.mxu0 %v4617
    %5303 = vmatpush1.bf16.msra.mxu0 %v4616
    %5304 = vmatprep.subr.bf16.mxu0 %v4621
    %5305 = vmatpush1.bf16.msra.mxu0 %v4620
    %5306 = vmatprep.mubr.bf16.mxu0 %v3759
    %5307 = vmatmul.mubr.bf16.gmra.mrb[0].mxu0 %v3758
    %v5308 = vpop.f32.mrb[0].mxu0
    %v5309 = vadd.f32 %v3086, %v5308
    %v5310 = vpop.f32.mrb[0].mxu0
    %v5311 = vadd.f32 %v3090, %v5310
    %v5312 = vpop.f32.mrb[0].mxu0
    %v5313 = vadd.f32 %v3086, %v5312
    %v5314 = vpop.f32.mrb[0].mxu0
    %v5315 = vadd.f32 %v3090, %v5314
    %5316 = vmatprep.mubr.bf16.mxu0 %v3767
    %5317 = vmatmul.mubr.bf16.gmra.mrb[0].mxu0 %v3766
    %v5318 = vpop.f32.mrb[0].mxu0
    %v5319 = vadd.f32 %v3086, %v5318
    %v5320 = vpop.f32.mrb[0].mxu0
    %v5321 = vadd.f32 %v3090, %v5320
    %v5322 = vpop.f32.mrb[0].mxu0
    %v5323 = vpop.f32.mrb[0].mxu0
    %5324 = vdwg.mxu0
    %5325 = vmatprep.subr.bf16.mxu0 %v4625
    %5326 = vmatpush1.bf16.msra.mxu0 %v4624
    %5327 = vmatprep.subr.bf16.mxu0 %v4629
    %5328 = vmatpush1.bf16.msra.mxu0 %v4628
    %5329 = vmatprep.subr.bf16.mxu0 %v4633
    %5330 = vmatpush1.bf16.msra.mxu0 %v4632
    %5331 = vmatprep.subr.bf16.mxu0 %v4637
    %5332 = vmatpush1.bf16.msra.mxu0 %v4636
    %5333 = vmatprep.subr.bf16.mxu0 %v4641
    %5334 = vmatpush1.bf16.msra.mxu0 %v4640
    %5335 = vmatprep.subr.bf16.mxu0 %v4645
    %5336 = vmatpush1.bf16.msra.mxu0 %v4644
    %5337 = vmatprep.subr.bf16.mxu0 %v4649
    %5338 = vmatpush1.bf16.msra.mxu0 %v4648
    %5339 = vmatprep.subr.bf16.mxu0 %v4653
    %5340 = vmatpush1.bf16.msra.mxu0 %v4652
    %5341 = vmatprep.subr.bf16.mxu0 %v4657
    %5342 = vmatpush1.bf16.msra.mxu0 %v4656
    %5343 = vmatprep.subr.bf16.mxu0 %v4661
    %5344 = vmatpush1.bf16.msra.mxu0 %v4660
    %5345 = vmatprep.subr.bf16.mxu0 %v4665
    %5346 = vmatpush1.bf16.msra.mxu0 %v4664
    %5347 = vmatprep.subr.bf16.mxu0 %v4669
    %5348 = vmatpush1.bf16.msra.mxu0 %v4668
    %5349 = vmatprep.subr.bf16.mxu0 %v4673
    %5350 = vmatpush1.bf16.msra.mxu0 %v4672
    %5351 = vmatprep.subr.bf16.mxu0 %v4677
    %5352 = vmatpush1.bf16.msra.mxu0 %v4676
    %5353 = vmatprep.subr.bf16.mxu0 %v4681
    %5354 = vmatpush1.bf16.msra.mxu0 %v4680
    %5355 = vmatprep.subr.bf16.mxu0 %v4685
    %5356 = vmatpush1.bf16.msra.mxu0 %v4684
    %5357 = vmatprep.mubr.bf16.mxu0 %v3761
    %5358 = vmatmul.mubr.bf16.gmra.mrb[0].mxu0 %v3760
    %v5359 = vpop.f32.mrb[0].mxu0
    %v5360 = vadd.f32 %v5309, %v5359
    %v5361 = vpop.f32.mrb[0].mxu0
    %v5362 = vadd.f32 %v5311, %v5361
    %v5363 = vpop.f32.mrb[0].mxu0
    %v5364 = vadd.f32 %v5313, %v5363
    %v5365 = vpop.f32.mrb[0].mxu0
    %v5366 = vadd.f32 %v5315, %v5365
    %5367 = vmatprep.mubr.bf16.mxu0 %v3769
    %5368 = vmatmul.mubr.bf16.gmra.mrb[0].mxu0 %v3768
    %v5369 = vpop.f32.mrb[0].mxu0
    %v5370 = vadd.f32 %v5319, %v5369
    %v5371 = vpop.f32.mrb[0].mxu0
    %v5372 = vadd.f32 %v5321, %v5371
    %v5373 = vpop.f32.mrb[0].mxu0
    %v5374 = vpop.f32.mrb[0].mxu0
    %5375 = vdwg.mxu0
    %5376 = vmatprep.subr.bf16.mxu0 %v4689
    %5377 = vmatpush1.bf16.msra.mxu0 %v4688
    %5378 = vmatprep.subr.bf16.mxu0 %v4693
    %5379 = vmatpush1.bf16.msra.mxu0 %v4692
    %5380 = vmatprep.subr.bf16.mxu0 %v4697
    %5381 = vmatpush1.bf16.msra.mxu0 %v4696
    %5382 = vmatprep.subr.bf16.mxu0 %v4701
    %5383 = vmatpush1.bf16.msra.mxu0 %v4700
    %5384 = vmatprep.subr.bf16.mxu0 %v4705
    %5385 = vmatpush1.bf16.msra.mxu0 %v4704
    %5386 = vmatprep.subr.bf16.mxu0 %v4709
    %5387 = vmatpush1.bf16.msra.mxu0 %v4708
    %5388 = vmatprep.subr.bf16.mxu0 %v4713
    %5389 = vmatpush1.bf16.msra.mxu0 %v4712
    %5390 = vmatprep.subr.bf16.mxu0 %v4717
    %5391 = vmatpush1.bf16.msra.mxu0 %v4716
    %5392 = vmatprep.subr.bf16.mxu0 %v4721
    %5393 = vmatpush1.bf16.msra.mxu0 %v4720
    %5394 = vmatprep.subr.bf16.mxu0 %v4725
    %5395 = vmatpush1.bf16.msra.mxu0 %v4724
    %5396 = vmatprep.subr.bf16.mxu0 %v4729
    %5397 = vmatpush1.bf16.msra.mxu0 %v4728
    %5398 = vmatprep.subr.bf16.mxu0 %v4733
    %5399 = vmatpush1.bf16.msra.mxu0 %v4732
    %5400 = vmatprep.subr.bf16.mxu0 %v4737
    %5401 = vmatpush1.bf16.msra.mxu0 %v4736
    %5402 = vmatprep.subr.bf16.mxu0 %v4741
    %5403 = vmatpush1.bf16.msra.mxu0 %v4740
    %5404 = vmatprep.subr.bf16.mxu0 %v4745
    %5405 = vmatpush1.bf16.msra.mxu0 %v4744
    %5406 = vmatprep.subr.bf16.mxu0 %v4749
    %5407 = vmatpush1.bf16.msra.mxu0 %v4748
    %5408 = vmatprep.mubr.bf16.mxu0 %v3763
    %5409 = vmatmul.mubr.bf16.gmra.mrb[0].mxu0 %v3762
    %v5410 = vpop.f32.mrb[0].mxu0
    %v5411 = vadd.f32 %v5360, %v5410
    %v5412 = vpop.f32.mrb[0].mxu0
    %v5413 = vadd.f32 %v5362, %v5412
    %v5414 = vpop.f32.mrb[0].mxu0
    %v5415 = vadd.f32 %v5364, %v5414
    %v5416 = vpop.f32.mrb[0].mxu0
    %v5417 = vadd.f32 %v5366, %v5416
    %5418 = vmatprep.mubr.bf16.mxu0 %v3771
    %5419 = vmatmul.mubr.bf16.gmra.mrb[0].mxu0 %v3770
    %v5420 = vpop.f32.mrb[0].mxu0
    %v5421 = vadd.f32 %v5370, %v5420
    %v5422 = vpop.f32.mrb[0].mxu0
    %v5423 = vadd.f32 %v5372, %v5422
    %v5424 = vpop.f32.mrb[0].mxu0
    %v5425 = vpop.f32.mrb[0].mxu0
    %5426 = vdwg.mxu0
    %5427 = vmatprep.subr.bf16.mxu0 %v4753
    %5428 = vmatpush1.bf16.msra.mxu0 %v4752
    %5429 = vmatprep.subr.bf16.mxu0 %v4757
    %5430 = vmatpush1.bf16.msra.mxu0 %v4756
    %5431 = vmatprep.subr.bf16.mxu0 %v4761
    %5432 = vmatpush1.bf16.msra.mxu0 %v4760
    %5433 = vmatprep.subr.bf16.mxu0 %v4765
    %5434 = vmatpush1.bf16.msra.mxu0 %v4764
    %5435 = vmatprep.subr.bf16.mxu0 %v4769
    %5436 = vmatpush1.bf16.msra.mxu0 %v4768
    %5437 = vmatprep.subr.bf16.mxu0 %v4773
    %5438 = vmatpush1.bf16.msra.mxu0 %v4772
    %5439 = vmatprep.subr.bf16.mxu0 %v4777
    %5440 = vmatpush1.bf16.msra.mxu0 %v4776
    %5441 = vmatprep.subr.bf16.mxu0 %v4781
    %5442 = vmatpush1.bf16.msra.mxu0 %v4780
    %5443 = vmatprep.subr.bf16.mxu0 %v4785
    %5444 = vmatpush1.bf16.msra.mxu0 %v4784
    %5445 = vmatprep.subr.bf16.mxu0 %v4789
    %5446 = vmatpush1.bf16.msra.mxu0 %v4788
    %5447 = vmatprep.subr.bf16.mxu0 %v4793
    %5448 = vmatpush1.bf16.msra.mxu0 %v4792
    %5449 = vmatprep.subr.bf16.mxu0 %v4797
    %5450 = vmatpush1.bf16.msra.mxu0 %v4796
    %5451 = vmatprep.subr.bf16.mxu0 %v4801
    %5452 = vmatpush1.bf16.msra.mxu0 %v4800
    %5453 = vmatprep.subr.bf16.mxu0 %v4805
    %5454 = vmatpush1.bf16.msra.mxu0 %v4804
    %5455 = vmatprep.subr.bf16.mxu0 %v4809
    %5456 = vmatpush1.bf16.msra.mxu0 %v4808
    %5457 = vmatprep.subr.bf16.mxu0 %v4813
    %5458 = vmatpush1.bf16.msra.mxu0 %v4812
    %5459 = vmatprep.mubr.bf16.mxu0 %v3765
    %5460 = vmatmul.mubr.bf16.gmra.mrb[0].mxu0 %v3764
    %v5461 = vpop.f32.mrb[0].mxu0
    %v5462 = vadd.f32 %v5411, %v5461
    %v5463 = vpop.f32.mrb[0].mxu0
    %v5464 = vadd.f32 %v5413, %v5463
    %v5465 = vpop.f32.mrb[0].mxu0
    %v5466 = vadd.f32 %v5415, %v5465
    %v5467 = vpop.f32.mrb[0].mxu0
    %v5468 = vadd.f32 %v5417, %v5467
    %5469 = vmatprep.mubr.bf16.mxu0 %v3773
    %5470 = vmatmul.mubr.bf16.gmra.mrb[0].mxu0 %v3772
    %v5471 = vpop.f32.mrb[0].mxu0
    %v5472 = vadd.f32 %v5421, %v5471
    %v5473 = vpop.f32.mrb[0].mxu0
    %v5474 = vadd.f32 %v5423, %v5473
    %v5475 = vpop.f32.mrb[0].mxu0
    %v5476 = vpop.f32.mrb[0].mxu0
    %5477 = vdwg.mxu0
    %v5478 = vmax.f32 %v5258, 0.0
    %v5479 = vmax.f32 %v5260, 0.0
    %v5480 = vmax.f32 %v5462, 0.0
    %v5481 = vmax.f32 %v5464, 0.0
    %v5482 = vmax.f32 %v5262, 0.0
    %v5483 = vmax.f32 %v5264, 0.0
    %v5484 = vmax.f32 %v5466, 0.0
    %v5485 = vmax.f32 %v5468, 0.0
    %v5486 = vmax.f32 %v5268, 0.0
    %v5487 = vmax.f32 %v5270, 0.0
    %v5488 = vmax.f32 %v5472, 0.0
    %v5489 = vmax.f32 %v5474, 0.0
    %v5502 = vcombine.low %v5478, %v5479
    %v5503 = vcombine.high %v5478, %v5479
    %v5504 = vcombine.low %v5480, %v5481
    %v5505 = vcombine.high %v5480, %v5481
    %v5507 = vunpack.c.l.s4 1966171168
    %v5508 = vunpack.c.0.s8 %v5507
    %v5509 = vlaneseq
    %v5510 = vshrl.u32 %v5509, 7
    %v5511 = vsub.s32 %v5508, %v5510
    %v5512 = vrot.slane %v5502, %v5511
    %v5514 = vunpack.c.l.s4 1966171168
    %v5515 = vunpack.c.0.s8 %v5514
    %v5516 = vlaneseq
    %v5517 = vshrl.u32 %v5516, 7
    %v5518 = vsub.s32 %v5515, %v5517
    %v5519 = vrot.slane %v5503, %v5518
    %v5521 = vunpack.c.l.s4 1966171168
    %v5522 = vunpack.c.0.s8 %v5521
    %v5523 = vlaneseq
    %v5524 = vshrl.u32 %v5523, 7
    %v5525 = vsub.s32 %v5522, %v5524
    %v5526 = vrot.slane %v5504, %v5525
    %v5528 = vunpack.c.l.s4 1966171168
    %v5529 = vunpack.c.0.s8 %v5528
    %v5530 = vlaneseq
    %v5531 = vshrl.u32 %v5530, 7
    %v5532 = vsub.s32 %v5529, %v5531
    %v5533 = vrot.slane %v5505, %v5532
    %v5534 = vcombine.low %v5512, %v5526
    %v5535 = vcombine.high %v5512, %v5526
    %v5536 = vcombine.low %v5519, %v5533
    %v5537 = vcombine.high %v5519, %v5533
    %v5539 = vunpack.c.l.s4 1966171168
    %v5540 = vunpack.c.0.s8 %v5539
    %v5541 = vlaneseq
    %v5542 = vshrl.u32 %v5541, 7
    %v5543 = vsub.s32 %v5540, %v5542
    %v5544 = vrot.slane %v5534, %v5543
    %v5546 = vunpack.c.l.s4 1966171168
    %v5547 = vunpack.c.0.s8 %v5546
    %v5548 = vlaneseq
    %v5549 = vshrl.u32 %v5548, 7
    %v5550 = vsub.s32 %v5547, %v5549
    %v5551 = vrot.slane %v5536, %v5550
    %v5553 = vunpack.c.l.s4 1966171168
    %v5554 = vunpack.c.0.s8 %v5553
    %v5555 = vlaneseq
    %v5556 = vshrl.u32 %v5555, 7
    %v5557 = vsub.s32 %v5554, %v5556
    %v5558 = vrot.slane %v5535, %v5557
    %v5560 = vunpack.c.l.s4 1966171168
    %v5561 = vunpack.c.0.s8 %v5560
    %v5562 = vlaneseq
    %v5563 = vshrl.u32 %v5562, 7
    %v5564 = vsub.s32 %v5561, %v5563
    %v5565 = vrot.slane %v5537, %v5564
    %v5566 = vcombine.high %v5544, %v5544
    %v5567 = vcombine.high %v5551, %v5551
    %v5568 = vcombine.high %v5558, %v5558
    %v5569 = vcombine.high %v5565, %v5565
    %v5570 = vcombine.low %v5482, %v5483
    %v5571 = vcombine.high %v5482, %v5483
    %v5572 = vcombine.low %v5484, %v5485
    %v5573 = vcombine.high %v5484, %v5485
    %v5575 = vunpack.c.l.s4 1966171168
    %v5576 = vunpack.c.0.s8 %v5575
    %v5577 = vlaneseq
    %v5578 = vshrl.u32 %v5577, 7
    %v5579 = vsub.s32 %v5576, %v5578
    %v5580 = vrot.slane %v5570, %v5579
    %v5582 = vunpack.c.l.s4 1966171168
    %v5583 = vunpack.c.0.s8 %v5582
    %v5584 = vlaneseq
    %v5585 = vshrl.u32 %v5584, 7
    %v5586 = vsub.s32 %v5583, %v5585
    %v5587 = vrot.slane %v5571, %v5586
    %v5589 = vunpack.c.l.s4 1966171168
    %v5590 = vunpack.c.0.s8 %v5589
    %v5591 = vlaneseq
    %v5592 = vshrl.u32 %v5591, 7
    %v5593 = vsub.s32 %v5590, %v5592
    %v5594 = vrot.slane %v5572, %v5593
    %v5596 = vunpack.c.l.s4 1966171168
    %v5597 = vunpack.c.0.s8 %v5596
    %v5598 = vlaneseq
    %v5599 = vshrl.u32 %v5598, 7
    %v5600 = vsub.s32 %v5597, %v5599
    %v5601 = vrot.slane %v5573, %v5600
    %v5602 = vcombine.low %v5580, %v5594
    %v5603 = vcombine.high %v5580, %v5594
    %v5604 = vcombine.low %v5587, %v5601
    %v5605 = vcombine.high %v5587, %v5601
    %v5607 = vunpack.c.l.s4 1966171168
    %v5608 = vunpack.c.0.s8 %v5607
    %v5609 = vlaneseq
    %v5610 = vshrl.u32 %v5609, 7
    %v5611 = vsub.s32 %v5608, %v5610
    %v5612 = vrot.slane %v5602, %v5611
    %v5614 = vunpack.c.l.s4 1966171168
    %v5615 = vunpack.c.0.s8 %v5614
    %v5616 = vlaneseq
    %v5617 = vshrl.u32 %v5616, 7
    %v5618 = vsub.s32 %v5615, %v5617
    %v5619 = vrot.slane %v5604, %v5618
    %v5621 = vunpack.c.l.s4 1966171168
    %v5622 = vunpack.c.0.s8 %v5621
    %v5623 = vlaneseq
    %v5624 = vshrl.u32 %v5623, 7
    %v5625 = vsub.s32 %v5622, %v5624
    %v5626 = vrot.slane %v5603, %v5625
    %v5628 = vunpack.c.l.s4 1966171168
    %v5629 = vunpack.c.0.s8 %v5628
    %v5630 = vlaneseq
    %v5631 = vshrl.u32 %v5630, 7
    %v5632 = vsub.s32 %v5629, %v5631
    %v5633 = vrot.slane %v5605, %v5632
    %v5634 = vcombine.high %v5612, %v5612
    %v5635 = vcombine.high %v5619, %v5619
    %v5636 = vcombine.high %v5626, %v5626
    %v5637 = vcombine.high %v5633, %v5633
    %v5638 = vcombine.low %v5486, %v5487
    %v5639 = vcombine.high %v5486, %v5487
    %v5640 = vcombine.low %v5488, %v5489
    %v5641 = vcombine.high %v5488, %v5489
    %v5643 = vunpack.c.l.s4 1966171168
    %v5644 = vunpack.c.0.s8 %v5643
    %v5645 = vlaneseq
    %v5646 = vshrl.u32 %v5645, 7
    %v5647 = vsub.s32 %v5644, %v5646
    %v5648 = vrot.slane %v5638, %v5647
    %v5650 = vunpack.c.l.s4 1966171168
    %v5651 = vunpack.c.0.s8 %v5650
    %v5652 = vlaneseq
    %v5653 = vshrl.u32 %v5652, 7
    %v5654 = vsub.s32 %v5651, %v5653
    %v5655 = vrot.slane %v5639, %v5654
    %v5657 = vunpack.c.l.s4 1966171168
    %v5658 = vunpack.c.0.s8 %v5657
    %v5659 = vlaneseq
    %v5660 = vshrl.u32 %v5659, 7
    %v5661 = vsub.s32 %v5658, %v5660
    %v5662 = vrot.slane %v5640, %v5661
    %v5664 = vunpack.c.l.s4 1966171168
    %v5665 = vunpack.c.0.s8 %v5664
    %v5666 = vlaneseq
    %v5667 = vshrl.u32 %v5666, 7
    %v5668 = vsub.s32 %v5665, %v5667
    %v5669 = vrot.slane %v5641, %v5668
    %v5670 = vcombine.low %v5648, %v5662
    %v5671 = vcombine.high %v5648, %v5662
    %v5672 = vcombine.low %v5655, %v5669
    %v5673 = vcombine.high %v5655, %v5669
    %v5675 = vunpack.c.l.s4 1966171168
    %v5676 = vunpack.c.0.s8 %v5675
    %v5677 = vlaneseq
    %v5678 = vshrl.u32 %v5677, 7
    %v5679 = vsub.s32 %v5676, %v5678
    %v5680 = vrot.slane %v5670, %v5679
    %v5682 = vunpack.c.l.s4 1966171168
    %v5683 = vunpack.c.0.s8 %v5682
    %v5684 = vlaneseq
    %v5685 = vshrl.u32 %v5684, 7
    %v5686 = vsub.s32 %v5683, %v5685
    %v5687 = vrot.slane %v5672, %v5686
    %v5689 = vunpack.c.l.s4 1966171168
    %v5690 = vunpack.c.0.s8 %v5689
    %v5691 = vlaneseq
    %v5692 = vshrl.u32 %v5691, 7
    %v5693 = vsub.s32 %v5690, %v5692
    %v5694 = vrot.slane %v5671, %v5693
    %v5696 = vunpack.c.l.s4 1966171168
    %v5697 = vunpack.c.0.s8 %v5696
    %v5698 = vlaneseq
    %v5699 = vshrl.u32 %v5698, 7
    %v5700 = vsub.s32 %v5697, %v5699
    %v5701 = vrot.slane %v5673, %v5700
    %v5702 = vcombine.high %v5680, %v5680
    %v5703 = vcombine.high %v5694, %v5694
    %v5724 = vmax.f32 %v5544, %v5558
    %v5725 = vmax.f32 %v5566, %v5568
    %v5726 = vmax.f32 %v5551, %v5565
    %v5727 = vmax.f32 %v5567, %v5569
    %v5728 = vmax.f32 %v5612, %v5626
    %v5729 = vmax.f32 %v5636, %v5619
    %v5730 = vmax.f32 %v5633, %v5635
    %v5731 = vmax.f32 %v5637, %v5680
    %v5732 = vmax.f32 %v5694, %v5702
    %v5733 = vmax.f32 %v5703, %v5687
    %vm5734 = vcmp.ge.f32.partialorder %v5544, %v5558
    %vm5735 = vcmp.ge.f32.partialorder %v5566, %v5568
    %vm5736 = vcmp.ge.f32.partialorder %v5551, %v5565
    %vm5737 = vcmp.ge.f32.partialorder %v5567, %v5569
    %vm5738 = vcmp.ge.f32.partialorder %v5612, %v5626
    %vm5739 = vcmp.ge.f32.partialorder %v5636, %v5619
    %vm5740 = vcmp.ge.f32.partialorder %v5633, %v5635
    %vm5741 = vcmp.ge.f32.partialorder %v5637, %v5680
    %vm5742 = vcmp.ge.f32.partialorder %v5694, %v5702
    %vm5743 = vcmp.ge.f32.partialorder %v5703, %v5687
    %v5744 = vsel %vm5734, 0, 1
    %v5745 = vsel %vm5735, 0, 1
    %v5746 = vsel %vm5736, 0, 1
    %v5747 = vsel %vm5737, 0, 1
    %v5748 = vsel %vm5738, 0, 1
    %v5749 = vsel %vm5739, 0, 1
    %v5750 = vsel %vm5740, 0, 1
    %v5751 = vsel %vm5741, 0, 1
    %v5752 = vsel %vm5742, 0, 1
    %v5753 = vsel %vm5743, 0, 1
    %v5764 = vcombine.low %v5724, %v5725
    %v5765 = vcombine.low %v5726, %v5727
    %v5767 = vunpack.c.l.s4 1966171168
    %v5768 = vunpack.c.0.s8 %v5767
    %v5769 = vlaneseq
    %v5770 = vshrl.u32 %v5769, 7
    %v5771 = vsub.s32 %v5768, %v5770
    %v5772 = vrot.slane %v5764, %v5771
    %v5774 = vunpack.c.l.s4 1966171168
    %v5775 = vunpack.c.0.s8 %v5774
    %v5776 = vlaneseq
    %v5777 = vshrl.u32 %v5776, 7
    %v5778 = vsub.s32 %v5775, %v5777
    %v5779 = vrot.slane %v5765, %v5778
    %v5781 = vunpack.c.l.s4 1966171168
    %v5782 = vunpack.c.0.s8 %v5781
    %v5783 = vlaneseq
    %v5784 = vshrl.u32 %v5783, 7
    %v5785 = vsub.s32 %v5782, %v5784
    %v5786 = vrot.slane %v5728, %v5785
    %v5787 = vcombine.low %v5772, %v5779
    %v5788 = vcombine.high %v5772, %v5779
    %v5789 = vcombine.high %v5786, %v5786
    %v5791 = vunpack.c.l.s4 1966171168
    %v5792 = vunpack.c.0.s8 %v5791
    %v5793 = vlaneseq
    %v5794 = vshrl.u32 %v5793, 7
    %v5795 = vsub.s32 %v5792, %v5794
    %v5796 = vrot.slane %v5787, %v5795
    %v5798 = vunpack.c.l.s4 1966171168
    %v5799 = vunpack.c.0.s8 %v5798
    %v5800 = vlaneseq
    %v5801 = vshrl.u32 %v5800, 7
    %v5802 = vsub.s32 %v5799, %v5801
    %v5803 = vrot.slane %v5788, %v5802
    %v5805 = vunpack.c.l.s4 1966171168
    %v5806 = vunpack.c.0.s8 %v5805
    %v5807 = vlaneseq
    %v5808 = vshrl.u32 %v5807, 7
    %v5809 = vsub.s32 %v5806, %v5808
    %v5810 = vrot.slane %v5786, %v5809
    %v5812 = vunpack.c.l.s4 1966171168
    %v5813 = vunpack.c.0.s8 %v5812
    %v5814 = vlaneseq
    %v5815 = vshrl.u32 %v5814, 7
    %v5816 = vsub.s32 %v5813, %v5815
    %v5817 = vrot.slane %v5789, %v5816
    %v5818 = vcombine.low %v5796, %v5810
    %v5819 = vcombine.high %v5796, %v5810
    %v5820 = vcombine.low %v5803, %v5817
    %v5821 = vcombine.high %v5803, %v5817
    %v5822 = vcombine.low %v5729, %v5730
    %v5823 = vcombine.low %v5731, %v5732
    %v5825 = vunpack.c.l.s4 1966171168
    %v5826 = vunpack.c.0.s8 %v5825
    %v5827 = vlaneseq
    %v5828 = vshrl.u32 %v5827, 7
    %v5829 = vsub.s32 %v5826, %v5828
    %v5830 = vrot.slane %v5822, %v5829
    %v5832 = vunpack.c.l.s4 1966171168
    %v5833 = vunpack.c.0.s8 %v5832
    %v5834 = vlaneseq
    %v5835 = vshrl.u32 %v5834, 7
    %v5836 = vsub.s32 %v5833, %v5835
    %v5837 = vrot.slane %v5823, %v5836
    %v5839 = vunpack.c.l.s4 1966171168
    %v5840 = vunpack.c.0.s8 %v5839
    %v5841 = vlaneseq
    %v5842 = vshrl.u32 %v5841, 7
    %v5843 = vsub.s32 %v5840, %v5842
    %v5844 = vrot.slane %v5733, %v5843
    %v5845 = vcombine.low %v5830, %v5837
    %v5846 = vcombine.high %v5830, %v5837
    %v5847 = vcombine.high %v5844, %v5844
    %v5849 = vunpack.c.l.s4 1966171168
    %v5850 = vunpack.c.0.s8 %v5849
    %v5851 = vlaneseq
    %v5852 = vshrl.u32 %v5851, 7
    %v5853 = vsub.s32 %v5850, %v5852
    %v5854 = vrot.slane %v5845, %v5853
    %v5856 = vunpack.c.l.s4 1966171168
    %v5857 = vunpack.c.0.s8 %v5856
    %v5858 = vlaneseq
    %v5859 = vshrl.u32 %v5858, 7
    %v5860 = vsub.s32 %v5857, %v5859
    %v5861 = vrot.slane %v5846, %v5860
    %v5863 = vunpack.c.l.s4 1966171168
    %v5864 = vunpack.c.0.s8 %v5863
    %v5865 = vlaneseq
    %v5866 = vshrl.u32 %v5865, 7
    %v5867 = vsub.s32 %v5864, %v5866
    %v5868 = vrot.slane %v5844, %v5867
    %v5870 = vunpack.c.l.s4 1966171168
    %v5871 = vunpack.c.0.s8 %v5870
    %v5872 = vlaneseq
    %v5873 = vshrl.u32 %v5872, 7
    %v5874 = vsub.s32 %v5871, %v5873
    %v5875 = vrot.slane %v5847, %v5874
    %v5876 = vcombine.low %v5854, %v5868
    %v5877 = vcombine.high %v5854, %v5868
    %v5878 = vcombine.low %v5861, %v5875
    %v5879 = vcombine.high %v5861, %v5875
    %v5888 = vlaneseq
    %v5889 = vshrl.u32 %v5888, 7
    %v5890 = vsub.s32 0, %v5889
    %v5891 = vrot.slane %v5634, %v5890
    %v5892 = vlaneseq
    %v5893 = vshrl.u32 %v5892, 7
    %v5894 = vsub.s32 1, %v5893
    %v5895 = vrot.slane %v5634, %v5894
    %v5896 = vlaneseq
    %v5897 = vshrl.u32 %v5896, 7
    %v5898 = vsub.s32 2, %v5897
    %v5899 = vrot.slane %v5634, %v5898
    %v5900 = vlaneseq
    %v5901 = vshrl.u32 %v5900, 7
    %v5902 = vsub.s32 3, %v5901
    %v5903 = vrot.slane %v5634, %v5902
    %v5904 = vlaneseq
    %v5905 = vshrl.u32 %v5904, 7
    %v5906 = vsub.s32 0, %v5905
    %v5907 = vrot.slane %v5701, %v5906
    %v5908 = vlaneseq
    %v5909 = vshrl.u32 %v5908, 7
    %v5910 = vsub.s32 1, %v5909
    %v5911 = vrot.slane %v5701, %v5910
    %v5912 = vlaneseq
    %v5913 = vshrl.u32 %v5912, 7
    %v5914 = vsub.s32 2, %v5913
    %v5915 = vrot.slane %v5701, %v5914
    %v5916 = vlaneseq
    %v5917 = vshrl.u32 %v5916, 7
    %v5918 = vsub.s32 3, %v5917
    %v5919 = vrot.slane %v5701, %v5918
    %vm5928 = vcmask 1044480
    %v5929 = vsel %vm5928, %v5818, %v5891
    %v5930 = vsel %vm5928, %v5820, %v5895
    %v5931 = vsel %vm5928, %v5819, %v5899
    %v5932 = vsel %vm5928, %v5821, %v5903
    %v5933 = vsel %vm5928, %v5876, %v5907
    %v5934 = vsel %vm5928, %v5878, %v5911
    %v5935 = vsel %vm5928, %v5877, %v5915
    %v5936 = vsel %vm5928, %v5879, %v5919
    %v5937 = vcombine.low %v5744, %v5745
    %v5938 = vcombine.low %v5746, %v5747
    %v5940 = vunpack.c.l.s4 1966171168
    %v5941 = vunpack.c.0.s8 %v5940
    %v5942 = vlaneseq
    %v5943 = vshrl.u32 %v5942, 7
    %v5944 = vsub.s32 %v5941, %v5943
    %v5945 = vrot.slane %v5937, %v5944
    %v5947 = vunpack.c.l.s4 1966171168
    %v5948 = vunpack.c.0.s8 %v5947
    %v5949 = vlaneseq
    %v5950 = vshrl.u32 %v5949, 7
    %v5951 = vsub.s32 %v5948, %v5950
    %v5952 = vrot.slane %v5938, %v5951
    %v5954 = vunpack.c.l.s4 1966171168
    %v5955 = vunpack.c.0.s8 %v5954
    %v5956 = vlaneseq
    %v5957 = vshrl.u32 %v5956, 7
    %v5958 = vsub.s32 %v5955, %v5957
    %v5959 = vrot.slane %v5748, %v5958
    %v5960 = vcombine.low %v5945, %v5952
    %v5961 = vcombine.high %v5945, %v5952
    %v5962 = vcombine.high %v5959, %v5959
    %v5964 = vunpack.c.l.s4 1966171168
    %v5965 = vunpack.c.0.s8 %v5964
    %v5966 = vlaneseq
    %v5967 = vshrl.u32 %v5966, 7
    %v5968 = vsub.s32 %v5965, %v5967
    %v5969 = vrot.slane %v5960, %v5968
    %v5971 = vunpack.c.l.s4 1966171168
    %v5972 = vunpack.c.0.s8 %v5971
    %v5973 = vlaneseq
    %v5974 = vshrl.u32 %v5973, 7
    %v5975 = vsub.s32 %v5972, %v5974
    %v5976 = vrot.slane %v5961, %v5975
    %v5978 = vunpack.c.l.s4 1966171168
    %v5979 = vunpack.c.0.s8 %v5978
    %v5980 = vlaneseq
    %v5981 = vshrl.u32 %v5980, 7
    %v5982 = vsub.s32 %v5979, %v5981
    %v5983 = vrot.slane %v5959, %v5982
    %v5985 = vunpack.c.l.s4 1966171168
    %v5986 = vunpack.c.0.s8 %v5985
    %v5987 = vlaneseq
    %v5988 = vshrl.u32 %v5987, 7
    %v5989 = vsub.s32 %v5986, %v5988
    %v5990 = vrot.slane %v5962, %v5989
    %v5991 = vcombine.low %v5969, %v5983
    %v5992 = vcombine.high %v5969, %v5983
    %v5993 = vcombine.low %v5976, %v5990
    %v5994 = vcombine.high %v5976, %v5990
    %v5995 = vcombine.low %v5749, %v5750
    %v5996 = vcombine.low %v5751, %v5752
    %v5998 = vunpack.c.l.s4 1966171168
    %v5999 = vunpack.c.0.s8 %v5998
    %v6000 = vlaneseq
    %v6001 = vshrl.u32 %v6000, 7
    %v6002 = vsub.s32 %v5999, %v6001
    %v6003 = vrot.slane %v5995, %v6002
    %v6005 = vunpack.c.l.s4 1966171168
    %v6006 = vunpack.c.0.s8 %v6005
    %v6007 = vlaneseq
    %v6008 = vshrl.u32 %v6007, 7
    %v6009 = vsub.s32 %v6006, %v6008
    %v6010 = vrot.slane %v5996, %v6009
    %v6012 = vunpack.c.l.s4 1966171168
    %v6013 = vunpack.c.0.s8 %v6012
    %v6014 = vlaneseq
    %v6015 = vshrl.u32 %v6014, 7
    %v6016 = vsub.s32 %v6013, %v6015
    %v6017 = vrot.slane %v5753, %v6016
    %v6018 = vcombine.low %v6003, %v6010
    %v6019 = vcombine.high %v6003, %v6010
    %v6020 = vcombine.high %v6017, %v6017
    %v6022 = vunpack.c.l.s4 1966171168
    %v6023 = vunpack.c.0.s8 %v6022
    %v6024 = vlaneseq
    %v6025 = vshrl.u32 %v6024, 7
    %v6026 = vsub.s32 %v6023, %v6025
    %v6027 = vrot.slane %v6018, %v6026
    %v6029 = vunpack.c.l.s4 1966171168
    %v6030 = vunpack.c.0.s8 %v6029
    %v6031 = vlaneseq
    %v6032 = vshrl.u32 %v6031, 7
    %v6033 = vsub.s32 %v6030, %v6032
    %v6034 = vrot.slane %v6019, %v6033
    %v6036 = vunpack.c.l.s4 1966171168
    %v6037 = vunpack.c.0.s8 %v6036
    %v6038 = vlaneseq
    %v6039 = vshrl.u32 %v6038, 7
    %v6040 = vsub.s32 %v6037, %v6039
    %v6041 = vrot.slane %v6017, %v6040
    %v6043 = vunpack.c.l.s4 1966171168
    %v6044 = vunpack.c.0.s8 %v6043
    %v6045 = vlaneseq
    %v6046 = vshrl.u32 %v6045, 7
    %v6047 = vsub.s32 %v6044, %v6046
    %v6048 = vrot.slane %v6020, %v6047
    %v6049 = vcombine.low %v6027, %v6041
    %v6050 = vcombine.high %v6027, %v6041
    %v6051 = vcombine.low %v6034, %v6048
    %v6052 = vcombine.high %v6034, %v6048
    %v6053 = vsel %vm5928, %v5991, 0
    %v6054 = vsel %vm5928, %v5993, 0
    %v6055 = vsel %vm5928, %v5992, 0
    %v6056 = vsel %vm5928, %v5994, 0
    %v6057 = vsel %vm5928, %v6049, 0
    %v6058 = vsel %vm5928, %v6051, 0
    %v6059 = vsel %vm5928, %v6050, 0
    %v6060 = vsel %vm5928, %v6052, 0
    %v6069 = vcombine.low %v5929, %v5930
    %v6070 = vcombine.high %v5929, %v5930
    %v6071 = vcombine.low %v5931, %v5932
    %v6072 = vcombine.high %v5931, %v5932
    %v6074 = vunpack.c.l.s4 1983009808
    %v6075 = vunpack.c.0.s8 %v6074
    %v6076 = vlaneseq
    %v6077 = vshrl.u32 %v6076, 7
    %v6078 = vsub.s32 %v6075, %v6077
    %v6079 = vrot.slane %v6069, %v6078
    %v6081 = vunpack.c.l.s4 1983009808
    %v6082 = vunpack.c.0.s8 %v6081
    %v6083 = vlaneseq
    %v6084 = vshrl.u32 %v6083, 7
    %v6085 = vsub.s32 %v6082, %v6084
    %v6086 = vrot.slane %v6070, %v6085
    %v6088 = vunpack.c.l.s4 1983009808
    %v6089 = vunpack.c.0.s8 %v6088
    %v6090 = vlaneseq
    %v6091 = vshrl.u32 %v6090, 7
    %v6092 = vsub.s32 %v6089, %v6091
    %v6093 = vrot.slane %v6071, %v6092
    %v6095 = vunpack.c.l.s4 1983009808
    %v6096 = vunpack.c.0.s8 %v6095
    %v6097 = vlaneseq
    %v6098 = vshrl.u32 %v6097, 7
    %v6099 = vsub.s32 %v6096, %v6098
    %v6100 = vrot.slane %v6072, %v6099
    %v6101 = vcombine.low %v6079, %v6093
    %v6102 = vcombine.high %v6079, %v6093
    %v6103 = vcombine.low %v6086, %v6100
    %v6104 = vcombine.low %v5933, %v5934
    %v6105 = vcombine.high %v5933, %v5934
    %v6106 = vcombine.low %v5935, %v5936
    %v6107 = vcombine.high %v5935, %v5936
    %v6109 = vunpack.c.l.s4 1983009808
    %v6110 = vunpack.c.0.s8 %v6109
    %v6111 = vlaneseq
    %v6112 = vshrl.u32 %v6111, 7
    %v6113 = vsub.s32 %v6110, %v6112
    %v6114 = vrot.slane %v6104, %v6113
    %v6116 = vunpack.c.l.s4 1983009808
    %v6117 = vunpack.c.0.s8 %v6116
    %v6118 = vlaneseq
    %v6119 = vshrl.u32 %v6118, 7
    %v6120 = vsub.s32 %v6117, %v6119
    %v6121 = vrot.slane %v6105, %v6120
    %v6123 = vunpack.c.l.s4 1983009808
    %v6124 = vunpack.c.0.s8 %v6123
    %v6125 = vlaneseq
    %v6126 = vshrl.u32 %v6125, 7
    %v6127 = vsub.s32 %v6124, %v6126
    %v6128 = vrot.slane %v6106, %v6127
    %v6130 = vunpack.c.l.s4 1983009808
    %v6131 = vunpack.c.0.s8 %v6130
    %v6132 = vlaneseq
    %v6133 = vshrl.u32 %v6132, 7
    %v6134 = vsub.s32 %v6131, %v6133
    %v6135 = vrot.slane %v6107, %v6134
    %v6136 = vcombine.low %v6114, %v6128
    %v6137 = vcombine.high %v6114, %v6128
    %v6138 = vcombine.low %v6121, %v6135
    %v6139 = vcombine.low %v6101, %v6102
    %v6140 = vcombine.high %v6101, %v6102
    %v6141 = vcombine.low %v6103, %v6136
    %v6142 = vcombine.high %v6103, %v6136
    %v6144 = vunpack.c.l.s4 1983009808
    %v6145 = vunpack.c.0.s8 %v6144
    %v6146 = vlaneseq
    %v6147 = vshrl.u32 %v6146, 7
    %v6148 = vsub.s32 %v6145, %v6147
    %v6149 = vrot.slane %v6139, %v6148
    %v6151 = vunpack.c.l.s4 1983009808
    %v6152 = vunpack.c.0.s8 %v6151
    %v6153 = vlaneseq
    %v6154 = vshrl.u32 %v6153, 7
    %v6155 = vsub.s32 %v6152, %v6154
    %v6156 = vrot.slane %v6140, %v6155
    %v6158 = vunpack.c.l.s4 1983009808
    %v6159 = vunpack.c.0.s8 %v6158
    %v6160 = vlaneseq
    %v6161 = vshrl.u32 %v6160, 7
    %v6162 = vsub.s32 %v6159, %v6161
    %v6163 = vrot.slane %v6141, %v6162
    %v6165 = vunpack.c.l.s4 1983009808
    %v6166 = vunpack.c.0.s8 %v6165
    %v6167 = vlaneseq
    %v6168 = vshrl.u32 %v6167, 7
    %v6169 = vsub.s32 %v6166, %v6168
    %v6170 = vrot.slane %v6142, %v6169
    %v6171 = vcombine.low %v6149, %v6163
    %v6172 = vcombine.high %v6149, %v6163
    %v6173 = vcombine.low %v6156, %v6170
    %v6174 = vcombine.high %v6156, %v6170
    %v6175 = vcombine.low %v6137, %v6138
    %v6176 = vcombine.high %v6137, %v6138
    %v6178 = vunpack.c.l.s4 1983009808
    %v6179 = vunpack.c.0.s8 %v6178
    %v6180 = vlaneseq
    %v6181 = vshrl.u32 %v6180, 7
    %v6182 = vsub.s32 %v6179, %v6181
    %v6183 = vrot.slane %v6175, %v6182
    %v6185 = vunpack.c.l.s4 1983009808
    %v6186 = vunpack.c.0.s8 %v6185
    %v6187 = vlaneseq
    %v6188 = vshrl.u32 %v6187, 7
    %v6189 = vsub.s32 %v6186, %v6188
    %v6190 = vrot.slane %v6176, %v6189
    %v6191 = vcombine.high %v6183, %v6183
    %v6192 = vcombine.high %v6190, %v6190
    %v6201 = vpack.c.bf16 %v6183, %v6171
    %v6202 = vpack.c.bf16 %v6191, %v6172
    %v6203 = vpack.c.bf16 %v6190, %v6173
    %v6204 = vpack.c.bf16 %v6192, %v6174
    %v6206 = vlaneseq
    %v6207 = vshrl.u32 %v6206, 7
    %v6208 = vsub.s32 0, %v6207
    %v6209 = vrot.slane %v425, %v6208
    %v6275 = vunpack.c.l.b16 %v361
    %v6276 = vunpack.c.l.b16 %v362
    %v6277 = vunpack.c.l.b16 %v363
    %v6278 = vunpack.c.l.b16 %v364
    %v6279 = vunpack.c.l.b16 %v365
    %v6280 = vunpack.c.l.b16 %v366
    %v6281 = vunpack.c.l.b16 %v367
    %v6282 = vunpack.c.l.b16 %v368
    %v6283 = vunpack.c.l.b16 %v369
    %v6284 = vunpack.c.l.b16 %v370
    %v6285 = vunpack.c.l.b16 %v371
    %v6286 = vunpack.c.l.b16 %v372
    %v6287 = vunpack.c.l.b16 %v373
    %v6288 = vunpack.c.l.b16 %v374
    %v6289 = vunpack.c.l.b16 %v375
    %v6290 = vunpack.c.l.b16 %v376
    %v6291 = vunpack.c.l.b16 %v377
    %v6292 = vunpack.c.l.b16 %v378
    %v6293 = vunpack.c.l.b16 %v379
    %v6294 = vunpack.c.l.b16 %v380
    %v6295 = vunpack.c.l.b16 %v381
    %v6296 = vunpack.c.l.b16 %v382
    %v6297 = vunpack.c.l.b16 %v383
    %v6298 = vunpack.c.l.b16 %v384
    %v6299 = vunpack.c.l.b16 %v385
    %v6300 = vunpack.c.l.b16 %v386
    %v6301 = vunpack.c.l.b16 %v387
    %v6302 = vunpack.c.l.b16 %v388
    %v6303 = vunpack.c.l.b16 %v389
    %v6304 = vunpack.c.l.b16 %v390
    %v6305 = vunpack.c.l.b16 %v391
    %v6306 = vunpack.c.l.b16 %v392
    %v6307 = vunpack.c.l.b16 %v393
    %v6308 = vunpack.c.l.b16 %v394
    %v6309 = vunpack.c.l.b16 %v395
    %v6310 = vunpack.c.l.b16 %v396
    %v6311 = vunpack.c.l.b16 %v397
    %v6312 = vunpack.c.l.b16 %v398
    %v6313 = vunpack.c.l.b16 %v399
    %v6314 = vunpack.c.l.b16 %v400
    %v6315 = vunpack.c.l.b16 %v401
    %v6316 = vunpack.c.l.b16 %v402
    %v6317 = vunpack.c.l.b16 %v403
    %v6318 = vunpack.c.l.b16 %v404
    %v6319 = vunpack.c.l.b16 %v405
    %v6320 = vunpack.c.l.b16 %v406
    %v6321 = vunpack.c.l.b16 %v407
    %v6322 = vunpack.c.l.b16 %v408
    %v6323 = vunpack.c.l.b16 %v409
    %v6324 = vunpack.c.l.b16 %v410
    %v6325 = vunpack.c.l.b16 %v411
    %v6326 = vunpack.c.l.b16 %v412
    %v6327 = vunpack.c.l.b16 %v413
    %v6328 = vunpack.c.l.b16 %v414
    %v6329 = vunpack.c.l.b16 %v415
    %v6330 = vunpack.c.l.b16 %v416
    %v6331 = vunpack.c.l.b16 %v417
    %v6332 = vunpack.c.l.b16 %v418
    %v6333 = vunpack.c.l.b16 %v419
    %v6334 = vunpack.c.l.b16 %v420
    %v6335 = vunpack.c.l.b16 %v421
    %v6336 = vunpack.c.l.b16 %v422
    %v6337 = vunpack.c.l.b16 %v423
    %v6338 = vunpack.c.l.b16 %v424
    %v6339 = vpack.c.b16 %v6276, %v6275
    %v6340 = vpack.c.b16 %v6278, %v6277
    %v6341 = vpack.c.b16 %v6280, %v6279
    %v6342 = vpack.c.b16 %v6282, %v6281
    %v6343 = vpack.c.b16 %v6284, %v6283
    %v6344 = vpack.c.b16 %v6286, %v6285
    %v6345 = vpack.c.b16 %v6288, %v6287
    %v6346 = vpack.c.b16 %v6290, %v6289
    %v6347 = vpack.c.b16 %v6292, %v6291
    %v6348 = vpack.c.b16 %v6294, %v6293
    %v6349 = vpack.c.b16 %v6296, %v6295
    %v6350 = vpack.c.b16 %v6298, %v6297
    %v6351 = vpack.c.b16 %v6300, %v6299
    %v6352 = vpack.c.b16 %v6302, %v6301
    %v6353 = vpack.c.b16 %v6304, %v6303
    %v6354 = vpack.c.b16 %v6306, %v6305
    %v6355 = vpack.c.b16 %v6308, %v6307
    %v6356 = vpack.c.b16 %v6310, %v6309
    %v6357 = vpack.c.b16 %v6312, %v6311
    %v6358 = vpack.c.b16 %v6314, %v6313
    %v6359 = vpack.c.b16 %v6316, %v6315
    %v6360 = vpack.c.b16 %v6318, %v6317
    %v6361 = vpack.c.b16 %v6320, %v6319
    %v6362 = vpack.c.b16 %v6322, %v6321
    %v6363 = vpack.c.b16 %v6324, %v6323
    %v6364 = vpack.c.b16 %v6326, %v6325
    %v6365 = vpack.c.b16 %v6328, %v6327
    %v6366 = vpack.c.b16 %v6330, %v6329
    %v6367 = vpack.c.b16 %v6332, %v6331
    %v6368 = vpack.c.b16 %v6334, %v6333
    %v6369 = vpack.c.b16 %v6336, %v6335
    %v6370 = vpack.c.b16 %v6338, %v6337
    %6403 = vmatprep.subr.bf16.mxu0 0
    %6404 = vmatpush1.bf16.msra.mxu0 %v6339
    %6405 = vmatprep.subr.bf16.mxu0 0
    %6406 = vmatpush1.bf16.msra.mxu0 %v6340
    %6407 = vmatprep.subr.bf16.mxu0 0
    %6408 = vmatpush1.bf16.msra.mxu0 %v6341
    %6409 = vmatprep.subr.bf16.mxu0 0
    %6410 = vmatpush1.bf16.msra.mxu0 %v6342
    %6411 = vmatprep.subr.bf16.mxu0 0
    %6412 = vmatpush1.bf16.msra.mxu0 %v6343
    %6413 = vmatprep.subr.bf16.mxu0 0
    %6414 = vmatpush1.bf16.msra.mxu0 %v6344
    %6415 = vmatprep.subr.bf16.mxu0 0
    %6416 = vmatpush1.bf16.msra.mxu0 %v6345
    %6417 = vmatprep.subr.bf16.mxu0 0
    %6418 = vmatpush1.bf16.msra.mxu0 %v6346
    %6419 = vmatprep.subr.bf16.mxu0 0
    %6420 = vmatpush1.bf16.msra.mxu0 %v6347
    %6421 = vmatprep.subr.bf16.mxu0 0
    %6422 = vmatpush1.bf16.msra.mxu0 %v6348
    %6423 = vmatprep.subr.bf16.mxu0 0
    %6424 = vmatpush1.bf16.msra.mxu0 %v6349
    %6425 = vmatprep.subr.bf16.mxu0 0
    %6426 = vmatpush1.bf16.msra.mxu0 %v6350
    %6427 = vmatprep.subr.bf16.mxu0 0
    %6428 = vmatpush1.bf16.msra.mxu0 %v6351
    %6429 = vmatprep.subr.bf16.mxu0 0
    %6430 = vmatpush1.bf16.msra.mxu0 %v6352
    %6431 = vmatprep.subr.bf16.mxu0 0
    %6432 = vmatpush1.bf16.msra.mxu0 %v6353
    %6433 = vmatprep.subr.bf16.mxu0 0
    %6434 = vmatpush1.bf16.msra.mxu0 %v6354
    %6435 = vmatprep.mubr.bf16.mxu0 %v6202
    %6436 = vmatmul.mubr.bf16.gmra.mrb[0].mxu0 %v6201
    %v6437 = vpop.f32.mrb[0].mxu0
    %v6438 = vadd.f32 %v6209, %v6437
    %v6439 = vpop.f32.mrb[0].mxu0
    %v6440 = vpop.f32.mrb[0].mxu0
    %v6441 = vadd.f32 %v6209, %v6440
    %v6442 = vpop.f32.mrb[0].mxu0
    %6443 = vdwg.mxu0
    %6444 = vmatprep.subr.bf16.mxu0 0
    %6445 = vmatpush1.bf16.msra.mxu0 %v6355
    %6446 = vmatprep.subr.bf16.mxu0 0
    %6447 = vmatpush1.bf16.msra.mxu0 %v6356
    %6448 = vmatprep.subr.bf16.mxu0 0
    %6449 = vmatpush1.bf16.msra.mxu0 %v6357
    %6450 = vmatprep.subr.bf16.mxu0 0
    %6451 = vmatpush1.bf16.msra.mxu0 %v6358
    %6452 = vmatprep.subr.bf16.mxu0 0
    %6453 = vmatpush1.bf16.msra.mxu0 %v6359
    %6454 = vmatprep.subr.bf16.mxu0 0
    %6455 = vmatpush1.bf16.msra.mxu0 %v6360
    %6456 = vmatprep.subr.bf16.mxu0 0
    %6457 = vmatpush1.bf16.msra.mxu0 %v6361
    %6458 = vmatprep.subr.bf16.mxu0 0
    %6459 = vmatpush1.bf16.msra.mxu0 %v6362
    %6460 = vmatprep.subr.bf16.mxu0 0
    %6461 = vmatpush1.bf16.msra.mxu0 %v6363
    %6462 = vmatprep.subr.bf16.mxu0 0
    %6463 = vmatpush1.bf16.msra.mxu0 %v6364
    %6464 = vmatprep.subr.bf16.mxu0 0
    %6465 = vmatpush1.bf16.msra.mxu0 %v6365
    %6466 = vmatprep.subr.bf16.mxu0 0
    %6467 = vmatpush1.bf16.msra.mxu0 %v6366
    %6468 = vmatprep.subr.bf16.mxu0 0
    %6469 = vmatpush1.bf16.msra.mxu0 %v6367
    %6470 = vmatprep.subr.bf16.mxu0 0
    %6471 = vmatpush1.bf16.msra.mxu0 %v6368
    %6472 = vmatprep.subr.bf16.mxu0 0
    %6473 = vmatpush1.bf16.msra.mxu0 %v6369
    %6474 = vmatprep.subr.bf16.mxu0 0
    %6475 = vmatpush1.bf16.msra.mxu0 %v6370
    %6476 = vmatprep.mubr.bf16.mxu0 %v6204
    %6477 = vmatmul.mubr.bf16.gmra.mrb[0].mxu0 %v6203
    %v6478 = vpop.f32.mrb[0].mxu0
    %v6479 = vadd.f32 %v6438, %v6478
    %v6480 = vpop.f32.mrb[0].mxu0
    %v6481 = vpop.f32.mrb[0].mxu0
    %v6482 = vadd.f32 %v6441, %v6481
    %v6483 = vpop.f32.mrb[0].mxu0
    %6484 = vdwg.mxu0
    %v6485 = vmax.f32 %v6479, 0.0
    %v6486 = vmax.f32 %v6482, 0.0
    %v6489 = vcombine.high %v6485, %v6485
    %v6491 = vunpack.c.l.s4 1983009808
    %v6492 = vunpack.c.0.s8 %v6491
    %v6493 = vlaneseq
    %v6494 = vshrl.u32 %v6493, 7
    %v6495 = vsub.s32 %v6492, %v6494
    %v6496 = vrot.slane %v6485, %v6495
    %v6498 = vunpack.c.l.s4 1983009808
    %v6499 = vunpack.c.0.s8 %v6498
    %v6500 = vlaneseq
    %v6501 = vshrl.u32 %v6500, 7
    %v6502 = vsub.s32 %v6499, %v6501
    %v6503 = vrot.slane %v6489, %v6502
    %v6504 = vcombine.high %v6496, %v6496
    %v6505 = vcombine.high %v6503, %v6503
    %v6507 = vunpack.c.l.s4 1983009808
    %v6508 = vunpack.c.0.s8 %v6507
    %v6509 = vlaneseq
    %v6510 = vshrl.u32 %v6509, 7
    %v6511 = vsub.s32 %v6508, %v6510
    %v6512 = vrot.slane %v6486, %v6511
    %v6513 = vcombine.high %v6512, %v6512
    %v6520 = vrot.slane %v6496, 7
    %v6521 = vrot.slane %v6520, 2
    %v6522 = vrot.slane %v6504, 7
    %v6523 = vrot.slane %v6522, 2
    %v6524 = vrot.slane %v6503, 7
    %v6525 = vrot.slane %v6524, 2
    %v6526 = vrot.slane %v6505, 7
    %v6527 = vrot.slane %v6526, 2
    %v6528 = vrot.slane %v6512, 7
    %v6529 = vrot.slane %v6528, 2
    %v6530 = vrot.slane %v6513, 7
    %v6531 = vrot.slane %v6530, 2
    %v6538 = vmax.f32 %v6496, %v6521
    %v6539 = vmax.f32 %v6504, %v6523
    %v6540 = vmax.f32 %v6503, %v6525
    %v6541 = vmax.f32 %v6505, %v6527
    %v6542 = vmax.f32 %v6512, %v6529
    %v6543 = vmax.f32 %v6513, %v6531
    %vm6544 = vcmp.ge.f32.partialorder %v6496, %v6521
    %vm6545 = vcmp.ge.f32.partialorder %v6504, %v6523
    %vm6546 = vcmp.ge.f32.partialorder %v6503, %v6525
    %vm6547 = vcmp.ge.f32.partialorder %v6505, %v6527
    %vm6548 = vcmp.ge.f32.partialorder %v6512, %v6529
    %vm6549 = vcmp.ge.f32.partialorder %v6513, %v6531
    %v6550 = vsel %vm6544, 0, 1
    %v6551 = vsel %vm6545, 0, 1
    %v6552 = vsel %vm6546, 0, 1
    %v6553 = vsel %vm6547, 0, 1
    %v6554 = vsel %vm6548, 0, 1
    %v6555 = vsel %vm6549, 0, 1
    %v6556 = vpack.c.bf16 %v6538, %v6538
    %v6557 = vpack.c.bf16 %v6539, %v6539
    %v6558 = vpack.c.bf16 %v6540, %v6540
    %v6559 = vpack.c.bf16 %v6541, %v6541
    %v6560 = vpack.c.bf16 %v6542, %v6542
    %v6561 = vpack.c.bf16 %v6543, %v6543
    %v6563 = vlaneseq
    %v6564 = vshrl.u32 %v6563, 7
    %v6565 = vsub.s32 0, %v6564
    %v6566 = vrot.slane %v442, %v6565
    %v6574 = vunpack.c.l.b16 %v6556
    %v6575 = vunpack.c.l.b16 %v6557
    %v6576 = vunpack.c.l.b16 %v6558
    %v6577 = vunpack.c.l.b16 %v6559
    %v6578 = vunpack.c.l.b16 %v6560
    %v6579 = vunpack.c.l.b16 %v6561
    %v6580 = vrot.slane %v6575, 7
    %v6581 = vsel %vm3448, %v6580, %v6574
    %v6582 = vrot.slane %v6576, 6
    %v6583 = vsel %vm3451, %v6582, %v6581
    %v6584 = vrot.slane %v6577, 5
    %v6585 = vsel %vm3454, %v6584, %v6583
    %v6586 = vrot.slane %v6578, 4
    %v6587 = vsel %vm3457, %v6586, %v6585
    %v6588 = vrot.slane %v6579, 3
    %v6589 = vsel %vm3460, %v6588, %v6587
    %v6590 = vpack.c.b16 %v6589, %v6589
    %v6608 = vunpack.c.l.b16 %v426
    %v6609 = vunpack.c.l.b16 %v427
    %v6610 = vunpack.c.l.b16 %v428
    %v6611 = vunpack.c.l.b16 %v429
    %v6612 = vunpack.c.l.b16 %v430
    %v6613 = vunpack.c.l.b16 %v431
    %v6614 = vunpack.c.l.b16 %v432
    %v6615 = vunpack.c.l.b16 %v433
    %v6616 = vunpack.c.l.b16 %v434
    %v6617 = vunpack.c.l.b16 %v435
    %v6618 = vunpack.c.l.b16 %v436
    %v6619 = vunpack.c.l.b16 %v437
    %v6620 = vunpack.c.l.b16 %v438
    %v6621 = vunpack.c.l.b16 %v439
    %v6622 = vunpack.c.l.b16 %v440
    %v6623 = vunpack.c.l.b16 %v441
    %v6624 = vpack.c.b16 %v6609, %v6608
    %v6625 = vpack.c.b16 %v6611, %v6610
    %v6626 = vpack.c.b16 %v6613, %v6612
    %v6627 = vpack.c.b16 %v6615, %v6614
    %v6628 = vpack.c.b16 %v6617, %v6616
    %v6629 = vpack.c.b16 %v6619, %v6618
    %v6630 = vpack.c.b16 %v6621, %v6620
    %v6631 = vpack.c.b16 %v6623, %v6622
    %6640 = vmatprep.subr.bf16.mxu0 0
    %6641 = vmatpush1.bf16.msra.mxu0 %v6624
    %6642 = vmatprep.subr.bf16.mxu0 0
    %6643 = vmatpush1.bf16.msra.mxu0 %v6625
    %6644 = vmatprep.subr.bf16.mxu0 0
    %6645 = vmatpush1.bf16.msra.mxu0 %v6626
    %6646 = vmatprep.subr.bf16.mxu0 0
    %6647 = vmatpush1.bf16.msra.mxu0 %v6627
    %6648 = vmatprep.subr.bf16.mxu0 0
    %6649 = vmatpush1.bf16.msra.mxu0 %v6628
    %6650 = vmatprep.subr.bf16.mxu0 0
    %6651 = vmatpush1.bf16.msra.mxu0 %v6629
    %6652 = vmatprep.subr.bf16.mxu0 0
    %6653 = vmatpush1.bf16.msra.mxu0 %v6630
    %6654 = vmatprep.subr.bf16.mxu0 0
    %6655 = vmatpush1.bf16.msra.mxu0 %v6631
    %6656 = vmatprep.subr.bf16.mxu0 0
    %6657 = vmatpush1.bf16.msra.mxu0 0
    %6658 = vmatprep.subr.bf16.mxu0 0
    %6659 = vmatpush1.bf16.msra.mxu0 0
    %6660 = vmatprep.subr.bf16.mxu0 0
    %6661 = vmatpush1.bf16.msra.mxu0 0
    %6662 = vmatprep.subr.bf16.mxu0 0
    %6663 = vmatpush1.bf16.msra.mxu0 0
    %6664 = vmatprep.subr.bf16.mxu0 0
    %6665 = vmatpush1.bf16.msra.mxu0 0
    %6666 = vmatprep.subr.bf16.mxu0 0
    %6667 = vmatpush1.bf16.msra.mxu0 0
    %6668 = vmatprep.subr.bf16.mxu0 0
    %6669 = vmatpush1.bf16.msra.mxu0 0
    %6670 = vmatprep.subr.bf16.mxu0 0
    %6671 = vmatpush1.bf16.msra.mxu0 0
    %6672 = vmatprep.mubr.bf16.mxu0 0
    %6673 = vmatmul.mubr.bf16.gmra.mrb[0].mxu0 %v6590
    %v6674 = vpop.f32.mrb[0].mxu0
    %v6675 = vadd.f32 %v6566, %v6674
    %v6676 = vpop.f32.mrb[0].mxu0
    %v6677 = vpop.f32.mrb[0].mxu0
    %v6678 = vpop.f32.mrb[0].mxu0
    %6679 = vdwg.mxu0
    %v6680 = vmax.f32 %v6675, 0.0
    %v6682 = vcombine.high %v6680, %v6680
    %v6684 = vunpack.c.l.s4 1966171168
    %v6685 = vunpack.c.0.s8 %v6684
    %v6686 = vlaneseq
    %v6687 = vshrl.u32 %v6686, 7
    %v6688 = vsub.s32 %v6685, %v6687
    %v6689 = vrot.slane %v6680, %v6688
    %v6691 = vunpack.c.l.s4 1966171168
    %v6692 = vunpack.c.0.s8 %v6691
    %v6693 = vlaneseq
    %v6694 = vshrl.u32 %v6693, 7
    %v6695 = vsub.s32 %v6692, %v6694
    %v6696 = vrot.slane %v6682, %v6695
    %v6697 = vcombine.high %v6689, %v6689
    %v6698 = vcombine.high %v6696, %v6696
    %v6700 = vunpack.c.l.s4 1966171168
    %v6701 = vunpack.c.0.s8 %v6700
    %v6702 = vlaneseq
    %v6703 = vshrl.u32 %v6702, 7
    %v6704 = vsub.s32 %v6701, %v6703
    %v6705 = vrot.slane %v6689, %v6704
    %v6707 = vunpack.c.l.s4 1966171168
    %v6708 = vunpack.c.0.s8 %v6707
    %v6709 = vlaneseq
    %v6710 = vshrl.u32 %v6709, 7
    %v6711 = vsub.s32 %v6708, %v6710
    %v6712 = vrot.slane %v6696, %v6711
    %v6714 = vunpack.c.l.s4 1966171168
    %v6715 = vunpack.c.0.s8 %v6714
    %v6716 = vlaneseq
    %v6717 = vshrl.u32 %v6716, 7
    %v6718 = vsub.s32 %v6715, %v6717
    %v6719 = vrot.slane %v6697, %v6718
    %v6721 = vunpack.c.l.s4 1966171168
    %v6722 = vunpack.c.0.s8 %v6721
    %v6723 = vlaneseq
    %v6724 = vshrl.u32 %v6723, 7
    %v6725 = vsub.s32 %v6722, %v6724
    %v6726 = vrot.slane %v6698, %v6725
    %v6727 = vcombine.high %v6705, %v6705
    %v6728 = vcombine.high %v6719, %v6719
    %v6733 = vmax.f32 %v6705, %v6719
    %v6734 = vmax.f32 %v6728, %v6712
    %vm6735 = vcmp.ge.f32.partialorder %v6705, %v6719
    %vm6736 = vcmp.ge.f32.partialorder %v6728, %v6712
    %v6737 = vsel %vm6735, 0, 1
    %v6738 = vsel %vm6736, 0, 1
    %v6739 = vlaneseq
    %v6740 = vshrl.u32 %v6739, 7
    %v6741 = vsub.s32 0, %v6740
    %v6742 = vrot.slane %v6727, %v6741
    %v6743 = vlaneseq
    %v6744 = vshrl.u32 %v6743, 7
    %v6745 = vsub.s32 0, %v6744
    %v6746 = vrot.slane %v6726, %v6745
    %vm6749 = vcmask 1040384
    %v6750 = vsel %vm6749, %v6737, 0
    %v6751 = vsel %vm6749, %v6738, 0
    %v6752 = vsel %vm6749, %v6733, %v6742
    %v6753 = vsel %vm6749, %v6734, %v6746
    %v6754 = vcombine.low %v6752, %v6753
    %v6756 = vunpack.c.l.s4 1934713408
    %v6757 = vunpack.c.0.s8 %v6756
    %v6758 = vlaneseq
    %v6759 = vshrl.u32 %v6758, 7
    %v6760 = vsub.s32 %v6757, %v6759
    %v6761 = vrot.slane %v6754, %v6760
    %v6762 = vcombine.high %v6761, 0.0
    %6764 = vrot.lane.b32.xlu0 %v6762, 64
    %v6765 = vpop.permute.xlu0 %6764
    %vm6767 = vcmask 523264
    %v6768 = vsel %vm6767, %v6761, %v6765
    %v6769 = vpack.c.bf16 %v6768, %v6768
    %v6771 = vlaneseq
    %v6772 = vshrl.u32 %v6771, 7
    %v6773 = vsub.s32 0, %v6772
    %v6774 = vrot.slane %v459, %v6773
    %v6792 = vunpack.c.l.b16 %v443
    %v6793 = vunpack.c.l.b16 %v444
    %v6794 = vunpack.c.l.b16 %v445
    %v6795 = vunpack.c.l.b16 %v446
    %v6796 = vunpack.c.l.b16 %v447
    %v6797 = vunpack.c.l.b16 %v448
    %v6798 = vunpack.c.l.b16 %v449
    %v6799 = vunpack.c.l.b16 %v450
    %v6800 = vunpack.c.l.b16 %v451
    %v6801 = vunpack.c.l.b16 %v452
    %v6802 = vunpack.c.l.b16 %v453
    %v6803 = vunpack.c.l.b16 %v454
    %v6804 = vunpack.c.l.b16 %v455
    %v6805 = vunpack.c.l.b16 %v456
    %v6806 = vunpack.c.l.b16 %v457
    %v6807 = vunpack.c.l.b16 %v458
    %v6808 = vpack.c.b16 %v6793, %v6792
    %v6809 = vpack.c.b16 %v6795, %v6794
    %v6810 = vpack.c.b16 %v6797, %v6796
    %v6811 = vpack.c.b16 %v6799, %v6798
    %v6812 = vpack.c.b16 %v6801, %v6800
    %v6813 = vpack.c.b16 %v6803, %v6802
    %v6814 = vpack.c.b16 %v6805, %v6804
    %v6815 = vpack.c.b16 %v6807, %v6806
    %6824 = vmatprep.subr.bf16.mxu0 0
    %6825 = vmatpush1.bf16.msra.mxu0 %v6808
    %6826 = vmatprep.subr.bf16.mxu0 0
    %6827 = vmatpush1.bf16.msra.mxu0 %v6809
    %6828 = vmatprep.subr.bf16.mxu0 0
    %6829 = vmatpush1.bf16.msra.mxu0 %v6810
    %6830 = vmatprep.subr.bf16.mxu0 0
    %6831 = vmatpush1.bf16.msra.mxu0 %v6811
    %6832 = vmatprep.subr.bf16.mxu0 0
    %6833 = vmatpush1.bf16.msra.mxu0 %v6812
    %6834 = vmatprep.subr.bf16.mxu0 0
    %6835 = vmatpush1.bf16.msra.mxu0 %v6813
    %6836 = vmatprep.subr.bf16.mxu0 0
    %6837 = vmatpush1.bf16.msra.mxu0 %v6814
    %6838 = vmatprep.subr.bf16.mxu0 0
    %6839 = vmatpush1.bf16.msra.mxu0 %v6815
    %6840 = vmatprep.subr.bf16.mxu0 0
    %6841 = vmatpush1.bf16.msra.mxu0 0
    %6842 = vmatprep.subr.bf16.mxu0 0
    %6843 = vmatpush1.bf16.msra.mxu0 0
    %6844 = vmatprep.subr.bf16.mxu0 0
    %6845 = vmatpush1.bf16.msra.mxu0 0
    %6846 = vmatprep.subr.bf16.mxu0 0
    %6847 = vmatpush1.bf16.msra.mxu0 0
    %6848 = vmatprep.subr.bf16.mxu0 0
    %6849 = vmatpush1.bf16.msra.mxu0 0
    %6850 = vmatprep.subr.bf16.mxu0 0
    %6851 = vmatpush1.bf16.msra.mxu0 0
    %6852 = vmatprep.subr.bf16.mxu0 0
    %6853 = vmatpush1.bf16.msra.mxu0 0
    %6854 = vmatprep.subr.bf16.mxu0 0
    %6855 = vmatpush1.bf16.msra.mxu0 0
    %6856 = vmatprep.mubr.bf16.mxu0 0
    %6857 = vmatmul.mubr.bf16.gmra.mrb[0].mxu0 %v6769
    %v6858 = vpop.f32.mrb[0].mxu0
    %v6859 = vadd.f32 %v6774, %v6858
    %v6860 = vpop.f32.mrb[0].mxu0
    %v6861 = vpop.f32.mrb[0].mxu0
    %v6862 = vpop.f32.mrb[0].mxu0
    %6863 = vdwg.mxu0
    %v6864 = vmax.f32 %v6859, 0.0
    %v6865 = vand.u32 2147483647, %v6859
    %v6866 = vsub.f32 0.0, %v6865
    %v6867 = vmul.f32 %v6866, 1.442695
    %v6868 = vpow.pop %v6867
    %v6869 = vadd.f32 %v6868, 1.0
    %v6870 = vlog2.pop %v6869
    %v6871 = vmul.f32 %v6870, 0.6931472
    %v6872 = vmul.f32 -0.5, %v6868
    %v6873 = vadd.f32 %v6872, 1.0
    %v6874 = vmul.f32 %v6873, %v6868
    %v6875 = vand.u32 2147483647, %v6868
    %vm6876 = vcmp.lt.f32.partialorder %v6875, 0.0004427343
    %v6877 = vsel %vm6876, %v6874, %v6871
    %v6878 = vadd.f32 %v6864, %v6877
    %v6879 = vadd.f32 %v6878, 1e-07
    %vm6880 = vcmask 123904
    %6881 = vst.msk [vmem:[#allocation7] sm:$0x3] %vm6880, %v6859
    %6883 = vrot.lane.b32.xlu0 %v6879, 112
    %v6884 = vpop.permute.xlu0 %6883
    %6886 = vst.msk [vmem:[#allocation8] sm:$0x3] %vm6880, %v6884
    %v6887 = vlaneseq
    %v6888 = vshrl.u32 %v6887, 7
    %v6889 = vsub.s32 0, %v6888
    %v6890 = vrot.slane %v1930, %v6889
    %v6891 = vlaneseq
    %v6892 = vshrl.u32 %v6891, 7
    %v6893 = vsub.s32 2, %v6892
    %v6894 = vrot.slane %v1930, %v6893
    %v6895 = vlaneseq
    %v6896 = vshrl.u32 %v6895, 7
    %v6897 = vsub.s32 4, %v6896
    %v6898 = vrot.slane %v1930, %v6897
    %v6899 = vlaneseq
    %v6900 = vshrl.u32 %v6899, 7
    %v6901 = vsub.s32 6, %v6900
    %v6902 = vrot.slane %v1930, %v6901
    %v6903 = vlaneseq
    %v6904 = vshrl.u32 %v6903, 7
    %v6905 = vsub.s32 0, %v6904
    %v6906 = vrot.slane %v1931, %v6905
    %v6907 = vlaneseq
    %v6908 = vshrl.u32 %v6907, 7
    %v6909 = vsub.s32 2, %v6908
    %v6910 = vrot.slane %v1931, %v6909
    %v6911 = vlaneseq
    %v6912 = vshrl.u32 %v6911, 7
    %v6913 = vsub.s32 4, %v6912
    %v6914 = vrot.slane %v1931, %v6913
    %v6915 = vlaneseq
    %v6916 = vshrl.u32 %v6915, 7
    %v6917 = vsub.s32 6, %v6916
    %v6918 = vrot.slane %v1931, %v6917
    %v6919 = vlaneseq
    %v6920 = vshrl.u32 %v6919, 7
    %v6921 = vsub.s32 0, %v6920
    %v6922 = vrot.slane %v1932, %v6921
    %v6923 = vlaneseq
    %v6924 = vshrl.u32 %v6923, 7
    %v6925 = vsub.s32 2, %v6924
    %v6926 = vrot.slane %v1932, %v6925
    %v6927 = vlaneseq
    %v6928 = vshrl.u32 %v6927, 7
    %v6929 = vsub.s32 4, %v6928
    %v6930 = vrot.slane %v1932, %v6929
    %v6931 = vlaneseq
    %v6932 = vshrl.u32 %v6931, 7
    %v6933 = vsub.s32 6, %v6932
    %v6934 = vrot.slane %v1932, %v6933
    %v6935 = vlaneseq
    %v6936 = vshrl.u32 %v6935, 7
    %v6937 = vsub.s32 0, %v6936
    %v6938 = vrot.slane %v1933, %v6937
    %v6939 = vlaneseq
    %v6940 = vshrl.u32 %v6939, 7
    %v6941 = vsub.s32 2, %v6940
    %v6942 = vrot.slane %v1933, %v6941
    %v6943 = vlaneseq
    %v6944 = vshrl.u32 %v6943, 7
    %v6945 = vsub.s32 4, %v6944
    %v6946 = vrot.slane %v1933, %v6945
    %v6947 = vlaneseq
    %v6948 = vshrl.u32 %v6947, 7
    %v6949 = vsub.s32 6, %v6948
    %v6950 = vrot.slane %v1933, %v6949
    %v6951 = vlaneseq
    %v6952 = vshrl.u32 %v6951, 7
    %v6953 = vsub.s32 0, %v6952
    %v6954 = vrot.slane %v1934, %v6953
    %v6955 = vlaneseq
    %v6956 = vshrl.u32 %v6955, 7
    %v6957 = vsub.s32 2, %v6956
    %v6958 = vrot.slane %v1934, %v6957
    %v6959 = vlaneseq
    %v6960 = vshrl.u32 %v6959, 7
    %v6961 = vsub.s32 4, %v6960
    %v6962 = vrot.slane %v1934, %v6961
    %v6963 = vlaneseq
    %v6964 = vshrl.u32 %v6963, 7
    %v6965 = vsub.s32 6, %v6964
    %v6966 = vrot.slane %v1934, %v6965
    %v6967 = vlaneseq
    %v6968 = vshrl.u32 %v6967, 7
    %v6969 = vsub.s32 0, %v6968
    %v6970 = vrot.slane %v1935, %v6969
    %v6971 = vlaneseq
    %v6972 = vshrl.u32 %v6971, 7
    %v6973 = vsub.s32 2, %v6972
    %v6974 = vrot.slane %v1935, %v6973
    %v6975 = vlaneseq
    %v6976 = vshrl.u32 %v6975, 7
    %v6977 = vsub.s32 4, %v6976
    %v6978 = vrot.slane %v1935, %v6977
    %v6979 = vlaneseq
    %v6980 = vshrl.u32 %v6979, 7
    %v6981 = vsub.s32 6, %v6980
    %v6982 = vrot.slane %v1935, %v6981
    %v6983 = vlaneseq
    %v6984 = vshrl.u32 %v6983, 7
    %v6985 = vsub.s32 0, %v6984
    %v6986 = vrot.slane %v1936, %v6985
    %v6987 = vlaneseq
    %v6988 = vshrl.u32 %v6987, 7
    %v6989 = vsub.s32 2, %v6988
    %v6990 = vrot.slane %v1936, %v6989
    %v6991 = vlaneseq
    %v6992 = vshrl.u32 %v6991, 7
    %v6993 = vsub.s32 4, %v6992
    %v6994 = vrot.slane %v1936, %v6993
    %v6995 = vlaneseq
    %v6996 = vshrl.u32 %v6995, 7
    %v6997 = vsub.s32 6, %v6996
    %v6998 = vrot.slane %v1936, %v6997
    %v6999 = vlaneseq
    %v7000 = vshrl.u32 %v6999, 7
    %v7001 = vsub.s32 0, %v7000
    %v7002 = vrot.slane %v1937, %v7001
    %v7003 = vlaneseq
    %v7004 = vshrl.u32 %v7003, 7
    %v7005 = vsub.s32 2, %v7004
    %v7006 = vrot.slane %v1937, %v7005
    %v7007 = vlaneseq
    %v7008 = vshrl.u32 %v7007, 7
    %v7009 = vsub.s32 4, %v7008
    %v7010 = vrot.slane %v1937, %v7009
    %v7011 = vlaneseq
    %v7012 = vshrl.u32 %v7011, 7
    %v7013 = vsub.s32 6, %v7012
    %v7014 = vrot.slane %v1937, %v7013
    %v7015 = vlaneseq
    %v7016 = vshrl.u32 %v7015, 7
    %v7017 = vsub.s32 0, %v7016
    %v7018 = vrot.slane %v1938, %v7017
    %v7019 = vlaneseq
    %v7020 = vshrl.u32 %v7019, 7
    %v7021 = vsub.s32 2, %v7020
    %v7022 = vrot.slane %v1938, %v7021
    %v7023 = vlaneseq
    %v7024 = vshrl.u32 %v7023, 7
    %v7025 = vsub.s32 4, %v7024
    %v7026 = vrot.slane %v1938, %v7025
    %v7027 = vlaneseq
    %v7028 = vshrl.u32 %v7027, 7
    %v7029 = vsub.s32 6, %v7028
    %v7030 = vrot.slane %v1938, %v7029
    %v7031 = vlaneseq
    %v7032 = vshrl.u32 %v7031, 7
    %v7033 = vsub.s32 0, %v7032
    %v7034 = vrot.slane %v1939, %v7033
    %v7035 = vlaneseq
    %v7036 = vshrl.u32 %v7035, 7
    %v7037 = vsub.s32 2, %v7036
    %v7038 = vrot.slane %v1939, %v7037
    %v7039 = vlaneseq
    %v7040 = vshrl.u32 %v7039, 7
    %v7041 = vsub.s32 4, %v7040
    %v7042 = vrot.slane %v1939, %v7041
    %v7043 = vlaneseq
    %v7044 = vshrl.u32 %v7043, 7
    %v7045 = vsub.s32 6, %v7044
    %v7046 = vrot.slane %v1939, %v7045
    %v7047 = vlaneseq
    %v7048 = vshrl.u32 %v7047, 7
    %v7049 = vsub.s32 0, %v7048
    %v7050 = vrot.slane %v1940, %v7049
    %v7051 = vlaneseq
    %v7052 = vshrl.u32 %v7051, 7
    %v7053 = vsub.s32 2, %v7052
    %v7054 = vrot.slane %v1940, %v7053
    %v7055 = vlaneseq
    %v7056 = vshrl.u32 %v7055, 7
    %v7057 = vsub.s32 4, %v7056
    %v7058 = vrot.slane %v1940, %v7057
    %v7059 = vlaneseq
    %v7060 = vshrl.u32 %v7059, 7
    %v7061 = vsub.s32 6, %v7060
    %v7062 = vrot.slane %v1940, %v7061
    %v7063 = vlaneseq
    %v7064 = vshrl.u32 %v7063, 7
    %v7065 = vsub.s32 0, %v7064
    %v7066 = vrot.slane %v1941, %v7065
    %v7067 = vlaneseq
    %v7068 = vshrl.u32 %v7067, 7
    %v7069 = vsub.s32 2, %v7068
    %v7070 = vrot.slane %v1941, %v7069
    %v7071 = vlaneseq
    %v7072 = vshrl.u32 %v7071, 7
    %v7073 = vsub.s32 4, %v7072
    %v7074 = vrot.slane %v1941, %v7073
    %v7075 = vlaneseq
    %v7076 = vshrl.u32 %v7075, 7
    %v7077 = vsub.s32 6, %v7076
    %v7078 = vrot.slane %v1941, %v7077
    %v7079 = vlaneseq
    %v7080 = vshrl.u32 %v7079, 7
    %v7081 = vsub.s32 0, %v7080
    %v7082 = vrot.slane %v1942, %v7081
    %v7083 = vlaneseq
    %v7084 = vshrl.u32 %v7083, 7
    %v7085 = vsub.s32 2, %v7084
    %v7086 = vrot.slane %v1942, %v7085
    %v7087 = vlaneseq
    %v7088 = vshrl.u32 %v7087, 7
    %v7089 = vsub.s32 4, %v7088
    %v7090 = vrot.slane %v1942, %v7089
    %v7091 = vlaneseq
    %v7092 = vshrl.u32 %v7091, 7
    %v7093 = vsub.s32 6, %v7092
    %v7094 = vrot.slane %v1942, %v7093
    %v7095 = vlaneseq
    %v7096 = vshrl.u32 %v7095, 7
    %v7097 = vsub.s32 0, %v7096
    %v7098 = vrot.slane %v1943, %v7097
    %v7099 = vlaneseq
    %v7100 = vshrl.u32 %v7099, 7
    %v7101 = vsub.s32 2, %v7100
    %v7102 = vrot.slane %v1943, %v7101
    %v7103 = vlaneseq
    %v7104 = vshrl.u32 %v7103, 7
    %v7105 = vsub.s32 4, %v7104
    %v7106 = vrot.slane %v1943, %v7105
    %v7107 = vlaneseq
    %v7108 = vshrl.u32 %v7107, 7
    %v7109 = vsub.s32 6, %v7108
    %v7110 = vrot.slane %v1943, %v7109
    %v7111 = vlaneseq
    %v7112 = vshrl.u32 %v7111, 7
    %v7113 = vsub.s32 0, %v7112
    %v7114 = vrot.slane %v1944, %v7113
    %v7115 = vlaneseq
    %v7116 = vshrl.u32 %v7115, 7
    %v7117 = vsub.s32 2, %v7116
    %v7118 = vrot.slane %v1944, %v7117
    %v7119 = vlaneseq
    %v7120 = vshrl.u32 %v7119, 7
    %v7121 = vsub.s32 4, %v7120
    %v7122 = vrot.slane %v1944, %v7121
    %v7123 = vlaneseq
    %v7124 = vshrl.u32 %v7123, 7
    %v7125 = vsub.s32 6, %v7124
    %v7126 = vrot.slane %v1944, %v7125
    %v7127 = vlaneseq
    %v7128 = vshrl.u32 %v7127, 7
    %v7129 = vsub.s32 0, %v7128
    %v7130 = vrot.slane %v1945, %v7129
    %v7131 = vlaneseq
    %v7132 = vshrl.u32 %v7131, 7
    %v7133 = vsub.s32 2, %v7132
    %v7134 = vrot.slane %v1945, %v7133
    %v7135 = vlaneseq
    %v7136 = vshrl.u32 %v7135, 7
    %v7137 = vsub.s32 4, %v7136
    %v7138 = vrot.slane %v1945, %v7137
    %v7139 = vlaneseq
    %v7140 = vshrl.u32 %v7139, 7
    %v7141 = vsub.s32 6, %v7140
    %v7142 = vrot.slane %v1945, %v7141
    %v7143 = vlaneseq
    %v7144 = vshrl.u32 %v7143, 7
    %v7145 = vsub.s32 0, %v7144
    %v7146 = vrot.slane %v1946, %v7145
    %v7147 = vlaneseq
    %v7148 = vshrl.u32 %v7147, 7
    %v7149 = vsub.s32 2, %v7148
    %v7150 = vrot.slane %v1946, %v7149
    %v7151 = vlaneseq
    %v7152 = vshrl.u32 %v7151, 7
    %v7153 = vsub.s32 4, %v7152
    %v7154 = vrot.slane %v1946, %v7153
    %v7155 = vlaneseq
    %v7156 = vshrl.u32 %v7155, 7
    %v7157 = vsub.s32 6, %v7156
    %v7158 = vrot.slane %v1946, %v7157
    %v7159 = vlaneseq
    %v7160 = vshrl.u32 %v7159, 7
    %v7161 = vsub.s32 0, %v7160
    %v7162 = vrot.slane %v1947, %v7161
    %v7163 = vlaneseq
    %v7164 = vshrl.u32 %v7163, 7
    %v7165 = vsub.s32 2, %v7164
    %v7166 = vrot.slane %v1947, %v7165
    %v7167 = vlaneseq
    %v7168 = vshrl.u32 %v7167, 7
    %v7169 = vsub.s32 4, %v7168
    %v7170 = vrot.slane %v1947, %v7169
    %v7171 = vlaneseq
    %v7172 = vshrl.u32 %v7171, 7
    %v7173 = vsub.s32 6, %v7172
    %v7174 = vrot.slane %v1947, %v7173
    %v7175 = vlaneseq
    %v7176 = vshrl.u32 %v7175, 7
    %v7177 = vsub.s32 0, %v7176
    %v7178 = vrot.slane %v1948, %v7177
    %v7179 = vlaneseq
    %v7180 = vshrl.u32 %v7179, 7
    %v7181 = vsub.s32 2, %v7180
    %v7182 = vrot.slane %v1948, %v7181
    %v7183 = vlaneseq
    %v7184 = vshrl.u32 %v7183, 7
    %v7185 = vsub.s32 4, %v7184
    %v7186 = vrot.slane %v1948, %v7185
    %v7187 = vlaneseq
    %v7188 = vshrl.u32 %v7187, 7
    %v7189 = vsub.s32 6, %v7188
    %v7190 = vrot.slane %v1948, %v7189
    %v7191 = vlaneseq
    %v7192 = vshrl.u32 %v7191, 7
    %v7193 = vsub.s32 0, %v7192
    %v7194 = vrot.slane %v1949, %v7193
    %v7195 = vlaneseq
    %v7196 = vshrl.u32 %v7195, 7
    %v7197 = vsub.s32 2, %v7196
    %v7198 = vrot.slane %v1949, %v7197
    %v7199 = vlaneseq
    %v7200 = vshrl.u32 %v7199, 7
    %v7201 = vsub.s32 4, %v7200
    %v7202 = vrot.slane %v1949, %v7201
    %v7203 = vlaneseq
    %v7204 = vshrl.u32 %v7203, 7
    %v7205 = vsub.s32 6, %v7204
    %v7206 = vrot.slane %v1949, %v7205
    %v7207 = vlaneseq
    %v7208 = vshrl.u32 %v7207, 7
    %v7209 = vsub.s32 0, %v7208
    %v7210 = vrot.slane %v1950, %v7209
    %v7211 = vlaneseq
    %v7212 = vshrl.u32 %v7211, 7
    %v7213 = vsub.s32 2, %v7212
    %v7214 = vrot.slane %v1950, %v7213
    %v7215 = vlaneseq
    %v7216 = vshrl.u32 %v7215, 7
    %v7217 = vsub.s32 4, %v7216
    %v7218 = vrot.slane %v1950, %v7217
    %v7219 = vlaneseq
    %v7220 = vshrl.u32 %v7219, 7
    %v7221 = vsub.s32 6, %v7220
    %v7222 = vrot.slane %v1950, %v7221
    %v7223 = vlaneseq
    %v7224 = vshrl.u32 %v7223, 7
    %v7225 = vsub.s32 0, %v7224
    %v7226 = vrot.slane %v1951, %v7225
    %v7227 = vlaneseq
    %v7228 = vshrl.u32 %v7227, 7
    %v7229 = vsub.s32 2, %v7228
    %v7230 = vrot.slane %v1951, %v7229
    %v7231 = vlaneseq
    %v7232 = vshrl.u32 %v7231, 7
    %v7233 = vsub.s32 4, %v7232
    %v7234 = vrot.slane %v1951, %v7233
    %v7235 = vlaneseq
    %v7236 = vshrl.u32 %v7235, 7
    %v7237 = vsub.s32 6, %v7236
    %v7238 = vrot.slane %v1951, %v7237
    %v7239 = vlaneseq
    %v7240 = vshrl.u32 %v7239, 7
    %v7241 = vsub.s32 0, %v7240
    %v7242 = vrot.slane %v1952, %v7241
    %v7243 = vlaneseq
    %v7244 = vshrl.u32 %v7243, 7
    %v7245 = vsub.s32 2, %v7244
    %v7246 = vrot.slane %v1952, %v7245
    %v7247 = vlaneseq
    %v7248 = vshrl.u32 %v7247, 7
    %v7249 = vsub.s32 4, %v7248
    %v7250 = vrot.slane %v1952, %v7249
    %v7251 = vlaneseq
    %v7252 = vshrl.u32 %v7251, 7
    %v7253 = vsub.s32 6, %v7252
    %v7254 = vrot.slane %v1952, %v7253
    %v7255 = vlaneseq
    %v7256 = vshrl.u32 %v7255, 7
    %v7257 = vsub.s32 0, %v7256
    %v7258 = vrot.slane %v1953, %v7257
    %v7259 = vlaneseq
    %v7260 = vshrl.u32 %v7259, 7
    %v7261 = vsub.s32 2, %v7260
    %v7262 = vrot.slane %v1953, %v7261
    %v7263 = vlaneseq
    %v7264 = vshrl.u32 %v7263, 7
    %v7265 = vsub.s32 4, %v7264
    %v7266 = vrot.slane %v1953, %v7265
    %v7267 = vlaneseq
    %v7268 = vshrl.u32 %v7267, 7
    %v7269 = vsub.s32 6, %v7268
    %v7270 = vrot.slane %v1953, %v7269
    %v7271 = vlaneseq
    %v7272 = vshrl.u32 %v7271, 7
    %v7273 = vsub.s32 0, %v7272
    %v7274 = vrot.slane %v1954, %v7273
    %v7275 = vlaneseq
    %v7276 = vshrl.u32 %v7275, 7
    %v7277 = vsub.s32 2, %v7276
    %v7278 = vrot.slane %v1954, %v7277
    %v7279 = vlaneseq
    %v7280 = vshrl.u32 %v7279, 7
    %v7281 = vsub.s32 4, %v7280
    %v7282 = vrot.slane %v1954, %v7281
    %v7283 = vlaneseq
    %v7284 = vshrl.u32 %v7283, 7
    %v7285 = vsub.s32 6, %v7284
    %v7286 = vrot.slane %v1954, %v7285
    %v7287 = vlaneseq
    %v7288 = vshrl.u32 %v7287, 7
    %v7289 = vsub.s32 0, %v7288
    %v7290 = vrot.slane %v1955, %v7289
    %v7291 = vlaneseq
    %v7292 = vshrl.u32 %v7291, 7
    %v7293 = vsub.s32 2, %v7292
    %v7294 = vrot.slane %v1955, %v7293
    %v7295 = vlaneseq
    %v7296 = vshrl.u32 %v7295, 7
    %v7297 = vsub.s32 4, %v7296
    %v7298 = vrot.slane %v1955, %v7297
    %v7299 = vlaneseq
    %v7300 = vshrl.u32 %v7299, 7
    %v7301 = vsub.s32 6, %v7300
    %v7302 = vrot.slane %v1955, %v7301
    %v7303 = vlaneseq
    %v7304 = vshrl.u32 %v7303, 7
    %v7305 = vsub.s32 0, %v7304
    %v7306 = vrot.slane %v1956, %v7305
    %v7307 = vlaneseq
    %v7308 = vshrl.u32 %v7307, 7
    %v7309 = vsub.s32 2, %v7308
    %v7310 = vrot.slane %v1956, %v7309
    %v7311 = vlaneseq
    %v7312 = vshrl.u32 %v7311, 7
    %v7313 = vsub.s32 4, %v7312
    %v7314 = vrot.slane %v1956, %v7313
    %v7315 = vlaneseq
    %v7316 = vshrl.u32 %v7315, 7
    %v7317 = vsub.s32 6, %v7316
    %v7318 = vrot.slane %v1956, %v7317
    %v7319 = vlaneseq
    %v7320 = vshrl.u32 %v7319, 7
    %v7321 = vsub.s32 0, %v7320
    %v7322 = vrot.slane %v1957, %v7321
    %v7323 = vlaneseq
    %v7324 = vshrl.u32 %v7323, 7
    %v7325 = vsub.s32 2, %v7324
    %v7326 = vrot.slane %v1957, %v7325
    %v7327 = vlaneseq
    %v7328 = vshrl.u32 %v7327, 7
    %v7329 = vsub.s32 4, %v7328
    %v7330 = vrot.slane %v1957, %v7329
    %v7331 = vlaneseq
    %v7332 = vshrl.u32 %v7331, 7
    %v7333 = vsub.s32 6, %v7332
    %v7334 = vrot.slane %v1957, %v7333
    %v7335 = vlaneseq
    %v7336 = vshrl.u32 %v7335, 7
    %v7337 = vsub.s32 0, %v7336
    %v7338 = vrot.slane %v1958, %v7337
    %v7339 = vlaneseq
    %v7340 = vshrl.u32 %v7339, 7
    %v7341 = vsub.s32 2, %v7340
    %v7342 = vrot.slane %v1958, %v7341
    %v7343 = vlaneseq
    %v7344 = vshrl.u32 %v7343, 7
    %v7345 = vsub.s32 4, %v7344
    %v7346 = vrot.slane %v1958, %v7345
    %v7347 = vlaneseq
    %v7348 = vshrl.u32 %v7347, 7
    %v7349 = vsub.s32 6, %v7348
    %v7350 = vrot.slane %v1958, %v7349
    %v7351 = vlaneseq
    %v7352 = vshrl.u32 %v7351, 7
    %v7353 = vsub.s32 0, %v7352
    %v7354 = vrot.slane %v1959, %v7353
    %v7355 = vlaneseq
    %v7356 = vshrl.u32 %v7355, 7
    %v7357 = vsub.s32 2, %v7356
    %v7358 = vrot.slane %v1959, %v7357
    %v7359 = vlaneseq
    %v7360 = vshrl.u32 %v7359, 7
    %v7361 = vsub.s32 4, %v7360
    %v7362 = vrot.slane %v1959, %v7361
    %v7363 = vlaneseq
    %v7364 = vshrl.u32 %v7363, 7
    %v7365 = vsub.s32 6, %v7364
    %v7366 = vrot.slane %v1959, %v7365
    %v7367 = vlaneseq
    %v7368 = vshrl.u32 %v7367, 7
    %v7369 = vsub.s32 0, %v7368
    %v7370 = vrot.slane %v1960, %v7369
    %v7371 = vlaneseq
    %v7372 = vshrl.u32 %v7371, 7
    %v7373 = vsub.s32 2, %v7372
    %v7374 = vrot.slane %v1960, %v7373
    %v7375 = vlaneseq
    %v7376 = vshrl.u32 %v7375, 7
    %v7377 = vsub.s32 4, %v7376
    %v7378 = vrot.slane %v1960, %v7377
    %v7379 = vlaneseq
    %v7380 = vshrl.u32 %v7379, 7
    %v7381 = vsub.s32 6, %v7380
    %v7382 = vrot.slane %v1960, %v7381
    %v7383 = vlaneseq
    %v7384 = vshrl.u32 %v7383, 7
    %v7385 = vsub.s32 0, %v7384
    %v7386 = vrot.slane %v1961, %v7385
    %v7387 = vlaneseq
    %v7388 = vshrl.u32 %v7387, 7
    %v7389 = vsub.s32 2, %v7388
    %v7390 = vrot.slane %v1961, %v7389
    %v7391 = vlaneseq
    %v7392 = vshrl.u32 %v7391, 7
    %v7393 = vsub.s32 4, %v7392
    %v7394 = vrot.slane %v1961, %v7393
    %v7395 = vlaneseq
    %v7396 = vshrl.u32 %v7395, 7
    %v7397 = vsub.s32 6, %v7396
    %v7398 = vrot.slane %v1961, %v7397
    %v7399 = vlaneseq
    %v7400 = vshrl.u32 %v7399, 7
    %v7401 = vsub.s32 0, %v7400
    %v7402 = vrot.slane %v1962, %v7401
    %v7403 = vlaneseq
    %v7404 = vshrl.u32 %v7403, 7
    %v7405 = vsub.s32 2, %v7404
    %v7406 = vrot.slane %v1962, %v7405
    %v7407 = vlaneseq
    %v7408 = vshrl.u32 %v7407, 7
    %v7409 = vsub.s32 4, %v7408
    %v7410 = vrot.slane %v1962, %v7409
    %v7411 = vlaneseq
    %v7412 = vshrl.u32 %v7411, 7
    %v7413 = vsub.s32 6, %v7412
    %v7414 = vrot.slane %v1962, %v7413
    %v7415 = vlaneseq
    %v7416 = vshrl.u32 %v7415, 7
    %v7417 = vsub.s32 0, %v7416
    %v7418 = vrot.slane %v1963, %v7417
    %v7419 = vlaneseq
    %v7420 = vshrl.u32 %v7419, 7
    %v7421 = vsub.s32 2, %v7420
    %v7422 = vrot.slane %v1963, %v7421
    %v7423 = vlaneseq
    %v7424 = vshrl.u32 %v7423, 7
    %v7425 = vsub.s32 4, %v7424
    %v7426 = vrot.slane %v1963, %v7425
    %v7427 = vlaneseq
    %v7428 = vshrl.u32 %v7427, 7
    %v7429 = vsub.s32 6, %v7428
    %v7430 = vrot.slane %v1963, %v7429
    %v7431 = vlaneseq
    %v7432 = vshrl.u32 %v7431, 7
    %v7433 = vsub.s32 0, %v7432
    %v7434 = vrot.slane %v1964, %v7433
    %v7435 = vlaneseq
    %v7436 = vshrl.u32 %v7435, 7
    %v7437 = vsub.s32 2, %v7436
    %v7438 = vrot.slane %v1964, %v7437
    %v7439 = vlaneseq
    %v7440 = vshrl.u32 %v7439, 7
    %v7441 = vsub.s32 4, %v7440
    %v7442 = vrot.slane %v1964, %v7441
    %v7443 = vlaneseq
    %v7444 = vshrl.u32 %v7443, 7
    %v7445 = vsub.s32 6, %v7444
    %v7446 = vrot.slane %v1964, %v7445
    %v7447 = vlaneseq
    %v7448 = vshrl.u32 %v7447, 7
    %v7449 = vsub.s32 0, %v7448
    %v7450 = vrot.slane %v1965, %v7449
    %v7451 = vlaneseq
    %v7452 = vshrl.u32 %v7451, 7
    %v7453 = vsub.s32 2, %v7452
    %v7454 = vrot.slane %v1965, %v7453
    %v7455 = vlaneseq
    %v7456 = vshrl.u32 %v7455, 7
    %v7457 = vsub.s32 4, %v7456
    %v7458 = vrot.slane %v1965, %v7457
    %v7459 = vlaneseq
    %v7460 = vshrl.u32 %v7459, 7
    %v7461 = vsub.s32 6, %v7460
    %v7462 = vrot.slane %v1965, %v7461
    %v7463 = vlaneseq
    %v7464 = vshrl.u32 %v7463, 7
    %v7465 = vsub.s32 0, %v7464
    %v7466 = vrot.slane %v1966, %v7465
    %v7467 = vlaneseq
    %v7468 = vshrl.u32 %v7467, 7
    %v7469 = vsub.s32 2, %v7468
    %v7470 = vrot.slane %v1966, %v7469
    %v7471 = vlaneseq
    %v7472 = vshrl.u32 %v7471, 7
    %v7473 = vsub.s32 4, %v7472
    %v7474 = vrot.slane %v1966, %v7473
    %v7475 = vlaneseq
    %v7476 = vshrl.u32 %v7475, 7
    %v7477 = vsub.s32 6, %v7476
    %v7478 = vrot.slane %v1966, %v7477
    %v7479 = vlaneseq
    %v7480 = vshrl.u32 %v7479, 7
    %v7481 = vsub.s32 0, %v7480
    %v7482 = vrot.slane %v1967, %v7481
    %v7483 = vlaneseq
    %v7484 = vshrl.u32 %v7483, 7
    %v7485 = vsub.s32 2, %v7484
    %v7486 = vrot.slane %v1967, %v7485
    %v7487 = vlaneseq
    %v7488 = vshrl.u32 %v7487, 7
    %v7489 = vsub.s32 4, %v7488
    %v7490 = vrot.slane %v1967, %v7489
    %v7491 = vlaneseq
    %v7492 = vshrl.u32 %v7491, 7
    %v7493 = vsub.s32 6, %v7492
    %v7494 = vrot.slane %v1967, %v7493
    %v7495 = vlaneseq
    %v7496 = vshrl.u32 %v7495, 7
    %v7497 = vsub.s32 0, %v7496
    %v7498 = vrot.slane %v1968, %v7497
    %v7499 = vlaneseq
    %v7500 = vshrl.u32 %v7499, 7
    %v7501 = vsub.s32 2, %v7500
    %v7502 = vrot.slane %v1968, %v7501
    %v7503 = vlaneseq
    %v7504 = vshrl.u32 %v7503, 7
    %v7505 = vsub.s32 4, %v7504
    %v7506 = vrot.slane %v1968, %v7505
    %v7507 = vlaneseq
    %v7508 = vshrl.u32 %v7507, 7
    %v7509 = vsub.s32 6, %v7508
    %v7510 = vrot.slane %v1968, %v7509
    %v7511 = vlaneseq
    %v7512 = vshrl.u32 %v7511, 7
    %v7513 = vsub.s32 0, %v7512
    %v7514 = vrot.slane %v1969, %v7513
    %v7515 = vlaneseq
    %v7516 = vshrl.u32 %v7515, 7
    %v7517 = vsub.s32 2, %v7516
    %v7518 = vrot.slane %v1969, %v7517
    %v7519 = vlaneseq
    %v7520 = vshrl.u32 %v7519, 7
    %v7521 = vsub.s32 4, %v7520
    %v7522 = vrot.slane %v1969, %v7521
    %v7523 = vlaneseq
    %v7524 = vshrl.u32 %v7523, 7
    %v7525 = vsub.s32 6, %v7524
    %v7526 = vrot.slane %v1969, %v7525
    %v7527 = vlaneseq
    %v7528 = vshrl.u32 %v7527, 7
    %v7529 = vsub.s32 0, %v7528
    %v7530 = vrot.slane %v1970, %v7529
    %v7531 = vlaneseq
    %v7532 = vshrl.u32 %v7531, 7
    %v7533 = vsub.s32 2, %v7532
    %v7534 = vrot.slane %v1970, %v7533
    %v7535 = vlaneseq
    %v7536 = vshrl.u32 %v7535, 7
    %v7537 = vsub.s32 4, %v7536
    %v7538 = vrot.slane %v1970, %v7537
    %v7539 = vlaneseq
    %v7540 = vshrl.u32 %v7539, 7
    %v7541 = vsub.s32 6, %v7540
    %v7542 = vrot.slane %v1970, %v7541
    %v7543 = vlaneseq
    %v7544 = vshrl.u32 %v7543, 7
    %v7545 = vsub.s32 0, %v7544
    %v7546 = vrot.slane %v1971, %v7545
    %v7547 = vlaneseq
    %v7548 = vshrl.u32 %v7547, 7
    %v7549 = vsub.s32 2, %v7548
    %v7550 = vrot.slane %v1971, %v7549
    %v7551 = vlaneseq
    %v7552 = vshrl.u32 %v7551, 7
    %v7553 = vsub.s32 4, %v7552
    %v7554 = vrot.slane %v1971, %v7553
    %v7555 = vlaneseq
    %v7556 = vshrl.u32 %v7555, 7
    %v7557 = vsub.s32 6, %v7556
    %v7558 = vrot.slane %v1971, %v7557
    %v7559 = vlaneseq
    %v7560 = vshrl.u32 %v7559, 7
    %v7561 = vsub.s32 0, %v7560
    %v7562 = vrot.slane %v1972, %v7561
    %v7563 = vlaneseq
    %v7564 = vshrl.u32 %v7563, 7
    %v7565 = vsub.s32 2, %v7564
    %v7566 = vrot.slane %v1972, %v7565
    %v7567 = vlaneseq
    %v7568 = vshrl.u32 %v7567, 7
    %v7569 = vsub.s32 4, %v7568
    %v7570 = vrot.slane %v1972, %v7569
    %v7571 = vlaneseq
    %v7572 = vshrl.u32 %v7571, 7
    %v7573 = vsub.s32 6, %v7572
    %v7574 = vrot.slane %v1972, %v7573
    %v7575 = vlaneseq
    %v7576 = vshrl.u32 %v7575, 7
    %v7577 = vsub.s32 0, %v7576
    %v7578 = vrot.slane %v1973, %v7577
    %v7579 = vlaneseq
    %v7580 = vshrl.u32 %v7579, 7
    %v7581 = vsub.s32 2, %v7580
    %v7582 = vrot.slane %v1973, %v7581
    %v7583 = vlaneseq
    %v7584 = vshrl.u32 %v7583, 7
    %v7585 = vsub.s32 4, %v7584
    %v7586 = vrot.slane %v1973, %v7585
    %v7587 = vlaneseq
    %v7588 = vshrl.u32 %v7587, 7
    %v7589 = vsub.s32 6, %v7588
    %v7590 = vrot.slane %v1973, %v7589
    %v7591 = vpack.c.b16 %v6894, %v6890
    %v7592 = vpack.c.b16 %v6902, %v6898
    %v7593 = vpack.c.b8 %v7592, %v7591
    %v7594 = vpack.c.b16 %v6910, %v6906
    %v7595 = vpack.c.b16 %v6918, %v6914
    %v7596 = vpack.c.b8 %v7595, %v7594
    %v7597 = vpack.c.b16 %v6926, %v6922
    %v7598 = vpack.c.b16 %v6934, %v6930
    %v7599 = vpack.c.b8 %v7598, %v7597
    %v7600 = vpack.c.b16 %v6942, %v6938
    %v7601 = vpack.c.b16 %v6950, %v6946
    %v7602 = vpack.c.b8 %v7601, %v7600
    %v7603 = vpack.c.b16 %v6958, %v6954
    %v7604 = vpack.c.b16 %v6966, %v6962
    %v7605 = vpack.c.b8 %v7604, %v7603
    %v7606 = vpack.c.b16 %v6974, %v6970
    %v7607 = vpack.c.b16 %v6982, %v6978
    %v7608 = vpack.c.b8 %v7607, %v7606
    %v7609 = vpack.c.b16 %v6990, %v6986
    %v7610 = vpack.c.b16 %v6998, %v6994
    %v7611 = vpack.c.b8 %v7610, %v7609
    %v7612 = vpack.c.b16 %v7006, %v7002
    %v7613 = vpack.c.b16 %v7014, %v7010
    %v7614 = vpack.c.b8 %v7613, %v7612
    %v7615 = vpack.c.b16 %v7022, %v7018
    %v7616 = vpack.c.b16 %v7030, %v7026
    %v7617 = vpack.c.b8 %v7616, %v7615
    %v7618 = vpack.c.b16 %v7038, %v7034
    %v7619 = vpack.c.b16 %v7046, %v7042
    %v7620 = vpack.c.b8 %v7619, %v7618
    %v7621 = vpack.c.b16 %v7054, %v7050
    %v7622 = vpack.c.b16 %v7062, %v7058
    %v7623 = vpack.c.b8 %v7622, %v7621
    %v7624 = vpack.c.b16 %v7070, %v7066
    %v7625 = vpack.c.b16 %v7078, %v7074
    %v7626 = vpack.c.b8 %v7625, %v7624
    %v7627 = vpack.c.b16 %v7086, %v7082
    %v7628 = vpack.c.b16 %v7094, %v7090
    %v7629 = vpack.c.b8 %v7628, %v7627
    %v7630 = vpack.c.b16 %v7102, %v7098
    %v7631 = vpack.c.b16 %v7110, %v7106
    %v7632 = vpack.c.b8 %v7631, %v7630
    %v7633 = vpack.c.b16 %v7118, %v7114
    %v7634 = vpack.c.b16 %v7126, %v7122
    %v7635 = vpack.c.b8 %v7634, %v7633
    %v7636 = vpack.c.b16 %v7134, %v7130
    %v7637 = vpack.c.b16 %v7142, %v7138
    %v7638 = vpack.c.b8 %v7637, %v7636
    %v7639 = vpack.c.b16 %v7150, %v7146
    %v7640 = vpack.c.b16 %v7158, %v7154
    %v7641 = vpack.c.b8 %v7640, %v7639
    %v7642 = vpack.c.b16 %v7166, %v7162
    %v7643 = vpack.c.b16 %v7174, %v7170
    %v7644 = vpack.c.b8 %v7643, %v7642
    %v7645 = vpack.c.b16 %v7182, %v7178
    %v7646 = vpack.c.b16 %v7190, %v7186
    %v7647 = vpack.c.b8 %v7646, %v7645
    %v7648 = vpack.c.b16 %v7198, %v7194
    %v7649 = vpack.c.b16 %v7206, %v7202
    %v7650 = vpack.c.b8 %v7649, %v7648
    %v7651 = vpack.c.b16 %v7214, %v7210
    %v7652 = vpack.c.b16 %v7222, %v7218
    %v7653 = vpack.c.b8 %v7652, %v7651
    %v7654 = vpack.c.b16 %v7230, %v7226
    %v7655 = vpack.c.b16 %v7238, %v7234
    %v7656 = vpack.c.b8 %v7655, %v7654
    %v7657 = vpack.c.b16 %v7246, %v7242
    %v7658 = vpack.c.b16 %v7254, %v7250
    %v7659 = vpack.c.b8 %v7658, %v7657
    %v7660 = vpack.c.b16 %v7262, %v7258
    %v7661 = vpack.c.b16 %v7270, %v7266
    %v7662 = vpack.c.b8 %v7661, %v7660
    %v7663 = vpack.c.b16 %v7278, %v7274
    %v7664 = vpack.c.b16 %v7286, %v7282
    %v7665 = vpack.c.b8 %v7664, %v7663
    %v7666 = vpack.c.b16 %v7294, %v7290
    %v7667 = vpack.c.b16 %v7302, %v7298
    %v7668 = vpack.c.b8 %v7667, %v7666
    %v7669 = vpack.c.b16 %v7310, %v7306
    %v7670 = vpack.c.b16 %v7318, %v7314
    %v7671 = vpack.c.b8 %v7670, %v7669
    %v7672 = vpack.c.b16 %v7326, %v7322
    %v7673 = vpack.c.b16 %v7334, %v7330
    %v7674 = vpack.c.b8 %v7673, %v7672
    %v7675 = vpack.c.b16 %v7342, %v7338
    %v7676 = vpack.c.b16 %v7350, %v7346
    %v7677 = vpack.c.b8 %v7676, %v7675
    %v7678 = vpack.c.b16 %v7358, %v7354
    %v7679 = vpack.c.b16 %v7366, %v7362
    %v7680 = vpack.c.b8 %v7679, %v7678
    %v7681 = vpack.c.b16 %v7374, %v7370
    %v7682 = vpack.c.b16 %v7382, %v7378
    %v7683 = vpack.c.b8 %v7682, %v7681
    %v7684 = vpack.c.b16 %v7390, %v7386
    %v7685 = vpack.c.b16 %v7398, %v7394
    %v7686 = vpack.c.b8 %v7685, %v7684
    %v7687 = vpack.c.b16 %v7406, %v7402
    %v7688 = vpack.c.b16 %v7414, %v7410
    %v7689 = vpack.c.b8 %v7688, %v7687
    %v7690 = vpack.c.b16 %v7422, %v7418
    %v7691 = vpack.c.b16 %v7430, %v7426
    %v7692 = vpack.c.b8 %v7691, %v7690
    %v7693 = vpack.c.b16 %v7438, %v7434
    %v7694 = vpack.c.b16 %v7446, %v7442
    %v7695 = vpack.c.b8 %v7694, %v7693
    %v7696 = vpack.c.b16 %v7454, %v7450
    %v7697 = vpack.c.b16 %v7462, %v7458
    %v7698 = vpack.c.b8 %v7697, %v7696
    %v7699 = vpack.c.b16 %v7470, %v7466
    %v7700 = vpack.c.b16 %v7478, %v7474
    %v7701 = vpack.c.b8 %v7700, %v7699
    %v7702 = vpack.c.b16 %v7486, %v7482
    %v7703 = vpack.c.b16 %v7494, %v7490
    %v7704 = vpack.c.b8 %v7703, %v7702
    %v7705 = vpack.c.b16 %v7502, %v7498
    %v7706 = vpack.c.b16 %v7510, %v7506
    %v7707 = vpack.c.b8 %v7706, %v7705
    %v7708 = vpack.c.b16 %v7518, %v7514
    %v7709 = vpack.c.b16 %v7526, %v7522
    %v7710 = vpack.c.b8 %v7709, %v7708
    %v7711 = vpack.c.b16 %v7534, %v7530
    %v7712 = vpack.c.b16 %v7542, %v7538
    %v7713 = vpack.c.b8 %v7712, %v7711
    %v7714 = vpack.c.b16 %v7550, %v7546
    %v7715 = vpack.c.b16 %v7558, %v7554
    %v7716 = vpack.c.b8 %v7715, %v7714
    %v7717 = vpack.c.b16 %v7566, %v7562
    %v7718 = vpack.c.b16 %v7574, %v7570
    %v7719 = vpack.c.b8 %v7718, %v7717
    %v7720 = vpack.c.b16 %v7582, %v7578
    %v7721 = vpack.c.b16 %v7590, %v7586
    %v7722 = vpack.c.b8 %v7721, %v7720
    %v7723 = vunpack.c.0.s8 %v7593
    %v7724 = vunpack.c.1.s8 %v7593
    %v7725 = vunpack.c.2.s8 %v7593
    %v7726 = vunpack.c.3.s8 %v7593
    %v7727 = vunpack.c.0.s8 %v7596
    %v7728 = vunpack.c.1.s8 %v7596
    %v7729 = vunpack.c.2.s8 %v7596
    %v7730 = vunpack.c.3.s8 %v7596
    %v7731 = vunpack.c.0.s8 %v7599
    %v7732 = vunpack.c.1.s8 %v7599
    %v7733 = vunpack.c.2.s8 %v7599
    %v7734 = vunpack.c.3.s8 %v7599
    %v7735 = vunpack.c.0.s8 %v7602
    %v7736 = vunpack.c.1.s8 %v7602
    %v7737 = vunpack.c.2.s8 %v7602
    %v7738 = vunpack.c.3.s8 %v7602
    %v7739 = vunpack.c.0.s8 %v7605
    %v7740 = vunpack.c.1.s8 %v7605
    %v7741 = vunpack.c.2.s8 %v7605
    %v7742 = vunpack.c.3.s8 %v7605
    %v7743 = vunpack.c.0.s8 %v7608
    %v7744 = vunpack.c.1.s8 %v7608
    %v7745 = vunpack.c.2.s8 %v7608
    %v7746 = vunpack.c.3.s8 %v7608
    %v7747 = vunpack.c.0.s8 %v7611
    %v7748 = vunpack.c.1.s8 %v7611
    %v7749 = vunpack.c.2.s8 %v7611
    %v7750 = vunpack.c.3.s8 %v7611
    %v7751 = vunpack.c.0.s8 %v7614
    %v7752 = vunpack.c.1.s8 %v7614
    %v7753 = vunpack.c.2.s8 %v7614
    %v7754 = vunpack.c.3.s8 %v7614
    %v7755 = vunpack.c.0.s8 %v7617
    %v7756 = vunpack.c.1.s8 %v7617
    %v7757 = vunpack.c.2.s8 %v7617
    %v7758 = vunpack.c.3.s8 %v7617
    %v7759 = vunpack.c.0.s8 %v7620
    %v7760 = vunpack.c.1.s8 %v7620
    %v7761 = vunpack.c.2.s8 %v7620
    %v7762 = vunpack.c.3.s8 %v7620
    %v7763 = vunpack.c.0.s8 %v7623
    %v7764 = vunpack.c.1.s8 %v7623
    %v7765 = vunpack.c.2.s8 %v7623
    %v7766 = vunpack.c.3.s8 %v7623
    %v7767 = vunpack.c.0.s8 %v7626
    %v7768 = vunpack.c.1.s8 %v7626
    %v7769 = vunpack.c.2.s8 %v7626
    %v7770 = vunpack.c.3.s8 %v7626
    %v7771 = vunpack.c.0.s8 %v7629
    %v7772 = vunpack.c.1.s8 %v7629
    %v7773 = vunpack.c.2.s8 %v7629
    %v7774 = vunpack.c.3.s8 %v7629
    %v7775 = vunpack.c.0.s8 %v7632
    %v7776 = vunpack.c.1.s8 %v7632
    %v7777 = vunpack.c.2.s8 %v7632
    %v7778 = vunpack.c.3.s8 %v7632
    %v7779 = vunpack.c.0.s8 %v7635
    %v7780 = vunpack.c.1.s8 %v7635
    %v7781 = vunpack.c.2.s8 %v7635
    %v7782 = vunpack.c.3.s8 %v7635
    %v7783 = vunpack.c.0.s8 %v7638
    %v7784 = vunpack.c.1.s8 %v7638
    %v7785 = vunpack.c.2.s8 %v7638
    %v7786 = vunpack.c.3.s8 %v7638
    %v7787 = vunpack.c.0.s8 %v7641
    %v7788 = vunpack.c.1.s8 %v7641
    %v7789 = vunpack.c.2.s8 %v7641
    %v7790 = vunpack.c.3.s8 %v7641
    %v7791 = vunpack.c.0.s8 %v7644
    %v7792 = vunpack.c.1.s8 %v7644
    %v7793 = vunpack.c.2.s8 %v7644
    %v7794 = vunpack.c.3.s8 %v7644
    %v7795 = vunpack.c.0.s8 %v7647
    %v7796 = vunpack.c.1.s8 %v7647
    %v7797 = vunpack.c.2.s8 %v7647
    %v7798 = vunpack.c.3.s8 %v7647
    %v7799 = vunpack.c.0.s8 %v7650
    %v7800 = vunpack.c.1.s8 %v7650
    %v7801 = vunpack.c.2.s8 %v7650
    %v7802 = vunpack.c.3.s8 %v7650
    %v7803 = vunpack.c.0.s8 %v7653
    %v7804 = vunpack.c.1.s8 %v7653
    %v7805 = vunpack.c.2.s8 %v7653
    %v7806 = vunpack.c.3.s8 %v7653
    %v7807 = vunpack.c.0.s8 %v7656
    %v7808 = vunpack.c.1.s8 %v7656
    %v7809 = vunpack.c.2.s8 %v7656
    %v7810 = vunpack.c.3.s8 %v7656
    %v7811 = vunpack.c.0.s8 %v7659
    %v7812 = vunpack.c.1.s8 %v7659
    %v7813 = vunpack.c.2.s8 %v7659
    %v7814 = vunpack.c.3.s8 %v7659
    %v7815 = vunpack.c.0.s8 %v7662
    %v7816 = vunpack.c.1.s8 %v7662
    %v7817 = vunpack.c.2.s8 %v7662
    %v7818 = vunpack.c.3.s8 %v7662
    %v7819 = vunpack.c.0.s8 %v7665
    %v7820 = vunpack.c.1.s8 %v7665
    %v7821 = vunpack.c.2.s8 %v7665
    %v7822 = vunpack.c.3.s8 %v7665
    %v7823 = vunpack.c.0.s8 %v7668
    %v7824 = vunpack.c.1.s8 %v7668
    %v7825 = vunpack.c.2.s8 %v7668
    %v7826 = vunpack.c.3.s8 %v7668
    %v7827 = vunpack.c.0.s8 %v7671
    %v7828 = vunpack.c.1.s8 %v7671
    %v7829 = vunpack.c.2.s8 %v7671
    %v7830 = vunpack.c.3.s8 %v7671
    %v7831 = vunpack.c.0.s8 %v7674
    %v7832 = vunpack.c.1.s8 %v7674
    %v7833 = vunpack.c.2.s8 %v7674
    %v7834 = vunpack.c.3.s8 %v7674
    %v7835 = vunpack.c.0.s8 %v7677
    %v7836 = vunpack.c.1.s8 %v7677
    %v7837 = vunpack.c.2.s8 %v7677
    %v7838 = vunpack.c.3.s8 %v7677
    %v7839 = vunpack.c.0.s8 %v7680
    %v7840 = vunpack.c.1.s8 %v7680
    %v7841 = vunpack.c.2.s8 %v7680
    %v7842 = vunpack.c.3.s8 %v7680
    %v7843 = vunpack.c.0.s8 %v7683
    %v7844 = vunpack.c.1.s8 %v7683
    %v7845 = vunpack.c.2.s8 %v7683
    %v7846 = vunpack.c.3.s8 %v7683
    %v7847 = vunpack.c.0.s8 %v7686
    %v7848 = vunpack.c.1.s8 %v7686
    %v7849 = vunpack.c.2.s8 %v7686
    %v7850 = vunpack.c.3.s8 %v7686
    %v7851 = vunpack.c.0.s8 %v7689
    %v7852 = vunpack.c.1.s8 %v7689
    %v7853 = vunpack.c.2.s8 %v7689
    %v7854 = vunpack.c.3.s8 %v7689
    %v7855 = vunpack.c.0.s8 %v7692
    %v7856 = vunpack.c.1.s8 %v7692
    %v7857 = vunpack.c.2.s8 %v7692
    %v7858 = vunpack.c.3.s8 %v7692
    %v7859 = vunpack.c.0.s8 %v7695
    %v7860 = vunpack.c.1.s8 %v7695
    %v7861 = vunpack.c.2.s8 %v7695
    %v7862 = vunpack.c.3.s8 %v7695
    %v7863 = vunpack.c.0.s8 %v7698
    %v7864 = vunpack.c.1.s8 %v7698
    %v7865 = vunpack.c.2.s8 %v7698
    %v7866 = vunpack.c.3.s8 %v7698
    %v7867 = vunpack.c.0.s8 %v7701
    %v7868 = vunpack.c.1.s8 %v7701
    %v7869 = vunpack.c.2.s8 %v7701
    %v7870 = vunpack.c.3.s8 %v7701
    %v7871 = vunpack.c.0.s8 %v7704
    %v7872 = vunpack.c.1.s8 %v7704
    %v7873 = vunpack.c.2.s8 %v7704
    %v7874 = vunpack.c.3.s8 %v7704
    %v7875 = vunpack.c.0.s8 %v7707
    %v7876 = vunpack.c.1.s8 %v7707
    %v7877 = vunpack.c.2.s8 %v7707
    %v7878 = vunpack.c.3.s8 %v7707
    %v7879 = vunpack.c.0.s8 %v7710
    %v7880 = vunpack.c.1.s8 %v7710
    %v7881 = vunpack.c.2.s8 %v7710
    %v7882 = vunpack.c.3.s8 %v7710
    %v7883 = vunpack.c.0.s8 %v7713
    %v7884 = vunpack.c.1.s8 %v7713
    %v7885 = vunpack.c.2.s8 %v7713
    %v7886 = vunpack.c.3.s8 %v7713
    %v7887 = vunpack.c.0.s8 %v7716
    %v7888 = vunpack.c.1.s8 %v7716
    %v7889 = vunpack.c.2.s8 %v7716
    %v7890 = vunpack.c.3.s8 %v7716
    %v7891 = vunpack.c.0.s8 %v7719
    %v7892 = vunpack.c.1.s8 %v7719
    %v7893 = vunpack.c.2.s8 %v7719
    %v7894 = vunpack.c.3.s8 %v7719
    %v7895 = vunpack.c.0.s8 %v7722
    %v7896 = vunpack.c.1.s8 %v7722
    %v7897 = vunpack.c.2.s8 %v7722
    %v7898 = vunpack.c.3.s8 %v7722
    %v7899 = vrot.slane %v7731, 7
    %v7900 = vsel %vm3448, %v7899, %v7723
    %v7901 = vrot.slane %v7739, 6
    %v7902 = vsel %vm3451, %v7901, %v7900
    %v7903 = vrot.slane %v7747, 5
    %v7904 = vsel %vm3454, %v7903, %v7902
    %v7905 = vrot.slane %v7755, 4
    %v7906 = vsel %vm3457, %v7905, %v7904
    %v7907 = vrot.slane %v7763, 3
    %v7908 = vsel %vm3460, %v7907, %v7906
    %v7909 = vrot.slane %v7771, 2
    %v7910 = vsel %vm3463, %v7909, %v7908
    %v7911 = vrot.slane %v7779, 1
    %v7912 = vsel %vm3466, %v7911, %v7910
    %v7913 = vrot.slane %v7732, 7
    %v7914 = vsel %vm3448, %v7913, %v7724
    %v7915 = vrot.slane %v7740, 6
    %v7916 = vsel %vm3451, %v7915, %v7914
    %v7917 = vrot.slane %v7748, 5
    %v7918 = vsel %vm3454, %v7917, %v7916
    %v7919 = vrot.slane %v7756, 4
    %v7920 = vsel %vm3457, %v7919, %v7918
    %v7921 = vrot.slane %v7764, 3
    %v7922 = vsel %vm3460, %v7921, %v7920
    %v7923 = vrot.slane %v7772, 2
    %v7924 = vsel %vm3463, %v7923, %v7922
    %v7925 = vrot.slane %v7780, 1
    %v7926 = vsel %vm3466, %v7925, %v7924
    %v7927 = vrot.slane %v7733, 7
    %v7928 = vsel %vm3448, %v7927, %v7725
    %v7929 = vrot.slane %v7741, 6
    %v7930 = vsel %vm3451, %v7929, %v7928
    %v7931 = vrot.slane %v7749, 5
    %v7932 = vsel %vm3454, %v7931, %v7930
    %v7933 = vrot.slane %v7757, 4
    %v7934 = vsel %vm3457, %v7933, %v7932
    %v7935 = vrot.slane %v7765, 3
    %v7936 = vsel %vm3460, %v7935, %v7934
    %v7937 = vrot.slane %v7773, 2
    %v7938 = vsel %vm3463, %v7937, %v7936
    %v7939 = vrot.slane %v7781, 1
    %v7940 = vsel %vm3466, %v7939, %v7938
    %v7941 = vrot.slane %v7734, 7
    %v7942 = vsel %vm3448, %v7941, %v7726
    %v7943 = vrot.slane %v7742, 6
    %v7944 = vsel %vm3451, %v7943, %v7942
    %v7945 = vrot.slane %v7750, 5
    %v7946 = vsel %vm3454, %v7945, %v7944
    %v7947 = vrot.slane %v7758, 4
    %v7948 = vsel %vm3457, %v7947, %v7946
    %v7949 = vrot.slane %v7766, 3
    %v7950 = vsel %vm3460, %v7949, %v7948
    %v7951 = vrot.slane %v7774, 2
    %v7952 = vsel %vm3463, %v7951, %v7950
    %v7953 = vrot.slane %v7782, 1
    %v7954 = vsel %vm3466, %v7953, %v7952
    %v7955 = vrot.slane %v7735, 7
    %v7956 = vsel %vm3448, %v7955, %v7727
    %v7957 = vrot.slane %v7743, 6
    %v7958 = vsel %vm3451, %v7957, %v7956
    %v7959 = vrot.slane %v7751, 5
    %v7960 = vsel %vm3454, %v7959, %v7958
    %v7961 = vrot.slane %v7759, 4
    %v7962 = vsel %vm3457, %v7961, %v7960
    %v7963 = vrot.slane %v7767, 3
    %v7964 = vsel %vm3460, %v7963, %v7962
    %v7965 = vrot.slane %v7775, 2
    %v7966 = vsel %vm3463, %v7965, %v7964
    %v7967 = vrot.slane %v7783, 1
    %v7968 = vsel %vm3466, %v7967, %v7966
    %v7969 = vrot.slane %v7736, 7
    %v7970 = vsel %vm3448, %v7969, %v7728
    %v7971 = vrot.slane %v7744, 6
    %v7972 = vsel %vm3451, %v7971, %v7970
    %v7973 = vrot.slane %v7752, 5
    %v7974 = vsel %vm3454, %v7973, %v7972
    %v7975 = vrot.slane %v7760, 4
    %v7976 = vsel %vm3457, %v7975, %v7974
    %v7977 = vrot.slane %v7768, 3
    %v7978 = vsel %vm3460, %v7977, %v7976
    %v7979 = vrot.slane %v7776, 2
    %v7980 = vsel %vm3463, %v7979, %v7978
    %v7981 = vrot.slane %v7784, 1
    %v7982 = vsel %vm3466, %v7981, %v7980
    %v7983 = vrot.slane %v7737, 7
    %v7984 = vsel %vm3448, %v7983, %v7729
    %v7985 = vrot.slane %v7745, 6
    %v7986 = vsel %vm3451, %v7985, %v7984
    %v7987 = vrot.slane %v7753, 5
    %v7988 = vsel %vm3454, %v7987, %v7986
    %v7989 = vrot.slane %v7761, 4
    %v7990 = vsel %vm3457, %v7989, %v7988
    %v7991 = vrot.slane %v7769, 3
    %v7992 = vsel %vm3460, %v7991, %v7990
    %v7993 = vrot.slane %v7777, 2
    %v7994 = vsel %vm3463, %v7993, %v7992
    %v7995 = vrot.slane %v7785, 1
    %v7996 = vsel %vm3466, %v7995, %v7994
    %v7997 = vrot.slane %v7738, 7
    %v7998 = vsel %vm3448, %v7997, %v7730
    %v7999 = vrot.slane %v7746, 6
    %v8000 = vsel %vm3451, %v7999, %v7998
    %v8001 = vrot.slane %v7754, 5
    %v8002 = vsel %vm3454, %v8001, %v8000
    %v8003 = vrot.slane %v7762, 4
    %v8004 = vsel %vm3457, %v8003, %v8002
    %v8005 = vrot.slane %v7770, 3
    %v8006 = vsel %vm3460, %v8005, %v8004
    %v8007 = vrot.slane %v7778, 2
    %v8008 = vsel %vm3463, %v8007, %v8006
    %v8009 = vrot.slane %v7786, 1
    %v8010 = vsel %vm3466, %v8009, %v8008
    %v8011 = vrot.slane %v7795, 7
    %v8012 = vsel %vm3448, %v8011, %v7787
    %v8013 = vrot.slane %v7803, 6
    %v8014 = vsel %vm3451, %v8013, %v8012
    %v8015 = vrot.slane %v7796, 7
    %v8016 = vsel %vm3448, %v8015, %v7788
    %v8017 = vrot.slane %v7804, 6
    %v8018 = vsel %vm3451, %v8017, %v8016
    %v8019 = vrot.slane %v7797, 7
    %v8020 = vsel %vm3448, %v8019, %v7789
    %v8021 = vrot.slane %v7805, 6
    %v8022 = vsel %vm3451, %v8021, %v8020
    %v8023 = vrot.slane %v7798, 7
    %v8024 = vsel %vm3448, %v8023, %v7790
    %v8025 = vrot.slane %v7806, 6
    %v8026 = vsel %vm3451, %v8025, %v8024
    %v8027 = vrot.slane %v7799, 7
    %v8028 = vsel %vm3448, %v8027, %v7791
    %v8029 = vrot.slane %v7807, 6
    %v8030 = vsel %vm3451, %v8029, %v8028
    %v8031 = vrot.slane %v7800, 7
    %v8032 = vsel %vm3448, %v8031, %v7792
    %v8033 = vrot.slane %v7808, 6
    %v8034 = vsel %vm3451, %v8033, %v8032
    %v8035 = vrot.slane %v7801, 7
    %v8036 = vsel %vm3448, %v8035, %v7793
    %v8037 = vrot.slane %v7809, 6
    %v8038 = vsel %vm3451, %v8037, %v8036
    %v8039 = vrot.slane %v7802, 7
    %v8040 = vsel %vm3448, %v8039, %v7794
    %v8041 = vrot.slane %v7810, 6
    %v8042 = vsel %vm3451, %v8041, %v8040
    %v8043 = vrot.slane %v7819, 7
    %v8044 = vsel %vm3448, %v8043, %v7811
    %v8045 = vrot.slane %v7827, 6
    %v8046 = vsel %vm3451, %v8045, %v8044
    %v8047 = vrot.slane %v7835, 5
    %v8048 = vsel %vm3454, %v8047, %v8046
    %v8049 = vrot.slane %v7843, 4
    %v8050 = vsel %vm3457, %v8049, %v8048
    %v8051 = vrot.slane %v7851, 3
    %v8052 = vsel %vm3460, %v8051, %v8050
    %v8053 = vrot.slane %v7859, 2
    %v8054 = vsel %vm3463, %v8053, %v8052
    %v8055 = vrot.slane %v7867, 1
    %v8056 = vsel %vm3466, %v8055, %v8054
    %v8057 = vrot.slane %v7820, 7
    %v8058 = vsel %vm3448, %v8057, %v7812
    %v8059 = vrot.slane %v7828, 6
    %v8060 = vsel %vm3451, %v8059, %v8058
    %v8061 = vrot.slane %v7836, 5
    %v8062 = vsel %vm3454, %v8061, %v8060
    %v8063 = vrot.slane %v7844, 4
    %v8064 = vsel %vm3457, %v8063, %v8062
    %v8065 = vrot.slane %v7852, 3
    %v8066 = vsel %vm3460, %v8065, %v8064
    %v8067 = vrot.slane %v7860, 2
    %v8068 = vsel %vm3463, %v8067, %v8066
    %v8069 = vrot.slane %v7868, 1
    %v8070 = vsel %vm3466, %v8069, %v8068
    %v8071 = vrot.slane %v7821, 7
    %v8072 = vsel %vm3448, %v8071, %v7813
    %v8073 = vrot.slane %v7829, 6
    %v8074 = vsel %vm3451, %v8073, %v8072
    %v8075 = vrot.slane %v7837, 5
    %v8076 = vsel %vm3454, %v8075, %v8074
    %v8077 = vrot.slane %v7845, 4
    %v8078 = vsel %vm3457, %v8077, %v8076
    %v8079 = vrot.slane %v7853, 3
    %v8080 = vsel %vm3460, %v8079, %v8078
    %v8081 = vrot.slane %v7861, 2
    %v8082 = vsel %vm3463, %v8081, %v8080
    %v8083 = vrot.slane %v7869, 1
    %v8084 = vsel %vm3466, %v8083, %v8082
    %v8085 = vrot.slane %v7822, 7
    %v8086 = vsel %vm3448, %v8085, %v7814
    %v8087 = vrot.slane %v7830, 6
    %v8088 = vsel %vm3451, %v8087, %v8086
    %v8089 = vrot.slane %v7838, 5
    %v8090 = vsel %vm3454, %v8089, %v8088
    %v8091 = vrot.slane %v7846, 4
    %v8092 = vsel %vm3457, %v8091, %v8090
    %v8093 = vrot.slane %v7854, 3
    %v8094 = vsel %vm3460, %v8093, %v8092
    %v8095 = vrot.slane %v7862, 2
    %v8096 = vsel %vm3463, %v8095, %v8094
    %v8097 = vrot.slane %v7870, 1
    %v8098 = vsel %vm3466, %v8097, %v8096
    %v8099 = vrot.slane %v7823, 7
    %v8100 = vsel %vm3448, %v8099, %v7815
    %v8101 = vrot.slane %v7831, 6
    %v8102 = vsel %vm3451, %v8101, %v8100
    %v8103 = vrot.slane %v7839, 5
    %v8104 = vsel %vm3454, %v8103, %v8102
    %v8105 = vrot.slane %v7847, 4
    %v8106 = vsel %vm3457, %v8105, %v8104
    %v8107 = vrot.slane %v7855, 3
    %v8108 = vsel %vm3460, %v8107, %v8106
    %v8109 = vrot.slane %v7863, 2
    %v8110 = vsel %vm3463, %v8109, %v8108
    %v8111 = vrot.slane %v7871, 1
    %v8112 = vsel %vm3466, %v8111, %v8110
    %v8113 = vrot.slane %v7824, 7
    %v8114 = vsel %vm3448, %v8113, %v7816
    %v8115 = vrot.slane %v7832, 6
    %v8116 = vsel %vm3451, %v8115, %v8114
    %v8117 = vrot.slane %v7840, 5
    %v8118 = vsel %vm3454, %v8117, %v8116
    %v8119 = vrot.slane %v7848, 4
    %v8120 = vsel %vm3457, %v8119, %v8118
    %v8121 = vrot.slane %v7856, 3
    %v8122 = vsel %vm3460, %v8121, %v8120
    %v8123 = vrot.slane %v7864, 2
    %v8124 = vsel %vm3463, %v8123, %v8122
    %v8125 = vrot.slane %v7872, 1
    %v8126 = vsel %vm3466, %v8125, %v8124
    %v8127 = vrot.slane %v7825, 7
    %v8128 = vsel %vm3448, %v8127, %v7817
    %v8129 = vrot.slane %v7833, 6
    %v8130 = vsel %vm3451, %v8129, %v8128
    %v8131 = vrot.slane %v7841, 5
    %v8132 = vsel %vm3454, %v8131, %v8130
    %v8133 = vrot.slane %v7849, 4
    %v8134 = vsel %vm3457, %v8133, %v8132
    %v8135 = vrot.slane %v7857, 3
    %v8136 = vsel %vm3460, %v8135, %v8134
    %v8137 = vrot.slane %v7865, 2
    %v8138 = vsel %vm3463, %v8137, %v8136
    %v8139 = vrot.slane %v7873, 1
    %v8140 = vsel %vm3466, %v8139, %v8138
    %v8141 = vrot.slane %v7826, 7
    %v8142 = vsel %vm3448, %v8141, %v7818
    %v8143 = vrot.slane %v7834, 6
    %v8144 = vsel %vm3451, %v8143, %v8142
    %v8145 = vrot.slane %v7842, 5
    %v8146 = vsel %vm3454, %v8145, %v8144
    %v8147 = vrot.slane %v7850, 4
    %v8148 = vsel %vm3457, %v8147, %v8146
    %v8149 = vrot.slane %v7858, 3
    %v8150 = vsel %vm3460, %v8149, %v8148
    %v8151 = vrot.slane %v7866, 2
    %v8152 = vsel %vm3463, %v8151, %v8150
    %v8153 = vrot.slane %v7874, 1
    %v8154 = vsel %vm3466, %v8153, %v8152
    %v8155 = vrot.slane %v7883, 7
    %v8156 = vsel %vm3448, %v8155, %v7875
    %v8157 = vrot.slane %v7891, 6
    %v8158 = vsel %vm3451, %v8157, %v8156
    %v8159 = vrot.slane %v7884, 7
    %v8160 = vsel %vm3448, %v8159, %v7876
    %v8161 = vrot.slane %v7892, 6
    %v8162 = vsel %vm3451, %v8161, %v8160
    %v8163 = vrot.slane %v7885, 7
    %v8164 = vsel %vm3448, %v8163, %v7877
    %v8165 = vrot.slane %v7893, 6
    %v8166 = vsel %vm3451, %v8165, %v8164
    %v8167 = vrot.slane %v7886, 7
    %v8168 = vsel %vm3448, %v8167, %v7878
    %v8169 = vrot.slane %v7894, 6
    %v8170 = vsel %vm3451, %v8169, %v8168
    %v8171 = vrot.slane %v7887, 7
    %v8172 = vsel %vm3448, %v8171, %v7879
    %v8173 = vrot.slane %v7895, 6
    %v8174 = vsel %vm3451, %v8173, %v8172
    %v8175 = vrot.slane %v7888, 7
    %v8176 = vsel %vm3448, %v8175, %v7880
    %v8177 = vrot.slane %v7896, 6
    %v8178 = vsel %vm3451, %v8177, %v8176
    %v8179 = vrot.slane %v7889, 7
    %v8180 = vsel %vm3448, %v8179, %v7881
    %v8181 = vrot.slane %v7897, 6
    %v8182 = vsel %vm3451, %v8181, %v8180
    %v8183 = vrot.slane %v7890, 7
    %v8184 = vsel %vm3448, %v8183, %v7882
    %v8185 = vrot.slane %v7898, 6
    %v8186 = vsel %vm3451, %v8185, %v8184
    %v8187 = vpack.c.b16 %v7926, %v7912
    %v8188 = vpack.c.b16 %v7954, %v7940
    %v8189 = vpack.c.b8 %v8188, %v8187
    %v8190 = vpack.c.b16 %v7982, %v7968
    %v8191 = vpack.c.b16 %v8010, %v7996
    %v8192 = vpack.c.b8 %v8191, %v8190
    %v8193 = vpack.c.b16 %v8018, %v8014
    %v8194 = vpack.c.b16 %v8026, %v8022
    %v8195 = vpack.c.b8 %v8194, %v8193
    %v8196 = vpack.c.b16 %v8034, %v8030
    %v8197 = vpack.c.b16 %v8042, %v8038
    %v8198 = vpack.c.b8 %v8197, %v8196
    %v8199 = vpack.c.b16 %v8070, %v8056
    %v8200 = vpack.c.b16 %v8098, %v8084
    %v8201 = vpack.c.b8 %v8200, %v8199
    %v8202 = vpack.c.b16 %v8126, %v8112
    %v8203 = vpack.c.b16 %v8154, %v8140
    %v8204 = vpack.c.b8 %v8203, %v8202
    %v8205 = vpack.c.b16 %v8162, %v8158
    %v8206 = vpack.c.b16 %v8170, %v8166
    %v8207 = vpack.c.b8 %v8206, %v8205
    %v8208 = vpack.c.b16 %v8178, %v8174
    %v8209 = vpack.c.b16 %v8186, %v8182
    %v8210 = vpack.c.b8 %v8209, %v8208
    %8211 = vst [vmem:[#allocation10] sm:$0xff] %v8189
    %8212 = vst [vmem:[#allocation10 + $0x8] sm:$0xff] %v8192
    %vm8213 = vcmask 1040384
    %vm8214 = vsmask.f32 512
    %vm8215 = vmand %vm8213, %vm8214
    %vm8216 = vcmask 1042434
    %vm8217 = vsmask.f32 2560
    %vm8218 = vmand %vm8216, %vm8217
    %vm8219 = vmor %vm8218, %vm8215
    %vm8220 = vcmask 1044484
    %vm8221 = vsmask.f32 4608
    %vm8222 = vmand %vm8220, %vm8221
    %vm8223 = vmor %vm8222, %vm8219
    %vm8224 = vcmask 1046534
    %vm8225 = vsmask.f32 6656
    %vm8226 = vmand %vm8224, %vm8225
    %vm8227 = vmor %vm8226, %vm8223
    %v8228 = vld [vmem:[#allocation10 + $0x10] sm:$0x55]
    %v8229 = vsel %vm8227, %v8195, %v8228
    %8230 = vst [vmem:[#allocation10 + $0x10] sm:$0x55] %v8229
    %v8231 = vld [vmem:[#allocation10 + $0x18] sm:$0x55]
    %v8232 = vsel %vm8227, %v8198, %v8231
    %8233 = vst [vmem:[#allocation10 + $0x18] sm:$0x55] %v8232
    %8234 = vst [vmem:[#allocation10 + $0x20] sm:$0xff] %v8201
    %8235 = vst [vmem:[#allocation10 + $0x28] sm:$0xff] %v8204
    %v8236 = vld [vmem:[#allocation10 + $0x30] sm:$0x55]
    %v8237 = vsel %vm8227, %v8207, %v8236
    %8238 = vst [vmem:[#allocation10 + $0x30] sm:$0x55] %v8237
    %v8239 = vld [vmem:[#allocation10 + $0x38] sm:$0x55]
    %v8240 = vsel %vm8227, %v8210, %v8239
    %8241 = vst [vmem:[#allocation10 + $0x38] sm:$0x55] %v8240
    %v8242 = vpack.c.b16 %v6054, %v6053
    %v8243 = vpack.c.b16 %v6056, %v6055
    %v8244 = vpack.c.b8 %v8243, %v8242
    %v8245 = vpack.c.b16 %v6058, %v6057
    %v8246 = vpack.c.b16 %v6060, %v6059
    %v8247 = vpack.c.b8 %v8246, %v8245
    %vm8248 = vcmask 1041408
    %vm8249 = vsmask.f32 1280
    %vm8250 = vmand %vm8248, %vm8249
    %vm8251 = vcmask 1043458
    %vm8252 = vsmask.f32 3328
    %vm8253 = vmand %vm8251, %vm8252
    %vm8254 = vmor %vm8253, %vm8250
    %vm8255 = vcmask 1045508
    %vm8256 = vsmask.f32 5376
    %vm8257 = vmand %vm8255, %vm8256
    %vm8258 = vmor %vm8257, %vm8254
    %vm8259 = vcmask 1047558
    %vm8260 = vsmask.f32 7424
    %vm8261 = vmand %vm8259, %vm8260
    %vm8262 = vmor %vm8261, %vm8258
    %v8263 = vld [vmem:[#allocation11] sm:$0xff]
    %v8264 = vsel %vm8262, %v8244, %v8263
    %8265 = vst [vmem:[#allocation11] sm:$0xff] %v8264
    %v8266 = vld [vmem:[#allocation11 + $0x8] sm:$0xff]
    %v8267 = vsel %vm8262, %v8247, %v8266
    %8268 = vst [vmem:[#allocation11 + $0x8] sm:$0xff] %v8267
    %v8269 = vpack.c.b16 %v6550, %v6550
    %v8270 = vpack.c.b8 %v8269, %v8269
    %v8271 = vpack.c.b16 %v6551, %v6551
    %v8272 = vpack.c.b8 %v8271, %v8271
    %v8273 = vpack.c.b16 %v6552, %v6552
    %v8274 = vpack.c.b8 %v8273, %v8273
    %v8275 = vpack.c.b16 %v6553, %v6553
    %v8276 = vpack.c.b8 %v8275, %v8275
    %v8277 = vpack.c.b16 %v6554, %v6554
    %v8278 = vpack.c.b8 %v8277, %v8277
    %v8279 = vpack.c.b16 %v6555, %v6555
    %v8280 = vpack.c.b8 %v8279, %v8279
    %v8282 = vunpack.c.l.s4 1966171168
    %v8283 = vunpack.c.0.s8 %v8282
    %v8284 = vlaneseq
    %v8285 = vshrl.u32 %v8284, 7
    %v8286 = vsub.s32 %v8283, %v8285
    %v8287 = vrot.slane %v8270, %v8286
    %v8289 = vunpack.c.l.s4 1966171168
    %v8290 = vunpack.c.0.s8 %v8289
    %v8291 = vlaneseq
    %v8292 = vshrl.u32 %v8291, 7
    %v8293 = vsub.s32 %v8290, %v8292
    %v8294 = vrot.slane %v8287, %v8293
    %v8296 = vunpack.c.l.s4 1966171168
    %v8297 = vunpack.c.0.s8 %v8296
    %v8298 = vlaneseq
    %v8299 = vshrl.u32 %v8298, 7
    %v8300 = vsub.s32 %v8297, %v8299
    %v8301 = vrot.slane %v8272, %v8300
    %v8303 = vunpack.c.l.s4 1966171168
    %v8304 = vunpack.c.0.s8 %v8303
    %v8305 = vlaneseq
    %v8306 = vshrl.u32 %v8305, 7
    %v8307 = vsub.s32 %v8304, %v8306
    %v8308 = vrot.slane %v8301, %v8307
    %v8310 = vunpack.c.l.s4 1966171168
    %v8311 = vunpack.c.0.s8 %v8310
    %v8312 = vlaneseq
    %v8313 = vshrl.u32 %v8312, 7
    %v8314 = vsub.s32 %v8311, %v8313
    %v8315 = vrot.slane %v8274, %v8314
    %v8317 = vunpack.c.l.s4 1966171168
    %v8318 = vunpack.c.0.s8 %v8317
    %v8319 = vlaneseq
    %v8320 = vshrl.u32 %v8319, 7
    %v8321 = vsub.s32 %v8318, %v8320
    %v8322 = vrot.slane %v8315, %v8321
    %v8324 = vunpack.c.l.s4 1966171168
    %v8325 = vunpack.c.0.s8 %v8324
    %v8326 = vlaneseq
    %v8327 = vshrl.u32 %v8326, 7
    %v8328 = vsub.s32 %v8325, %v8327
    %v8329 = vrot.slane %v8276, %v8328
    %v8331 = vunpack.c.l.s4 1966171168
    %v8332 = vunpack.c.0.s8 %v8331
    %v8333 = vlaneseq
    %v8334 = vshrl.u32 %v8333, 7
    %v8335 = vsub.s32 %v8332, %v8334
    %v8336 = vrot.slane %v8329, %v8335
    %v8338 = vunpack.c.l.s4 1966171168
    %v8339 = vunpack.c.0.s8 %v8338
    %v8340 = vlaneseq
    %v8341 = vshrl.u32 %v8340, 7
    %v8342 = vsub.s32 %v8339, %v8341
    %v8343 = vrot.slane %v8278, %v8342
    %v8345 = vunpack.c.l.s4 1966171168
    %v8346 = vunpack.c.0.s8 %v8345
    %v8347 = vlaneseq
    %v8348 = vshrl.u32 %v8347, 7
    %v8349 = vsub.s32 %v8346, %v8348
    %v8350 = vrot.slane %v8343, %v8349
    %v8352 = vunpack.c.l.s4 1966171168
    %v8353 = vunpack.c.0.s8 %v8352
    %v8354 = vlaneseq
    %v8355 = vshrl.u32 %v8354, 7
    %v8356 = vsub.s32 %v8353, %v8355
    %v8357 = vrot.slane %v8280, %v8356
    %v8359 = vunpack.c.l.s4 1966171168
    %v8360 = vunpack.c.0.s8 %v8359
    %v8361 = vlaneseq
    %v8362 = vshrl.u32 %v8361, 7
    %v8363 = vsub.s32 %v8360, %v8362
    %v8364 = vrot.slane %v8357, %v8363
    %v8366 = vunpack.c.l.s4 1935823168
    %v8367 = vunpack.c.0.s8 %v8366
    %v8368 = vlaneseq
    %v8369 = vshrl.u32 %v8368, 7
    %v8370 = vsub.s32 %v8367, %v8369
    %v8371 = vrot.slane %v8294, %v8370
    %v8373 = vunpack.c.l.s4 1935823168
    %v8374 = vunpack.c.0.s8 %v8373
    %v8375 = vlaneseq
    %v8376 = vshrl.u32 %v8375, 7
    %v8377 = vsub.s32 %v8374, %v8376
    %v8378 = vrot.slane %v8308, %v8377
    %v8380 = vunpack.c.l.s4 1935823168
    %v8381 = vunpack.c.0.s8 %v8380
    %v8382 = vlaneseq
    %v8383 = vshrl.u32 %v8382, 7
    %v8384 = vsub.s32 %v8381, %v8383
    %v8385 = vrot.slane %v8322, %v8384
    %v8387 = vunpack.c.l.s4 1935823168
    %v8388 = vunpack.c.0.s8 %v8387
    %v8389 = vlaneseq
    %v8390 = vshrl.u32 %v8389, 7
    %v8391 = vsub.s32 %v8388, %v8390
    %v8392 = vrot.slane %v8336, %v8391
    %v8394 = vunpack.c.l.s4 1935823168
    %v8395 = vunpack.c.0.s8 %v8394
    %v8396 = vlaneseq
    %v8397 = vshrl.u32 %v8396, 7
    %v8398 = vsub.s32 %v8395, %v8397
    %v8399 = vrot.slane %v8350, %v8398
    %v8401 = vunpack.c.l.s4 1935823168
    %v8402 = vunpack.c.0.s8 %v8401
    %v8403 = vlaneseq
    %v8404 = vshrl.u32 %v8403, 7
    %v8405 = vsub.s32 %v8402, %v8404
    %v8406 = vrot.slane %v8364, %v8405
    %v8407 = vunpack.c.0.s8 %v8371
    %v8408 = vunpack.c.0.s8 %v8378
    %v8409 = vunpack.c.0.s8 %v8385
    %v8410 = vunpack.c.0.s8 %v8392
    %v8411 = vunpack.c.0.s8 %v8399
    %v8412 = vunpack.c.0.s8 %v8406
    %v8413 = vrot.slane %v8408, 7
    %v8414 = vsel %vm3448, %v8413, %v8407
    %v8415 = vrot.slane %v8409, 6
    %v8416 = vsel %vm3451, %v8415, %v8414
    %v8417 = vrot.slane %v8411, 7
    %v8418 = vsel %vm3448, %v8417, %v8410
    %v8419 = vrot.slane %v8412, 6
    %v8420 = vsel %vm3451, %v8419, %v8418
    %v8421 = vpack.c.b16 %v8416, %v8416
    %v8422 = vpack.c.b8 %v8421, %v8421
    %v8423 = vpack.c.b16 %v8420, %v8420
    %v8424 = vpack.c.b8 %v8423, %v8423
    %v8426 = vunpack.c.l.s4 1966171168
    %v8427 = vunpack.c.0.s8 %v8426
    %v8428 = vlaneseq
    %v8429 = vshrl.u32 %v8428, 7
    %v8430 = vsub.s32 %v8427, %v8429
    %v8431 = vrot.slane %v8422, %v8430
    %v8433 = vunpack.c.l.s4 1966171168
    %v8434 = vunpack.c.0.s8 %v8433
    %v8435 = vlaneseq
    %v8436 = vshrl.u32 %v8435, 7
    %v8437 = vsub.s32 %v8434, %v8436
    %v8438 = vrot.slane %v8424, %v8437
    %v8439 = vld [vmem:[#allocation13] sm:$0x1]
    %v8440 = vsel %vm8215, %v8431, %v8439
    %8441 = vst [vmem:[#allocation13] sm:$0x1] %v8440
    %v8442 = vld [vmem:[#allocation13 + $0x1] sm:$0x1]
    %v8443 = vsel %vm8215, %v8438, %v8442
    %8444 = vst [vmem:[#allocation13 + $0x1] sm:$0x1] %v8443
    %v8445 = vpack.c.b16 %v6750, %v6750
    %v8446 = vpack.c.b8 %v8445, %v8445
    %v8447 = vpack.c.b16 %v6751, %v6751
    %v8448 = vpack.c.b8 %v8447, %v8447
    %vm8449 = vcmask 516096
    %vm8450 = vsmask.f32 256
    %vm8451 = vmand %vm8449, %vm8450
    %v8452 = vld [vmem:[#allocation14] sm:$0x1]
    %v8453 = vsel %vm8451, %v8446, %v8452
    %8454 = vst [vmem:[#allocation14] sm:$0x1] %v8453
    %v8455 = vld [vmem:[#allocation14 + $0x1] sm:$0x1]
    %v8456 = vsel %vm8451, %v8448, %v8455
    %8457 = vst [vmem:[#allocation14 + $0x1] sm:$0x1] %v8456
    // Predicated region
    $region54: #{tpu_custom_call.1} parent=1 // pred_check
      _
    $region55: #{tpu_custom_call.1} parent=1 // pred_check_branch
      %8459 = sbr.rel (0) target = $region57
    $region56: #{tpu_custom_call.1} parent=1 // pred_region
      %s8461 = ssub.s32 32, 32
      %8462 = vsyncadd [#allocation4], %s8461
      %s8464 = sshll.u32 [#allocation7], 4
      %s8465 = int_to_ptr.vmem [resolvable:$true] %s8464
      %8467 = dma.vmem_to_hbm [thread:$0]  %s8465, 32, %s11, [#allocation4]
    $region57: #{tpu_custom_call.1} parent=1 // pred_fallthru
      _
    // Predicated region
    $region58: #{tpu_custom_call.1} parent=1 // pred_check
      _
    $region59: #{tpu_custom_call.1} parent=1 // pred_check_branch
      %8469 = sbr.rel (0) target = $region61
    $region60: #{tpu_custom_call.1} parent=1 // pred_region
      %s8471 = ssub.s32 32, 32
      %8472 = vsyncadd [#allocation9], %s8471
      %s8474 = sshll.u32 [#allocation8], 4
      %s8475 = int_to_ptr.vmem [resolvable:$true] %s8474
      %8477 = dma.vmem_to_hbm [thread:$0]  %s8475, 32, %s12, [#allocation9]
    $region61: #{tpu_custom_call.1} parent=1 // pred_fallthru
      _
    // Predicated region
    $region62: #{tpu_custom_call.1} parent=1 // pred_check
      _
    $region63: #{tpu_custom_call.1} parent=1 // pred_check_branch
      %8479 = sbr.rel (0) target = $region65
    $region64: #{tpu_custom_call.1} parent=1 // pred_region
      %s8481 = ssub.s32 1024, 1024
      %8482 = vsyncadd [#allocation9], %s8481
      %s8483 = sshll.u32 [#allocation10], 4
      %s8484 = int_to_ptr.vmem [resolvable:$true] %s8483
      %8489 = dma.vmem_to_hbm [thread:$0]  %s8484, 1024, %s13, [#allocation9], 256, 256, 16
    $region65: #{tpu_custom_call.1} parent=1 // pred_fallthru
      _
    // Predicated region
    $region66: #{tpu_custom_call.1} parent=1 // pred_check
      _
    $region67: #{tpu_custom_call.1} parent=1 // pred_check_branch
      %8491 = sbr.rel (0) target = $region69
    $region68: #{tpu_custom_call.1} parent=1 // pred_region
      %s8493 = ssub.s32 256, 256
      %8494 = vsyncadd [#allocation12], %s8493
      %s8495 = sshll.u32 [#allocation11], 4
      %s8496 = int_to_ptr.vmem [resolvable:$true] %s8495
      %8501 = dma.vmem_to_hbm [thread:$0]  %s8496, 256, %s14, [#allocation12], 128, 128, 8
    $region69: #{tpu_custom_call.1} parent=1 // pred_fallthru
      _
    // Predicated region
    $region70: #{tpu_custom_call.1} parent=1 // pred_check
      _
    $region71: #{tpu_custom_call.1} parent=1 // pred_check_branch
      %8503 = sbr.rel (0) target = $region73
    $region72: #{tpu_custom_call.1} parent=1 // pred_region
      %s8505 = ssub.s32 32, 32
      %8506 = vsyncadd [#allocation12], %s8505
      %s8507 = sshll.u32 [#allocation13], 4
      %s8508 = int_to_ptr.vmem [resolvable:$true] %s8507
      %8513 = dma.vmem_to_hbm [thread:$0]  %s8508, 32, %s15, [#allocation12], 16, 16, 1
    $region73: #{tpu_custom_call.1} parent=1 // pred_fallthru
      _
    // Predicated region
    $region74: #{tpu_custom_call.1} parent=1 // pred_check
      _
    $region75: #{tpu_custom_call.1} parent=1 // pred_check_branch
      %8515 = sbr.rel (0) target = $region77
    $region76: #{tpu_custom_call.1} parent=1 // pred_region
      %s8517 = ssub.s32 32, 32
      %8518 = vsyncadd [#allocation15], %s8517
      %s8519 = sshll.u32 [#allocation14], 4
      %s8520 = int_to_ptr.vmem [resolvable:$true] %s8519
      %8525 = dma.vmem_to_hbm [thread:$0]  %s8520, 32, %s16, [#allocation15], 16, 16, 1
    $region77: #{tpu_custom_call.1} parent=1 // pred_fallthru
      _
    // Predicated region
    $region78: #{tpu_custom_call.1} parent=1 // pred_check
      _
    $region79: #{tpu_custom_call.1} parent=1 // pred_check_branch
      %8527 = sbr.rel (0) target = $region81
    $region80: #{tpu_custom_call.1} parent=1 // pred_region
      %8528 = dma.done [#allocation4], 32
    $region81: #{tpu_custom_call.1} parent=1 // pred_fallthru
      _
    // Predicated region
    $region82: #{tpu_custom_call.1} parent=1 // pred_check
      _
    $region83: #{tpu_custom_call.1} parent=1 // pred_check_branch
      %8530 = sbr.rel (0) target = $region85
    $region84: #{tpu_custom_call.1} parent=1 // pred_region
      %8531 = dma.done [#allocation9], 32
    $region85: #{tpu_custom_call.1} parent=1 // pred_fallthru
      _
    // Predicated region
    $region86: #{tpu_custom_call.1} parent=1 // pred_check
      _
    $region87: #{tpu_custom_call.1} parent=1 // pred_check_branch
      %8533 = sbr.rel (0) target = $region89
    $region88: #{tpu_custom_call.1} parent=1 // pred_region
      %8534 = dma.done [#allocation9], 1024
    $region89: #{tpu_custom_call.1} parent=1 // pred_fallthru
      _
    // Predicated region
    $region90: #{tpu_custom_call.1} parent=1 // pred_check
      _
    $region91: #{tpu_custom_call.1} parent=1 // pred_check_branch
      %8536 = sbr.rel (0) target = $region93
    $region92: #{tpu_custom_call.1} parent=1 // pred_region
      %8537 = dma.done [#allocation12], 256
    $region93: #{tpu_custom_call.1} parent=1 // pred_fallthru
      _
    // Predicated region
    $region94: #{tpu_custom_call.1} parent=1 // pred_check
      _
    $region95: #{tpu_custom_call.1} parent=1 // pred_check_branch
      %8539 = sbr.rel (0) target = $region97
    $region96: #{tpu_custom_call.1} parent=1 // pred_region
      %8540 = dma.done [#allocation12], 32
    $region97: #{tpu_custom_call.1} parent=1 // pred_fallthru
      _
    // Predicated region
    $region98: #{tpu_custom_call.1} parent=1 // pred_check
      _
    $region99: #{tpu_custom_call.1} parent=1 // pred_check_branch
      %8542 = sbr.rel (0) target = $region101
    $region100: #{tpu_custom_call.1} parent=1 // pred_region
      %8543 = dma.done [#allocation15], 32
    $region101: #{tpu_custom_call.1} parent=1 // pred_fallthru
      _
    %8544 = vsyncpa [#allocation3], 1
    %8545 = vsyncpa [#allocation6], 1
    %8546 = vsyncpa [#allocation4], 1
    %8547 = vsyncpa [#allocation9], 1
    %8548 = vsyncpa [#allocation12], 1
    %8549 = vsyncpa [#allocation15], 1

</llo_original>
